<compile_context>
chip_gen: v6e
topology: v6e:2x2x1
jax: 0.10.0
libtpu: 0.0.40
codegen_flags: <defaults>
</compile_context>

<pallas_src>
import math

import jax
import jax.numpy as jnp
from jax.experimental import pallas as pl
from jax.experimental.pallas import tpu as pltpu


# ----------------------------- fused Pallas kernel -----------------------------

def _lenet_kernel(x_ref,                      # (32, 96)     image: rows=H, lanes=W*Cin
                  bd1_ref, b1_ref,            # (25, 84, 168), (1, 168)
                  rs1_ref, cs1_ref,           # (2, 14, 28),  (2, 168, 84)
                  bd2_ref, b2_ref,            # (25, 60, 160), (1, 160)
                  rs2_ref, cs2_ref,           # (2, 5, 10),   (2, 160, 80)
                  fc1w_ref, fc1b_ref,         # (5, 80, 120), (1, 120)
                  fc2w_ref, fc2b_ref,         # (120, 84),    (1, 84)
                  fc3w_ref, fc3b_ref,         # (84, 10),     (1, 10)
                  o_ref):                     # (1, 10)
    f32 = jnp.float32
    dot = lambda a, b: jnp.dot(a, b, preferred_element_type=f32)

    x = x_ref[...]                                                # (32, 96)

    # ---- conv1 (5x5, 3->6) + bias + ReLU: (28, 28*6) ----
    acc = jnp.zeros((28, 168), f32)
    for i in range(5):
        for j in range(5):
            acc += dot(x[i:i + 28, j * 3:j * 3 + 84], bd1_ref[i * 5 + j])
    x1 = jnp.maximum(acc + b1_ref[...], 0.0)                      # (28, 168)

    # ---- maxpool 2x2 -> (14, 14*6) via 0/1 selection matmuls ----
    r = jnp.maximum(dot(rs1_ref[0], x1), dot(rs1_ref[1], x1))     # (14, 168)
    p1 = jnp.maximum(dot(r, cs1_ref[0]), dot(r, cs1_ref[1]))      # (14, 84)

    # ---- conv2 (5x5, 6->16) + bias + ReLU: (10, 10*16) ----
    acc = jnp.zeros((10, 160), f32)
    for i in range(5):
        for j in range(5):
            acc += dot(p1[i:i + 10, j * 6:j * 6 + 60], bd2_ref[i * 5 + j])
    x2 = jnp.maximum(acc + b2_ref[...], 0.0)                      # (10, 160)

    # ---- maxpool 2x2 -> (5, 5*16) ----
    r = jnp.maximum(dot(rs2_ref[0], x2), dot(rs2_ref[1], x2))     # (5, 160)
    p2 = jnp.maximum(dot(r, cs2_ref[0]), dot(r, cs2_ref[1]))      # (5, 80)

    # ---- fc1 (400 -> 120) + ReLU (NCHW flatten order folded into fc1w packing) ----
    h = jnp.zeros((1, 120), f32)
    for hh in range(5):
        h += dot(p2[hh:hh + 1, :], fc1w_ref[hh])
    h = jnp.maximum(h + fc1b_ref[...], 0.0)                       # (1, 120)

    # ---- fc2 (120 -> 84) + ReLU ----
    h = jnp.maximum(dot(h, fc2w_ref[...]) + fc2b_ref[...], 0.0)   # (1, 84)

    # ---- fc3 (84 -> 10) ----
    o_ref[...] = (dot(h, fc3w_ref[...]) + fc3b_ref[...]).astype(o_ref.dtype)


# ----------------------------- one-time weight packing -----------------------------

def _conv_block_diag(w_oihw, wo):
    """Per-tap block-diagonal matmul weights for a channels-in-lanes conv.

    bd[kh*KW+kw][x*I + c, y*O + o] = (x == y) * w[o, c, kh, kw], so that a
    (Ho, wo*I) shifted input slab @ bd[tap] is that tap's contribution to the
    (Ho, wo*O) conv output.
    """
    O, I, KH, KW = w_oihw.shape
    w_io = jnp.transpose(w_oihw, (2, 3, 1, 0))                    # (KH, KW, I, O)
    eye = jnp.eye(wo, dtype=w_oihw.dtype)
    bd = jnp.einsum("xy,hwco->hwxcyo", eye, w_io)                 # (KH,KW,wo,I,wo,O)
    return bd.reshape(KH * KW, wo * I, wo * O)


def _row_selectors(ho):
    """(2, ho//2, ho) 0/1 matrices: sel[p] @ X picks rows 2*hp + p of X."""
    hp = ho // 2
    idx = jnp.arange(hp)
    sel = jnp.zeros((2, hp, ho), jnp.float32)
    sel = sel.at[0, idx, 2 * idx].set(1.0)
    sel = sel.at[1, idx, 2 * idx + 1].set(1.0)
    return sel


def _col_selectors(wo, c):
    """(2, wo*c, (wo//2)*c) 0/1 matrices: X @ sel[q] keeps channel k of width 2*wp + q."""
    wp = wo // 2
    r = jnp.arange(wo * c)
    s = jnp.arange(wp * c)
    r_w, r_c = r // c, r % c
    s_w, s_c = s // c, s % c

    def make(q):
        return ((r_w[:, None] == 2 * s_w[None, :] + q) &
                (r_c[:, None] == s_c[None, :])).astype(jnp.float32)

    return jnp.stack([make(0), make(1)])


def pack_params(params):
    """Host-side, one-time packing of PyTorch-layout LeNet params."""
    p = {}
    p["bd1"] = _conv_block_diag(params["conv1_w"], 28)            # (25, 84, 168)
    p["b1"] = jnp.tile(params["conv1_b"], 28)[None, :]            # (1, 168)
    p["rs1"] = _row_selectors(28)                                 # (2, 14, 28)
    p["cs1"] = _col_selectors(28, 6)                              # (2, 168, 84)
    p["bd2"] = _conv_block_diag(params["conv2_w"], 10)            # (25, 60, 160)
    p["b2"] = jnp.tile(params["conv2_b"], 10)[None, :]            # (1, 160)
    p["rs2"] = _row_selectors(10)                                 # (2, 5, 10)
    p["cs2"] = _col_selectors(10, 16)                             # (2, 160, 80)
    # fc1_w: (120, 400) with input index c*25 + h*5 + w  ->  (5, 80, 120) [h, w*16+c, out]
    p["fc1w"] = jnp.transpose(params["fc1_w"].reshape(120, 16, 5, 5),
                              (2, 3, 1, 0)).reshape(5, 80, 120)
    p["fc1b"] = params["fc1_b"][None, :]                          # (1, 120)
    p["fc2w"] = params["fc2_w"].T                                 # (120, 84)
    p["fc2b"] = params["fc2_b"][None, :]                          # (1, 84)
    p["fc3w"] = params["fc3_w"].T                                 # (84, 10)
    p["fc3b"] = params["fc3_b"][None, :]                          # (1, 10)
    return p


_PACKED_ORDER = ("bd1", "b1", "rs1", "cs1", "bd2", "b2", "rs2", "cs2",
                 "fc1w", "fc1b", "fc2w", "fc2b", "fc3w", "fc3b")


def _full_spec(a):
    nd = a.ndim

    def idx(b):
        return (0,) * nd       # same block every grid step -> stays resident in VMEM

    return pl.BlockSpec(a.shape, idx)


# ----------------------------- forward pass -----------------------------

def lenet_forward(x_nchw, packed):
    B, C, H, W = x_nchw.shape
    assert (C, H, W) == (3, 32, 32), "LeNet expects 3x32x32 inputs"
    # NCHW -> rows = H, lanes = W*C (channels-last inside each width group)
    x2d = jnp.transpose(x_nchw, (0, 2, 3, 1)).reshape(B, H, W * C)      # (B, 32, 96)

    weights = [packed[k] for k in _PACKED_ORDER]
    out = pl.pallas_call(
        _lenet_kernel,
        out_shape=jax.ShapeDtypeStruct((B, 1, 10), jnp.float32),
        grid=(B,),
        in_specs=[pl.BlockSpec((None, H, W * C), lambda b: (b, 0, 0))]
                 + [_full_spec(w) for w in weights],
        out_specs=pl.BlockSpec((None, 1, 10), lambda b: (b, 0, 0)),
        compiler_params=pltpu.CompilerParams(
            dimension_semantics=("parallel",)),   # batch shards across v7x's 2 TCs
    )(x2d, *weights)
    return out.reshape(B, 10)


# ----------------------------- init + pure-JAX reference -----------------------------

def init_params(key):
    """Deterministic init mirroring PyTorch's default U(-1/sqrt(fan_in), 1/sqrt(fan_in))."""
    def uniform(k, shape, fan_in):
        bound = 1.0 / math.sqrt(fan_in)
        return jax.random.uniform(k, shape, jnp.float32, -bound, bound)

    ks = jax.random.split(key, 10)
    return {
        "conv1_w": uniform(ks[0], (6, 3, 5, 5), 3 * 5 * 5),
        "conv1_b": uniform(ks[1], (6,), 3 * 5 * 5),
        "conv2_w": uniform(ks[2], (16, 6, 5, 5), 6 * 5 * 5),
        "conv2_b": uniform(ks[3], (16,), 6 * 5 * 5),
        "fc1_w": uniform(ks[4], (120, 400), 400),
        "fc1_b": uniform(ks[5], (120,), 400),
        "fc2_w": uniform(ks[6], (84, 120), 120),
        "fc2_b": uniform(ks[7], (84,), 120),
        "fc3_w": uniform(ks[8], (10, 84), 84),
        "fc3_b": uniform(ks[9], (10,), 84),
    }


def lenet_reference(x, params):
    """Plain-JAX LeNet forward (matches the PyTorch module) for a correctness check."""
    dn = ("NCHW", "OIHW", "NCHW")
    hi = jax.lax.Precision.HIGHEST
    y = jax.lax.conv_general_dilated(x, params["conv1_w"], (1, 1), "VALID",
                                     dimension_numbers=dn, precision=hi)
    y = jnp.maximum(y + params["conv1_b"][None, :, None, None], 0.0)
    y = jax.lax.reduce_window(y, -jnp.inf, jax.lax.max, (1, 1, 2, 2), (1, 1, 2, 2), "VALID")
    y = jax.lax.conv_general_dilated(y, params["conv2_w"], (1, 1), "VALID",
                                     dimension_numbers=dn, precision=hi)
    y = jnp.maximum(y + params["conv2_b"][None, :, None, None], 0.0)
    y = jax.lax.reduce_window(y, -jnp.inf, jax.lax.max, (1, 1, 2, 2), (1, 1, 2, 2), "VALID")
    y = y.reshape(y.shape[0], 400)                                # NCHW flatten = torch .view
    y = jnp.maximum(jnp.dot(y, params["fc1_w"].T, precision=hi) + params["fc1_b"], 0.0)
    y = jnp.maximum(jnp.dot(y, params["fc2_w"].T, precision=hi) + params["fc2_b"], 0.0)
    return jnp.dot(y, params["fc3_w"].T, precision=hi) + params["fc3_b"]


if __name__ == "__main__":
    key = jax.random.PRNGKey(0)
    pkey, xkey = jax.random.split(key)
    params = init_params(pkey)
    packed = pack_params(params)                 # one-time weight packing

    x = jax.random.normal(xkey, (2, 3, 32, 32), jnp.float32)
    out = jax.jit(lenet_forward)(x, packed)
    out = jax.block_until_ready(out)

    ref = lenet_reference(x, params)
    assert out.shape == (2, 10) and out.dtype == jnp.float32
    assert bool(jnp.allclose(out, ref, atol=5e-3, rtol=5e-3)), (
        f"max abs err {float(jnp.max(jnp.abs(out - ref)))}")
    print("KERNEL_OK")
</pallas_src>

<mosaic_0001>
module attributes {stable_mosaic.version = 11 : i64} {
  func.func @_lenet_kernel(%arg0: i32, %arg1: memref<1x32x96xf32, #tpu.memory_space<vmem>>, %arg2: memref<25x84x168xf32, #tpu.memory_space<vmem>>, %arg3: memref<1x168xf32, #tpu.memory_space<vmem>>, %arg4: memref<2x14x28xf32, #tpu.memory_space<vmem>>, %arg5: memref<2x168x84xf32, #tpu.memory_space<vmem>>, %arg6: memref<25x60x160xf32, #tpu.memory_space<vmem>>, %arg7: memref<1x160xf32, #tpu.memory_space<vmem>>, %arg8: memref<2x5x10xf32, #tpu.memory_space<vmem>>, %arg9: memref<2x160x80xf32, #tpu.memory_space<vmem>>, %arg10: memref<5x80x120xf32, #tpu.memory_space<vmem>>, %arg11: memref<1x120xf32, #tpu.memory_space<vmem>>, %arg12: memref<120x84xf32, #tpu.memory_space<vmem>>, %arg13: memref<1x84xf32, #tpu.memory_space<vmem>>, %arg14: memref<84x10xf32, #tpu.memory_space<vmem>>, %arg15: memref<1x10xf32, #tpu.memory_space<vmem>>, %arg16: memref<1x1x10xf32, #tpu.memory_space<vmem>>) attributes {dimension_semantics = [#tpu.dimension_semantics<parallel>], iteration_bounds = array<i64: 2>, scalar_prefetch = 0 : i64, scratch_operands = 0 : i64, tpu.core_type = #tpu.core_type<tc>, window_params = [{transform_indices = @transform_0, window_bounds = array<i64: 1, 32, 96>}, {pipeline_mode = #tpu.pipeline_mode<synchronous>, transform_indices = @transform_1, window_bounds = array<i64: 25, 84, 168>}, {pipeline_mode = #tpu.pipeline_mode<synchronous>, transform_indices = @transform_2, window_bounds = array<i64: 1, 168>}, {pipeline_mode = #tpu.pipeline_mode<synchronous>, transform_indices = @transform_3, window_bounds = array<i64: 2, 14, 28>}, {pipeline_mode = #tpu.pipeline_mode<synchronous>, transform_indices = @transform_4, window_bounds = array<i64: 2, 168, 84>}, {pipeline_mode = #tpu.pipeline_mode<synchronous>, transform_indices = @transform_5, window_bounds = array<i64: 25, 60, 160>}, {pipeline_mode = #tpu.pipeline_mode<synchronous>, transform_indices = @transform_6, window_bounds = array<i64: 1, 160>}, {pipeline_mode = #tpu.pipeline_mode<synchronous>, transform_indices = @transform_7, window_bounds = array<i64: 2, 5, 10>}, {pipeline_mode = #tpu.pipeline_mode<synchronous>, transform_indices = @transform_8, window_bounds = array<i64: 2, 160, 80>}, {pipeline_mode = #tpu.pipeline_mode<synchronous>, transform_indices = @transform_9, window_bounds = array<i64: 5, 80, 120>}, {pipeline_mode = #tpu.pipeline_mode<synchronous>, transform_indices = @transform_10, window_bounds = array<i64: 1, 120>}, {pipeline_mode = #tpu.pipeline_mode<synchronous>, transform_indices = @transform_11, window_bounds = array<i64: 120, 84>}, {pipeline_mode = #tpu.pipeline_mode<synchronous>, transform_indices = @transform_12, window_bounds = array<i64: 1, 84>}, {pipeline_mode = #tpu.pipeline_mode<synchronous>, transform_indices = @transform_13, window_bounds = array<i64: 84, 10>}, {pipeline_mode = #tpu.pipeline_mode<synchronous>, transform_indices = @transform_14, window_bounds = array<i64: 1, 10>}, {transform_indices = @transform_15, window_bounds = array<i64: 1, 1, 10>}]} {
    %c0 = arith.constant 0 : index
    %c0_0 = arith.constant 0 : index
    %c0_1 = arith.constant 0 : index
    %0 = vector.load %arg1[%c0, %c0_0, %c0_1] : memref<1x32x96xf32, #tpu.memory_space<vmem>>, vector<1x32x96xf32>
    %1 = vector.shape_cast %0 : vector<1x32x96xf32> to vector<32x96xf32>
    %cst = arith.constant 0.000000e+00 : f32
    %2 = vector.broadcast %cst : f32 to vector<28x168xf32>
    %3 = vector.extract_strided_slice %1 {offsets = [0, 0], sizes = [28, 84], strides = [1, 1]} : vector<32x96xf32> to vector<28x84xf32>
    %c0_2 = arith.constant 0 : index
    %c0_3 = arith.constant 0 : index
    %c0_4 = arith.constant 0 : index
    %4 = vector.load %arg2[%c0_2, %c0_3, %c0_4] : memref<25x84x168xf32, #tpu.memory_space<vmem>>, vector<1x84x168xf32>
    %5 = vector.shape_cast %4 : vector<1x84x168xf32> to vector<84x168xf32>
    %cst_5 = arith.constant dense<0.000000e+00> : vector<28x168xf32>
    %6 = tpu.matmul %3, %5, %cst_5 {dimension_numbers = #tpu.dot_dimension_numbers<[1], [0], [0], [1], [0, 0, 1, 1], [], []>} : vector<28x84xf32>, vector<84x168xf32>, vector<28x168xf32> -> vector<28x168xf32>
    %7 = arith.addf %2, %6 : vector<28x168xf32>
    %8 = vector.extract_strided_slice %1 {offsets = [0, 3], sizes = [28, 84], strides = [1, 1]} : vector<32x96xf32> to vector<28x84xf32>
    %c1 = arith.constant 1 : index
    %c0_6 = arith.constant 0 : index
    %c0_7 = arith.constant 0 : index
    %9 = vector.load %arg2[%c1, %c0_6, %c0_7] : memref<25x84x168xf32, #tpu.memory_space<vmem>>, vector<1x84x168xf32>
    %10 = vector.shape_cast %9 : vector<1x84x168xf32> to vector<84x168xf32>
    %cst_8 = arith.constant dense<0.000000e+00> : vector<28x168xf32>
    %11 = tpu.matmul %8, %10, %cst_8 {dimension_numbers = #tpu.dot_dimension_numbers<[1], [0], [0], [1], [0, 0, 1, 1], [], []>} : vector<28x84xf32>, vector<84x168xf32>, vector<28x168xf32> -> vector<28x168xf32>
    %12 = arith.addf %7, %11 : vector<28x168xf32>
    %13 = vector.extract_strided_slice %1 {offsets = [0, 6], sizes = [28, 84], strides = [1, 1]} : vector<32x96xf32> to vector<28x84xf32>
    %c2 = arith.constant 2 : index
    %c0_9 = arith.constant 0 : index
    %c0_10 = arith.constant 0 : index
    %14 = vector.load %arg2[%c2, %c0_9, %c0_10] : memref<25x84x168xf32, #tpu.memory_space<vmem>>, vector<1x84x168xf32>
    %15 = vector.shape_cast %14 : vector<1x84x168xf32> to vector<84x168xf32>
    %cst_11 = arith.constant dense<0.000000e+00> : vector<28x168xf32>
    %16 = tpu.matmul %13, %15, %cst_11 {dimension_numbers = #tpu.dot_dimension_numbers<[1], [0], [0], [1], [0, 0, 1, 1], [], []>} : vector<28x84xf32>, vector<84x168xf32>, vector<28x168xf32> -> vector<28x168xf32>
    %17 = arith.addf %12, %16 : vector<28x168xf32>
    %18 = vector.extract_strided_slice %1 {offsets = [0, 9], sizes = [28, 84], strides = [1, 1]} : vector<32x96xf32> to vector<28x84xf32>
    %c3 = arith.constant 3 : index
    %c0_12 = arith.constant 0 : index
    %c0_13 = arith.constant 0 : index
    %19 = vector.load %arg2[%c3, %c0_12, %c0_13] : memref<25x84x168xf32, #tpu.memory_space<vmem>>, vector<1x84x168xf32>
    %20 = vector.shape_cast %19 : vector<1x84x168xf32> to vector<84x168xf32>
    %cst_14 = arith.constant dense<0.000000e+00> : vector<28x168xf32>
    %21 = tpu.matmul %18, %20, %cst_14 {dimension_numbers = #tpu.dot_dimension_numbers<[1], [0], [0], [1], [0, 0, 1, 1], [], []>} : vector<28x84xf32>, vector<84x168xf32>, vector<28x168xf32> -> vector<28x168xf32>
    %22 = arith.addf %17, %21 : vector<28x168xf32>
    %23 = vector.extract_strided_slice %1 {offsets = [0, 12], sizes = [28, 84], strides = [1, 1]} : vector<32x96xf32> to vector<28x84xf32>
    %c4 = arith.constant 4 : index
    %c0_15 = arith.constant 0 : index
    %c0_16 = arith.constant 0 : index
    %24 = vector.load %arg2[%c4, %c0_15, %c0_16] : memref<25x84x168xf32, #tpu.memory_space<vmem>>, vector<1x84x168xf32>
    %25 = vector.shape_cast %24 : vector<1x84x168xf32> to vector<84x168xf32>
    %cst_17 = arith.constant dense<0.000000e+00> : vector<28x168xf32>
    %26 = tpu.matmul %23, %25, %cst_17 {dimension_numbers = #tpu.dot_dimension_numbers<[1], [0], [0], [1], [0, 0, 1, 1], [], []>} : vector<28x84xf32>, vector<84x168xf32>, vector<28x168xf32> -> vector<28x168xf32>
    %27 = arith.addf %22, %26 : vector<28x168xf32>
    %28 = vector.extract_strided_slice %1 {offsets = [1, 0], sizes = [28, 84], strides = [1, 1]} : vector<32x96xf32> to vector<28x84xf32>
    %c5 = arith.constant 5 : index
    %c0_18 = arith.constant 0 : index
    %c0_19 = arith.constant 0 : index
    %29 = vector.load %arg2[%c5, %c0_18, %c0_19] : memref<25x84x168xf32, #tpu.memory_space<vmem>>, vector<1x84x168xf32>
    %30 = vector.shape_cast %29 : vector<1x84x168xf32> to vector<84x168xf32>
    %cst_20 = arith.constant dense<0.000000e+00> : vector<28x168xf32>
    %31 = tpu.matmul %28, %30, %cst_20 {dimension_numbers = #tpu.dot_dimension_numbers<[1], [0], [0], [1], [0, 0, 1, 1], [], []>} : vector<28x84xf32>, vector<84x168xf32>, vector<28x168xf32> -> vector<28x168xf32>
    %32 = arith.addf %27, %31 : vector<28x168xf32>
    %33 = vector.extract_strided_slice %1 {offsets = [1, 3], sizes = [28, 84], strides = [1, 1]} : vector<32x96xf32> to vector<28x84xf32>
    %c6 = arith.constant 6 : index
    %c0_21 = arith.constant 0 : index
    %c0_22 = arith.constant 0 : index
    %34 = vector.load %arg2[%c6, %c0_21, %c0_22] : memref<25x84x168xf32, #tpu.memory_space<vmem>>, vector<1x84x168xf32>
    %35 = vector.shape_cast %34 : vector<1x84x168xf32> to vector<84x168xf32>
    %cst_23 = arith.constant dense<0.000000e+00> : vector<28x168xf32>
    %36 = tpu.matmul %33, %35, %cst_23 {dimension_numbers = #tpu.dot_dimension_numbers<[1], [0], [0], [1], [0, 0, 1, 1], [], []>} : vector<28x84xf32>, vector<84x168xf32>, vector<28x168xf32> -> vector<28x168xf32>
    %37 = arith.addf %32, %36 : vector<28x168xf32>
    %38 = vector.extract_strided_slice %1 {offsets = [1, 6], sizes = [28, 84], strides = [1, 1]} : vector<32x96xf32> to vector<28x84xf32>
    %c7 = arith.constant 7 : index
    %c0_24 = arith.constant 0 : index
    %c0_25 = arith.constant 0 : index
    %39 = vector.load %arg2[%c7, %c0_24, %c0_25] : memref<25x84x168xf32, #tpu.memory_space<vmem>>, vector<1x84x168xf32>
    %40 = vector.shape_cast %39 : vector<1x84x168xf32> to vector<84x168xf32>
    %cst_26 = arith.constant dense<0.000000e+00> : vector<28x168xf32>
    %41 = tpu.matmul %38, %40, %cst_26 {dimension_numbers = #tpu.dot_dimension_numbers<[1], [0], [0], [1], [0, 0, 1, 1], [], []>} : vector<28x84xf32>, vector<84x168xf32>, vector<28x168xf32> -> vector<28x168xf32>
    %42 = arith.addf %37, %41 : vector<28x168xf32>
    %43 = vector.extract_strided_slice %1 {offsets = [1, 9], sizes = [28, 84], strides = [1, 1]} : vector<32x96xf32> to vector<28x84xf32>
    %c8 = arith.constant 8 : index
    %c0_27 = arith.constant 0 : index
    %c0_28 = arith.constant 0 : index
    %44 = vector.load %arg2[%c8, %c0_27, %c0_28] : memref<25x84x168xf32, #tpu.memory_space<vmem>>, vector<1x84x168xf32>
    %45 = vector.shape_cast %44 : vector<1x84x168xf32> to vector<84x168xf32>
    %cst_29 = arith.constant dense<0.000000e+00> : vector<28x168xf32>
    %46 = tpu.matmul %43, %45, %cst_29 {dimension_numbers = #tpu.dot_dimension_numbers<[1], [0], [0], [1], [0, 0, 1, 1], [], []>} : vector<28x84xf32>, vector<84x168xf32>, vector<28x168xf32> -> vector<28x168xf32>
    %47 = arith.addf %42, %46 : vector<28x168xf32>
    %48 = vector.extract_strided_slice %1 {offsets = [1, 12], sizes = [28, 84], strides = [1, 1]} : vector<32x96xf32> to vector<28x84xf32>
    %c9 = arith.constant 9 : index
    %c0_30 = arith.constant 0 : index
    %c0_31 = arith.constant 0 : index
    %49 = vector.load %arg2[%c9, %c0_30, %c0_31] : memref<25x84x168xf32, #tpu.memory_space<vmem>>, vector<1x84x168xf32>
    %50 = vector.shape_cast %49 : vector<1x84x168xf32> to vector<84x168xf32>
    %cst_32 = arith.constant dense<0.000000e+00> : vector<28x168xf32>
    %51 = tpu.matmul %48, %50, %cst_32 {dimension_numbers = #tpu.dot_dimension_numbers<[1], [0], [0], [1], [0, 0, 1, 1], [], []>} : vector<28x84xf32>, vector<84x168xf32>, vector<28x168xf32> -> vector<28x168xf32>
    %52 = arith.addf %47, %51 : vector<28x168xf32>
    %53 = vector.extract_strided_slice %1 {offsets = [2, 0], sizes = [28, 84], strides = [1, 1]} : vector<32x96xf32> to vector<28x84xf32>
    %c10 = arith.constant 10 : index
    %c0_33 = arith.constant 0 : index
    %c0_34 = arith.constant 0 : index
    %54 = vector.load %arg2[%c10, %c0_33, %c0_34] : memref<25x84x168xf32, #tpu.memory_space<vmem>>, vector<1x84x168xf32>
    %55 = vector.shape_cast %54 : vector<1x84x168xf32> to vector<84x168xf32>
    %cst_35 = arith.constant dense<0.000000e+00> : vector<28x168xf32>
    %56 = tpu.matmul %53, %55, %cst_35 {dimension_numbers = #tpu.dot_dimension_numbers<[1], [0], [0], [1], [0, 0, 1, 1], [], []>} : vector<28x84xf32>, vector<84x168xf32>, vector<28x168xf32> -> vector<28x168xf32>
    %57 = arith.addf %52, %56 : vector<28x168xf32>
    %58 = vector.extract_strided_slice %1 {offsets = [2, 3], sizes = [28, 84], strides = [1, 1]} : vector<32x96xf32> to vector<28x84xf32>
    %c11 = arith.constant 11 : index
    %c0_36 = arith.constant 0 : index
    %c0_37 = arith.constant 0 : index
    %59 = vector.load %arg2[%c11, %c0_36, %c0_37] : memref<25x84x168xf32, #tpu.memory_space<vmem>>, vector<1x84x168xf32>
    %60 = vector.shape_cast %59 : vector<1x84x168xf32> to vector<84x168xf32>
    %cst_38 = arith.constant dense<0.000000e+00> : vector<28x168xf32>
    %61 = tpu.matmul %58, %60, %cst_38 {dimension_numbers = #tpu.dot_dimension_numbers<[1], [0], [0], [1], [0, 0, 1, 1], [], []>} : vector<28x84xf32>, vector<84x168xf32>, vector<28x168xf32> -> vector<28x168xf32>
    %62 = arith.addf %57, %61 : vector<28x168xf32>
    %63 = vector.extract_strided_slice %1 {offsets = [2, 6], sizes = [28, 84], strides = [1, 1]} : vector<32x96xf32> to vector<28x84xf32>
    %c12 = arith.constant 12 : index
    %c0_39 = arith.constant 0 : index
    %c0_40 = arith.constant 0 : index
    %64 = vector.load %arg2[%c12, %c0_39, %c0_40] : memref<25x84x168xf32, #tpu.memory_space<vmem>>, vector<1x84x168xf32>
    %65 = vector.shape_cast %64 : vector<1x84x168xf32> to vector<84x168xf32>
    %cst_41 = arith.constant dense<0.000000e+00> : vector<28x168xf32>
    %66 = tpu.matmul %63, %65, %cst_41 {dimension_numbers = #tpu.dot_dimension_numbers<[1], [0], [0], [1], [0, 0, 1, 1], [], []>} : vector<28x84xf32>, vector<84x168xf32>, vector<28x168xf32> -> vector<28x168xf32>
    %67 = arith.addf %62, %66 : vector<28x168xf32>
    %68 = vector.extract_strided_slice %1 {offsets = [2, 9], sizes = [28, 84], strides = [1, 1]} : vector<32x96xf32> to vector<28x84xf32>
    %c13 = arith.constant 13 : index
    %c0_42 = arith.constant 0 : index
    %c0_43 = arith.constant 0 : index
    %69 = vector.load %arg2[%c13, %c0_42, %c0_43] : memref<25x84x168xf32, #tpu.memory_space<vmem>>, vector<1x84x168xf32>
    %70 = vector.shape_cast %69 : vector<1x84x168xf32> to vector<84x168xf32>
    %cst_44 = arith.constant dense<0.000000e+00> : vector<28x168xf32>
    %71 = tpu.matmul %68, %70, %cst_44 {dimension_numbers = #tpu.dot_dimension_numbers<[1], [0], [0], [1], [0, 0, 1, 1], [], []>} : vector<28x84xf32>, vector<84x168xf32>, vector<28x168xf32> -> vector<28x168xf32>
    %72 = arith.addf %67, %71 : vector<28x168xf32>
    %73 = vector.extract_strided_slice %1 {offsets = [2, 12], sizes = [28, 84], strides = [1, 1]} : vector<32x96xf32> to vector<28x84xf32>
    %c14 = arith.constant 14 : index
    %c0_45 = arith.constant 0 : index
    %c0_46 = arith.constant 0 : index
    %74 = vector.load %arg2[%c14, %c0_45, %c0_46] : memref<25x84x168xf32, #tpu.memory_space<vmem>>, vector<1x84x168xf32>
    %75 = vector.shape_cast %74 : vector<1x84x168xf32> to vector<84x168xf32>
    %cst_47 = arith.constant dense<0.000000e+00> : vector<28x168xf32>
    %76 = tpu.matmul %73, %75, %cst_47 {dimension_numbers = #tpu.dot_dimension_numbers<[1], [0], [0], [1], [0, 0, 1, 1], [], []>} : vector<28x84xf32>, vector<84x168xf32>, vector<28x168xf32> -> vector<28x168xf32>
    %77 = arith.addf %72, %76 : vector<28x168xf32>
    %78 = vector.extract_strided_slice %1 {offsets = [3, 0], sizes = [28, 84], strides = [1, 1]} : vector<32x96xf32> to vector<28x84xf32>
    %c15 = arith.constant 15 : index
    %c0_48 = arith.constant 0 : index
    %c0_49 = arith.constant 0 : index
    %79 = vector.load %arg2[%c15, %c0_48, %c0_49] : memref<25x84x168xf32, #tpu.memory_space<vmem>>, vector<1x84x168xf32>
    %80 = vector.shape_cast %79 : vector<1x84x168xf32> to vector<84x168xf32>
    %cst_50 = arith.constant dense<0.000000e+00> : vector<28x168xf32>
    %81 = tpu.matmul %78, %80, %cst_50 {dimension_numbers = #tpu.dot_dimension_numbers<[1], [0], [0], [1], [0, 0, 1, 1], [], []>} : vector<28x84xf32>, vector<84x168xf32>, vector<28x168xf32> -> vector<28x168xf32>
    %82 = arith.addf %77, %81 : vector<28x168xf32>
    %83 = vector.extract_strided_slice %1 {offsets = [3, 3], sizes = [28, 84], strides = [1, 1]} : vector<32x96xf32> to vector<28x84xf32>
    %c16 = arith.constant 16 : index
    %c0_51 = arith.constant 0 : index
    %c0_52 = arith.constant 0 : index
    %84 = vector.load %arg2[%c16, %c0_51, %c0_52] : memref<25x84x168xf32, #tpu.memory_space<vmem>>, vector<1x84x168xf32>
    %85 = vector.shape_cast %84 : vector<1x84x168xf32> to vector<84x168xf32>
    %cst_53 = arith.constant dense<0.000000e+00> : vector<28x168xf32>
    %86 = tpu.matmul %83, %85, %cst_53 {dimension_numbers = #tpu.dot_dimension_numbers<[1], [0], [0], [1], [0, 0, 1, 1], [], []>} : vector<28x84xf32>, vector<84x168xf32>, vector<28x168xf32> -> vector<28x168xf32>
    %87 = arith.addf %82, %86 : vector<28x168xf32>
    %88 = vector.extract_strided_slice %1 {offsets = [3, 6], sizes = [28, 84], strides = [1, 1]} : vector<32x96xf32> to vector<28x84xf32>
    %c17 = arith.constant 17 : index
    %c0_54 = arith.constant 0 : index
    %c0_55 = arith.constant 0 : index
    %89 = vector.load %arg2[%c17, %c0_54, %c0_55] : memref<25x84x168xf32, #tpu.memory_space<vmem>>, vector<1x84x168xf32>
    %90 = vector.shape_cast %89 : vector<1x84x168xf32> to vector<84x168xf32>
    %cst_56 = arith.constant dense<0.000000e+00> : vector<28x168xf32>
    %91 = tpu.matmul %88, %90, %cst_56 {dimension_numbers = #tpu.dot_dimension_numbers<[1], [0], [0], [1], [0, 0, 1, 1], [], []>} : vector<28x84xf32>, vector<84x168xf32>, vector<28x168xf32> -> vector<28x168xf32>
    %92 = arith.addf %87, %91 : vector<28x168xf32>
    %93 = vector.extract_strided_slice %1 {offsets = [3, 9], sizes = [28, 84], strides = [1, 1]} : vector<32x96xf32> to vector<28x84xf32>
    %c18 = arith.constant 18 : index
    %c0_57 = arith.constant 0 : index
    %c0_58 = arith.constant 0 : index
    %94 = vector.load %arg2[%c18, %c0_57, %c0_58] : memref<25x84x168xf32, #tpu.memory_space<vmem>>, vector<1x84x168xf32>
    %95 = vector.shape_cast %94 : vector<1x84x168xf32> to vector<84x168xf32>
    %cst_59 = arith.constant dense<0.000000e+00> : vector<28x168xf32>
    %96 = tpu.matmul %93, %95, %cst_59 {dimension_numbers = #tpu.dot_dimension_numbers<[1], [0], [0], [1], [0, 0, 1, 1], [], []>} : vector<28x84xf32>, vector<84x168xf32>, vector<28x168xf32> -> vector<28x168xf32>
    %97 = arith.addf %92, %96 : vector<28x168xf32>
    %98 = vector.extract_strided_slice %1 {offsets = [3, 12], sizes = [28, 84], strides = [1, 1]} : vector<32x96xf32> to vector<28x84xf32>
    %c19 = arith.constant 19 : index
    %c0_60 = arith.constant 0 : index
    %c0_61 = arith.constant 0 : index
    %99 = vector.load %arg2[%c19, %c0_60, %c0_61] : memref<25x84x168xf32, #tpu.memory_space<vmem>>, vector<1x84x168xf32>
    %100 = vector.shape_cast %99 : vector<1x84x168xf32> to vector<84x168xf32>
    %cst_62 = arith.constant dense<0.000000e+00> : vector<28x168xf32>
    %101 = tpu.matmul %98, %100, %cst_62 {dimension_numbers = #tpu.dot_dimension_numbers<[1], [0], [0], [1], [0, 0, 1, 1], [], []>} : vector<28x84xf32>, vector<84x168xf32>, vector<28x168xf32> -> vector<28x168xf32>
    %102 = arith.addf %97, %101 : vector<28x168xf32>
    %103 = vector.extract_strided_slice %1 {offsets = [4, 0], sizes = [28, 84], strides = [1, 1]} : vector<32x96xf32> to vector<28x84xf32>
    %c20 = arith.constant 20 : index
    %c0_63 = arith.constant 0 : index
    %c0_64 = arith.constant 0 : index
    %104 = vector.load %arg2[%c20, %c0_63, %c0_64] : memref<25x84x168xf32, #tpu.memory_space<vmem>>, vector<1x84x168xf32>
    %105 = vector.shape_cast %104 : vector<1x84x168xf32> to vector<84x168xf32>
    %cst_65 = arith.constant dense<0.000000e+00> : vector<28x168xf32>
    %106 = tpu.matmul %103, %105, %cst_65 {dimension_numbers = #tpu.dot_dimension_numbers<[1], [0], [0], [1], [0, 0, 1, 1], [], []>} : vector<28x84xf32>, vector<84x168xf32>, vector<28x168xf32> -> vector<28x168xf32>
    %107 = arith.addf %102, %106 : vector<28x168xf32>
    %108 = vector.extract_strided_slice %1 {offsets = [4, 3], sizes = [28, 84], strides = [1, 1]} : vector<32x96xf32> to vector<28x84xf32>
    %c21 = arith.constant 21 : index
    %c0_66 = arith.constant 0 : index
    %c0_67 = arith.constant 0 : index
    %109 = vector.load %arg2[%c21, %c0_66, %c0_67] : memref<25x84x168xf32, #tpu.memory_space<vmem>>, vector<1x84x168xf32>
    %110 = vector.shape_cast %109 : vector<1x84x168xf32> to vector<84x168xf32>
    %cst_68 = arith.constant dense<0.000000e+00> : vector<28x168xf32>
    %111 = tpu.matmul %108, %110, %cst_68 {dimension_numbers = #tpu.dot_dimension_numbers<[1], [0], [0], [1], [0, 0, 1, 1], [], []>} : vector<28x84xf32>, vector<84x168xf32>, vector<28x168xf32> -> vector<28x168xf32>
    %112 = arith.addf %107, %111 : vector<28x168xf32>
    %113 = vector.extract_strided_slice %1 {offsets = [4, 6], sizes = [28, 84], strides = [1, 1]} : vector<32x96xf32> to vector<28x84xf32>
    %c22 = arith.constant 22 : index
    %c0_69 = arith.constant 0 : index
    %c0_70 = arith.constant 0 : index
    %114 = vector.load %arg2[%c22, %c0_69, %c0_70] : memref<25x84x168xf32, #tpu.memory_space<vmem>>, vector<1x84x168xf32>
    %115 = vector.shape_cast %114 : vector<1x84x168xf32> to vector<84x168xf32>
    %cst_71 = arith.constant dense<0.000000e+00> : vector<28x168xf32>
    %116 = tpu.matmul %113, %115, %cst_71 {dimension_numbers = #tpu.dot_dimension_numbers<[1], [0], [0], [1], [0, 0, 1, 1], [], []>} : vector<28x84xf32>, vector<84x168xf32>, vector<28x168xf32> -> vector<28x168xf32>
    %117 = arith.addf %112, %116 : vector<28x168xf32>
    %118 = vector.extract_strided_slice %1 {offsets = [4, 9], sizes = [28, 84], strides = [1, 1]} : vector<32x96xf32> to vector<28x84xf32>
    %c23 = arith.constant 23 : index
    %c0_72 = arith.constant 0 : index
    %c0_73 = arith.constant 0 : index
    %119 = vector.load %arg2[%c23, %c0_72, %c0_73] : memref<25x84x168xf32, #tpu.memory_space<vmem>>, vector<1x84x168xf32>
    %120 = vector.shape_cast %119 : vector<1x84x168xf32> to vector<84x168xf32>
    %cst_74 = arith.constant dense<0.000000e+00> : vector<28x168xf32>
    %121 = tpu.matmul %118, %120, %cst_74 {dimension_numbers = #tpu.dot_dimension_numbers<[1], [0], [0], [1], [0, 0, 1, 1], [], []>} : vector<28x84xf32>, vector<84x168xf32>, vector<28x168xf32> -> vector<28x168xf32>
    %122 = arith.addf %117, %121 : vector<28x168xf32>
    %123 = vector.extract_strided_slice %1 {offsets = [4, 12], sizes = [28, 84], strides = [1, 1]} : vector<32x96xf32> to vector<28x84xf32>
    %c24 = arith.constant 24 : index
    %c0_75 = arith.constant 0 : index
    %c0_76 = arith.constant 0 : index
    %124 = vector.load %arg2[%c24, %c0_75, %c0_76] : memref<25x84x168xf32, #tpu.memory_space<vmem>>, vector<1x84x168xf32>
    %125 = vector.shape_cast %124 : vector<1x84x168xf32> to vector<84x168xf32>
    %cst_77 = arith.constant dense<0.000000e+00> : vector<28x168xf32>
    %126 = tpu.matmul %123, %125, %cst_77 {dimension_numbers = #tpu.dot_dimension_numbers<[1], [0], [0], [1], [0, 0, 1, 1], [], []>} : vector<28x84xf32>, vector<84x168xf32>, vector<28x168xf32> -> vector<28x168xf32>
    %127 = arith.addf %122, %126 : vector<28x168xf32>
    %c0_78 = arith.constant 0 : index
    %c0_79 = arith.constant 0 : index
    %128 = vector.load %arg3[%c0_78, %c0_79] : memref<1x168xf32, #tpu.memory_space<vmem>>, vector<1x168xf32>
    %129 = vector.broadcast %128 : vector<1x168xf32> to vector<28x168xf32>
    %130 = arith.addf %127, %129 : vector<28x168xf32>
    %cst_80 = arith.constant 0.000000e+00 : f32
    %131 = vector.broadcast %cst_80 : f32 to vector<28x168xf32>
    %132 = arith.maximumf %130, %131 : vector<28x168xf32>
    %c0_81 = arith.constant 0 : index
    %c0_82 = arith.constant 0 : index
    %c0_83 = arith.constant 0 : index
    %133 = vector.load %arg4[%c0_81, %c0_82, %c0_83] : memref<2x14x28xf32, #tpu.memory_space<vmem>>, vector<1x14x28xf32>
    %134 = vector.shape_cast %133 : vector<1x14x28xf32> to vector<14x28xf32>
    %cst_84 = arith.constant dense<0.000000e+00> : vector<14x168xf32>
    %135 = tpu.matmul %134, %132, %cst_84 {dimension_numbers = #tpu.dot_dimension_numbers<[1], [0], [0], [1], [0, 0, 1, 1], [], []>} : vector<14x28xf32>, vector<28x168xf32>, vector<14x168xf32> -> vector<14x168xf32>
    %c1_85 = arith.constant 1 : index
    %c0_86 = arith.constant 0 : index
    %c0_87 = arith.constant 0 : index
    %136 = vector.load %arg4[%c1_85, %c0_86, %c0_87] : memref<2x14x28xf32, #tpu.memory_space<vmem>>, vector<1x14x28xf32>
    %137 = vector.shape_cast %136 : vector<1x14x28xf32> to vector<14x28xf32>
    %cst_88 = arith.constant dense<0.000000e+00> : vector<14x168xf32>
    %138 = tpu.matmul %137, %132, %cst_88 {dimension_numbers = #tpu.dot_dimension_numbers<[1], [0], [0], [1], [0, 0, 1, 1], [], []>} : vector<14x28xf32>, vector<28x168xf32>, vector<14x168xf32> -> vector<14x168xf32>
    %139 = arith.maximumf %135, %138 : vector<14x168xf32>
    %c0_89 = arith.constant 0 : index
    %c0_90 = arith.constant 0 : index
    %c0_91 = arith.constant 0 : index
    %140 = vector.load %arg5[%c0_89, %c0_90, %c0_91] : memref<2x168x84xf32, #tpu.memory_space<vmem>>, vector<1x168x84xf32>
    %141 = vector.shape_cast %140 : vector<1x168x84xf32> to vector<168x84xf32>
    %cst_92 = arith.constant dense<0.000000e+00> : vector<14x84xf32>
    %142 = tpu.matmul %139, %141, %cst_92 {dimension_numbers = #tpu.dot_dimension_numbers<[1], [0], [0], [1], [0, 0, 1, 1], [], []>} : vector<14x168xf32>, vector<168x84xf32>, vector<14x84xf32> -> vector<14x84xf32>
    %c1_93 = arith.constant 1 : index
    %c0_94 = arith.constant 0 : index
    %c0_95 = arith.constant 0 : index
    %143 = vector.load %arg5[%c1_93, %c0_94, %c0_95] : memref<2x168x84xf32, #tpu.memory_space<vmem>>, vector<1x168x84xf32>
    %144 = vector.shape_cast %143 : vector<1x168x84xf32> to vector<168x84xf32>
    %cst_96 = arith.constant dense<0.000000e+00> : vector<14x84xf32>
    %145 = tpu.matmul %139, %144, %cst_96 {dimension_numbers = #tpu.dot_dimension_numbers<[1], [0], [0], [1], [0, 0, 1, 1], [], []>} : vector<14x168xf32>, vector<168x84xf32>, vector<14x84xf32> -> vector<14x84xf32>
    %146 = arith.maximumf %142, %145 : vector<14x84xf32>
    %cst_97 = arith.constant 0.000000e+00 : f32
    %147 = vector.broadcast %cst_97 : f32 to vector<10x160xf32>
    %148 = vector.extract_strided_slice %146 {offsets = [0, 0], sizes = [10, 60], strides = [1, 1]} : vector<14x84xf32> to vector<10x60xf32>
    %c0_98 = arith.constant 0 : index
    %c0_99 = arith.constant 0 : index
    %c0_100 = arith.constant 0 : index
    %149 = vector.load %arg6[%c0_98, %c0_99, %c0_100] : memref<25x60x160xf32, #tpu.memory_space<vmem>>, vector<1x60x160xf32>
    %150 = vector.shape_cast %149 : vector<1x60x160xf32> to vector<60x160xf32>
    %cst_101 = arith.constant dense<0.000000e+00> : vector<10x160xf32>
    %151 = tpu.matmul %148, %150, %cst_101 {dimension_numbers = #tpu.dot_dimension_numbers<[1], [0], [0], [1], [0, 0, 1, 1], [], []>} : vector<10x60xf32>, vector<60x160xf32>, vector<10x160xf32> -> vector<10x160xf32>
    %152 = arith.addf %147, %151 : vector<10x160xf32>
    %153 = vector.extract_strided_slice %146 {offsets = [0, 6], sizes = [10, 60], strides = [1, 1]} : vector<14x84xf32> to vector<10x60xf32>
    %c1_102 = arith.constant 1 : index
    %c0_103 = arith.constant 0 : index
    %c0_104 = arith.constant 0 : index
    %154 = vector.load %arg6[%c1_102, %c0_103, %c0_104] : memref<25x60x160xf32, #tpu.memory_space<vmem>>, vector<1x60x160xf32>
    %155 = vector.shape_cast %154 : vector<1x60x160xf32> to vector<60x160xf32>
    %cst_105 = arith.constant dense<0.000000e+00> : vector<10x160xf32>
    %156 = tpu.matmul %153, %155, %cst_105 {dimension_numbers = #tpu.dot_dimension_numbers<[1], [0], [0], [1], [0, 0, 1, 1], [], []>} : vector<10x60xf32>, vector<60x160xf32>, vector<10x160xf32> -> vector<10x160xf32>
    %157 = arith.addf %152, %156 : vector<10x160xf32>
    %158 = vector.extract_strided_slice %146 {offsets = [0, 12], sizes = [10, 60], strides = [1, 1]} : vector<14x84xf32> to vector<10x60xf32>
    %c2_106 = arith.constant 2 : index
    %c0_107 = arith.constant 0 : index
    %c0_108 = arith.constant 0 : index
    %159 = vector.load %arg6[%c2_106, %c0_107, %c0_108] : memref<25x60x160xf32, #tpu.memory_space<vmem>>, vector<1x60x160xf32>
    %160 = vector.shape_cast %159 : vector<1x60x160xf32> to vector<60x160xf32>
    %cst_109 = arith.constant dense<0.000000e+00> : vector<10x160xf32>
    %161 = tpu.matmul %158, %160, %cst_109 {dimension_numbers = #tpu.dot_dimension_numbers<[1], [0], [0], [1], [0, 0, 1, 1], [], []>} : vector<10x60xf32>, vector<60x160xf32>, vector<10x160xf32> -> vector<10x160xf32>
    %162 = arith.addf %157, %161 : vector<10x160xf32>
    %163 = vector.extract_strided_slice %146 {offsets = [0, 18], sizes = [10, 60], strides = [1, 1]} : vector<14x84xf32> to vector<10x60xf32>
    %c3_110 = arith.constant 3 : index
    %c0_111 = arith.constant 0 : index
    %c0_112 = arith.constant 0 : index
    %164 = vector.load %arg6[%c3_110, %c0_111, %c0_112] : memref<25x60x160xf32, #tpu.memory_space<vmem>>, vector<1x60x160xf32>
    %165 = vector.shape_cast %164 : vector<1x60x160xf32> to vector<60x160xf32>
    %cst_113 = arith.constant dense<0.000000e+00> : vector<10x160xf32>
    %166 = tpu.matmul %163, %165, %cst_113 {dimension_numbers = #tpu.dot_dimension_numbers<[1], [0], [0], [1], [0, 0, 1, 1], [], []>} : vector<10x60xf32>, vector<60x160xf32>, vector<10x160xf32> -> vector<10x160xf32>
    %167 = arith.addf %162, %166 : vector<10x160xf32>
    %168 = vector.extract_strided_slice %146 {offsets = [0, 24], sizes = [10, 60], strides = [1, 1]} : vector<14x84xf32> to vector<10x60xf32>
    %c4_114 = arith.constant 4 : index
    %c0_115 = arith.constant 0 : index
    %c0_116 = arith.constant 0 : index
    %169 = vector.load %arg6[%c4_114, %c0_115, %c0_116] : memref<25x60x160xf32, #tpu.memory_space<vmem>>, vector<1x60x160xf32>
    %170 = vector.shape_cast %169 : vector<1x60x160xf32> to vector<60x160xf32>
    %cst_117 = arith.constant dense<0.000000e+00> : vector<10x160xf32>
    %171 = tpu.matmul %168, %170, %cst_117 {dimension_numbers = #tpu.dot_dimension_numbers<[1], [0], [0], [1], [0, 0, 1, 1], [], []>} : vector<10x60xf32>, vector<60x160xf32>, vector<10x160xf32> -> vector<10x160xf32>
    %172 = arith.addf %167, %171 : vector<10x160xf32>
    %173 = vector.extract_strided_slice %146 {offsets = [1, 0], sizes = [10, 60], strides = [1, 1]} : vector<14x84xf32> to vector<10x60xf32>
    %c5_118 = arith.constant 5 : index
    %c0_119 = arith.constant 0 : index
    %c0_120 = arith.constant 0 : index
    %174 = vector.load %arg6[%c5_118, %c0_119, %c0_120] : memref<25x60x160xf32, #tpu.memory_space<vmem>>, vector<1x60x160xf32>
    %175 = vector.shape_cast %174 : vector<1x60x160xf32> to vector<60x160xf32>
    %cst_121 = arith.constant dense<0.000000e+00> : vector<10x160xf32>
    %176 = tpu.matmul %173, %175, %cst_121 {dimension_numbers = #tpu.dot_dimension_numbers<[1], [0], [0], [1], [0, 0, 1, 1], [], []>} : vector<10x60xf32>, vector<60x160xf32>, vector<10x160xf32> -> vector<10x160xf32>
    %177 = arith.addf %172, %176 : vector<10x160xf32>
    %178 = vector.extract_strided_slice %146 {offsets = [1, 6], sizes = [10, 60], strides = [1, 1]} : vector<14x84xf32> to vector<10x60xf32>
    %c6_122 = arith.constant 6 : index
    %c0_123 = arith.constant 0 : index
    %c0_124 = arith.constant 0 : index
    %179 = vector.load %arg6[%c6_122, %c0_123, %c0_124] : memref<25x60x160xf32, #tpu.memory_space<vmem>>, vector<1x60x160xf32>
    %180 = vector.shape_cast %179 : vector<1x60x160xf32> to vector<60x160xf32>
    %cst_125 = arith.constant dense<0.000000e+00> : vector<10x160xf32>
    %181 = tpu.matmul %178, %180, %cst_125 {dimension_numbers = #tpu.dot_dimension_numbers<[1], [0], [0], [1], [0, 0, 1, 1], [], []>} : vector<10x60xf32>, vector<60x160xf32>, vector<10x160xf32> -> vector<10x160xf32>
    %182 = arith.addf %177, %181 : vector<10x160xf32>
    %183 = vector.extract_strided_slice %146 {offsets = [1, 12], sizes = [10, 60], strides = [1, 1]} : vector<14x84xf32> to vector<10x60xf32>
    %c7_126 = arith.constant 7 : index
    %c0_127 = arith.constant 0 : index
    %c0_128 = arith.constant 0 : index
    %184 = vector.load %arg6[%c7_126, %c0_127, %c0_128] : memref<25x60x160xf32, #tpu.memory_space<vmem>>, vector<1x60x160xf32>
    %185 = vector.shape_cast %184 : vector<1x60x160xf32> to vector<60x160xf32>
    %cst_129 = arith.constant dense<0.000000e+00> : vector<10x160xf32>
    %186 = tpu.matmul %183, %185, %cst_129 {dimension_numbers = #tpu.dot_dimension_numbers<[1], [0], [0], [1], [0, 0, 1, 1], [], []>} : vector<10x60xf32>, vector<60x160xf32>, vector<10x160xf32> -> vector<10x160xf32>
    %187 = arith.addf %182, %186 : vector<10x160xf32>
    %188 = vector.extract_strided_slice %146 {offsets = [1, 18], sizes = [10, 60], strides = [1, 1]} : vector<14x84xf32> to vector<10x60xf32>
    %c8_130 = arith.constant 8 : index
    %c0_131 = arith.constant 0 : index
    %c0_132 = arith.constant 0 : index
    %189 = vector.load %arg6[%c8_130, %c0_131, %c0_132] : memref<25x60x160xf32, #tpu.memory_space<vmem>>, vector<1x60x160xf32>
    %190 = vector.shape_cast %189 : vector<1x60x160xf32> to vector<60x160xf32>
    %cst_133 = arith.constant dense<0.000000e+00> : vector<10x160xf32>
    %191 = tpu.matmul %188, %190, %cst_133 {dimension_numbers = #tpu.dot_dimension_numbers<[1], [0], [0], [1], [0, 0, 1, 1], [], []>} : vector<10x60xf32>, vector<60x160xf32>, vector<10x160xf32> -> vector<10x160xf32>
    %192 = arith.addf %187, %191 : vector<10x160xf32>
    %193 = vector.extract_strided_slice %146 {offsets = [1, 24], sizes = [10, 60], strides = [1, 1]} : vector<14x84xf32> to vector<10x60xf32>
    %c9_134 = arith.constant 9 : index
    %c0_135 = arith.constant 0 : index
    %c0_136 = arith.constant 0 : index
    %194 = vector.load %arg6[%c9_134, %c0_135, %c0_136] : memref<25x60x160xf32, #tpu.memory_space<vmem>>, vector<1x60x160xf32>
    %195 = vector.shape_cast %194 : vector<1x60x160xf32> to vector<60x160xf32>
    %cst_137 = arith.constant dense<0.000000e+00> : vector<10x160xf32>
    %196 = tpu.matmul %193, %195, %cst_137 {dimension_numbers = #tpu.dot_dimension_numbers<[1], [0], [0], [1], [0, 0, 1, 1], [], []>} : vector<10x60xf32>, vector<60x160xf32>, vector<10x160xf32> -> vector<10x160xf32>
    %197 = arith.addf %192, %196 : vector<10x160xf32>
    %198 = vector.extract_strided_slice %146 {offsets = [2, 0], sizes = [10, 60], strides = [1, 1]} : vector<14x84xf32> to vector<10x60xf32>
    %c10_138 = arith.constant 10 : index
    %c0_139 = arith.constant 0 : index
    %c0_140 = arith.constant 0 : index
    %199 = vector.load %arg6[%c10_138, %c0_139, %c0_140] : memref<25x60x160xf32, #tpu.memory_space<vmem>>, vector<1x60x160xf32>
    %200 = vector.shape_cast %199 : vector<1x60x160xf32> to vector<60x160xf32>
    %cst_141 = arith.constant dense<0.000000e+00> : vector<10x160xf32>
    %201 = tpu.matmul %198, %200, %cst_141 {dimension_numbers = #tpu.dot_dimension_numbers<[1], [0], [0], [1], [0, 0, 1, 1], [], []>} : vector<10x60xf32>, vector<60x160xf32>, vector<10x160xf32> -> vector<10x160xf32>
    %202 = arith.addf %197, %201 : vector<10x160xf32>
    %203 = vector.extract_strided_slice %146 {offsets = [2, 6], sizes = [10, 60], strides = [1, 1]} : vector<14x84xf32> to vector<10x60xf32>
    %c11_142 = arith.constant 11 : index
    %c0_143 = arith.constant 0 : index
    %c0_144 = arith.constant 0 : index
    %204 = vector.load %arg6[%c11_142, %c0_143, %c0_144] : memref<25x60x160xf32, #tpu.memory_space<vmem>>, vector<1x60x160xf32>
    %205 = vector.shape_cast %204 : vector<1x60x160xf32> to vector<60x160xf32>
    %cst_145 = arith.constant dense<0.000000e+00> : vector<10x160xf32>
    %206 = tpu.matmul %203, %205, %cst_145 {dimension_numbers = #tpu.dot_dimension_numbers<[1], [0], [0], [1], [0, 0, 1, 1], [], []>} : vector<10x60xf32>, vector<60x160xf32>, vector<10x160xf32> -> vector<10x160xf32>
    %207 = arith.addf %202, %206 : vector<10x160xf32>
    %208 = vector.extract_strided_slice %146 {offsets = [2, 12], sizes = [10, 60], strides = [1, 1]} : vector<14x84xf32> to vector<10x60xf32>
    %c12_146 = arith.constant 12 : index
    %c0_147 = arith.constant 0 : index
    %c0_148 = arith.constant 0 : index
    %209 = vector.load %arg6[%c12_146, %c0_147, %c0_148] : memref<25x60x160xf32, #tpu.memory_space<vmem>>, vector<1x60x160xf32>
    %210 = vector.shape_cast %209 : vector<1x60x160xf32> to vector<60x160xf32>
    %cst_149 = arith.constant dense<0.000000e+00> : vector<10x160xf32>
    %211 = tpu.matmul %208, %210, %cst_149 {dimension_numbers = #tpu.dot_dimension_numbers<[1], [0], [0], [1], [0, 0, 1, 1], [], []>} : vector<10x60xf32>, vector<60x160xf32>, vector<10x160xf32> -> vector<10x160xf32>
    %212 = arith.addf %207, %211 : vector<10x160xf32>
    %213 = vector.extract_strided_slice %146 {offsets = [2, 18], sizes = [10, 60], strides = [1, 1]} : vector<14x84xf32> to vector<10x60xf32>
    %c13_150 = arith.constant 13 : index
    %c0_151 = arith.constant 0 : index
    %c0_152 = arith.constant 0 : index
    %214 = vector.load %arg6[%c13_150, %c0_151, %c0_152] : memref<25x60x160xf32, #tpu.memory_space<vmem>>, vector<1x60x160xf32>
    %215 = vector.shape_cast %214 : vector<1x60x160xf32> to vector<60x160xf32>
    %cst_153 = arith.constant dense<0.000000e+00> : vector<10x160xf32>
    %216 = tpu.matmul %213, %215, %cst_153 {dimension_numbers = #tpu.dot_dimension_numbers<[1], [0], [0], [1], [0, 0, 1, 1], [], []>} : vector<10x60xf32>, vector<60x160xf32>, vector<10x160xf32> -> vector<10x160xf32>
    %217 = arith.addf %212, %216 : vector<10x160xf32>
    %218 = vector.extract_strided_slice %146 {offsets = [2, 24], sizes = [10, 60], strides = [1, 1]} : vector<14x84xf32> to vector<10x60xf32>
    %c14_154 = arith.constant 14 : index
    %c0_155 = arith.constant 0 : index
    %c0_156 = arith.constant 0 : index
    %219 = vector.load %arg6[%c14_154, %c0_155, %c0_156] : memref<25x60x160xf32, #tpu.memory_space<vmem>>, vector<1x60x160xf32>
    %220 = vector.shape_cast %219 : vector<1x60x160xf32> to vector<60x160xf32>
    %cst_157 = arith.constant dense<0.000000e+00> : vector<10x160xf32>
    %221 = tpu.matmul %218, %220, %cst_157 {dimension_numbers = #tpu.dot_dimension_numbers<[1], [0], [0], [1], [0, 0, 1, 1], [], []>} : vector<10x60xf32>, vector<60x160xf32>, vector<10x160xf32> -> vector<10x160xf32>
    %222 = arith.addf %217, %221 : vector<10x160xf32>
    %223 = vector.extract_strided_slice %146 {offsets = [3, 0], sizes = [10, 60], strides = [1, 1]} : vector<14x84xf32> to vector<10x60xf32>
    %c15_158 = arith.constant 15 : index
    %c0_159 = arith.constant 0 : index
    %c0_160 = arith.constant 0 : index
    %224 = vector.load %arg6[%c15_158, %c0_159, %c0_160] : memref<25x60x160xf32, #tpu.memory_space<vmem>>, vector<1x60x160xf32>
    %225 = vector.shape_cast %224 : vector<1x60x160xf32> to vector<60x160xf32>
    %cst_161 = arith.constant dense<0.000000e+00> : vector<10x160xf32>
    %226 = tpu.matmul %223, %225, %cst_161 {dimension_numbers = #tpu.dot_dimension_numbers<[1], [0], [0], [1], [0, 0, 1, 1], [], []>} : vector<10x60xf32>, vector<60x160xf32>, vector<10x160xf32> -> vector<10x160xf32>
    %227 = arith.addf %222, %226 : vector<10x160xf32>
    %228 = vector.extract_strided_slice %146 {offsets = [3, 6], sizes = [10, 60], strides = [1, 1]} : vector<14x84xf32> to vector<10x60xf32>
    %c16_162 = arith.constant 16 : index
    %c0_163 = arith.constant 0 : index
    %c0_164 = arith.constant 0 : index
    %229 = vector.load %arg6[%c16_162, %c0_163, %c0_164] : memref<25x60x160xf32, #tpu.memory_space<vmem>>, vector<1x60x160xf32>
    %230 = vector.shape_cast %229 : vector<1x60x160xf32> to vector<60x160xf32>
    %cst_165 = arith.constant dense<0.000000e+00> : vector<10x160xf32>
    %231 = tpu.matmul %228, %230, %cst_165 {dimension_numbers = #tpu.dot_dimension_numbers<[1], [0], [0], [1], [0, 0, 1, 1], [], []>} : vector<10x60xf32>, vector<60x160xf32>, vector<10x160xf32> -> vector<10x160xf32>
    %232 = arith.addf %227, %231 : vector<10x160xf32>
    %233 = vector.extract_strided_slice %146 {offsets = [3, 12], sizes = [10, 60], strides = [1, 1]} : vector<14x84xf32> to vector<10x60xf32>
    %c17_166 = arith.constant 17 : index
    %c0_167 = arith.constant 0 : index
    %c0_168 = arith.constant 0 : index
    %234 = vector.load %arg6[%c17_166, %c0_167, %c0_168] : memref<25x60x160xf32, #tpu.memory_space<vmem>>, vector<1x60x160xf32>
    %235 = vector.shape_cast %234 : vector<1x60x160xf32> to vector<60x160xf32>
    %cst_169 = arith.constant dense<0.000000e+00> : vector<10x160xf32>
    %236 = tpu.matmul %233, %235, %cst_169 {dimension_numbers = #tpu.dot_dimension_numbers<[1], [0], [0], [1], [0, 0, 1, 1], [], []>} : vector<10x60xf32>, vector<60x160xf32>, vector<10x160xf32> -> vector<10x160xf32>
    %237 = arith.addf %232, %236 : vector<10x160xf32>
    %238 = vector.extract_strided_slice %146 {offsets = [3, 18], sizes = [10, 60], strides = [1, 1]} : vector<14x84xf32> to vector<10x60xf32>
    %c18_170 = arith.constant 18 : index
    %c0_171 = arith.constant 0 : index
    %c0_172 = arith.constant 0 : index
    %239 = vector.load %arg6[%c18_170, %c0_171, %c0_172] : memref<25x60x160xf32, #tpu.memory_space<vmem>>, vector<1x60x160xf32>
    %240 = vector.shape_cast %239 : vector<1x60x160xf32> to vector<60x160xf32>
    %cst_173 = arith.constant dense<0.000000e+00> : vector<10x160xf32>
    %241 = tpu.matmul %238, %240, %cst_173 {dimension_numbers = #tpu.dot_dimension_numbers<[1], [0], [0], [1], [0, 0, 1, 1], [], []>} : vector<10x60xf32>, vector<60x160xf32>, vector<10x160xf32> -> vector<10x160xf32>
    %242 = arith.addf %237, %241 : vector<10x160xf32>
    %243 = vector.extract_strided_slice %146 {offsets = [3, 24], sizes = [10, 60], strides = [1, 1]} : vector<14x84xf32> to vector<10x60xf32>
    %c19_174 = arith.constant 19 : index
    %c0_175 = arith.constant 0 : index
    %c0_176 = arith.constant 0 : index
    %244 = vector.load %arg6[%c19_174, %c0_175, %c0_176] : memref<25x60x160xf32, #tpu.memory_space<vmem>>, vector<1x60x160xf32>
    %245 = vector.shape_cast %244 : vector<1x60x160xf32> to vector<60x160xf32>
    %cst_177 = arith.constant dense<0.000000e+00> : vector<10x160xf32>
    %246 = tpu.matmul %243, %245, %cst_177 {dimension_numbers = #tpu.dot_dimension_numbers<[1], [0], [0], [1], [0, 0, 1, 1], [], []>} : vector<10x60xf32>, vector<60x160xf32>, vector<10x160xf32> -> vector<10x160xf32>
    %247 = arith.addf %242, %246 : vector<10x160xf32>
    %248 = vector.extract_strided_slice %146 {offsets = [4, 0], sizes = [10, 60], strides = [1, 1]} : vector<14x84xf32> to vector<10x60xf32>
    %c20_178 = arith.constant 20 : index
    %c0_179 = arith.constant 0 : index
    %c0_180 = arith.constant 0 : index
    %249 = vector.load %arg6[%c20_178, %c0_179, %c0_180] : memref<25x60x160xf32, #tpu.memory_space<vmem>>, vector<1x60x160xf32>
    %250 = vector.shape_cast %249 : vector<1x60x160xf32> to vector<60x160xf32>
    %cst_181 = arith.constant dense<0.000000e+00> : vector<10x160xf32>
    %251 = tpu.matmul %248, %250, %cst_181 {dimension_numbers = #tpu.dot_dimension_numbers<[1], [0], [0], [1], [0, 0, 1, 1], [], []>} : vector<10x60xf32>, vector<60x160xf32>, vector<10x160xf32> -> vector<10x160xf32>
    %252 = arith.addf %247, %251 : vector<10x160xf32>
    %253 = vector.extract_strided_slice %146 {offsets = [4, 6], sizes = [10, 60], strides = [1, 1]} : vector<14x84xf32> to vector<10x60xf32>
    %c21_182 = arith.constant 21 : index
    %c0_183 = arith.constant 0 : index
    %c0_184 = arith.constant 0 : index
    %254 = vector.load %arg6[%c21_182, %c0_183, %c0_184] : memref<25x60x160xf32, #tpu.memory_space<vmem>>, vector<1x60x160xf32>
    %255 = vector.shape_cast %254 : vector<1x60x160xf32> to vector<60x160xf32>
    %cst_185 = arith.constant dense<0.000000e+00> : vector<10x160xf32>
    %256 = tpu.matmul %253, %255, %cst_185 {dimension_numbers = #tpu.dot_dimension_numbers<[1], [0], [0], [1], [0, 0, 1, 1], [], []>} : vector<10x60xf32>, vector<60x160xf32>, vector<10x160xf32> -> vector<10x160xf32>
    %257 = arith.addf %252, %256 : vector<10x160xf32>
    %258 = vector.extract_strided_slice %146 {offsets = [4, 12], sizes = [10, 60], strides = [1, 1]} : vector<14x84xf32> to vector<10x60xf32>
    %c22_186 = arith.constant 22 : index
    %c0_187 = arith.constant 0 : index
    %c0_188 = arith.constant 0 : index
    %259 = vector.load %arg6[%c22_186, %c0_187, %c0_188] : memref<25x60x160xf32, #tpu.memory_space<vmem>>, vector<1x60x160xf32>
    %260 = vector.shape_cast %259 : vector<1x60x160xf32> to vector<60x160xf32>
    %cst_189 = arith.constant dense<0.000000e+00> : vector<10x160xf32>
    %261 = tpu.matmul %258, %260, %cst_189 {dimension_numbers = #tpu.dot_dimension_numbers<[1], [0], [0], [1], [0, 0, 1, 1], [], []>} : vector<10x60xf32>, vector<60x160xf32>, vector<10x160xf32> -> vector<10x160xf32>
    %262 = arith.addf %257, %261 : vector<10x160xf32>
    %263 = vector.extract_strided_slice %146 {offsets = [4, 18], sizes = [10, 60], strides = [1, 1]} : vector<14x84xf32> to vector<10x60xf32>
    %c23_190 = arith.constant 23 : index
    %c0_191 = arith.constant 0 : index
    %c0_192 = arith.constant 0 : index
    %264 = vector.load %arg6[%c23_190, %c0_191, %c0_192] : memref<25x60x160xf32, #tpu.memory_space<vmem>>, vector<1x60x160xf32>
    %265 = vector.shape_cast %264 : vector<1x60x160xf32> to vector<60x160xf32>
    %cst_193 = arith.constant dense<0.000000e+00> : vector<10x160xf32>
    %266 = tpu.matmul %263, %265, %cst_193 {dimension_numbers = #tpu.dot_dimension_numbers<[1], [0], [0], [1], [0, 0, 1, 1], [], []>} : vector<10x60xf32>, vector<60x160xf32>, vector<10x160xf32> -> vector<10x160xf32>
    %267 = arith.addf %262, %266 : vector<10x160xf32>
    %268 = vector.extract_strided_slice %146 {offsets = [4, 24], sizes = [10, 60], strides = [1, 1]} : vector<14x84xf32> to vector<10x60xf32>
    %c24_194 = arith.constant 24 : index
    %c0_195 = arith.constant 0 : index
    %c0_196 = arith.constant 0 : index
    %269 = vector.load %arg6[%c24_194, %c0_195, %c0_196] : memref<25x60x160xf32, #tpu.memory_space<vmem>>, vector<1x60x160xf32>
    %270 = vector.shape_cast %269 : vector<1x60x160xf32> to vector<60x160xf32>
    %cst_197 = arith.constant dense<0.000000e+00> : vector<10x160xf32>
    %271 = tpu.matmul %268, %270, %cst_197 {dimension_numbers = #tpu.dot_dimension_numbers<[1], [0], [0], [1], [0, 0, 1, 1], [], []>} : vector<10x60xf32>, vector<60x160xf32>, vector<10x160xf32> -> vector<10x160xf32>
    %272 = arith.addf %267, %271 : vector<10x160xf32>
    %c0_198 = arith.constant 0 : index
    %c0_199 = arith.constant 0 : index
    %273 = vector.load %arg7[%c0_198, %c0_199] : memref<1x160xf32, #tpu.memory_space<vmem>>, vector<1x160xf32>
    %274 = vector.broadcast %273 : vector<1x160xf32> to vector<10x160xf32>
    %275 = arith.addf %272, %274 : vector<10x160xf32>
    %cst_200 = arith.constant 0.000000e+00 : f32
    %276 = vector.broadcast %cst_200 : f32 to vector<10x160xf32>
    %277 = arith.maximumf %275, %276 : vector<10x160xf32>
    %c0_201 = arith.constant 0 : index
    %c0_202 = arith.constant 0 : index
    %c0_203 = arith.constant 0 : index
    %278 = vector.load %arg8[%c0_201, %c0_202, %c0_203] : memref<2x5x10xf32, #tpu.memory_space<vmem>>, vector<1x5x10xf32>
    %279 = vector.shape_cast %278 : vector<1x5x10xf32> to vector<5x10xf32>
    %cst_204 = arith.constant dense<0.000000e+00> : vector<5x160xf32>
    %280 = tpu.matmul %279, %277, %cst_204 {dimension_numbers = #tpu.dot_dimension_numbers<[1], [0], [0], [1], [0, 0, 1, 1], [], []>} : vector<5x10xf32>, vector<10x160xf32>, vector<5x160xf32> -> vector<5x160xf32>
    %c1_205 = arith.constant 1 : index
    %c0_206 = arith.constant 0 : index
    %c0_207 = arith.constant 0 : index
    %281 = vector.load %arg8[%c1_205, %c0_206, %c0_207] : memref<2x5x10xf32, #tpu.memory_space<vmem>>, vector<1x5x10xf32>
    %282 = vector.shape_cast %281 : vector<1x5x10xf32> to vector<5x10xf32>
    %cst_208 = arith.constant dense<0.000000e+00> : vector<5x160xf32>
    %283 = tpu.matmul %282, %277, %cst_208 {dimension_numbers = #tpu.dot_dimension_numbers<[1], [0], [0], [1], [0, 0, 1, 1], [], []>} : vector<5x10xf32>, vector<10x160xf32>, vector<5x160xf32> -> vector<5x160xf32>
    %284 = arith.maximumf %280, %283 : vector<5x160xf32>
    %c0_209 = arith.constant 0 : index
    %c0_210 = arith.constant 0 : index
    %c0_211 = arith.constant 0 : index
    %285 = vector.load %arg9[%c0_209, %c0_210, %c0_211] : memref<2x160x80xf32, #tpu.memory_space<vmem>>, vector<1x160x80xf32>
    %286 = vector.shape_cast %285 : vector<1x160x80xf32> to vector<160x80xf32>
    %cst_212 = arith.constant dense<0.000000e+00> : vector<5x80xf32>
    %287 = tpu.matmul %284, %286, %cst_212 {dimension_numbers = #tpu.dot_dimension_numbers<[1], [0], [0], [1], [0, 0, 1, 1], [], []>} : vector<5x160xf32>, vector<160x80xf32>, vector<5x80xf32> -> vector<5x80xf32>
    %c1_213 = arith.constant 1 : index
    %c0_214 = arith.constant 0 : index
    %c0_215 = arith.constant 0 : index
    %288 = vector.load %arg9[%c1_213, %c0_214, %c0_215] : memref<2x160x80xf32, #tpu.memory_space<vmem>>, vector<1x160x80xf32>
    %289 = vector.shape_cast %288 : vector<1x160x80xf32> to vector<160x80xf32>
    %cst_216 = arith.constant dense<0.000000e+00> : vector<5x80xf32>
    %290 = tpu.matmul %284, %289, %cst_216 {dimension_numbers = #tpu.dot_dimension_numbers<[1], [0], [0], [1], [0, 0, 1, 1], [], []>} : vector<5x160xf32>, vector<160x80xf32>, vector<5x80xf32> -> vector<5x80xf32>
    %291 = arith.maximumf %287, %290 : vector<5x80xf32>
    %cst_217 = arith.constant 0.000000e+00 : f32
    %292 = vector.broadcast %cst_217 : f32 to vector<1x120xf32>
    %293 = vector.extract_strided_slice %291 {offsets = [0, 0], sizes = [1, 80], strides = [1, 1]} : vector<5x80xf32> to vector<1x80xf32>
    %c0_218 = arith.constant 0 : index
    %c0_219 = arith.constant 0 : index
    %c0_220 = arith.constant 0 : index
    %294 = vector.load %arg10[%c0_218, %c0_219, %c0_220] : memref<5x80x120xf32, #tpu.memory_space<vmem>>, vector<1x80x120xf32>
    %295 = vector.shape_cast %294 : vector<1x80x120xf32> to vector<80x120xf32>
    %cst_221 = arith.constant dense<0.000000e+00> : vector<1x120xf32>
    %296 = tpu.matmul %293, %295, %cst_221 {dimension_numbers = #tpu.dot_dimension_numbers<[1], [0], [0], [1], [0, 0, 1, 1], [], []>} : vector<1x80xf32>, vector<80x120xf32>, vector<1x120xf32> -> vector<1x120xf32>
    %297 = arith.addf %292, %296 : vector<1x120xf32>
    %298 = vector.extract_strided_slice %291 {offsets = [1, 0], sizes = [1, 80], strides = [1, 1]} : vector<5x80xf32> to vector<1x80xf32>
    %c1_222 = arith.constant 1 : index
    %c0_223 = arith.constant 0 : index
    %c0_224 = arith.constant 0 : index
    %299 = vector.load %arg10[%c1_222, %c0_223, %c0_224] : memref<5x80x120xf32, #tpu.memory_space<vmem>>, vector<1x80x120xf32>
    %300 = vector.shape_cast %299 : vector<1x80x120xf32> to vector<80x120xf32>
    %cst_225 = arith.constant dense<0.000000e+00> : vector<1x120xf32>
    %301 = tpu.matmul %298, %300, %cst_225 {dimension_numbers = #tpu.dot_dimension_numbers<[1], [0], [0], [1], [0, 0, 1, 1], [], []>} : vector<1x80xf32>, vector<80x120xf32>, vector<1x120xf32> -> vector<1x120xf32>
    %302 = arith.addf %297, %301 : vector<1x120xf32>
    %303 = vector.extract_strided_slice %291 {offsets = [2, 0], sizes = [1, 80], strides = [1, 1]} : vector<5x80xf32> to vector<1x80xf32>
    %c2_226 = arith.constant 2 : index
    %c0_227 = arith.constant 0 : index
    %c0_228 = arith.constant 0 : index
    %304 = vector.load %arg10[%c2_226, %c0_227, %c0_228] : memref<5x80x120xf32, #tpu.memory_space<vmem>>, vector<1x80x120xf32>
    %305 = vector.shape_cast %304 : vector<1x80x120xf32> to vector<80x120xf32>
    %cst_229 = arith.constant dense<0.000000e+00> : vector<1x120xf32>
    %306 = tpu.matmul %303, %305, %cst_229 {dimension_numbers = #tpu.dot_dimension_numbers<[1], [0], [0], [1], [0, 0, 1, 1], [], []>} : vector<1x80xf32>, vector<80x120xf32>, vector<1x120xf32> -> vector<1x120xf32>
    %307 = arith.addf %302, %306 : vector<1x120xf32>
    %308 = vector.extract_strided_slice %291 {offsets = [3, 0], sizes = [1, 80], strides = [1, 1]} : vector<5x80xf32> to vector<1x80xf32>
    %c3_230 = arith.constant 3 : index
    %c0_231 = arith.constant 0 : index
    %c0_232 = arith.constant 0 : index
    %309 = vector.load %arg10[%c3_230, %c0_231, %c0_232] : memref<5x80x120xf32, #tpu.memory_space<vmem>>, vector<1x80x120xf32>
    %310 = vector.shape_cast %309 : vector<1x80x120xf32> to vector<80x120xf32>
    %cst_233 = arith.constant dense<0.000000e+00> : vector<1x120xf32>
    %311 = tpu.matmul %308, %310, %cst_233 {dimension_numbers = #tpu.dot_dimension_numbers<[1], [0], [0], [1], [0, 0, 1, 1], [], []>} : vector<1x80xf32>, vector<80x120xf32>, vector<1x120xf32> -> vector<1x120xf32>
    %312 = arith.addf %307, %311 : vector<1x120xf32>
    %313 = vector.extract_strided_slice %291 {offsets = [4, 0], sizes = [1, 80], strides = [1, 1]} : vector<5x80xf32> to vector<1x80xf32>
    %c4_234 = arith.constant 4 : index
    %c0_235 = arith.constant 0 : index
    %c0_236 = arith.constant 0 : index
    %314 = vector.load %arg10[%c4_234, %c0_235, %c0_236] : memref<5x80x120xf32, #tpu.memory_space<vmem>>, vector<1x80x120xf32>
    %315 = vector.shape_cast %314 : vector<1x80x120xf32> to vector<80x120xf32>
    %cst_237 = arith.constant dense<0.000000e+00> : vector<1x120xf32>
    %316 = tpu.matmul %313, %315, %cst_237 {dimension_numbers = #tpu.dot_dimension_numbers<[1], [0], [0], [1], [0, 0, 1, 1], [], []>} : vector<1x80xf32>, vector<80x120xf32>, vector<1x120xf32> -> vector<1x120xf32>
    %317 = arith.addf %312, %316 : vector<1x120xf32>
    %c0_238 = arith.constant 0 : index
    %c0_239 = arith.constant 0 : index
    %318 = vector.load %arg11[%c0_238, %c0_239] : memref<1x120xf32, #tpu.memory_space<vmem>>, vector<1x120xf32>
    %319 = arith.addf %317, %318 : vector<1x120xf32>
    %cst_240 = arith.constant 0.000000e+00 : f32
    %320 = vector.broadcast %cst_240 : f32 to vector<1x120xf32>
    %321 = arith.maximumf %319, %320 : vector<1x120xf32>
    %c0_241 = arith.constant 0 : index
    %c0_242 = arith.constant 0 : index
    %322 = vector.load %arg12[%c0_241, %c0_242] : memref<120x84xf32, #tpu.memory_space<vmem>>, vector<120x84xf32>
    %cst_243 = arith.constant dense<0.000000e+00> : vector<1x84xf32>
    %323 = tpu.matmul %321, %322, %cst_243 {dimension_numbers = #tpu.dot_dimension_numbers<[1], [0], [0], [1], [0, 0, 1, 1], [], []>} : vector<1x120xf32>, vector<120x84xf32>, vector<1x84xf32> -> vector<1x84xf32>
    %c0_244 = arith.constant 0 : index
    %c0_245 = arith.constant 0 : index
    %324 = vector.load %arg13[%c0_244, %c0_245] : memref<1x84xf32, #tpu.memory_space<vmem>>, vector<1x84xf32>
    %325 = arith.addf %323, %324 : vector<1x84xf32>
    %cst_246 = arith.constant 0.000000e+00 : f32
    %326 = vector.broadcast %cst_246 : f32 to vector<1x84xf32>
    %327 = arith.maximumf %325, %326 : vector<1x84xf32>
    %c0_247 = arith.constant 0 : index
    %c0_248 = arith.constant 0 : index
    %328 = vector.load %arg14[%c0_247, %c0_248] : memref<84x10xf32, #tpu.memory_space<vmem>>, vector<84x10xf32>
    %cst_249 = arith.constant dense<0.000000e+00> : vector<1x10xf32>
    %329 = tpu.matmul %327, %328, %cst_249 {dimension_numbers = #tpu.dot_dimension_numbers<[1], [0], [0], [1], [0, 0, 1, 1], [], []>} : vector<1x84xf32>, vector<84x10xf32>, vector<1x10xf32> -> vector<1x10xf32>
    %c0_250 = arith.constant 0 : index
    %c0_251 = arith.constant 0 : index
    %330 = vector.load %arg15[%c0_250, %c0_251] : memref<1x10xf32, #tpu.memory_space<vmem>>, vector<1x10xf32>
    %331 = arith.addf %329, %330 : vector<1x10xf32>
    %c0_252 = arith.constant 0 : index
    %c0_253 = arith.constant 0 : index
    %c0_254 = arith.constant 0 : index
    %332 = vector.load %arg16[%c0_252, %c0_253, %c0_254] : memref<1x1x10xf32, #tpu.memory_space<vmem>>, vector<1x1x10xf32>
    %333 = vector.shape_cast %332 : vector<1x1x10xf32> to vector<1x10xf32>
    %334 = vector.shape_cast %331 : vector<1x10xf32> to vector<1x1x10xf32>
    tpu.vector_store %arg16[%c0_252, %c0_253, %c0_254], %334 {strides = array<i32>} : memref<1x1x10xf32, #tpu.memory_space<vmem>>, vector<1x1x10xf32>,
    return
  }
  func.func @transform_0(%arg0: i32) -> (i32, i32, i32) {
    %c0_i32 = arith.constant 0 : i32
    %c0_i32_0 = arith.constant 0 : i32
    %c0_i32_1 = arith.constant 0 : i32
    return %arg0, %c0_i32, %c0_i32_0 : i32, i32, i32
  }
  func.func @transform_1(%arg0: i32) -> (i32, i32, i32) {
    %c0_i32 = arith.constant 0 : i32
    %c0_i32_0 = arith.constant 0 : i32
    %c0_i32_1 = arith.constant 0 : i32
    %c0_i32_2 = arith.constant 0 : i32
    return %c0_i32, %c0_i32_0, %c0_i32_1 : i32, i32, i32
  }
  func.func @transform_2(%arg0: i32) -> (i32, i32) {
    %c0_i32 = arith.constant 0 : i32
    %c0_i32_0 = arith.constant 0 : i32
    %c0_i32_1 = arith.constant 0 : i32
    return %c0_i32, %c0_i32_0 : i32, i32
  }
  func.func @transform_3(%arg0: i32) -> (i32, i32, i32) {
    %c0_i32 = arith.constant 0 : i32
    %c0_i32_0 = arith.constant 0 : i32
    %c0_i32_1 = arith.constant 0 : i32
    %c0_i32_2 = arith.constant 0 : i32
    return %c0_i32, %c0_i32_0, %c0_i32_1 : i32, i32, i32
  }
  func.func @transform_4(%arg0: i32) -> (i32, i32, i32) {
    %c0_i32 = arith.constant 0 : i32
    %c0_i32_0 = arith.constant 0 : i32
    %c0_i32_1 = arith.constant 0 : i32
    %c0_i32_2 = arith.constant 0 : i32
    return %c0_i32, %c0_i32_0, %c0_i32_1 : i32, i32, i32
  }
  func.func @transform_5(%arg0: i32) -> (i32, i32, i32) {
    %c0_i32 = arith.constant 0 : i32
    %c0_i32_0 = arith.constant 0 : i32
    %c0_i32_1 = arith.constant 0 : i32
    %c0_i32_2 = arith.constant 0 : i32
    return %c0_i32, %c0_i32_0, %c0_i32_1 : i32, i32, i32
  }
  func.func @transform_6(%arg0: i32) -> (i32, i32) {
    %c0_i32 = arith.constant 0 : i32
    %c0_i32_0 = arith.constant 0 : i32
    %c0_i32_1 = arith.constant 0 : i32
    return %c0_i32, %c0_i32_0 : i32, i32
  }
  func.func @transform_7(%arg0: i32) -> (i32, i32, i32) {
    %c0_i32 = arith.constant 0 : i32
    %c0_i32_0 = arith.constant 0 : i32
    %c0_i32_1 = arith.constant 0 : i32
    %c0_i32_2 = arith.constant 0 : i32
    return %c0_i32, %c0_i32_0, %c0_i32_1 : i32, i32, i32
  }
  func.func @transform_8(%arg0: i32) -> (i32, i32, i32) {
    %c0_i32 = arith.constant 0 : i32
    %c0_i32_0 = arith.constant 0 : i32
    %c0_i32_1 = arith.constant 0 : i32
    %c0_i32_2 = arith.constant 0 : i32
    return %c0_i32, %c0_i32_0, %c0_i32_1 : i32, i32, i32
  }
  func.func @transform_9(%arg0: i32) -> (i32, i32, i32) {
    %c0_i32 = arith.constant 0 : i32
    %c0_i32_0 = arith.constant 0 : i32
    %c0_i32_1 = arith.constant 0 : i32
    %c0_i32_2 = arith.constant 0 : i32
    return %c0_i32, %c0_i32_0, %c0_i32_1 : i32, i32, i32
  }
  func.func @transform_10(%arg0: i32) -> (i32, i32) {
    %c0_i32 = arith.constant 0 : i32
    %c0_i32_0 = arith.constant 0 : i32
    %c0_i32_1 = arith.constant 0 : i32
    return %c0_i32, %c0_i32_0 : i32, i32
  }
  func.func @transform_11(%arg0: i32) -> (i32, i32) {
    %c0_i32 = arith.constant 0 : i32
    %c0_i32_0 = arith.constant 0 : i32
    %c0_i32_1 = arith.constant 0 : i32
    return %c0_i32, %c0_i32_0 : i32, i32
  }
  func.func @transform_12(%arg0: i32) -> (i32, i32) {
    %c0_i32 = arith.constant 0 : i32
    %c0_i32_0 = arith.constant 0 : i32
    %c0_i32_1 = arith.constant 0 : i32
    return %c0_i32, %c0_i32_0 : i32, i32
  }
  func.func @transform_13(%arg0: i32) -> (i32, i32) {
    %c0_i32 = arith.constant 0 : i32
    %c0_i32_0 = arith.constant 0 : i32
    %c0_i32_1 = arith.constant 0 : i32
    return %c0_i32, %c0_i32_0 : i32, i32
  }
  func.func @transform_14(%arg0: i32) -> (i32, i32) {
    %c0_i32 = arith.constant 0 : i32
    %c0_i32_0 = arith.constant 0 : i32
    %c0_i32_1 = arith.constant 0 : i32
    return %c0_i32, %c0_i32_0 : i32, i32
  }
  func.func @transform_15(%arg0: i32) -> (i32, i32, i32) {
    %c0_i32 = arith.constant 0 : i32
    %c0_i32_0 = arith.constant 0 : i32
    %c0_i32_1 = arith.constant 0 : i32
    return %arg0, %c0_i32, %c0_i32_0 : i32, i32, i32
  }
}

</mosaic_0001>

<llo_original>
// kernel: lenet_forward.1
$region0: #{lenet_forward.1}
  #allocation0 [shape = 'u32[]', space=smem, size = 0x4, offset = 0x4, fixed_abs, tag = 'smem constant byte address 0x4 - core index']
  #allocation1 [shape = 'u32[144,128]{1,0:T(1,128)}', space=vmem, size = 0x12000, scoped, tag = 'internal scratch']
  %s0 = inlined_call_operand.vmem [shape: f32[2,32,96], index: 0, kind: input, shape index: {}]
  %s1 = inlined_call_operand.vmem [shape: f32[25,84,168], index: 1, kind: input, shape index: {}]
  %s2 = inlined_call_operand.vmem [shape: f32[1,168], index: 2, kind: input, shape index: {}]
  %s3 = inlined_call_operand.vmem [shape: f32[2,14,28], index: 3, kind: input, shape index: {}]
  %s4 = inlined_call_operand.vmem [shape: f32[2,168,84], index: 4, kind: input, shape index: {}]
  %s5 = inlined_call_operand.vmem [shape: f32[25,60,160], index: 5, kind: input, shape index: {}]
  %s6 = inlined_call_operand.vmem [shape: f32[1,160], index: 6, kind: input, shape index: {}]
  %s7 = inlined_call_operand.vmem [shape: f32[2,5,10], index: 7, kind: input, shape index: {}]
  %s8 = inlined_call_operand.vmem [shape: f32[2,160,80], index: 8, kind: input, shape index: {}]
  %s9 = inlined_call_operand.vmem [shape: f32[5,80,120], index: 9, kind: input, shape index: {}]
  %s10 = inlined_call_operand.vmem [shape: f32[1,120], index: 10, kind: input, shape index: {}]
  %s11 = inlined_call_operand.vmem [shape: f32[120,84], index: 11, kind: input, shape index: {}]
  %s12 = inlined_call_operand.vmem [shape: f32[1,84], index: 12, kind: input, shape index: {}]
  %s13 = inlined_call_operand.vmem [shape: f32[84,10], index: 13, kind: input, shape index: {}]
  %s14 = inlined_call_operand.vmem [shape: f32[1,10], index: 14, kind: input, shape index: {}]
  %s15 = inlined_call_operand.hbm [shape: f32[2,1,10], index: 15, kind: output, shape index: {}]
  %s16 = sld [smem:[#allocation0]]
  $region93: #{lenet_forward.1} parent=0
    _
  %s18 = ssub.s32 1, %s16
  %s19 = scalar_select 0, %s18, %s16
  $region1: #{lenet_forward.1} parent=0
    #allocation2 [shape = 'u8[1024]{0}', space=vmem, size = 0x400, scoped, tag = 'output window, operand 0']
    #allocation3 [shape = 's32[2]{0}', space=sflag, size = 0x8, scoped, tag = 'scoped memory for lenet_forward.1']
    %20 = vsyncpa [#allocation3], 0
    %s21 = scalar_lea.sflag [#allocation3], 1
    %22 = vsyncpa %s21, 0
    loop: start=0, step=1, limit=4
    $region2: #{lenet_forward.1} parent=1 // loop_pre_header
      _
    $region3: #{lenet_forward.1} parent=1 // loop_header
      %s24 = sphi 0, %s28
      %p25 = scmp.ge.s32.totalorder %s24, 4
      %s34 = sphi 0, %s36
      %s37 = sphi 0, %s34
      %s38 = sphi 0, %s37
      %s54 = sphi 0, %s38
      %s58 = sphi 0, %s58
      %s60 = sphi 0, %s58
      %s61 = sphi 0, %s60
      %s75 = sphi 0, %s61
      %s79 = sphi 0, %s79
      %s81 = sphi 0, %s79
      %s82 = sphi 0, %s81
      %s96 = sphi 0, %s82
      %s100 = sphi 0, %s100
      %s102 = sphi 0, %s100
      %s103 = sphi 0, %s102
      %s117 = sphi 0, %s103
      %s121 = sphi 0, %s121
      %s123 = sphi 0, %s121
      %s124 = sphi 0, %s123
      %s138 = sphi 0, %s124
      %s142 = sphi 0, %s142
      %s144 = sphi 0, %s142
      %s145 = sphi 0, %s144
      %s159 = sphi 0, %s145
      %s163 = sphi 0, %s163
      %s165 = sphi 0, %s163
      %s166 = sphi 0, %s165
      %s180 = sphi 0, %s166
      %s184 = sphi 0, %s184
      %s186 = sphi 0, %s184
      %s187 = sphi 0, %s186
      %s201 = sphi 0, %s187
      %s205 = sphi 0, %s205
      %s207 = sphi 0, %s205
      %s208 = sphi 0, %s207
      %s222 = sphi 0, %s208
      %s226 = sphi 0, %s226
      %s228 = sphi 0, %s226
      %s229 = sphi 0, %s228
      %s243 = sphi 0, %s229
      %s247 = sphi 0, %s247
      %s249 = sphi 0, %s247
      %s250 = sphi 0, %s249
      %s264 = sphi 0, %s250
      %s268 = sphi 0, %s268
      %s270 = sphi 0, %s268
      %s271 = sphi 0, %s270
      %s285 = sphi 0, %s271
      %s289 = sphi 0, %s289
      %s291 = sphi 0, %s289
      %s292 = sphi 0, %s291
      %s306 = sphi 0, %s292
      %s310 = sphi 0, %s310
      %s312 = sphi 0, %s310
      %s313 = sphi 0, %s312
      %s327 = sphi 0, %s313
      %s331 = sphi 0, %s331
      %s333 = sphi 0, %s331
      %s334 = sphi 0, %s333
      %s348 = sphi 0, %s334
      %s354 = sphi 0, %s356
      %s357 = sphi 0, %s354
      %s358 = sphi 0, %s357
      %s374 = sphi 0, %s358
    $region4: #{lenet_forward.1} parent=1 // loop_header_branch
      %27 = sbr.rel (%p25) target = $region8
    $region5: #{lenet_forward.1} parent=1 // loop_body
      %s29 = ssub.s32 %s24, 1
      %s30 = ssub.s32 %s24, 2
      %s31 = sadd.s32 %s24, 1
      %s32 = ssub.s32 %s24, %s31
      %p33 = scmp.eq.s32.totalorder %s32, 0
      %s35 = sadd.s32 %s34, 1
      %s36 = scalar_select %p33, %s34, %s35
      %p39 = pneg %p33
      %p40 = scmp.eq.s32.totalorder %s24, 1
      %p41 = por %p39, %p40
      %p42 = scmp.ne.s32.totalorder %s34, %s37
      %p43 = scmp.eq.s32.totalorder %s24, 0
      %p44 = por %p42, %p43
      %p45 = scmp.ne.s32.totalorder %s34, %s37
      %p46 = scmp.eq.s32.totalorder %s29, 1
      %p47 = por %p45, %p46
      %p48 = scmp.ne.s32.totalorder %s37, %s38
      %p49 = scmp.eq.s32.totalorder %s29, 0
      %p50 = por %p48, %p49
      %p51 = scmp.ne.s32.totalorder %s37, %s38
      %p52 = scmp.eq.s32.totalorder %s30, 1
      %p53 = por %p51, %p52
      %p55 = scmp.ne.s32.totalorder %s38, %s54
      %p56 = scmp.eq.s32.totalorder %s30, 0
      %p57 = por %p55, %p56
      %s59 = sadd.s32 %s58, 1
      %p62 = scmp.eq.s32.totalorder %s24, 1
      %p63 = scmp.ne.s32.totalorder %s58, %s60
      %p64 = scmp.eq.s32.totalorder %s24, 0
      %p65 = por %p63, %p64
      %p66 = scmp.ne.s32.totalorder %s58, %s60
      %p67 = scmp.eq.s32.totalorder %s29, 1
      %p68 = por %p66, %p67
      %p69 = scmp.ne.s32.totalorder %s60, %s61
      %p70 = scmp.eq.s32.totalorder %s29, 0
      %p71 = por %p69, %p70
      %p72 = scmp.ne.s32.totalorder %s60, %s61
      %p73 = scmp.eq.s32.totalorder %s30, 1
      %p74 = por %p72, %p73
      %p76 = scmp.ne.s32.totalorder %s61, %s75
      %p77 = scmp.eq.s32.totalorder %s30, 0
      %p78 = por %p76, %p77
      %s80 = sadd.s32 %s79, 1
      %p83 = scmp.eq.s32.totalorder %s24, 1
      %p84 = scmp.ne.s32.totalorder %s79, %s81
      %p85 = scmp.eq.s32.totalorder %s24, 0
      %p86 = por %p84, %p85
      %p87 = scmp.ne.s32.totalorder %s79, %s81
      %p88 = scmp.eq.s32.totalorder %s29, 1
      %p89 = por %p87, %p88
      %p90 = scmp.ne.s32.totalorder %s81, %s82
      %p91 = scmp.eq.s32.totalorder %s29, 0
      %p92 = por %p90, %p91
      %p93 = scmp.ne.s32.totalorder %s81, %s82
      %p94 = scmp.eq.s32.totalorder %s30, 1
      %p95 = por %p93, %p94
      %p97 = scmp.ne.s32.totalorder %s82, %s96
      %p98 = scmp.eq.s32.totalorder %s30, 0
      %p99 = por %p97, %p98
      %s101 = sadd.s32 %s100, 1
      %p104 = scmp.eq.s32.totalorder %s24, 1
      %p105 = scmp.ne.s32.totalorder %s100, %s102
      %p106 = scmp.eq.s32.totalorder %s24, 0
      %p107 = por %p105, %p106
      %p108 = scmp.ne.s32.totalorder %s100, %s102
      %p109 = scmp.eq.s32.totalorder %s29, 1
      %p110 = por %p108, %p109
      %p111 = scmp.ne.s32.totalorder %s102, %s103
      %p112 = scmp.eq.s32.totalorder %s29, 0
      %p113 = por %p111, %p112
      %p114 = scmp.ne.s32.totalorder %s102, %s103
      %p115 = scmp.eq.s32.totalorder %s30, 1
      %p116 = por %p114, %p115
      %p118 = scmp.ne.s32.totalorder %s103, %s117
      %p119 = scmp.eq.s32.totalorder %s30, 0
      %p120 = por %p118, %p119
      %s122 = sadd.s32 %s121, 1
      %p125 = scmp.eq.s32.totalorder %s24, 1
      %p126 = scmp.ne.s32.totalorder %s121, %s123
      %p127 = scmp.eq.s32.totalorder %s24, 0
      %p128 = por %p126, %p127
      %p129 = scmp.ne.s32.totalorder %s121, %s123
      %p130 = scmp.eq.s32.totalorder %s29, 1
      %p131 = por %p129, %p130
      %p132 = scmp.ne.s32.totalorder %s123, %s124
      %p133 = scmp.eq.s32.totalorder %s29, 0
      %p134 = por %p132, %p133
      %p135 = scmp.ne.s32.totalorder %s123, %s124
      %p136 = scmp.eq.s32.totalorder %s30, 1
      %p137 = por %p135, %p136
      %p139 = scmp.ne.s32.totalorder %s124, %s138
      %p140 = scmp.eq.s32.totalorder %s30, 0
      %p141 = por %p139, %p140
      %s143 = sadd.s32 %s142, 1
      %p146 = scmp.eq.s32.totalorder %s24, 1
      %p147 = scmp.ne.s32.totalorder %s142, %s144
      %p148 = scmp.eq.s32.totalorder %s24, 0
      %p149 = por %p147, %p148
      %p150 = scmp.ne.s32.totalorder %s142, %s144
      %p151 = scmp.eq.s32.totalorder %s29, 1
      %p152 = por %p150, %p151
      %p153 = scmp.ne.s32.totalorder %s144, %s145
      %p154 = scmp.eq.s32.totalorder %s29, 0
      %p155 = por %p153, %p154
      %p156 = scmp.ne.s32.totalorder %s144, %s145
      %p157 = scmp.eq.s32.totalorder %s30, 1
      %p158 = por %p156, %p157
      %p160 = scmp.ne.s32.totalorder %s145, %s159
      %p161 = scmp.eq.s32.totalorder %s30, 0
      %p162 = por %p160, %p161
      %s164 = sadd.s32 %s163, 1
      %p167 = scmp.eq.s32.totalorder %s24, 1
      %p168 = scmp.ne.s32.totalorder %s163, %s165
      %p169 = scmp.eq.s32.totalorder %s24, 0
      %p170 = por %p168, %p169
      %p171 = scmp.ne.s32.totalorder %s163, %s165
      %p172 = scmp.eq.s32.totalorder %s29, 1
      %p173 = por %p171, %p172
      %p174 = scmp.ne.s32.totalorder %s165, %s166
      %p175 = scmp.eq.s32.totalorder %s29, 0
      %p176 = por %p174, %p175
      %p177 = scmp.ne.s32.totalorder %s165, %s166
      %p178 = scmp.eq.s32.totalorder %s30, 1
      %p179 = por %p177, %p178
      %p181 = scmp.ne.s32.totalorder %s166, %s180
      %p182 = scmp.eq.s32.totalorder %s30, 0
      %p183 = por %p181, %p182
      %s185 = sadd.s32 %s184, 1
      %p188 = scmp.eq.s32.totalorder %s24, 1
      %p189 = scmp.ne.s32.totalorder %s184, %s186
      %p190 = scmp.eq.s32.totalorder %s24, 0
      %p191 = por %p189, %p190
      %p192 = scmp.ne.s32.totalorder %s184, %s186
      %p193 = scmp.eq.s32.totalorder %s29, 1
      %p194 = por %p192, %p193
      %p195 = scmp.ne.s32.totalorder %s186, %s187
      %p196 = scmp.eq.s32.totalorder %s29, 0
      %p197 = por %p195, %p196
      %p198 = scmp.ne.s32.totalorder %s186, %s187
      %p199 = scmp.eq.s32.totalorder %s30, 1
      %p200 = por %p198, %p199
      %p202 = scmp.ne.s32.totalorder %s187, %s201
      %p203 = scmp.eq.s32.totalorder %s30, 0
      %p204 = por %p202, %p203
      %s206 = sadd.s32 %s205, 1
      %p209 = scmp.eq.s32.totalorder %s24, 1
      %p210 = scmp.ne.s32.totalorder %s205, %s207
      %p211 = scmp.eq.s32.totalorder %s24, 0
      %p212 = por %p210, %p211
      %p213 = scmp.ne.s32.totalorder %s205, %s207
      %p214 = scmp.eq.s32.totalorder %s29, 1
      %p215 = por %p213, %p214
      %p216 = scmp.ne.s32.totalorder %s207, %s208
      %p217 = scmp.eq.s32.totalorder %s29, 0
      %p218 = por %p216, %p217
      %p219 = scmp.ne.s32.totalorder %s207, %s208
      %p220 = scmp.eq.s32.totalorder %s30, 1
      %p221 = por %p219, %p220
      %p223 = scmp.ne.s32.totalorder %s208, %s222
      %p224 = scmp.eq.s32.totalorder %s30, 0
      %p225 = por %p223, %p224
      %s227 = sadd.s32 %s226, 1
      %p230 = scmp.eq.s32.totalorder %s24, 1
      %p231 = scmp.ne.s32.totalorder %s226, %s228
      %p232 = scmp.eq.s32.totalorder %s24, 0
      %p233 = por %p231, %p232
      %p234 = scmp.ne.s32.totalorder %s226, %s228
      %p235 = scmp.eq.s32.totalorder %s29, 1
      %p236 = por %p234, %p235
      %p237 = scmp.ne.s32.totalorder %s228, %s229
      %p238 = scmp.eq.s32.totalorder %s29, 0
      %p239 = por %p237, %p238
      %p240 = scmp.ne.s32.totalorder %s228, %s229
      %p241 = scmp.eq.s32.totalorder %s30, 1
      %p242 = por %p240, %p241
      %p244 = scmp.ne.s32.totalorder %s229, %s243
      %p245 = scmp.eq.s32.totalorder %s30, 0
      %p246 = por %p244, %p245
      %s248 = sadd.s32 %s247, 1
      %p251 = scmp.eq.s32.totalorder %s24, 1
      %p252 = scmp.ne.s32.totalorder %s247, %s249
      %p253 = scmp.eq.s32.totalorder %s24, 0
      %p254 = por %p252, %p253
      %p255 = scmp.ne.s32.totalorder %s247, %s249
      %p256 = scmp.eq.s32.totalorder %s29, 1
      %p257 = por %p255, %p256
      %p258 = scmp.ne.s32.totalorder %s249, %s250
      %p259 = scmp.eq.s32.totalorder %s29, 0
      %p260 = por %p258, %p259
      %p261 = scmp.ne.s32.totalorder %s249, %s250
      %p262 = scmp.eq.s32.totalorder %s30, 1
      %p263 = por %p261, %p262
      %p265 = scmp.ne.s32.totalorder %s250, %s264
      %p266 = scmp.eq.s32.totalorder %s30, 0
      %p267 = por %p265, %p266
      %s269 = sadd.s32 %s268, 1
      %p272 = scmp.eq.s32.totalorder %s24, 1
      %p273 = scmp.ne.s32.totalorder %s268, %s270
      %p274 = scmp.eq.s32.totalorder %s24, 0
      %p275 = por %p273, %p274
      %p276 = scmp.ne.s32.totalorder %s268, %s270
      %p277 = scmp.eq.s32.totalorder %s29, 1
      %p278 = por %p276, %p277
      %p279 = scmp.ne.s32.totalorder %s270, %s271
      %p280 = scmp.eq.s32.totalorder %s29, 0
      %p281 = por %p279, %p280
      %p282 = scmp.ne.s32.totalorder %s270, %s271
      %p283 = scmp.eq.s32.totalorder %s30, 1
      %p284 = por %p282, %p283
      %p286 = scmp.ne.s32.totalorder %s271, %s285
      %p287 = scmp.eq.s32.totalorder %s30, 0
      %p288 = por %p286, %p287
      %s290 = sadd.s32 %s289, 1
      %p293 = scmp.eq.s32.totalorder %s24, 1
      %p294 = scmp.ne.s32.totalorder %s289, %s291
      %p295 = scmp.eq.s32.totalorder %s24, 0
      %p296 = por %p294, %p295
      %p297 = scmp.ne.s32.totalorder %s289, %s291
      %p298 = scmp.eq.s32.totalorder %s29, 1
      %p299 = por %p297, %p298
      %p300 = scmp.ne.s32.totalorder %s291, %s292
      %p301 = scmp.eq.s32.totalorder %s29, 0
      %p302 = por %p300, %p301
      %p303 = scmp.ne.s32.totalorder %s291, %s292
      %p304 = scmp.eq.s32.totalorder %s30, 1
      %p305 = por %p303, %p304
      %p307 = scmp.ne.s32.totalorder %s292, %s306
      %p308 = scmp.eq.s32.totalorder %s30, 0
      %p309 = por %p307, %p308
      %s311 = sadd.s32 %s310, 1
      %p314 = scmp.eq.s32.totalorder %s24, 1
      %p315 = scmp.ne.s32.totalorder %s310, %s312
      %p316 = scmp.eq.s32.totalorder %s24, 0
      %p317 = por %p315, %p316
      %p318 = scmp.ne.s32.totalorder %s310, %s312
      %p319 = scmp.eq.s32.totalorder %s29, 1
      %p320 = por %p318, %p319
      %p321 = scmp.ne.s32.totalorder %s312, %s313
      %p322 = scmp.eq.s32.totalorder %s29, 0
      %p323 = por %p321, %p322
      %p324 = scmp.ne.s32.totalorder %s312, %s313
      %p325 = scmp.eq.s32.totalorder %s30, 1
      %p326 = por %p324, %p325
      %p328 = scmp.ne.s32.totalorder %s313, %s327
      %p329 = scmp.eq.s32.totalorder %s30, 0
      %p330 = por %p328, %p329
      %s332 = sadd.s32 %s331, 1
      %p335 = scmp.eq.s32.totalorder %s24, 1
      %p336 = scmp.ne.s32.totalorder %s331, %s333
      %p337 = scmp.eq.s32.totalorder %s24, 0
      %p338 = por %p336, %p337
      %p339 = scmp.ne.s32.totalorder %s331, %s333
      %p340 = scmp.eq.s32.totalorder %s29, 1
      %p341 = por %p339, %p340
      %p342 = scmp.ne.s32.totalorder %s333, %s334
      %p343 = scmp.eq.s32.totalorder %s29, 0
      %p344 = por %p342, %p343
      %p345 = scmp.ne.s32.totalorder %s333, %s334
      %p346 = scmp.eq.s32.totalorder %s30, 1
      %p347 = por %p345, %p346
      %p349 = scmp.ne.s32.totalorder %s334, %s348
      %p350 = scmp.eq.s32.totalorder %s30, 0
      %p351 = por %p349, %p350
      %s352 = ssub.s32 %s24, %s31
      %p353 = scmp.eq.s32.totalorder %s352, 0
      %s355 = sadd.s32 %s354, 1
      %s356 = scalar_select %p353, %s354, %s355
      %p359 = pneg %p353
      %p360 = scmp.eq.s32.totalorder %s24, 1
      %p361 = por %p359, %p360
      %p362 = scmp.ne.s32.totalorder %s354, %s357
      %p363 = scmp.eq.s32.totalorder %s24, 0
      %p364 = por %p362, %p363
      %p365 = scmp.ne.s32.totalorder %s354, %s357
      %p366 = scmp.eq.s32.totalorder %s29, 1
      %p367 = por %p365, %p366
      %p368 = scmp.ne.s32.totalorder %s357, %s358
      %p369 = scmp.eq.s32.totalorder %s29, 0
      %p370 = por %p368, %p369
      %p371 = scmp.ne.s32.totalorder %s357, %s358
      %p372 = scmp.eq.s32.totalorder %s30, 1
      %p373 = por %p371, %p372
      %p375 = scmp.ne.s32.totalorder %s358, %s374
      %p376 = scmp.eq.s32.totalorder %s30, 0
      %p377 = por %p375, %p376
      %p378 = scmp.le.s32.totalorder 1, %s24
      %p379 = scmp.lt.s32.totalorder %s24, 3
      %p380 = pnand %p378, %p379
      %p381 = pneg %p380
      // Predicated region
      $region9: #{lenet_forward.1} parent=5 // pred_check
        _
      $region10: #{lenet_forward.1} parent=5 // pred_check_branch
        %383 = sbr.rel (%p380) target = $region12
      $region11: #{lenet_forward.1} parent=5 // pred_region
        %s384 = ssub.s32 %s24, 1
        // Predicated region
        $region13: #{lenet_forward.1} parent=11 // pred_check
          %p385 = pneg %p71
        $region14: #{lenet_forward.1} parent=11 // pred_check_branch
          %387 = sbr.rel (%p385) target = $region16
        $region15: #{lenet_forward.1} parent=11 // pred_region
          _
        $region16: #{lenet_forward.1} parent=11 // pred_fallthru
          _
        // Predicated region
        $region17: #{lenet_forward.1} parent=11 // pred_check
          %p388 = pneg %p92
        $region18: #{lenet_forward.1} parent=11 // pred_check_branch
          %390 = sbr.rel (%p388) target = $region20
        $region19: #{lenet_forward.1} parent=11 // pred_region
          _
        $region20: #{lenet_forward.1} parent=11 // pred_fallthru
          _
        // Predicated region
        $region21: #{lenet_forward.1} parent=11 // pred_check
          %p391 = pneg %p113
        $region22: #{lenet_forward.1} parent=11 // pred_check_branch
          %393 = sbr.rel (%p391) target = $region24
        $region23: #{lenet_forward.1} parent=11 // pred_region
          _
        $region24: #{lenet_forward.1} parent=11 // pred_fallthru
          _
        // Predicated region
        $region25: #{lenet_forward.1} parent=11 // pred_check
          %p394 = pneg %p134
        $region26: #{lenet_forward.1} parent=11 // pred_check_branch
          %396 = sbr.rel (%p394) target = $region28
        $region27: #{lenet_forward.1} parent=11 // pred_region
          _
        $region28: #{lenet_forward.1} parent=11 // pred_fallthru
          _
        // Predicated region
        $region29: #{lenet_forward.1} parent=11 // pred_check
          %p397 = pneg %p155
        $region30: #{lenet_forward.1} parent=11 // pred_check_branch
          %399 = sbr.rel (%p397) target = $region32
        $region31: #{lenet_forward.1} parent=11 // pred_region
          _
        $region32: #{lenet_forward.1} parent=11 // pred_fallthru
          _
        // Predicated region
        $region33: #{lenet_forward.1} parent=11 // pred_check
          %p400 = pneg %p176
        $region34: #{lenet_forward.1} parent=11 // pred_check_branch
          %402 = sbr.rel (%p400) target = $region36
        $region35: #{lenet_forward.1} parent=11 // pred_region
          _
        $region36: #{lenet_forward.1} parent=11 // pred_fallthru
          _
        // Predicated region
        $region37: #{lenet_forward.1} parent=11 // pred_check
          %p403 = pneg %p197
        $region38: #{lenet_forward.1} parent=11 // pred_check_branch
          %405 = sbr.rel (%p403) target = $region40
        $region39: #{lenet_forward.1} parent=11 // pred_region
          _
        $region40: #{lenet_forward.1} parent=11 // pred_fallthru
          _
        // Predicated region
        $region41: #{lenet_forward.1} parent=11 // pred_check
          %p406 = pneg %p218
        $region42: #{lenet_forward.1} parent=11 // pred_check_branch
          %408 = sbr.rel (%p406) target = $region44
        $region43: #{lenet_forward.1} parent=11 // pred_region
          _
        $region44: #{lenet_forward.1} parent=11 // pred_fallthru
          _
        // Predicated region
        $region45: #{lenet_forward.1} parent=11 // pred_check
          %p409 = pneg %p239
        $region46: #{lenet_forward.1} parent=11 // pred_check_branch
          %411 = sbr.rel (%p409) target = $region48
        $region47: #{lenet_forward.1} parent=11 // pred_region
          _
        $region48: #{lenet_forward.1} parent=11 // pred_fallthru
          _
        // Predicated region
        $region49: #{lenet_forward.1} parent=11 // pred_check
          %p412 = pneg %p260
        $region50: #{lenet_forward.1} parent=11 // pred_check_branch
          %414 = sbr.rel (%p412) target = $region52
        $region51: #{lenet_forward.1} parent=11 // pred_region
          _
        $region52: #{lenet_forward.1} parent=11 // pred_fallthru
          _
        // Predicated region
        $region53: #{lenet_forward.1} parent=11 // pred_check
          %p415 = pneg %p281
        $region54: #{lenet_forward.1} parent=11 // pred_check_branch
          %417 = sbr.rel (%p415) target = $region56
        $region55: #{lenet_forward.1} parent=11 // pred_region
          _
        $region56: #{lenet_forward.1} parent=11 // pred_fallthru
          _
        // Predicated region
        $region57: #{lenet_forward.1} parent=11 // pred_check
          %p418 = pneg %p302
        $region58: #{lenet_forward.1} parent=11 // pred_check_branch
          %420 = sbr.rel (%p418) target = $region60
        $region59: #{lenet_forward.1} parent=11 // pred_region
          _
        $region60: #{lenet_forward.1} parent=11 // pred_fallthru
          _
        // Predicated region
        $region61: #{lenet_forward.1} parent=11 // pred_check
          %p421 = pneg %p323
        $region62: #{lenet_forward.1} parent=11 // pred_check_branch
          %423 = sbr.rel (%p421) target = $region64
        $region63: #{lenet_forward.1} parent=11 // pred_region
          _
        $region64: #{lenet_forward.1} parent=11 // pred_fallthru
          _
        // Predicated region
        $region65: #{lenet_forward.1} parent=11 // pred_check
          %p424 = pneg %p344
        $region66: #{lenet_forward.1} parent=11 // pred_check_branch
          %426 = sbr.rel (%p424) target = $region68
        $region67: #{lenet_forward.1} parent=11 // pred_region
          _
        $region68: #{lenet_forward.1} parent=11 // pred_fallthru
          _
      $region12: #{lenet_forward.1} parent=5 // pred_fallthru
        _
      %p427 = scmp.lt.s32.totalorder %s24, 2
      // Predicated region
      $region69: #{lenet_forward.1} parent=5 // pred_check
        %p428 = pneg %p427
      $region70: #{lenet_forward.1} parent=5 // pred_check_branch
        %430 = sbr.rel (%p428) target = $region72
      $region71: #{lenet_forward.1} parent=5 // pred_region
        // Predicated region
        $region73: #{lenet_forward.1} parent=71 // pred_check
          %p431 = pneg %p44
        $region74: #{lenet_forward.1} parent=71 // pred_check_branch
          %433 = sbr.rel (%p431) target = $region76
        $region75: #{lenet_forward.1} parent=71 // pred_region
          %p434 = scmp.lt.s32.totalorder %s24, 1
          %s435 = scalar_select %p434, %s24, 1
          %s436 = smul.addr %s435, 4
          %s437 = smul.addr %s436, 8
          %s438 = scalar_lea.vmem %s0, %s437
        $region76: #{lenet_forward.1} parent=71 // pred_fallthru
          _
      $region72: #{lenet_forward.1} parent=5 // pred_fallthru
        _
      %p439 = scmp.le.s32.totalorder 1, %s24
      %p440 = scmp.lt.s32.totalorder %s24, 3
      %p441 = pnand %p439, %p440
      %p442 = pneg %p441
      // Predicated region
      $region77: #{lenet_forward.1} parent=5 // pred_check
        _
      $region78: #{lenet_forward.1} parent=5 // pred_check_branch
        %444 = sbr.rel (%p441) target = $region80
      $region79: #{lenet_forward.1} parent=5 // pred_region
        %s445 = ssub.s32 %s24, 1
        %p446 = scmp.lt.s32.totalorder %s29, 1
        %s447 = scalar_select %p446, %s29, 1
        %s448 = smul.addr %s447, 4
        %s449 = smul.addr %s448, 8
        %s450 = scalar_lea.vmem %s0, %s449
        %p451 = pneg %p50
        %p452 = pneg %p47
        %p453 = pneg %p71
        %p454 = pneg %p68
        %p455 = pneg %p92
        %p456 = pneg %p89
        %p457 = pneg %p113
        %p458 = pneg %p110
        %p459 = pneg %p134
        %p460 = pneg %p131
        %p461 = pneg %p155
        %p462 = pneg %p152
        %p463 = pneg %p176
        %p464 = pneg %p173
        %p465 = pneg %p197
        %p466 = pneg %p194
        %p467 = pneg %p218
        %p468 = pneg %p215
        %p469 = pneg %p239
        %p470 = pneg %p236
        %p471 = pneg %p260
        %p472 = pneg %p257
        %p473 = pneg %p281
        %p474 = pneg %p278
        %p475 = pneg %p302
        %p476 = pneg %p299
        %p477 = pneg %p323
        %p478 = pneg %p320
        %p479 = pneg %p344
        %p480 = pneg %p341
        %p481 = pneg %p370
        %p482 = pneg %p367
        %s483 = sand.u32 %s357, 1
        %s484 = scalar_lea.sflag [#allocation3], %s483
        %s485 = sand.u32 %s357, 1
        %s486 = scalar_lea.vmem [#allocation2], %s485
        %p487 = scmp.lt.s32.totalorder %s29, 1
        %s488 = scalar_select %p487, %s29, 1
        %s489 = smul.addr %s488, 4
        %s490 = smul.addr %s489, 8
        %s491 = scalar_lea.vmem %s0, %s490
        %v492 = vld [vmem:[%s491] sm:$0xff]
        %v493 = vld [vmem:[%s491 + $0x8] sm:$0xff]
        %v494 = vld [vmem:[%s491 + $0x10] sm:$0xff]
        %v495 = vld [vmem:[%s491 + $0x18] sm:$0xff]
        %v496 = vld [vmem:[%s1] sm:$0xff]
        %v497 = vld [vmem:[%s1 + $0x8] sm:$0xff]
        %v498 = vld [vmem:[%s1 + $0x10] sm:$0xff]
        %v499 = vld [vmem:[%s1 + $0x18] sm:$0xff]
        %v500 = vld [vmem:[%s1 + $0x20] sm:$0xff]
        %v501 = vld [vmem:[%s1 + $0x28] sm:$0xff]
        %v502 = vld [vmem:[%s1 + $0x30] sm:$0xff]
        %v503 = vld [vmem:[%s1 + $0x38] sm:$0xff]
        %v504 = vld [vmem:[%s1 + $0x40] sm:$0xff]
        %v505 = vld [vmem:[%s1 + $0x48] sm:$0xff]
        %v506 = vld [vmem:[%s1 + $0x50] sm:$0xff]
        %v507 = vld [vmem:[%s1 + $0x58] sm:$0xff]
        %v508 = vld [vmem:[%s1 + $0x60] sm:$0xff]
        %v509 = vld [vmem:[%s1 + $0x68] sm:$0xff]
        %v510 = vld [vmem:[%s1 + $0x70] sm:$0xff]
        %v511 = vld [vmem:[%s1 + $0x78] sm:$0xff]
        %v512 = vld [vmem:[%s1 + $0x80] sm:$0xff]
        %v513 = vld [vmem:[%s1 + $0x88] sm:$0xff]
        %v514 = vld [vmem:[%s1 + $0x90] sm:$0xff]
        %v515 = vld [vmem:[%s1 + $0x98] sm:$0xff]
        %v516 = vld [vmem:[%s1 + $0xa0] sm:$0xf]
        %v517 = vld [vmem:[%s1 + $0xa8] sm:$0xf]
        %s518 = scalar_lea.vmem %s1, 176
        %v519 = vld [vmem:[%s518] sm:$0xff]
        %v520 = vld [vmem:[%s518 + $0x8] sm:$0xff]
        %v521 = vld [vmem:[%s518 + $0x10] sm:$0xff]
        %v522 = vld [vmem:[%s518 + $0x18] sm:$0xff]
        %v523 = vld [vmem:[%s518 + $0x20] sm:$0xff]
        %v524 = vld [vmem:[%s518 + $0x28] sm:$0xff]
        %v525 = vld [vmem:[%s518 + $0x30] sm:$0xff]
        %v526 = vld [vmem:[%s518 + $0x38] sm:$0xff]
        %v527 = vld [vmem:[%s518 + $0x40] sm:$0xff]
        %v528 = vld [vmem:[%s518 + $0x48] sm:$0xff]
        %v529 = vld [vmem:[%s518 + $0x50] sm:$0xff]
        %v530 = vld [vmem:[%s518 + $0x58] sm:$0xff]
        %v531 = vld [vmem:[%s518 + $0x60] sm:$0xff]
        %v532 = vld [vmem:[%s518 + $0x68] sm:$0xff]
        %v533 = vld [vmem:[%s518 + $0x70] sm:$0xff]
        %v534 = vld [vmem:[%s518 + $0x78] sm:$0xff]
        %v535 = vld [vmem:[%s518 + $0x80] sm:$0xff]
        %v536 = vld [vmem:[%s518 + $0x88] sm:$0xff]
        %v537 = vld [vmem:[%s518 + $0x90] sm:$0xff]
        %v538 = vld [vmem:[%s518 + $0x98] sm:$0xff]
        %v539 = vld [vmem:[%s518 + $0xa0] sm:$0xf]
        %v540 = vld [vmem:[%s518 + $0xa8] sm:$0xf]
        %545 = vrot.lane.b32.xlu0 %v492, 125
        %v546 = vpop.permute.xlu0 %545
        %547 = vrot.lane.b32.xlu0 %v493, 125
        %v548 = vpop.permute.xlu0 %547
        %549 = vrot.lane.b32.xlu0 %v494, 125
        %v550 = vpop.permute.xlu0 %549
        %551 = vrot.lane.b32.xlu0 %v495, 125
        %v552 = vpop.permute.xlu0 %551
        %vm553 = vcmask 687104
        %v554 = vsel %vm553, %v546, 0
        %v556 = vsel %vm553, %v548, 0
        %v558 = vsel %vm553, %v550, 0
        %v560 = vsel %vm553, %v552, 0
        %vm562 = vcmask 1043456
        %v564 = vsel %vm562, %v539, 0
        %v567 = vsel %vm562, %v540, 0
        %569 = vmatprep.subr.mxu0 0.0
        %570 = vmatpush1.msra.mxu0 0.0
        %571 = vmatprep.subr.mxu0 0.0
        %572 = vmatpush1.msra.mxu0 0.0
        %573 = vmatprep.subr.mxu0 0.0
        %574 = vmatpush1.msra.mxu0 0.0
        %575 = vmatprep.subr.mxu0 0.0
        %576 = vmatpush1.msra.mxu0 0.0
        %577 = vmatprep.subr.mxu0 0.0
        %578 = vmatpush1.msra.mxu0 0.0
        %579 = vmatprep.subr.mxu0 %v567
        %580 = vmatpush1.msra.mxu0 %v564
        %581 = vmatprep.subr.mxu0 %v538
        %582 = vmatpush1.msra.mxu0 %v537
        %583 = vmatprep.subr.mxu0 %v536
        %584 = vmatpush1.msra.mxu0 %v535
        %585 = vmatprep.subr.mxu0 %v534
        %586 = vmatpush1.msra.mxu0 %v533
        %587 = vmatprep.subr.mxu0 %v532
        %588 = vmatpush1.msra.mxu0 %v531
        %589 = vmatprep.subr.mxu0 %v530
        %590 = vmatpush1.msra.mxu0 %v529
        %591 = vmatprep.subr.mxu0 %v528
        %592 = vmatpush1.msra.mxu0 %v527
        %593 = vmatprep.subr.mxu0 %v526
        %594 = vmatpush1.msra.mxu0 %v525
        %595 = vmatprep.subr.mxu0 %v524
        %596 = vmatpush1.msra.mxu0 %v523
        %597 = vmatprep.subr.mxu0 %v522
        %598 = vmatpush1.msra.mxu0 %v521
        %599 = vmatprep.subr.mxu0 %v520
        %600 = vmatpush1.msra.mxu0 %v519
        %601 = vmatprep.subr.mxu0 0.0
        %602 = vmatpush2.msra.mxu0 0.0
        %603 = vmatprep.subr.mxu0 0.0
        %604 = vmatpush2.msra.mxu0 0.0
        %605 = vmatprep.subr.mxu0 0.0
        %606 = vmatpush2.msra.mxu0 0.0
        %607 = vmatprep.subr.mxu0 0.0
        %608 = vmatpush2.msra.mxu0 0.0
        %609 = vmatprep.subr.mxu0 0.0
        %610 = vmatpush2.msra.mxu0 0.0
        %611 = vmatprep.subr.mxu0 0.0
        %612 = vmatpush2.msra.mxu0 0.0
        %613 = vmatprep.subr.mxu0 0.0
        %614 = vmatpush2.msra.mxu0 0.0
        %615 = vmatprep.subr.mxu0 0.0
        %616 = vmatpush2.msra.mxu0 0.0
        %617 = vmatprep.subr.mxu0 0.0
        %618 = vmatpush2.msra.mxu0 0.0
        %619 = vmatprep.subr.mxu0 0.0
        %620 = vmatpush2.msra.mxu0 0.0
        %621 = vmatprep.subr.mxu0 0.0
        %622 = vmatpush2.msra.mxu0 0.0
        %623 = vmatprep.subr.mxu0 0.0
        %624 = vmatpush2.msra.mxu0 0.0
        %625 = vmatprep.subr.mxu0 0.0
        %626 = vmatpush2.msra.mxu0 0.0
        %627 = vmatprep.subr.mxu0 0.0
        %628 = vmatpush2.msra.mxu0 0.0
        %629 = vmatprep.subr.mxu0 0.0
        %630 = vmatpush2.msra.mxu0 0.0
        %631 = vmatprep.subr.mxu0 0.0
        %632 = vmatpush2.msra.mxu0 0.0
        %633 = vmatprep.mubr.f32.mxu0 0.0
        %634 = vmatmul.mubr.f32.gmra.mxu0 %v554
        %v635 = vpop.f32.mrf.mxu0
        %v636 = vadd.f32 0.0, %v635
        %v637 = vpop.f32.mrf.mxu0
        %v638 = vadd.f32 0.0, %v637
        %639 = vmatprep.mubr.f32.mxu0 0.0
        %640 = vmatmul.mubr.f32.gmra.mxu0 %v556
        %v641 = vpop.f32.mrf.mxu0
        %v642 = vadd.f32 0.0, %v641
        %v643 = vpop.f32.mrf.mxu0
        %v644 = vadd.f32 0.0, %v643
        %645 = vmatprep.mubr.f32.mxu0 0.0
        %646 = vmatmul.mubr.f32.gmra.mxu0 %v558
        %v647 = vpop.f32.mrf.mxu0
        %v648 = vadd.f32 0.0, %v647
        %v649 = vpop.f32.mrf.mxu0
        %v650 = vadd.f32 0.0, %v649
        %651 = vmatprep.mubr.f32.mxu0 0.0
        %652 = vmatmul.mubr.f32.gmra.mxu0 %v560
        %v653 = vpop.f32.mrf.mxu0
        %v654 = vadd.f32 0.0, %v653
        %v655 = vpop.f32.mrf.mxu0
        %v656 = vadd.f32 0.0, %v655
        %657 = vdwg.mxu0
        %v658 = vsel %vm553, %v492, 0
        %v660 = vsel %vm553, %v493, 0
        %v662 = vsel %vm553, %v494, 0
        %v664 = vsel %vm553, %v495, 0
        %v667 = vsel %vm562, %v516, 0
        %v670 = vsel %vm562, %v517, 0
        %672 = vmatprep.subr.mxu0 0.0
        %673 = vmatpush1.msra.mxu0 0.0
        %674 = vmatprep.subr.mxu0 0.0
        %675 = vmatpush1.msra.mxu0 0.0
        %676 = vmatprep.subr.mxu0 0.0
        %677 = vmatpush1.msra.mxu0 0.0
        %678 = vmatprep.subr.mxu0 0.0
        %679 = vmatpush1.msra.mxu0 0.0
        %680 = vmatprep.subr.mxu0 0.0
        %681 = vmatpush1.msra.mxu0 0.0
        %682 = vmatprep.subr.mxu0 %v670
        %683 = vmatpush1.msra.mxu0 %v667
        %684 = vmatprep.subr.mxu0 %v515
        %685 = vmatpush1.msra.mxu0 %v514
        %686 = vmatprep.subr.mxu0 %v513
        %687 = vmatpush1.msra.mxu0 %v512
        %688 = vmatprep.subr.mxu0 %v511
        %689 = vmatpush1.msra.mxu0 %v510
        %690 = vmatprep.subr.mxu0 %v509
        %691 = vmatpush1.msra.mxu0 %v508
        %692 = vmatprep.subr.mxu0 %v507
        %693 = vmatpush1.msra.mxu0 %v506
        %694 = vmatprep.subr.mxu0 %v505
        %695 = vmatpush1.msra.mxu0 %v504
        %696 = vmatprep.subr.mxu0 %v503
        %697 = vmatpush1.msra.mxu0 %v502
        %698 = vmatprep.subr.mxu0 %v501
        %699 = vmatpush1.msra.mxu0 %v500
        %700 = vmatprep.subr.mxu0 %v499
        %701 = vmatpush1.msra.mxu0 %v498
        %702 = vmatprep.subr.mxu0 %v497
        %703 = vmatpush1.msra.mxu0 %v496
        %704 = vmatprep.subr.mxu0 0.0
        %705 = vmatpush2.msra.mxu0 0.0
        %706 = vmatprep.subr.mxu0 0.0
        %707 = vmatpush2.msra.mxu0 0.0
        %708 = vmatprep.subr.mxu0 0.0
        %709 = vmatpush2.msra.mxu0 0.0
        %710 = vmatprep.subr.mxu0 0.0
        %711 = vmatpush2.msra.mxu0 0.0
        %712 = vmatprep.subr.mxu0 0.0
        %713 = vmatpush2.msra.mxu0 0.0
        %714 = vmatprep.subr.mxu0 0.0
        %715 = vmatpush2.msra.mxu0 0.0
        %716 = vmatprep.subr.mxu0 0.0
        %717 = vmatpush2.msra.mxu0 0.0
        %718 = vmatprep.subr.mxu0 0.0
        %719 = vmatpush2.msra.mxu0 0.0
        %720 = vmatprep.subr.mxu0 0.0
        %721 = vmatpush2.msra.mxu0 0.0
        %722 = vmatprep.subr.mxu0 0.0
        %723 = vmatpush2.msra.mxu0 0.0
        %724 = vmatprep.subr.mxu0 0.0
        %725 = vmatpush2.msra.mxu0 0.0
        %726 = vmatprep.subr.mxu0 0.0
        %727 = vmatpush2.msra.mxu0 0.0
        %728 = vmatprep.subr.mxu0 0.0
        %729 = vmatpush2.msra.mxu0 0.0
        %730 = vmatprep.subr.mxu0 0.0
        %731 = vmatpush2.msra.mxu0 0.0
        %732 = vmatprep.subr.mxu0 0.0
        %733 = vmatpush2.msra.mxu0 0.0
        %734 = vmatprep.subr.mxu0 0.0
        %735 = vmatpush2.msra.mxu0 0.0
        %736 = vmatprep.mubr.f32.mxu0 0.0
        %737 = vmatmul.mubr.f32.gmra.mxu0 %v658
        %v738 = vpop.f32.mrf.mxu0
        %v739 = vadd.f32 %v636, %v738
        %v740 = vpop.f32.mrf.mxu0
        %v741 = vadd.f32 %v638, %v740
        %742 = vmatprep.mubr.f32.mxu0 0.0
        %743 = vmatmul.mubr.f32.gmra.mxu0 %v660
        %v744 = vpop.f32.mrf.mxu0
        %v745 = vadd.f32 %v642, %v744
        %v746 = vpop.f32.mrf.mxu0
        %v747 = vadd.f32 %v644, %v746
        %748 = vmatprep.mubr.f32.mxu0 0.0
        %749 = vmatmul.mubr.f32.gmra.mxu0 %v662
        %v750 = vpop.f32.mrf.mxu0
        %v751 = vadd.f32 %v648, %v750
        %v752 = vpop.f32.mrf.mxu0
        %v753 = vadd.f32 %v650, %v752
        %754 = vmatprep.mubr.f32.mxu0 0.0
        %755 = vmatmul.mubr.f32.gmra.mxu0 %v664
        %v756 = vpop.f32.mrf.mxu0
        %v757 = vadd.f32 %v654, %v756
        %v758 = vpop.f32.mrf.mxu0
        %v759 = vadd.f32 %v656, %v758
        %760 = vdwg.mxu0
        %s761 = scalar_lea.vmem %s1, 352
        %v762 = vld [vmem:[%s761] sm:$0xff]
        %v763 = vld [vmem:[%s761 + $0x8] sm:$0xff]
        %v764 = vld [vmem:[%s761 + $0x10] sm:$0xff]
        %v765 = vld [vmem:[%s761 + $0x18] sm:$0xff]
        %v766 = vld [vmem:[%s761 + $0x20] sm:$0xff]
        %v767 = vld [vmem:[%s761 + $0x28] sm:$0xff]
        %v768 = vld [vmem:[%s761 + $0x30] sm:$0xff]
        %v769 = vld [vmem:[%s761 + $0x38] sm:$0xff]
        %v770 = vld [vmem:[%s761 + $0x40] sm:$0xff]
        %v771 = vld [vmem:[%s761 + $0x48] sm:$0xff]
        %v772 = vld [vmem:[%s761 + $0x50] sm:$0xff]
        %v773 = vld [vmem:[%s761 + $0x58] sm:$0xff]
        %v774 = vld [vmem:[%s761 + $0x60] sm:$0xff]
        %v775 = vld [vmem:[%s761 + $0x68] sm:$0xff]
        %v776 = vld [vmem:[%s761 + $0x70] sm:$0xff]
        %v777 = vld [vmem:[%s761 + $0x78] sm:$0xff]
        %v778 = vld [vmem:[%s761 + $0x80] sm:$0xff]
        %v779 = vld [vmem:[%s761 + $0x88] sm:$0xff]
        %v780 = vld [vmem:[%s761 + $0x90] sm:$0xff]
        %v781 = vld [vmem:[%s761 + $0x98] sm:$0xff]
        %v782 = vld [vmem:[%s761 + $0xa0] sm:$0xf]
        %v783 = vld [vmem:[%s761 + $0xa8] sm:$0xf]
        %784 = vrot.lane.b32.xlu0 %v492, 122
        %v785 = vpop.permute.xlu0 %784
        %786 = vrot.lane.b32.xlu0 %v493, 122
        %v787 = vpop.permute.xlu0 %786
        %788 = vrot.lane.b32.xlu0 %v494, 122
        %v789 = vpop.permute.xlu0 %788
        %790 = vrot.lane.b32.xlu0 %v495, 122
        %v791 = vpop.permute.xlu0 %790
        %v792 = vsel %vm553, %v785, 0
        %v794 = vsel %vm553, %v787, 0
        %v796 = vsel %vm553, %v789, 0
        %v798 = vsel %vm553, %v791, 0
        %v801 = vsel %vm562, %v782, 0
        %v804 = vsel %vm562, %v783, 0
        %806 = vmatprep.subr.mxu0 0.0
        %807 = vmatpush1.msra.mxu0 0.0
        %808 = vmatprep.subr.mxu0 0.0
        %809 = vmatpush1.msra.mxu0 0.0
        %810 = vmatprep.subr.mxu0 0.0
        %811 = vmatpush1.msra.mxu0 0.0
        %812 = vmatprep.subr.mxu0 0.0
        %813 = vmatpush1.msra.mxu0 0.0
        %814 = vmatprep.subr.mxu0 0.0
        %815 = vmatpush1.msra.mxu0 0.0
        %816 = vmatprep.subr.mxu0 %v804
        %817 = vmatpush1.msra.mxu0 %v801
        %818 = vmatprep.subr.mxu0 %v781
        %819 = vmatpush1.msra.mxu0 %v780
        %820 = vmatprep.subr.mxu0 %v779
        %821 = vmatpush1.msra.mxu0 %v778
        %822 = vmatprep.subr.mxu0 %v777
        %823 = vmatpush1.msra.mxu0 %v776
        %824 = vmatprep.subr.mxu0 %v775
        %825 = vmatpush1.msra.mxu0 %v774
        %826 = vmatprep.subr.mxu0 %v773
        %827 = vmatpush1.msra.mxu0 %v772
        %828 = vmatprep.subr.mxu0 %v771
        %829 = vmatpush1.msra.mxu0 %v770
        %830 = vmatprep.subr.mxu0 %v769
        %831 = vmatpush1.msra.mxu0 %v768
        %832 = vmatprep.subr.mxu0 %v767
        %833 = vmatpush1.msra.mxu0 %v766
        %834 = vmatprep.subr.mxu0 %v765
        %835 = vmatpush1.msra.mxu0 %v764
        %836 = vmatprep.subr.mxu0 %v763
        %837 = vmatpush1.msra.mxu0 %v762
        %838 = vmatprep.subr.mxu0 0.0
        %839 = vmatpush2.msra.mxu0 0.0
        %840 = vmatprep.subr.mxu0 0.0
        %841 = vmatpush2.msra.mxu0 0.0
        %842 = vmatprep.subr.mxu0 0.0
        %843 = vmatpush2.msra.mxu0 0.0
        %844 = vmatprep.subr.mxu0 0.0
        %845 = vmatpush2.msra.mxu0 0.0
        %846 = vmatprep.subr.mxu0 0.0
        %847 = vmatpush2.msra.mxu0 0.0
        %848 = vmatprep.subr.mxu0 0.0
        %849 = vmatpush2.msra.mxu0 0.0
        %850 = vmatprep.subr.mxu0 0.0
        %851 = vmatpush2.msra.mxu0 0.0
        %852 = vmatprep.subr.mxu0 0.0
        %853 = vmatpush2.msra.mxu0 0.0
        %854 = vmatprep.subr.mxu0 0.0
        %855 = vmatpush2.msra.mxu0 0.0
        %856 = vmatprep.subr.mxu0 0.0
        %857 = vmatpush2.msra.mxu0 0.0
        %858 = vmatprep.subr.mxu0 0.0
        %859 = vmatpush2.msra.mxu0 0.0
        %860 = vmatprep.subr.mxu0 0.0
        %861 = vmatpush2.msra.mxu0 0.0
        %862 = vmatprep.subr.mxu0 0.0
        %863 = vmatpush2.msra.mxu0 0.0
        %864 = vmatprep.subr.mxu0 0.0
        %865 = vmatpush2.msra.mxu0 0.0
        %866 = vmatprep.subr.mxu0 0.0
        %867 = vmatpush2.msra.mxu0 0.0
        %868 = vmatprep.subr.mxu0 0.0
        %869 = vmatpush2.msra.mxu0 0.0
        %870 = vmatprep.mubr.f32.mxu0 0.0
        %871 = vmatmul.mubr.f32.gmra.mxu0 %v792
        %v872 = vpop.f32.mrf.mxu0
        %v873 = vadd.f32 0.0, %v872
        %v874 = vpop.f32.mrf.mxu0
        %v875 = vadd.f32 0.0, %v874
        %876 = vmatprep.mubr.f32.mxu0 0.0
        %877 = vmatmul.mubr.f32.gmra.mxu0 %v794
        %v878 = vpop.f32.mrf.mxu0
        %v879 = vadd.f32 0.0, %v878
        %v880 = vpop.f32.mrf.mxu0
        %v881 = vadd.f32 0.0, %v880
        %882 = vmatprep.mubr.f32.mxu0 0.0
        %883 = vmatmul.mubr.f32.gmra.mxu0 %v796
        %v884 = vpop.f32.mrf.mxu0
        %v885 = vadd.f32 0.0, %v884
        %v886 = vpop.f32.mrf.mxu0
        %v887 = vadd.f32 0.0, %v886
        %888 = vmatprep.mubr.f32.mxu0 0.0
        %889 = vmatmul.mubr.f32.gmra.mxu0 %v798
        %v890 = vpop.f32.mrf.mxu0
        %v891 = vadd.f32 0.0, %v890
        %v892 = vpop.f32.mrf.mxu0
        %v893 = vadd.f32 0.0, %v892
        %894 = vdwg.mxu0
        %v895 = vadd.f32 %v739, %v873
        %v896 = vadd.f32 %v741, %v875
        %v897 = vadd.f32 %v745, %v879
        %v898 = vadd.f32 %v747, %v881
        %v899 = vadd.f32 %v751, %v885
        %v900 = vadd.f32 %v753, %v887
        %v901 = vadd.f32 %v757, %v891
        %v902 = vadd.f32 %v759, %v893
        %s903 = scalar_lea.vmem %s1, 528
        %v904 = vld [vmem:[%s903] sm:$0xff]
        %v905 = vld [vmem:[%s903 + $0x8] sm:$0xff]
        %v906 = vld [vmem:[%s903 + $0x10] sm:$0xff]
        %v907 = vld [vmem:[%s903 + $0x18] sm:$0xff]
        %v908 = vld [vmem:[%s903 + $0x20] sm:$0xff]
        %v909 = vld [vmem:[%s903 + $0x28] sm:$0xff]
        %v910 = vld [vmem:[%s903 + $0x30] sm:$0xff]
        %v911 = vld [vmem:[%s903 + $0x38] sm:$0xff]
        %v912 = vld [vmem:[%s903 + $0x40] sm:$0xff]
        %v913 = vld [vmem:[%s903 + $0x48] sm:$0xff]
        %v914 = vld [vmem:[%s903 + $0x50] sm:$0xff]
        %v915 = vld [vmem:[%s903 + $0x58] sm:$0xff]
        %v916 = vld [vmem:[%s903 + $0x60] sm:$0xff]
        %v917 = vld [vmem:[%s903 + $0x68] sm:$0xff]
        %v918 = vld [vmem:[%s903 + $0x70] sm:$0xff]
        %v919 = vld [vmem:[%s903 + $0x78] sm:$0xff]
        %v920 = vld [vmem:[%s903 + $0x80] sm:$0xff]
        %v921 = vld [vmem:[%s903 + $0x88] sm:$0xff]
        %v922 = vld [vmem:[%s903 + $0x90] sm:$0xff]
        %v923 = vld [vmem:[%s903 + $0x98] sm:$0xff]
        %v924 = vld [vmem:[%s903 + $0xa0] sm:$0xf]
        %v925 = vld [vmem:[%s903 + $0xa8] sm:$0xf]
        %926 = vrot.lane.b32.xlu0 %v492, 119
        %v927 = vpop.permute.xlu0 %926
        %928 = vrot.lane.b32.xlu0 %v493, 119
        %v929 = vpop.permute.xlu0 %928
        %930 = vrot.lane.b32.xlu0 %v494, 119
        %v931 = vpop.permute.xlu0 %930
        %932 = vrot.lane.b32.xlu0 %v495, 119
        %v933 = vpop.permute.xlu0 %932
        %v934 = vsel %vm553, %v927, 0
        %v936 = vsel %vm553, %v929, 0
        %v938 = vsel %vm553, %v931, 0
        %v940 = vsel %vm553, %v933, 0
        %v943 = vsel %vm562, %v924, 0
        %v946 = vsel %vm562, %v925, 0
        %948 = vmatprep.subr.mxu0 0.0
        %949 = vmatpush1.msra.mxu0 0.0
        %950 = vmatprep.subr.mxu0 0.0
        %951 = vmatpush1.msra.mxu0 0.0
        %952 = vmatprep.subr.mxu0 0.0
        %953 = vmatpush1.msra.mxu0 0.0
        %954 = vmatprep.subr.mxu0 0.0
        %955 = vmatpush1.msra.mxu0 0.0
        %956 = vmatprep.subr.mxu0 0.0
        %957 = vmatpush1.msra.mxu0 0.0
        %958 = vmatprep.subr.mxu0 %v946
        %959 = vmatpush1.msra.mxu0 %v943
        %960 = vmatprep.subr.mxu0 %v923
        %961 = vmatpush1.msra.mxu0 %v922
        %962 = vmatprep.subr.mxu0 %v921
        %963 = vmatpush1.msra.mxu0 %v920
        %964 = vmatprep.subr.mxu0 %v919
        %965 = vmatpush1.msra.mxu0 %v918
        %966 = vmatprep.subr.mxu0 %v917
        %967 = vmatpush1.msra.mxu0 %v916
        %968 = vmatprep.subr.mxu0 %v915
        %969 = vmatpush1.msra.mxu0 %v914
        %970 = vmatprep.subr.mxu0 %v913
        %971 = vmatpush1.msra.mxu0 %v912
        %972 = vmatprep.subr.mxu0 %v911
        %973 = vmatpush1.msra.mxu0 %v910
        %974 = vmatprep.subr.mxu0 %v909
        %975 = vmatpush1.msra.mxu0 %v908
        %976 = vmatprep.subr.mxu0 %v907
        %977 = vmatpush1.msra.mxu0 %v906
        %978 = vmatprep.subr.mxu0 %v905
        %979 = vmatpush1.msra.mxu0 %v904
        %980 = vmatprep.subr.mxu0 0.0
        %981 = vmatpush2.msra.mxu0 0.0
        %982 = vmatprep.subr.mxu0 0.0
        %983 = vmatpush2.msra.mxu0 0.0
        %984 = vmatprep.subr.mxu0 0.0
        %985 = vmatpush2.msra.mxu0 0.0
        %986 = vmatprep.subr.mxu0 0.0
        %987 = vmatpush2.msra.mxu0 0.0
        %988 = vmatprep.subr.mxu0 0.0
        %989 = vmatpush2.msra.mxu0 0.0
        %990 = vmatprep.subr.mxu0 0.0
        %991 = vmatpush2.msra.mxu0 0.0
        %992 = vmatprep.subr.mxu0 0.0
        %993 = vmatpush2.msra.mxu0 0.0
        %994 = vmatprep.subr.mxu0 0.0
        %995 = vmatpush2.msra.mxu0 0.0
        %996 = vmatprep.subr.mxu0 0.0
        %997 = vmatpush2.msra.mxu0 0.0
        %998 = vmatprep.subr.mxu0 0.0
        %999 = vmatpush2.msra.mxu0 0.0
        %1000 = vmatprep.subr.mxu0 0.0
        %1001 = vmatpush2.msra.mxu0 0.0
        %1002 = vmatprep.subr.mxu0 0.0
        %1003 = vmatpush2.msra.mxu0 0.0
        %1004 = vmatprep.subr.mxu0 0.0
        %1005 = vmatpush2.msra.mxu0 0.0
        %1006 = vmatprep.subr.mxu0 0.0
        %1007 = vmatpush2.msra.mxu0 0.0
        %1008 = vmatprep.subr.mxu0 0.0
        %1009 = vmatpush2.msra.mxu0 0.0
        %1010 = vmatprep.subr.mxu0 0.0
        %1011 = vmatpush2.msra.mxu0 0.0
        %1012 = vmatprep.mubr.f32.mxu0 0.0
        %1013 = vmatmul.mubr.f32.gmra.mxu0 %v934
        %v1014 = vpop.f32.mrf.mxu0
        %v1015 = vadd.f32 0.0, %v1014
        %v1016 = vpop.f32.mrf.mxu0
        %v1017 = vadd.f32 0.0, %v1016
        %1018 = vmatprep.mubr.f32.mxu0 0.0
        %1019 = vmatmul.mubr.f32.gmra.mxu0 %v936
        %v1020 = vpop.f32.mrf.mxu0
        %v1021 = vadd.f32 0.0, %v1020
        %v1022 = vpop.f32.mrf.mxu0
        %v1023 = vadd.f32 0.0, %v1022
        %1024 = vmatprep.mubr.f32.mxu0 0.0
        %1025 = vmatmul.mubr.f32.gmra.mxu0 %v938
        %v1026 = vpop.f32.mrf.mxu0
        %v1027 = vadd.f32 0.0, %v1026
        %v1028 = vpop.f32.mrf.mxu0
        %v1029 = vadd.f32 0.0, %v1028
        %1030 = vmatprep.mubr.f32.mxu0 0.0
        %1031 = vmatmul.mubr.f32.gmra.mxu0 %v940
        %v1032 = vpop.f32.mrf.mxu0
        %v1033 = vadd.f32 0.0, %v1032
        %v1034 = vpop.f32.mrf.mxu0
        %v1035 = vadd.f32 0.0, %v1034
        %1036 = vdwg.mxu0
        %v1037 = vadd.f32 %v895, %v1015
        %v1038 = vadd.f32 %v896, %v1017
        %v1039 = vadd.f32 %v897, %v1021
        %v1040 = vadd.f32 %v898, %v1023
        %v1041 = vadd.f32 %v899, %v1027
        %v1042 = vadd.f32 %v900, %v1029
        %v1043 = vadd.f32 %v901, %v1033
        %v1044 = vadd.f32 %v902, %v1035
        %s1045 = scalar_lea.vmem %s1, 704
        %v1046 = vld [vmem:[%s1045] sm:$0xff]
        %v1047 = vld [vmem:[%s1045 + $0x8] sm:$0xff]
        %v1048 = vld [vmem:[%s1045 + $0x10] sm:$0xff]
        %v1049 = vld [vmem:[%s1045 + $0x18] sm:$0xff]
        %v1050 = vld [vmem:[%s1045 + $0x20] sm:$0xff]
        %v1051 = vld [vmem:[%s1045 + $0x28] sm:$0xff]
        %v1052 = vld [vmem:[%s1045 + $0x30] sm:$0xff]
        %v1053 = vld [vmem:[%s1045 + $0x38] sm:$0xff]
        %v1054 = vld [vmem:[%s1045 + $0x40] sm:$0xff]
        %v1055 = vld [vmem:[%s1045 + $0x48] sm:$0xff]
        %v1056 = vld [vmem:[%s1045 + $0x50] sm:$0xff]
        %v1057 = vld [vmem:[%s1045 + $0x58] sm:$0xff]
        %v1058 = vld [vmem:[%s1045 + $0x60] sm:$0xff]
        %v1059 = vld [vmem:[%s1045 + $0x68] sm:$0xff]
        %v1060 = vld [vmem:[%s1045 + $0x70] sm:$0xff]
        %v1061 = vld [vmem:[%s1045 + $0x78] sm:$0xff]
        %v1062 = vld [vmem:[%s1045 + $0x80] sm:$0xff]
        %v1063 = vld [vmem:[%s1045 + $0x88] sm:$0xff]
        %v1064 = vld [vmem:[%s1045 + $0x90] sm:$0xff]
        %v1065 = vld [vmem:[%s1045 + $0x98] sm:$0xff]
        %v1066 = vld [vmem:[%s1045 + $0xa0] sm:$0xf]
        %v1067 = vld [vmem:[%s1045 + $0xa8] sm:$0xf]
        %1068 = vrot.lane.b32.xlu0 %v492, 116
        %v1069 = vpop.permute.xlu0 %1068
        %1070 = vrot.lane.b32.xlu0 %v493, 116
        %v1071 = vpop.permute.xlu0 %1070
        %1072 = vrot.lane.b32.xlu0 %v494, 116
        %v1073 = vpop.permute.xlu0 %1072
        %1074 = vrot.lane.b32.xlu0 %v495, 116
        %v1075 = vpop.permute.xlu0 %1074
        %v1076 = vsel %vm553, %v1069, 0
        %v1078 = vsel %vm553, %v1071, 0
        %v1080 = vsel %vm553, %v1073, 0
        %v1082 = vsel %vm553, %v1075, 0
        %v1085 = vsel %vm562, %v1066, 0
        %v1088 = vsel %vm562, %v1067, 0
        %1090 = vmatprep.subr.mxu0 0.0
        %1091 = vmatpush1.msra.mxu0 0.0
        %1092 = vmatprep.subr.mxu0 0.0
        %1093 = vmatpush1.msra.mxu0 0.0
        %1094 = vmatprep.subr.mxu0 0.0
        %1095 = vmatpush1.msra.mxu0 0.0
        %1096 = vmatprep.subr.mxu0 0.0
        %1097 = vmatpush1.msra.mxu0 0.0
        %1098 = vmatprep.subr.mxu0 0.0
        %1099 = vmatpush1.msra.mxu0 0.0
        %1100 = vmatprep.subr.mxu0 %v1088
        %1101 = vmatpush1.msra.mxu0 %v1085
        %1102 = vmatprep.subr.mxu0 %v1065
        %1103 = vmatpush1.msra.mxu0 %v1064
        %1104 = vmatprep.subr.mxu0 %v1063
        %1105 = vmatpush1.msra.mxu0 %v1062
        %1106 = vmatprep.subr.mxu0 %v1061
        %1107 = vmatpush1.msra.mxu0 %v1060
        %1108 = vmatprep.subr.mxu0 %v1059
        %1109 = vmatpush1.msra.mxu0 %v1058
        %1110 = vmatprep.subr.mxu0 %v1057
        %1111 = vmatpush1.msra.mxu0 %v1056
        %1112 = vmatprep.subr.mxu0 %v1055
        %1113 = vmatpush1.msra.mxu0 %v1054
        %1114 = vmatprep.subr.mxu0 %v1053
        %1115 = vmatpush1.msra.mxu0 %v1052
        %1116 = vmatprep.subr.mxu0 %v1051
        %1117 = vmatpush1.msra.mxu0 %v1050
        %1118 = vmatprep.subr.mxu0 %v1049
        %1119 = vmatpush1.msra.mxu0 %v1048
        %1120 = vmatprep.subr.mxu0 %v1047
        %1121 = vmatpush1.msra.mxu0 %v1046
        %1122 = vmatprep.subr.mxu0 0.0
        %1123 = vmatpush2.msra.mxu0 0.0
        %1124 = vmatprep.subr.mxu0 0.0
        %1125 = vmatpush2.msra.mxu0 0.0
        %1126 = vmatprep.subr.mxu0 0.0
        %1127 = vmatpush2.msra.mxu0 0.0
        %1128 = vmatprep.subr.mxu0 0.0
        %1129 = vmatpush2.msra.mxu0 0.0
        %1130 = vmatprep.subr.mxu0 0.0
        %1131 = vmatpush2.msra.mxu0 0.0
        %1132 = vmatprep.subr.mxu0 0.0
        %1133 = vmatpush2.msra.mxu0 0.0
        %1134 = vmatprep.subr.mxu0 0.0
        %1135 = vmatpush2.msra.mxu0 0.0
        %1136 = vmatprep.subr.mxu0 0.0
        %1137 = vmatpush2.msra.mxu0 0.0
        %1138 = vmatprep.subr.mxu0 0.0
        %1139 = vmatpush2.msra.mxu0 0.0
        %1140 = vmatprep.subr.mxu0 0.0
        %1141 = vmatpush2.msra.mxu0 0.0
        %1142 = vmatprep.subr.mxu0 0.0
        %1143 = vmatpush2.msra.mxu0 0.0
        %1144 = vmatprep.subr.mxu0 0.0
        %1145 = vmatpush2.msra.mxu0 0.0
        %1146 = vmatprep.subr.mxu0 0.0
        %1147 = vmatpush2.msra.mxu0 0.0
        %1148 = vmatprep.subr.mxu0 0.0
        %1149 = vmatpush2.msra.mxu0 0.0
        %1150 = vmatprep.subr.mxu0 0.0
        %1151 = vmatpush2.msra.mxu0 0.0
        %1152 = vmatprep.subr.mxu0 0.0
        %1153 = vmatpush2.msra.mxu0 0.0
        %1154 = vmatprep.mubr.f32.mxu0 0.0
        %1155 = vmatmul.mubr.f32.gmra.mxu0 %v1076
        %v1156 = vpop.f32.mrf.mxu0
        %v1157 = vadd.f32 0.0, %v1156
        %v1158 = vpop.f32.mrf.mxu0
        %v1159 = vadd.f32 0.0, %v1158
        %1160 = vmatprep.mubr.f32.mxu0 0.0
        %1161 = vmatmul.mubr.f32.gmra.mxu0 %v1078
        %v1162 = vpop.f32.mrf.mxu0
        %v1163 = vadd.f32 0.0, %v1162
        %v1164 = vpop.f32.mrf.mxu0
        %v1165 = vadd.f32 0.0, %v1164
        %1166 = vmatprep.mubr.f32.mxu0 0.0
        %1167 = vmatmul.mubr.f32.gmra.mxu0 %v1080
        %v1168 = vpop.f32.mrf.mxu0
        %v1169 = vadd.f32 0.0, %v1168
        %v1170 = vpop.f32.mrf.mxu0
        %v1171 = vadd.f32 0.0, %v1170
        %1172 = vmatprep.mubr.f32.mxu0 0.0
        %1173 = vmatmul.mubr.f32.gmra.mxu0 %v1082
        %v1174 = vpop.f32.mrf.mxu0
        %v1175 = vadd.f32 0.0, %v1174
        %v1176 = vpop.f32.mrf.mxu0
        %v1177 = vadd.f32 0.0, %v1176
        %1178 = vdwg.mxu0
        %v1179 = vadd.f32 %v1037, %v1157
        %v1180 = vadd.f32 %v1038, %v1159
        %v1181 = vadd.f32 %v1039, %v1163
        %v1182 = vadd.f32 %v1040, %v1165
        %v1183 = vadd.f32 %v1041, %v1169
        %v1184 = vadd.f32 %v1042, %v1171
        %v1185 = vadd.f32 %v1043, %v1175
        %v1186 = vadd.f32 %v1044, %v1177
        %s1187 = scalar_lea.vmem %s1, 880
        %v1188 = vld [vmem:[%s1187] sm:$0xff]
        %v1189 = vld [vmem:[%s1187 + $0x8] sm:$0xff]
        %v1190 = vld [vmem:[%s1187 + $0x10] sm:$0xff]
        %v1191 = vld [vmem:[%s1187 + $0x18] sm:$0xff]
        %v1192 = vld [vmem:[%s1187 + $0x20] sm:$0xff]
        %v1193 = vld [vmem:[%s1187 + $0x28] sm:$0xff]
        %v1194 = vld [vmem:[%s1187 + $0x30] sm:$0xff]
        %v1195 = vld [vmem:[%s1187 + $0x38] sm:$0xff]
        %v1196 = vld [vmem:[%s1187 + $0x40] sm:$0xff]
        %v1197 = vld [vmem:[%s1187 + $0x48] sm:$0xff]
        %v1198 = vld [vmem:[%s1187 + $0x50] sm:$0xff]
        %v1199 = vld [vmem:[%s1187 + $0x58] sm:$0xff]
        %v1200 = vld [vmem:[%s1187 + $0x60] sm:$0xff]
        %v1201 = vld [vmem:[%s1187 + $0x68] sm:$0xff]
        %v1202 = vld [vmem:[%s1187 + $0x70] sm:$0xff]
        %v1203 = vld [vmem:[%s1187 + $0x78] sm:$0xff]
        %v1204 = vld [vmem:[%s1187 + $0x80] sm:$0xff]
        %v1205 = vld [vmem:[%s1187 + $0x88] sm:$0xff]
        %v1206 = vld [vmem:[%s1187 + $0x90] sm:$0xff]
        %v1207 = vld [vmem:[%s1187 + $0x98] sm:$0xff]
        %v1208 = vld [vmem:[%s1187 + $0xa0] sm:$0xf]
        %v1209 = vld [vmem:[%s1187 + $0xa8] sm:$0xf]
        %vm1210 = vcmask 1046528
        %v1211 = vrot.slane %v492, 1
        %v1212 = vrot.slane %v493, 1
        %v1213 = vsel %vm1210, %v1211, %v1212
        %v1214 = vrot.slane %v494, 1
        %v1215 = vsel %vm1210, %v1212, %v1214
        %v1216 = vrot.slane %v495, 1
        %v1217 = vsel %vm1210, %v1214, %v1216
        %v1218 = vsel %vm553, %v1213, 0
        %v1220 = vsel %vm553, %v1215, 0
        %v1222 = vsel %vm553, %v1217, 0
        %v1224 = vsel %vm553, %v1216, 0
        %v1227 = vsel %vm562, %v1208, 0
        %v1230 = vsel %vm562, %v1209, 0
        %1232 = vmatprep.subr.mxu0 0.0
        %1233 = vmatpush1.msra.mxu0 0.0
        %1234 = vmatprep.subr.mxu0 0.0
        %1235 = vmatpush1.msra.mxu0 0.0
        %1236 = vmatprep.subr.mxu0 0.0
        %1237 = vmatpush1.msra.mxu0 0.0
        %1238 = vmatprep.subr.mxu0 0.0
        %1239 = vmatpush1.msra.mxu0 0.0
        %1240 = vmatprep.subr.mxu0 0.0
        %1241 = vmatpush1.msra.mxu0 0.0
        %1242 = vmatprep.subr.mxu0 %v1230
        %1243 = vmatpush1.msra.mxu0 %v1227
        %1244 = vmatprep.subr.mxu0 %v1207
        %1245 = vmatpush1.msra.mxu0 %v1206
        %1246 = vmatprep.subr.mxu0 %v1205
        %1247 = vmatpush1.msra.mxu0 %v1204
        %1248 = vmatprep.subr.mxu0 %v1203
        %1249 = vmatpush1.msra.mxu0 %v1202
        %1250 = vmatprep.subr.mxu0 %v1201
        %1251 = vmatpush1.msra.mxu0 %v1200
        %1252 = vmatprep.subr.mxu0 %v1199
        %1253 = vmatpush1.msra.mxu0 %v1198
        %1254 = vmatprep.subr.mxu0 %v1197
        %1255 = vmatpush1.msra.mxu0 %v1196
        %1256 = vmatprep.subr.mxu0 %v1195
        %1257 = vmatpush1.msra.mxu0 %v1194
        %1258 = vmatprep.subr.mxu0 %v1193
        %1259 = vmatpush1.msra.mxu0 %v1192
        %1260 = vmatprep.subr.mxu0 %v1191
        %1261 = vmatpush1.msra.mxu0 %v1190
        %1262 = vmatprep.subr.mxu0 %v1189
        %1263 = vmatpush1.msra.mxu0 %v1188
        %1264 = vmatprep.subr.mxu0 0.0
        %1265 = vmatpush2.msra.mxu0 0.0
        %1266 = vmatprep.subr.mxu0 0.0
        %1267 = vmatpush2.msra.mxu0 0.0
        %1268 = vmatprep.subr.mxu0 0.0
        %1269 = vmatpush2.msra.mxu0 0.0
        %1270 = vmatprep.subr.mxu0 0.0
        %1271 = vmatpush2.msra.mxu0 0.0
        %1272 = vmatprep.subr.mxu0 0.0
        %1273 = vmatpush2.msra.mxu0 0.0
        %1274 = vmatprep.subr.mxu0 0.0
        %1275 = vmatpush2.msra.mxu0 0.0
        %1276 = vmatprep.subr.mxu0 0.0
        %1277 = vmatpush2.msra.mxu0 0.0
        %1278 = vmatprep.subr.mxu0 0.0
        %1279 = vmatpush2.msra.mxu0 0.0
        %1280 = vmatprep.subr.mxu0 0.0
        %1281 = vmatpush2.msra.mxu0 0.0
        %1282 = vmatprep.subr.mxu0 0.0
        %1283 = vmatpush2.msra.mxu0 0.0
        %1284 = vmatprep.subr.mxu0 0.0
        %1285 = vmatpush2.msra.mxu0 0.0
        %1286 = vmatprep.subr.mxu0 0.0
        %1287 = vmatpush2.msra.mxu0 0.0
        %1288 = vmatprep.subr.mxu0 0.0
        %1289 = vmatpush2.msra.mxu0 0.0
        %1290 = vmatprep.subr.mxu0 0.0
        %1291 = vmatpush2.msra.mxu0 0.0
        %1292 = vmatprep.subr.mxu0 0.0
        %1293 = vmatpush2.msra.mxu0 0.0
        %1294 = vmatprep.subr.mxu0 0.0
        %1295 = vmatpush2.msra.mxu0 0.0
        %1296 = vmatprep.mubr.f32.mxu0 0.0
        %1297 = vmatmul.mubr.f32.gmra.mxu0 %v1218
        %v1298 = vpop.f32.mrf.mxu0
        %v1299 = vadd.f32 0.0, %v1298
        %v1300 = vpop.f32.mrf.mxu0
        %v1301 = vadd.f32 0.0, %v1300
        %1302 = vmatprep.mubr.f32.mxu0 0.0
        %1303 = vmatmul.mubr.f32.gmra.mxu0 %v1220
        %v1304 = vpop.f32.mrf.mxu0
        %v1305 = vadd.f32 0.0, %v1304
        %v1306 = vpop.f32.mrf.mxu0
        %v1307 = vadd.f32 0.0, %v1306
        %1308 = vmatprep.mubr.f32.mxu0 0.0
        %1309 = vmatmul.mubr.f32.gmra.mxu0 %v1222
        %v1310 = vpop.f32.mrf.mxu0
        %v1311 = vadd.f32 0.0, %v1310
        %v1312 = vpop.f32.mrf.mxu0
        %v1313 = vadd.f32 0.0, %v1312
        %1314 = vmatprep.mubr.f32.mxu0 0.0
        %1315 = vmatmul.mubr.f32.gmra.mxu0 %v1224
        %v1316 = vpop.f32.mrf.mxu0
        %v1317 = vadd.f32 0.0, %v1316
        %v1318 = vpop.f32.mrf.mxu0
        %v1319 = vadd.f32 0.0, %v1318
        %1320 = vdwg.mxu0
        %v1321 = vadd.f32 %v1179, %v1299
        %v1322 = vadd.f32 %v1180, %v1301
        %v1323 = vadd.f32 %v1181, %v1305
        %v1324 = vadd.f32 %v1182, %v1307
        %v1325 = vadd.f32 %v1183, %v1311
        %v1326 = vadd.f32 %v1184, %v1313
        %v1327 = vadd.f32 %v1185, %v1317
        %v1328 = vadd.f32 %v1186, %v1319
        %s1329 = scalar_lea.vmem %s1, 1056
        %v1330 = vld [vmem:[%s1329] sm:$0xff]
        %v1331 = vld [vmem:[%s1329 + $0x8] sm:$0xff]
        %v1332 = vld [vmem:[%s1329 + $0x10] sm:$0xff]
        %v1333 = vld [vmem:[%s1329 + $0x18] sm:$0xff]
        %v1334 = vld [vmem:[%s1329 + $0x20] sm:$0xff]
        %v1335 = vld [vmem:[%s1329 + $0x28] sm:$0xff]
        %v1336 = vld [vmem:[%s1329 + $0x30] sm:$0xff]
        %v1337 = vld [vmem:[%s1329 + $0x38] sm:$0xff]
        %v1338 = vld [vmem:[%s1329 + $0x40] sm:$0xff]
        %v1339 = vld [vmem:[%s1329 + $0x48] sm:$0xff]
        %v1340 = vld [vmem:[%s1329 + $0x50] sm:$0xff]
        %v1341 = vld [vmem:[%s1329 + $0x58] sm:$0xff]
        %v1342 = vld [vmem:[%s1329 + $0x60] sm:$0xff]
        %v1343 = vld [vmem:[%s1329 + $0x68] sm:$0xff]
        %v1344 = vld [vmem:[%s1329 + $0x70] sm:$0xff]
        %v1345 = vld [vmem:[%s1329 + $0x78] sm:$0xff]
        %v1346 = vld [vmem:[%s1329 + $0x80] sm:$0xff]
        %v1347 = vld [vmem:[%s1329 + $0x88] sm:$0xff]
        %v1348 = vld [vmem:[%s1329 + $0x90] sm:$0xff]
        %v1349 = vld [vmem:[%s1329 + $0x98] sm:$0xff]
        %v1350 = vld [vmem:[%s1329 + $0xa0] sm:$0xf]
        %v1351 = vld [vmem:[%s1329 + $0xa8] sm:$0xf]
        %1352 = vrot.lane.b32.xlu0 %v1213, 125
        %v1353 = vpop.permute.xlu0 %1352
        %1354 = vrot.lane.b32.xlu0 %v1215, 125
        %v1355 = vpop.permute.xlu0 %1354
        %1356 = vrot.lane.b32.xlu0 %v1217, 125
        %v1357 = vpop.permute.xlu0 %1356
        %1358 = vrot.lane.b32.xlu0 %v1216, 125
        %v1359 = vpop.permute.xlu0 %1358
        %v1360 = vsel %vm553, %v1353, 0
        %v1362 = vsel %vm553, %v1355, 0
        %v1364 = vsel %vm553, %v1357, 0
        %v1366 = vsel %vm553, %v1359, 0
        %v1369 = vsel %vm562, %v1350, 0
        %v1372 = vsel %vm562, %v1351, 0
        %1374 = vmatprep.subr.mxu0 0.0
        %1375 = vmatpush1.msra.mxu0 0.0
        %1376 = vmatprep.subr.mxu0 0.0
        %1377 = vmatpush1.msra.mxu0 0.0
        %1378 = vmatprep.subr.mxu0 0.0
        %1379 = vmatpush1.msra.mxu0 0.0
        %1380 = vmatprep.subr.mxu0 0.0
        %1381 = vmatpush1.msra.mxu0 0.0
        %1382 = vmatprep.subr.mxu0 0.0
        %1383 = vmatpush1.msra.mxu0 0.0
        %1384 = vmatprep.subr.mxu0 %v1372
        %1385 = vmatpush1.msra.mxu0 %v1369
        %1386 = vmatprep.subr.mxu0 %v1349
        %1387 = vmatpush1.msra.mxu0 %v1348
        %1388 = vmatprep.subr.mxu0 %v1347
        %1389 = vmatpush1.msra.mxu0 %v1346
        %1390 = vmatprep.subr.mxu0 %v1345
        %1391 = vmatpush1.msra.mxu0 %v1344
        %1392 = vmatprep.subr.mxu0 %v1343
        %1393 = vmatpush1.msra.mxu0 %v1342
        %1394 = vmatprep.subr.mxu0 %v1341
        %1395 = vmatpush1.msra.mxu0 %v1340
        %1396 = vmatprep.subr.mxu0 %v1339
        %1397 = vmatpush1.msra.mxu0 %v1338
        %1398 = vmatprep.subr.mxu0 %v1337
        %1399 = vmatpush1.msra.mxu0 %v1336
        %1400 = vmatprep.subr.mxu0 %v1335
        %1401 = vmatpush1.msra.mxu0 %v1334
        %1402 = vmatprep.subr.mxu0 %v1333
        %1403 = vmatpush1.msra.mxu0 %v1332
        %1404 = vmatprep.subr.mxu0 %v1331
        %1405 = vmatpush1.msra.mxu0 %v1330
        %1406 = vmatprep.subr.mxu0 0.0
        %1407 = vmatpush2.msra.mxu0 0.0
        %1408 = vmatprep.subr.mxu0 0.0
        %1409 = vmatpush2.msra.mxu0 0.0
        %1410 = vmatprep.subr.mxu0 0.0
        %1411 = vmatpush2.msra.mxu0 0.0
        %1412 = vmatprep.subr.mxu0 0.0
        %1413 = vmatpush2.msra.mxu0 0.0
        %1414 = vmatprep.subr.mxu0 0.0
        %1415 = vmatpush2.msra.mxu0 0.0
        %1416 = vmatprep.subr.mxu0 0.0
        %1417 = vmatpush2.msra.mxu0 0.0
        %1418 = vmatprep.subr.mxu0 0.0
        %1419 = vmatpush2.msra.mxu0 0.0
        %1420 = vmatprep.subr.mxu0 0.0
        %1421 = vmatpush2.msra.mxu0 0.0
        %1422 = vmatprep.subr.mxu0 0.0
        %1423 = vmatpush2.msra.mxu0 0.0
        %1424 = vmatprep.subr.mxu0 0.0
        %1425 = vmatpush2.msra.mxu0 0.0
        %1426 = vmatprep.subr.mxu0 0.0
        %1427 = vmatpush2.msra.mxu0 0.0
        %1428 = vmatprep.subr.mxu0 0.0
        %1429 = vmatpush2.msra.mxu0 0.0
        %1430 = vmatprep.subr.mxu0 0.0
        %1431 = vmatpush2.msra.mxu0 0.0
        %1432 = vmatprep.subr.mxu0 0.0
        %1433 = vmatpush2.msra.mxu0 0.0
        %1434 = vmatprep.subr.mxu0 0.0
        %1435 = vmatpush2.msra.mxu0 0.0
        %1436 = vmatprep.subr.mxu0 0.0
        %1437 = vmatpush2.msra.mxu0 0.0
        %1438 = vmatprep.mubr.f32.mxu0 0.0
        %1439 = vmatmul.mubr.f32.gmra.mxu0 %v1360
        %v1440 = vpop.f32.mrf.mxu0
        %v1441 = vadd.f32 0.0, %v1440
        %v1442 = vpop.f32.mrf.mxu0
        %v1443 = vadd.f32 0.0, %v1442
        %1444 = vmatprep.mubr.f32.mxu0 0.0
        %1445 = vmatmul.mubr.f32.gmra.mxu0 %v1362
        %v1446 = vpop.f32.mrf.mxu0
        %v1447 = vadd.f32 0.0, %v1446
        %v1448 = vpop.f32.mrf.mxu0
        %v1449 = vadd.f32 0.0, %v1448
        %1450 = vmatprep.mubr.f32.mxu0 0.0
        %1451 = vmatmul.mubr.f32.gmra.mxu0 %v1364
        %v1452 = vpop.f32.mrf.mxu0
        %v1453 = vadd.f32 0.0, %v1452
        %v1454 = vpop.f32.mrf.mxu0
        %v1455 = vadd.f32 0.0, %v1454
        %1456 = vmatprep.mubr.f32.mxu0 0.0
        %1457 = vmatmul.mubr.f32.gmra.mxu0 %v1366
        %v1458 = vpop.f32.mrf.mxu0
        %v1459 = vadd.f32 0.0, %v1458
        %v1460 = vpop.f32.mrf.mxu0
        %v1461 = vadd.f32 0.0, %v1460
        %1462 = vdwg.mxu0
        %v1463 = vadd.f32 %v1321, %v1441
        %v1464 = vadd.f32 %v1322, %v1443
        %v1465 = vadd.f32 %v1323, %v1447
        %v1466 = vadd.f32 %v1324, %v1449
        %v1467 = vadd.f32 %v1325, %v1453
        %v1468 = vadd.f32 %v1326, %v1455
        %v1469 = vadd.f32 %v1327, %v1459
        %v1470 = vadd.f32 %v1328, %v1461
        %s1471 = scalar_lea.vmem %s1, 1232
        %v1472 = vld [vmem:[%s1471] sm:$0xff]
        %v1473 = vld [vmem:[%s1471 + $0x8] sm:$0xff]
        %v1474 = vld [vmem:[%s1471 + $0x10] sm:$0xff]
        %v1475 = vld [vmem:[%s1471 + $0x18] sm:$0xff]
        %v1476 = vld [vmem:[%s1471 + $0x20] sm:$0xff]
        %v1477 = vld [vmem:[%s1471 + $0x28] sm:$0xff]
        %v1478 = vld [vmem:[%s1471 + $0x30] sm:$0xff]
        %v1479 = vld [vmem:[%s1471 + $0x38] sm:$0xff]
        %v1480 = vld [vmem:[%s1471 + $0x40] sm:$0xff]
        %v1481 = vld [vmem:[%s1471 + $0x48] sm:$0xff]
        %v1482 = vld [vmem:[%s1471 + $0x50] sm:$0xff]
        %v1483 = vld [vmem:[%s1471 + $0x58] sm:$0xff]
        %v1484 = vld [vmem:[%s1471 + $0x60] sm:$0xff]
        %v1485 = vld [vmem:[%s1471 + $0x68] sm:$0xff]
        %v1486 = vld [vmem:[%s1471 + $0x70] sm:$0xff]
        %v1487 = vld [vmem:[%s1471 + $0x78] sm:$0xff]
        %v1488 = vld [vmem:[%s1471 + $0x80] sm:$0xff]
        %v1489 = vld [vmem:[%s1471 + $0x88] sm:$0xff]
        %v1490 = vld [vmem:[%s1471 + $0x90] sm:$0xff]
        %v1491 = vld [vmem:[%s1471 + $0x98] sm:$0xff]
        %v1492 = vld [vmem:[%s1471 + $0xa0] sm:$0xf]
        %v1493 = vld [vmem:[%s1471 + $0xa8] sm:$0xf]
        %1494 = vrot.lane.b32.xlu0 %v1213, 122
        %v1495 = vpop.permute.xlu0 %1494
        %1496 = vrot.lane.b32.xlu0 %v1215, 122
        %v1497 = vpop.permute.xlu0 %1496
        %1498 = vrot.lane.b32.xlu0 %v1217, 122
        %v1499 = vpop.permute.xlu0 %1498
        %1500 = vrot.lane.b32.xlu0 %v1216, 122
        %v1501 = vpop.permute.xlu0 %1500
        %v1502 = vsel %vm553, %v1495, 0
        %v1504 = vsel %vm553, %v1497, 0
        %v1506 = vsel %vm553, %v1499, 0
        %v1508 = vsel %vm553, %v1501, 0
        %v1511 = vsel %vm562, %v1492, 0
        %v1514 = vsel %vm562, %v1493, 0
        %1516 = vmatprep.subr.mxu0 0.0
        %1517 = vmatpush1.msra.mxu0 0.0
        %1518 = vmatprep.subr.mxu0 0.0
        %1519 = vmatpush1.msra.mxu0 0.0
        %1520 = vmatprep.subr.mxu0 0.0
        %1521 = vmatpush1.msra.mxu0 0.0
        %1522 = vmatprep.subr.mxu0 0.0
        %1523 = vmatpush1.msra.mxu0 0.0
        %1524 = vmatprep.subr.mxu0 0.0
        %1525 = vmatpush1.msra.mxu0 0.0
        %1526 = vmatprep.subr.mxu0 %v1514
        %1527 = vmatpush1.msra.mxu0 %v1511
        %1528 = vmatprep.subr.mxu0 %v1491
        %1529 = vmatpush1.msra.mxu0 %v1490
        %1530 = vmatprep.subr.mxu0 %v1489
        %1531 = vmatpush1.msra.mxu0 %v1488
        %1532 = vmatprep.subr.mxu0 %v1487
        %1533 = vmatpush1.msra.mxu0 %v1486
        %1534 = vmatprep.subr.mxu0 %v1485
        %1535 = vmatpush1.msra.mxu0 %v1484
        %1536 = vmatprep.subr.mxu0 %v1483
        %1537 = vmatpush1.msra.mxu0 %v1482
        %1538 = vmatprep.subr.mxu0 %v1481
        %1539 = vmatpush1.msra.mxu0 %v1480
        %1540 = vmatprep.subr.mxu0 %v1479
        %1541 = vmatpush1.msra.mxu0 %v1478
        %1542 = vmatprep.subr.mxu0 %v1477
        %1543 = vmatpush1.msra.mxu0 %v1476
        %1544 = vmatprep.subr.mxu0 %v1475
        %1545 = vmatpush1.msra.mxu0 %v1474
        %1546 = vmatprep.subr.mxu0 %v1473
        %1547 = vmatpush1.msra.mxu0 %v1472
        %1548 = vmatprep.subr.mxu0 0.0
        %1549 = vmatpush2.msra.mxu0 0.0
        %1550 = vmatprep.subr.mxu0 0.0
        %1551 = vmatpush2.msra.mxu0 0.0
        %1552 = vmatprep.subr.mxu0 0.0
        %1553 = vmatpush2.msra.mxu0 0.0
        %1554 = vmatprep.subr.mxu0 0.0
        %1555 = vmatpush2.msra.mxu0 0.0
        %1556 = vmatprep.subr.mxu0 0.0
        %1557 = vmatpush2.msra.mxu0 0.0
        %1558 = vmatprep.subr.mxu0 0.0
        %1559 = vmatpush2.msra.mxu0 0.0
        %1560 = vmatprep.subr.mxu0 0.0
        %1561 = vmatpush2.msra.mxu0 0.0
        %1562 = vmatprep.subr.mxu0 0.0
        %1563 = vmatpush2.msra.mxu0 0.0
        %1564 = vmatprep.subr.mxu0 0.0
        %1565 = vmatpush2.msra.mxu0 0.0
        %1566 = vmatprep.subr.mxu0 0.0
        %1567 = vmatpush2.msra.mxu0 0.0
        %1568 = vmatprep.subr.mxu0 0.0
        %1569 = vmatpush2.msra.mxu0 0.0
        %1570 = vmatprep.subr.mxu0 0.0
        %1571 = vmatpush2.msra.mxu0 0.0
        %1572 = vmatprep.subr.mxu0 0.0
        %1573 = vmatpush2.msra.mxu0 0.0
        %1574 = vmatprep.subr.mxu0 0.0
        %1575 = vmatpush2.msra.mxu0 0.0
        %1576 = vmatprep.subr.mxu0 0.0
        %1577 = vmatpush2.msra.mxu0 0.0
        %1578 = vmatprep.subr.mxu0 0.0
        %1579 = vmatpush2.msra.mxu0 0.0
        %1580 = vmatprep.mubr.f32.mxu0 0.0
        %1581 = vmatmul.mubr.f32.gmra.mxu0 %v1502
        %v1582 = vpop.f32.mrf.mxu0
        %v1583 = vadd.f32 0.0, %v1582
        %v1584 = vpop.f32.mrf.mxu0
        %v1585 = vadd.f32 0.0, %v1584
        %1586 = vmatprep.mubr.f32.mxu0 0.0
        %1587 = vmatmul.mubr.f32.gmra.mxu0 %v1504
        %v1588 = vpop.f32.mrf.mxu0
        %v1589 = vadd.f32 0.0, %v1588
        %v1590 = vpop.f32.mrf.mxu0
        %v1591 = vadd.f32 0.0, %v1590
        %1592 = vmatprep.mubr.f32.mxu0 0.0
        %1593 = vmatmul.mubr.f32.gmra.mxu0 %v1506
        %v1594 = vpop.f32.mrf.mxu0
        %v1595 = vadd.f32 0.0, %v1594
        %v1596 = vpop.f32.mrf.mxu0
        %v1597 = vadd.f32 0.0, %v1596
        %1598 = vmatprep.mubr.f32.mxu0 0.0
        %1599 = vmatmul.mubr.f32.gmra.mxu0 %v1508
        %v1600 = vpop.f32.mrf.mxu0
        %v1601 = vadd.f32 0.0, %v1600
        %v1602 = vpop.f32.mrf.mxu0
        %v1603 = vadd.f32 0.0, %v1602
        %1604 = vdwg.mxu0
        %v1605 = vadd.f32 %v1463, %v1583
        %v1606 = vadd.f32 %v1464, %v1585
        %v1607 = vadd.f32 %v1465, %v1589
        %v1608 = vadd.f32 %v1466, %v1591
        %v1609 = vadd.f32 %v1467, %v1595
        %v1610 = vadd.f32 %v1468, %v1597
        %v1611 = vadd.f32 %v1469, %v1601
        %v1612 = vadd.f32 %v1470, %v1603
        %s1613 = scalar_lea.vmem %s1, 1408
        %v1614 = vld [vmem:[%s1613] sm:$0xff]
        %v1615 = vld [vmem:[%s1613 + $0x8] sm:$0xff]
        %v1616 = vld [vmem:[%s1613 + $0x10] sm:$0xff]
        %v1617 = vld [vmem:[%s1613 + $0x18] sm:$0xff]
        %v1618 = vld [vmem:[%s1613 + $0x20] sm:$0xff]
        %v1619 = vld [vmem:[%s1613 + $0x28] sm:$0xff]
        %v1620 = vld [vmem:[%s1613 + $0x30] sm:$0xff]
        %v1621 = vld [vmem:[%s1613 + $0x38] sm:$0xff]
        %v1622 = vld [vmem:[%s1613 + $0x40] sm:$0xff]
        %v1623 = vld [vmem:[%s1613 + $0x48] sm:$0xff]
        %v1624 = vld [vmem:[%s1613 + $0x50] sm:$0xff]
        %v1625 = vld [vmem:[%s1613 + $0x58] sm:$0xff]
        %v1626 = vld [vmem:[%s1613 + $0x60] sm:$0xff]
        %v1627 = vld [vmem:[%s1613 + $0x68] sm:$0xff]
        %v1628 = vld [vmem:[%s1613 + $0x70] sm:$0xff]
        %v1629 = vld [vmem:[%s1613 + $0x78] sm:$0xff]
        %v1630 = vld [vmem:[%s1613 + $0x80] sm:$0xff]
        %v1631 = vld [vmem:[%s1613 + $0x88] sm:$0xff]
        %v1632 = vld [vmem:[%s1613 + $0x90] sm:$0xff]
        %v1633 = vld [vmem:[%s1613 + $0x98] sm:$0xff]
        %v1634 = vld [vmem:[%s1613 + $0xa0] sm:$0xf]
        %v1635 = vld [vmem:[%s1613 + $0xa8] sm:$0xf]
        %1636 = vrot.lane.b32.xlu0 %v1213, 119
        %v1637 = vpop.permute.xlu0 %1636
        %1638 = vrot.lane.b32.xlu0 %v1215, 119
        %v1639 = vpop.permute.xlu0 %1638
        %1640 = vrot.lane.b32.xlu0 %v1217, 119
        %v1641 = vpop.permute.xlu0 %1640
        %1642 = vrot.lane.b32.xlu0 %v1216, 119
        %v1643 = vpop.permute.xlu0 %1642
        %v1644 = vsel %vm553, %v1637, 0
        %v1646 = vsel %vm553, %v1639, 0
        %v1648 = vsel %vm553, %v1641, 0
        %v1650 = vsel %vm553, %v1643, 0
        %v1653 = vsel %vm562, %v1634, 0
        %v1656 = vsel %vm562, %v1635, 0
        %1658 = vmatprep.subr.mxu0 0.0
        %1659 = vmatpush1.msra.mxu0 0.0
        %1660 = vmatprep.subr.mxu0 0.0
        %1661 = vmatpush1.msra.mxu0 0.0
        %1662 = vmatprep.subr.mxu0 0.0
        %1663 = vmatpush1.msra.mxu0 0.0
        %1664 = vmatprep.subr.mxu0 0.0
        %1665 = vmatpush1.msra.mxu0 0.0
        %1666 = vmatprep.subr.mxu0 0.0
        %1667 = vmatpush1.msra.mxu0 0.0
        %1668 = vmatprep.subr.mxu0 %v1656
        %1669 = vmatpush1.msra.mxu0 %v1653
        %1670 = vmatprep.subr.mxu0 %v1633
        %1671 = vmatpush1.msra.mxu0 %v1632
        %1672 = vmatprep.subr.mxu0 %v1631
        %1673 = vmatpush1.msra.mxu0 %v1630
        %1674 = vmatprep.subr.mxu0 %v1629
        %1675 = vmatpush1.msra.mxu0 %v1628
        %1676 = vmatprep.subr.mxu0 %v1627
        %1677 = vmatpush1.msra.mxu0 %v1626
        %1678 = vmatprep.subr.mxu0 %v1625
        %1679 = vmatpush1.msra.mxu0 %v1624
        %1680 = vmatprep.subr.mxu0 %v1623
        %1681 = vmatpush1.msra.mxu0 %v1622
        %1682 = vmatprep.subr.mxu0 %v1621
        %1683 = vmatpush1.msra.mxu0 %v1620
        %1684 = vmatprep.subr.mxu0 %v1619
        %1685 = vmatpush1.msra.mxu0 %v1618
        %1686 = vmatprep.subr.mxu0 %v1617
        %1687 = vmatpush1.msra.mxu0 %v1616
        %1688 = vmatprep.subr.mxu0 %v1615
        %1689 = vmatpush1.msra.mxu0 %v1614
        %1690 = vmatprep.subr.mxu0 0.0
        %1691 = vmatpush2.msra.mxu0 0.0
        %1692 = vmatprep.subr.mxu0 0.0
        %1693 = vmatpush2.msra.mxu0 0.0
        %1694 = vmatprep.subr.mxu0 0.0
        %1695 = vmatpush2.msra.mxu0 0.0
        %1696 = vmatprep.subr.mxu0 0.0
        %1697 = vmatpush2.msra.mxu0 0.0
        %1698 = vmatprep.subr.mxu0 0.0
        %1699 = vmatpush2.msra.mxu0 0.0
        %1700 = vmatprep.subr.mxu0 0.0
        %1701 = vmatpush2.msra.mxu0 0.0
        %1702 = vmatprep.subr.mxu0 0.0
        %1703 = vmatpush2.msra.mxu0 0.0
        %1704 = vmatprep.subr.mxu0 0.0
        %1705 = vmatpush2.msra.mxu0 0.0
        %1706 = vmatprep.subr.mxu0 0.0
        %1707 = vmatpush2.msra.mxu0 0.0
        %1708 = vmatprep.subr.mxu0 0.0
        %1709 = vmatpush2.msra.mxu0 0.0
        %1710 = vmatprep.subr.mxu0 0.0
        %1711 = vmatpush2.msra.mxu0 0.0
        %1712 = vmatprep.subr.mxu0 0.0
        %1713 = vmatpush2.msra.mxu0 0.0
        %1714 = vmatprep.subr.mxu0 0.0
        %1715 = vmatpush2.msra.mxu0 0.0
        %1716 = vmatprep.subr.mxu0 0.0
        %1717 = vmatpush2.msra.mxu0 0.0
        %1718 = vmatprep.subr.mxu0 0.0
        %1719 = vmatpush2.msra.mxu0 0.0
        %1720 = vmatprep.subr.mxu0 0.0
        %1721 = vmatpush2.msra.mxu0 0.0
        %1722 = vmatprep.mubr.f32.mxu0 0.0
        %1723 = vmatmul.mubr.f32.gmra.mxu0 %v1644
        %v1724 = vpop.f32.mrf.mxu0
        %v1725 = vadd.f32 0.0, %v1724
        %v1726 = vpop.f32.mrf.mxu0
        %v1727 = vadd.f32 0.0, %v1726
        %1728 = vmatprep.mubr.f32.mxu0 0.0
        %1729 = vmatmul.mubr.f32.gmra.mxu0 %v1646
        %v1730 = vpop.f32.mrf.mxu0
        %v1731 = vadd.f32 0.0, %v1730
        %v1732 = vpop.f32.mrf.mxu0
        %v1733 = vadd.f32 0.0, %v1732
        %1734 = vmatprep.mubr.f32.mxu0 0.0
        %1735 = vmatmul.mubr.f32.gmra.mxu0 %v1648
        %v1736 = vpop.f32.mrf.mxu0
        %v1737 = vadd.f32 0.0, %v1736
        %v1738 = vpop.f32.mrf.mxu0
        %v1739 = vadd.f32 0.0, %v1738
        %1740 = vmatprep.mubr.f32.mxu0 0.0
        %1741 = vmatmul.mubr.f32.gmra.mxu0 %v1650
        %v1742 = vpop.f32.mrf.mxu0
        %v1743 = vadd.f32 0.0, %v1742
        %v1744 = vpop.f32.mrf.mxu0
        %v1745 = vadd.f32 0.0, %v1744
        %1746 = vdwg.mxu0
        %v1747 = vadd.f32 %v1605, %v1725
        %v1748 = vadd.f32 %v1606, %v1727
        %v1749 = vadd.f32 %v1607, %v1731
        %v1750 = vadd.f32 %v1608, %v1733
        %v1751 = vadd.f32 %v1609, %v1737
        %v1752 = vadd.f32 %v1610, %v1739
        %v1753 = vadd.f32 %v1611, %v1743
        %v1754 = vadd.f32 %v1612, %v1745
        %s1755 = scalar_lea.vmem %s1, 1584
        %v1756 = vld [vmem:[%s1755] sm:$0xff]
        %v1757 = vld [vmem:[%s1755 + $0x8] sm:$0xff]
        %v1758 = vld [vmem:[%s1755 + $0x10] sm:$0xff]
        %v1759 = vld [vmem:[%s1755 + $0x18] sm:$0xff]
        %v1760 = vld [vmem:[%s1755 + $0x20] sm:$0xff]
        %v1761 = vld [vmem:[%s1755 + $0x28] sm:$0xff]
        %v1762 = vld [vmem:[%s1755 + $0x30] sm:$0xff]
        %v1763 = vld [vmem:[%s1755 + $0x38] sm:$0xff]
        %v1764 = vld [vmem:[%s1755 + $0x40] sm:$0xff]
        %v1765 = vld [vmem:[%s1755 + $0x48] sm:$0xff]
        %v1766 = vld [vmem:[%s1755 + $0x50] sm:$0xff]
        %v1767 = vld [vmem:[%s1755 + $0x58] sm:$0xff]
        %v1768 = vld [vmem:[%s1755 + $0x60] sm:$0xff]
        %v1769 = vld [vmem:[%s1755 + $0x68] sm:$0xff]
        %v1770 = vld [vmem:[%s1755 + $0x70] sm:$0xff]
        %v1771 = vld [vmem:[%s1755 + $0x78] sm:$0xff]
        %v1772 = vld [vmem:[%s1755 + $0x80] sm:$0xff]
        %v1773 = vld [vmem:[%s1755 + $0x88] sm:$0xff]
        %v1774 = vld [vmem:[%s1755 + $0x90] sm:$0xff]
        %v1775 = vld [vmem:[%s1755 + $0x98] sm:$0xff]
        %v1776 = vld [vmem:[%s1755 + $0xa0] sm:$0xf]
        %v1777 = vld [vmem:[%s1755 + $0xa8] sm:$0xf]
        %1778 = vrot.lane.b32.xlu0 %v1213, 116
        %v1779 = vpop.permute.xlu0 %1778
        %1780 = vrot.lane.b32.xlu0 %v1215, 116
        %v1781 = vpop.permute.xlu0 %1780
        %1782 = vrot.lane.b32.xlu0 %v1217, 116
        %v1783 = vpop.permute.xlu0 %1782
        %1784 = vrot.lane.b32.xlu0 %v1216, 116
        %v1785 = vpop.permute.xlu0 %1784
        %v1786 = vsel %vm553, %v1779, 0
        %v1788 = vsel %vm553, %v1781, 0
        %v1790 = vsel %vm553, %v1783, 0
        %v1792 = vsel %vm553, %v1785, 0
        %v1795 = vsel %vm562, %v1776, 0
        %v1798 = vsel %vm562, %v1777, 0
        %1800 = vmatprep.subr.mxu0 0.0
        %1801 = vmatpush1.msra.mxu0 0.0
        %1802 = vmatprep.subr.mxu0 0.0
        %1803 = vmatpush1.msra.mxu0 0.0
        %1804 = vmatprep.subr.mxu0 0.0
        %1805 = vmatpush1.msra.mxu0 0.0
        %1806 = vmatprep.subr.mxu0 0.0
        %1807 = vmatpush1.msra.mxu0 0.0
        %1808 = vmatprep.subr.mxu0 0.0
        %1809 = vmatpush1.msra.mxu0 0.0
        %1810 = vmatprep.subr.mxu0 %v1798
        %1811 = vmatpush1.msra.mxu0 %v1795
        %1812 = vmatprep.subr.mxu0 %v1775
        %1813 = vmatpush1.msra.mxu0 %v1774
        %1814 = vmatprep.subr.mxu0 %v1773
        %1815 = vmatpush1.msra.mxu0 %v1772
        %1816 = vmatprep.subr.mxu0 %v1771
        %1817 = vmatpush1.msra.mxu0 %v1770
        %1818 = vmatprep.subr.mxu0 %v1769
        %1819 = vmatpush1.msra.mxu0 %v1768
        %1820 = vmatprep.subr.mxu0 %v1767
        %1821 = vmatpush1.msra.mxu0 %v1766
        %1822 = vmatprep.subr.mxu0 %v1765
        %1823 = vmatpush1.msra.mxu0 %v1764
        %1824 = vmatprep.subr.mxu0 %v1763
        %1825 = vmatpush1.msra.mxu0 %v1762
        %1826 = vmatprep.subr.mxu0 %v1761
        %1827 = vmatpush1.msra.mxu0 %v1760
        %1828 = vmatprep.subr.mxu0 %v1759
        %1829 = vmatpush1.msra.mxu0 %v1758
        %1830 = vmatprep.subr.mxu0 %v1757
        %1831 = vmatpush1.msra.mxu0 %v1756
        %1832 = vmatprep.subr.mxu0 0.0
        %1833 = vmatpush2.msra.mxu0 0.0
        %1834 = vmatprep.subr.mxu0 0.0
        %1835 = vmatpush2.msra.mxu0 0.0
        %1836 = vmatprep.subr.mxu0 0.0
        %1837 = vmatpush2.msra.mxu0 0.0
        %1838 = vmatprep.subr.mxu0 0.0
        %1839 = vmatpush2.msra.mxu0 0.0
        %1840 = vmatprep.subr.mxu0 0.0
        %1841 = vmatpush2.msra.mxu0 0.0
        %1842 = vmatprep.subr.mxu0 0.0
        %1843 = vmatpush2.msra.mxu0 0.0
        %1844 = vmatprep.subr.mxu0 0.0
        %1845 = vmatpush2.msra.mxu0 0.0
        %1846 = vmatprep.subr.mxu0 0.0
        %1847 = vmatpush2.msra.mxu0 0.0
        %1848 = vmatprep.subr.mxu0 0.0
        %1849 = vmatpush2.msra.mxu0 0.0
        %1850 = vmatprep.subr.mxu0 0.0
        %1851 = vmatpush2.msra.mxu0 0.0
        %1852 = vmatprep.subr.mxu0 0.0
        %1853 = vmatpush2.msra.mxu0 0.0
        %1854 = vmatprep.subr.mxu0 0.0
        %1855 = vmatpush2.msra.mxu0 0.0
        %1856 = vmatprep.subr.mxu0 0.0
        %1857 = vmatpush2.msra.mxu0 0.0
        %1858 = vmatprep.subr.mxu0 0.0
        %1859 = vmatpush2.msra.mxu0 0.0
        %1860 = vmatprep.subr.mxu0 0.0
        %1861 = vmatpush2.msra.mxu0 0.0
        %1862 = vmatprep.subr.mxu0 0.0
        %1863 = vmatpush2.msra.mxu0 0.0
        %1864 = vmatprep.mubr.f32.mxu0 0.0
        %1865 = vmatmul.mubr.f32.gmra.mxu0 %v1786
        %v1866 = vpop.f32.mrf.mxu0
        %v1867 = vadd.f32 0.0, %v1866
        %v1868 = vpop.f32.mrf.mxu0
        %v1869 = vadd.f32 0.0, %v1868
        %1870 = vmatprep.mubr.f32.mxu0 0.0
        %1871 = vmatmul.mubr.f32.gmra.mxu0 %v1788
        %v1872 = vpop.f32.mrf.mxu0
        %v1873 = vadd.f32 0.0, %v1872
        %v1874 = vpop.f32.mrf.mxu0
        %v1875 = vadd.f32 0.0, %v1874
        %1876 = vmatprep.mubr.f32.mxu0 0.0
        %1877 = vmatmul.mubr.f32.gmra.mxu0 %v1790
        %v1878 = vpop.f32.mrf.mxu0
        %v1879 = vadd.f32 0.0, %v1878
        %v1880 = vpop.f32.mrf.mxu0
        %v1881 = vadd.f32 0.0, %v1880
        %1882 = vmatprep.mubr.f32.mxu0 0.0
        %1883 = vmatmul.mubr.f32.gmra.mxu0 %v1792
        %v1884 = vpop.f32.mrf.mxu0
        %v1885 = vadd.f32 0.0, %v1884
        %v1886 = vpop.f32.mrf.mxu0
        %v1887 = vadd.f32 0.0, %v1886
        %1888 = vdwg.mxu0
        %v1889 = vadd.f32 %v1747, %v1867
        %v1890 = vadd.f32 %v1748, %v1869
        %v1891 = vadd.f32 %v1749, %v1873
        %v1892 = vadd.f32 %v1750, %v1875
        %v1893 = vadd.f32 %v1751, %v1879
        %v1894 = vadd.f32 %v1752, %v1881
        %v1895 = vadd.f32 %v1753, %v1885
        %v1896 = vadd.f32 %v1754, %v1887
        %s1897 = scalar_lea.vmem %s1, 1760
        %v1898 = vld [vmem:[%s1897] sm:$0xff]
        %v1899 = vld [vmem:[%s1897 + $0x8] sm:$0xff]
        %v1900 = vld [vmem:[%s1897 + $0x10] sm:$0xff]
        %v1901 = vld [vmem:[%s1897 + $0x18] sm:$0xff]
        %v1902 = vld [vmem:[%s1897 + $0x20] sm:$0xff]
        %v1903 = vld [vmem:[%s1897 + $0x28] sm:$0xff]
        %v1904 = vld [vmem:[%s1897 + $0x30] sm:$0xff]
        %v1905 = vld [vmem:[%s1897 + $0x38] sm:$0xff]
        %v1906 = vld [vmem:[%s1897 + $0x40] sm:$0xff]
        %v1907 = vld [vmem:[%s1897 + $0x48] sm:$0xff]
        %v1908 = vld [vmem:[%s1897 + $0x50] sm:$0xff]
        %v1909 = vld [vmem:[%s1897 + $0x58] sm:$0xff]
        %v1910 = vld [vmem:[%s1897 + $0x60] sm:$0xff]
        %v1911 = vld [vmem:[%s1897 + $0x68] sm:$0xff]
        %v1912 = vld [vmem:[%s1897 + $0x70] sm:$0xff]
        %v1913 = vld [vmem:[%s1897 + $0x78] sm:$0xff]
        %v1914 = vld [vmem:[%s1897 + $0x80] sm:$0xff]
        %v1915 = vld [vmem:[%s1897 + $0x88] sm:$0xff]
        %v1916 = vld [vmem:[%s1897 + $0x90] sm:$0xff]
        %v1917 = vld [vmem:[%s1897 + $0x98] sm:$0xff]
        %v1918 = vld [vmem:[%s1897 + $0xa0] sm:$0xf]
        %v1919 = vld [vmem:[%s1897 + $0xa8] sm:$0xf]
        %vm1920 = vcmask 1045504
        %v1921 = vrot.slane %v492, 2
        %v1922 = vrot.slane %v493, 2
        %v1923 = vsel %vm1920, %v1921, %v1922
        %v1924 = vrot.slane %v494, 2
        %v1925 = vsel %vm1920, %v1922, %v1924
        %v1926 = vrot.slane %v495, 2
        %v1927 = vsel %vm1920, %v1924, %v1926
        %v1928 = vsel %vm553, %v1923, 0
        %v1930 = vsel %vm553, %v1925, 0
        %v1932 = vsel %vm553, %v1927, 0
        %v1934 = vsel %vm553, %v1926, 0
        %v1937 = vsel %vm562, %v1918, 0
        %v1940 = vsel %vm562, %v1919, 0
        %1942 = vmatprep.subr.mxu0 0.0
        %1943 = vmatpush1.msra.mxu0 0.0
        %1944 = vmatprep.subr.mxu0 0.0
        %1945 = vmatpush1.msra.mxu0 0.0
        %1946 = vmatprep.subr.mxu0 0.0
        %1947 = vmatpush1.msra.mxu0 0.0
        %1948 = vmatprep.subr.mxu0 0.0
        %1949 = vmatpush1.msra.mxu0 0.0
        %1950 = vmatprep.subr.mxu0 0.0
        %1951 = vmatpush1.msra.mxu0 0.0
        %1952 = vmatprep.subr.mxu0 %v1940
        %1953 = vmatpush1.msra.mxu0 %v1937
        %1954 = vmatprep.subr.mxu0 %v1917
        %1955 = vmatpush1.msra.mxu0 %v1916
        %1956 = vmatprep.subr.mxu0 %v1915
        %1957 = vmatpush1.msra.mxu0 %v1914
        %1958 = vmatprep.subr.mxu0 %v1913
        %1959 = vmatpush1.msra.mxu0 %v1912
        %1960 = vmatprep.subr.mxu0 %v1911
        %1961 = vmatpush1.msra.mxu0 %v1910
        %1962 = vmatprep.subr.mxu0 %v1909
        %1963 = vmatpush1.msra.mxu0 %v1908
        %1964 = vmatprep.subr.mxu0 %v1907
        %1965 = vmatpush1.msra.mxu0 %v1906
        %1966 = vmatprep.subr.mxu0 %v1905
        %1967 = vmatpush1.msra.mxu0 %v1904
        %1968 = vmatprep.subr.mxu0 %v1903
        %1969 = vmatpush1.msra.mxu0 %v1902
        %1970 = vmatprep.subr.mxu0 %v1901
        %1971 = vmatpush1.msra.mxu0 %v1900
        %1972 = vmatprep.subr.mxu0 %v1899
        %1973 = vmatpush1.msra.mxu0 %v1898
        %1974 = vmatprep.subr.mxu0 0.0
        %1975 = vmatpush2.msra.mxu0 0.0
        %1976 = vmatprep.subr.mxu0 0.0
        %1977 = vmatpush2.msra.mxu0 0.0
        %1978 = vmatprep.subr.mxu0 0.0
        %1979 = vmatpush2.msra.mxu0 0.0
        %1980 = vmatprep.subr.mxu0 0.0
        %1981 = vmatpush2.msra.mxu0 0.0
        %1982 = vmatprep.subr.mxu0 0.0
        %1983 = vmatpush2.msra.mxu0 0.0
        %1984 = vmatprep.subr.mxu0 0.0
        %1985 = vmatpush2.msra.mxu0 0.0
        %1986 = vmatprep.subr.mxu0 0.0
        %1987 = vmatpush2.msra.mxu0 0.0
        %1988 = vmatprep.subr.mxu0 0.0
        %1989 = vmatpush2.msra.mxu0 0.0
        %1990 = vmatprep.subr.mxu0 0.0
        %1991 = vmatpush2.msra.mxu0 0.0
        %1992 = vmatprep.subr.mxu0 0.0
        %1993 = vmatpush2.msra.mxu0 0.0
        %1994 = vmatprep.subr.mxu0 0.0
        %1995 = vmatpush2.msra.mxu0 0.0
        %1996 = vmatprep.subr.mxu0 0.0
        %1997 = vmatpush2.msra.mxu0 0.0
        %1998 = vmatprep.subr.mxu0 0.0
        %1999 = vmatpush2.msra.mxu0 0.0
        %2000 = vmatprep.subr.mxu0 0.0
        %2001 = vmatpush2.msra.mxu0 0.0
        %2002 = vmatprep.subr.mxu0 0.0
        %2003 = vmatpush2.msra.mxu0 0.0
        %2004 = vmatprep.subr.mxu0 0.0
        %2005 = vmatpush2.msra.mxu0 0.0
        %2006 = vmatprep.mubr.f32.mxu0 0.0
        %2007 = vmatmul.mubr.f32.gmra.mxu0 %v1928
        %v2008 = vpop.f32.mrf.mxu0
        %v2009 = vadd.f32 0.0, %v2008
        %v2010 = vpop.f32.mrf.mxu0
        %v2011 = vadd.f32 0.0, %v2010
        %2012 = vmatprep.mubr.f32.mxu0 0.0
        %2013 = vmatmul.mubr.f32.gmra.mxu0 %v1930
        %v2014 = vpop.f32.mrf.mxu0
        %v2015 = vadd.f32 0.0, %v2014
        %v2016 = vpop.f32.mrf.mxu0
        %v2017 = vadd.f32 0.0, %v2016
        %2018 = vmatprep.mubr.f32.mxu0 0.0
        %2019 = vmatmul.mubr.f32.gmra.mxu0 %v1932
        %v2020 = vpop.f32.mrf.mxu0
        %v2021 = vadd.f32 0.0, %v2020
        %v2022 = vpop.f32.mrf.mxu0
        %v2023 = vadd.f32 0.0, %v2022
        %2024 = vmatprep.mubr.f32.mxu0 0.0
        %2025 = vmatmul.mubr.f32.gmra.mxu0 %v1934
        %v2026 = vpop.f32.mrf.mxu0
        %v2027 = vadd.f32 0.0, %v2026
        %v2028 = vpop.f32.mrf.mxu0
        %v2029 = vadd.f32 0.0, %v2028
        %2030 = vdwg.mxu0
        %v2031 = vadd.f32 %v1889, %v2009
        %v2032 = vadd.f32 %v1890, %v2011
        %v2033 = vadd.f32 %v1891, %v2015
        %v2034 = vadd.f32 %v1892, %v2017
        %v2035 = vadd.f32 %v1893, %v2021
        %v2036 = vadd.f32 %v1894, %v2023
        %v2037 = vadd.f32 %v1895, %v2027
        %v2038 = vadd.f32 %v1896, %v2029
        %s2039 = scalar_lea.vmem %s1, 1936
        %v2040 = vld [vmem:[%s2039] sm:$0xff]
        %v2041 = vld [vmem:[%s2039 + $0x8] sm:$0xff]
        %v2042 = vld [vmem:[%s2039 + $0x10] sm:$0xff]
        %v2043 = vld [vmem:[%s2039 + $0x18] sm:$0xff]
        %v2044 = vld [vmem:[%s2039 + $0x20] sm:$0xff]
        %v2045 = vld [vmem:[%s2039 + $0x28] sm:$0xff]
        %v2046 = vld [vmem:[%s2039 + $0x30] sm:$0xff]
        %v2047 = vld [vmem:[%s2039 + $0x38] sm:$0xff]
        %v2048 = vld [vmem:[%s2039 + $0x40] sm:$0xff]
        %v2049 = vld [vmem:[%s2039 + $0x48] sm:$0xff]
        %v2050 = vld [vmem:[%s2039 + $0x50] sm:$0xff]
        %v2051 = vld [vmem:[%s2039 + $0x58] sm:$0xff]
        %v2052 = vld [vmem:[%s2039 + $0x60] sm:$0xff]
        %v2053 = vld [vmem:[%s2039 + $0x68] sm:$0xff]
        %v2054 = vld [vmem:[%s2039 + $0x70] sm:$0xff]
        %v2055 = vld [vmem:[%s2039 + $0x78] sm:$0xff]
        %v2056 = vld [vmem:[%s2039 + $0x80] sm:$0xff]
        %v2057 = vld [vmem:[%s2039 + $0x88] sm:$0xff]
        %v2058 = vld [vmem:[%s2039 + $0x90] sm:$0xff]
        %v2059 = vld [vmem:[%s2039 + $0x98] sm:$0xff]
        %v2060 = vld [vmem:[%s2039 + $0xa0] sm:$0xf]
        %v2061 = vld [vmem:[%s2039 + $0xa8] sm:$0xf]
        %2062 = vrot.lane.b32.xlu0 %v1923, 125
        %v2063 = vpop.permute.xlu0 %2062
        %2064 = vrot.lane.b32.xlu0 %v1925, 125
        %v2065 = vpop.permute.xlu0 %2064
        %2066 = vrot.lane.b32.xlu0 %v1927, 125
        %v2067 = vpop.permute.xlu0 %2066
        %2068 = vrot.lane.b32.xlu0 %v1926, 125
        %v2069 = vpop.permute.xlu0 %2068
        %v2070 = vsel %vm553, %v2063, 0
        %v2072 = vsel %vm553, %v2065, 0
        %v2074 = vsel %vm553, %v2067, 0
        %v2076 = vsel %vm553, %v2069, 0
        %v2079 = vsel %vm562, %v2060, 0
        %v2082 = vsel %vm562, %v2061, 0
        %2084 = vmatprep.subr.mxu0 0.0
        %2085 = vmatpush1.msra.mxu0 0.0
        %2086 = vmatprep.subr.mxu0 0.0
        %2087 = vmatpush1.msra.mxu0 0.0
        %2088 = vmatprep.subr.mxu0 0.0
        %2089 = vmatpush1.msra.mxu0 0.0
        %2090 = vmatprep.subr.mxu0 0.0
        %2091 = vmatpush1.msra.mxu0 0.0
        %2092 = vmatprep.subr.mxu0 0.0
        %2093 = vmatpush1.msra.mxu0 0.0
        %2094 = vmatprep.subr.mxu0 %v2082
        %2095 = vmatpush1.msra.mxu0 %v2079
        %2096 = vmatprep.subr.mxu0 %v2059
        %2097 = vmatpush1.msra.mxu0 %v2058
        %2098 = vmatprep.subr.mxu0 %v2057
        %2099 = vmatpush1.msra.mxu0 %v2056
        %2100 = vmatprep.subr.mxu0 %v2055
        %2101 = vmatpush1.msra.mxu0 %v2054
        %2102 = vmatprep.subr.mxu0 %v2053
        %2103 = vmatpush1.msra.mxu0 %v2052
        %2104 = vmatprep.subr.mxu0 %v2051
        %2105 = vmatpush1.msra.mxu0 %v2050
        %2106 = vmatprep.subr.mxu0 %v2049
        %2107 = vmatpush1.msra.mxu0 %v2048
        %2108 = vmatprep.subr.mxu0 %v2047
        %2109 = vmatpush1.msra.mxu0 %v2046
        %2110 = vmatprep.subr.mxu0 %v2045
        %2111 = vmatpush1.msra.mxu0 %v2044
        %2112 = vmatprep.subr.mxu0 %v2043
        %2113 = vmatpush1.msra.mxu0 %v2042
        %2114 = vmatprep.subr.mxu0 %v2041
        %2115 = vmatpush1.msra.mxu0 %v2040
        %2116 = vmatprep.subr.mxu0 0.0
        %2117 = vmatpush2.msra.mxu0 0.0
        %2118 = vmatprep.subr.mxu0 0.0
        %2119 = vmatpush2.msra.mxu0 0.0
        %2120 = vmatprep.subr.mxu0 0.0
        %2121 = vmatpush2.msra.mxu0 0.0
        %2122 = vmatprep.subr.mxu0 0.0
        %2123 = vmatpush2.msra.mxu0 0.0
        %2124 = vmatprep.subr.mxu0 0.0
        %2125 = vmatpush2.msra.mxu0 0.0
        %2126 = vmatprep.subr.mxu0 0.0
        %2127 = vmatpush2.msra.mxu0 0.0
        %2128 = vmatprep.subr.mxu0 0.0
        %2129 = vmatpush2.msra.mxu0 0.0
        %2130 = vmatprep.subr.mxu0 0.0
        %2131 = vmatpush2.msra.mxu0 0.0
        %2132 = vmatprep.subr.mxu0 0.0
        %2133 = vmatpush2.msra.mxu0 0.0
        %2134 = vmatprep.subr.mxu0 0.0
        %2135 = vmatpush2.msra.mxu0 0.0
        %2136 = vmatprep.subr.mxu0 0.0
        %2137 = vmatpush2.msra.mxu0 0.0
        %2138 = vmatprep.subr.mxu0 0.0
        %2139 = vmatpush2.msra.mxu0 0.0
        %2140 = vmatprep.subr.mxu0 0.0
        %2141 = vmatpush2.msra.mxu0 0.0
        %2142 = vmatprep.subr.mxu0 0.0
        %2143 = vmatpush2.msra.mxu0 0.0
        %2144 = vmatprep.subr.mxu0 0.0
        %2145 = vmatpush2.msra.mxu0 0.0
        %2146 = vmatprep.subr.mxu0 0.0
        %2147 = vmatpush2.msra.mxu0 0.0
        %2148 = vmatprep.mubr.f32.mxu0 0.0
        %2149 = vmatmul.mubr.f32.gmra.mxu0 %v2070
        %v2150 = vpop.f32.mrf.mxu0
        %v2151 = vadd.f32 0.0, %v2150
        %v2152 = vpop.f32.mrf.mxu0
        %v2153 = vadd.f32 0.0, %v2152
        %2154 = vmatprep.mubr.f32.mxu0 0.0
        %2155 = vmatmul.mubr.f32.gmra.mxu0 %v2072
        %v2156 = vpop.f32.mrf.mxu0
        %v2157 = vadd.f32 0.0, %v2156
        %v2158 = vpop.f32.mrf.mxu0
        %v2159 = vadd.f32 0.0, %v2158
        %2160 = vmatprep.mubr.f32.mxu0 0.0
        %2161 = vmatmul.mubr.f32.gmra.mxu0 %v2074
        %v2162 = vpop.f32.mrf.mxu0
        %v2163 = vadd.f32 0.0, %v2162
        %v2164 = vpop.f32.mrf.mxu0
        %v2165 = vadd.f32 0.0, %v2164
        %2166 = vmatprep.mubr.f32.mxu0 0.0
        %2167 = vmatmul.mubr.f32.gmra.mxu0 %v2076
        %v2168 = vpop.f32.mrf.mxu0
        %v2169 = vadd.f32 0.0, %v2168
        %v2170 = vpop.f32.mrf.mxu0
        %v2171 = vadd.f32 0.0, %v2170
        %2172 = vdwg.mxu0
        %v2173 = vadd.f32 %v2031, %v2151
        %v2174 = vadd.f32 %v2032, %v2153
        %v2175 = vadd.f32 %v2033, %v2157
        %v2176 = vadd.f32 %v2034, %v2159
        %v2177 = vadd.f32 %v2035, %v2163
        %v2178 = vadd.f32 %v2036, %v2165
        %v2179 = vadd.f32 %v2037, %v2169
        %v2180 = vadd.f32 %v2038, %v2171
        %s2181 = scalar_lea.vmem %s1, 2112
        %v2182 = vld [vmem:[%s2181] sm:$0xff]
        %v2183 = vld [vmem:[%s2181 + $0x8] sm:$0xff]
        %v2184 = vld [vmem:[%s2181 + $0x10] sm:$0xff]
        %v2185 = vld [vmem:[%s2181 + $0x18] sm:$0xff]
        %v2186 = vld [vmem:[%s2181 + $0x20] sm:$0xff]
        %v2187 = vld [vmem:[%s2181 + $0x28] sm:$0xff]
        %v2188 = vld [vmem:[%s2181 + $0x30] sm:$0xff]
        %v2189 = vld [vmem:[%s2181 + $0x38] sm:$0xff]
        %v2190 = vld [vmem:[%s2181 + $0x40] sm:$0xff]
        %v2191 = vld [vmem:[%s2181 + $0x48] sm:$0xff]
        %v2192 = vld [vmem:[%s2181 + $0x50] sm:$0xff]
        %v2193 = vld [vmem:[%s2181 + $0x58] sm:$0xff]
        %v2194 = vld [vmem:[%s2181 + $0x60] sm:$0xff]
        %v2195 = vld [vmem:[%s2181 + $0x68] sm:$0xff]
        %v2196 = vld [vmem:[%s2181 + $0x70] sm:$0xff]
        %v2197 = vld [vmem:[%s2181 + $0x78] sm:$0xff]
        %v2198 = vld [vmem:[%s2181 + $0x80] sm:$0xff]
        %v2199 = vld [vmem:[%s2181 + $0x88] sm:$0xff]
        %v2200 = vld [vmem:[%s2181 + $0x90] sm:$0xff]
        %v2201 = vld [vmem:[%s2181 + $0x98] sm:$0xff]
        %v2202 = vld [vmem:[%s2181 + $0xa0] sm:$0xf]
        %v2203 = vld [vmem:[%s2181 + $0xa8] sm:$0xf]
        %2204 = vrot.lane.b32.xlu0 %v1923, 122
        %v2205 = vpop.permute.xlu0 %2204
        %2206 = vrot.lane.b32.xlu0 %v1925, 122
        %v2207 = vpop.permute.xlu0 %2206
        %2208 = vrot.lane.b32.xlu0 %v1927, 122
        %v2209 = vpop.permute.xlu0 %2208
        %2210 = vrot.lane.b32.xlu0 %v1926, 122
        %v2211 = vpop.permute.xlu0 %2210
        %v2212 = vsel %vm553, %v2205, 0
        %v2214 = vsel %vm553, %v2207, 0
        %v2216 = vsel %vm553, %v2209, 0
        %v2218 = vsel %vm553, %v2211, 0
        %v2221 = vsel %vm562, %v2202, 0
        %v2224 = vsel %vm562, %v2203, 0
        %2226 = vmatprep.subr.mxu0 0.0
        %2227 = vmatpush1.msra.mxu0 0.0
        %2228 = vmatprep.subr.mxu0 0.0
        %2229 = vmatpush1.msra.mxu0 0.0
        %2230 = vmatprep.subr.mxu0 0.0
        %2231 = vmatpush1.msra.mxu0 0.0
        %2232 = vmatprep.subr.mxu0 0.0
        %2233 = vmatpush1.msra.mxu0 0.0
        %2234 = vmatprep.subr.mxu0 0.0
        %2235 = vmatpush1.msra.mxu0 0.0
        %2236 = vmatprep.subr.mxu0 %v2224
        %2237 = vmatpush1.msra.mxu0 %v2221
        %2238 = vmatprep.subr.mxu0 %v2201
        %2239 = vmatpush1.msra.mxu0 %v2200
        %2240 = vmatprep.subr.mxu0 %v2199
        %2241 = vmatpush1.msra.mxu0 %v2198
        %2242 = vmatprep.subr.mxu0 %v2197
        %2243 = vmatpush1.msra.mxu0 %v2196
        %2244 = vmatprep.subr.mxu0 %v2195
        %2245 = vmatpush1.msra.mxu0 %v2194
        %2246 = vmatprep.subr.mxu0 %v2193
        %2247 = vmatpush1.msra.mxu0 %v2192
        %2248 = vmatprep.subr.mxu0 %v2191
        %2249 = vmatpush1.msra.mxu0 %v2190
        %2250 = vmatprep.subr.mxu0 %v2189
        %2251 = vmatpush1.msra.mxu0 %v2188
        %2252 = vmatprep.subr.mxu0 %v2187
        %2253 = vmatpush1.msra.mxu0 %v2186
        %2254 = vmatprep.subr.mxu0 %v2185
        %2255 = vmatpush1.msra.mxu0 %v2184
        %2256 = vmatprep.subr.mxu0 %v2183
        %2257 = vmatpush1.msra.mxu0 %v2182
        %2258 = vmatprep.subr.mxu0 0.0
        %2259 = vmatpush2.msra.mxu0 0.0
        %2260 = vmatprep.subr.mxu0 0.0
        %2261 = vmatpush2.msra.mxu0 0.0
        %2262 = vmatprep.subr.mxu0 0.0
        %2263 = vmatpush2.msra.mxu0 0.0
        %2264 = vmatprep.subr.mxu0 0.0
        %2265 = vmatpush2.msra.mxu0 0.0
        %2266 = vmatprep.subr.mxu0 0.0
        %2267 = vmatpush2.msra.mxu0 0.0
        %2268 = vmatprep.subr.mxu0 0.0
        %2269 = vmatpush2.msra.mxu0 0.0
        %2270 = vmatprep.subr.mxu0 0.0
        %2271 = vmatpush2.msra.mxu0 0.0
        %2272 = vmatprep.subr.mxu0 0.0
        %2273 = vmatpush2.msra.mxu0 0.0
        %2274 = vmatprep.subr.mxu0 0.0
        %2275 = vmatpush2.msra.mxu0 0.0
        %2276 = vmatprep.subr.mxu0 0.0
        %2277 = vmatpush2.msra.mxu0 0.0
        %2278 = vmatprep.subr.mxu0 0.0
        %2279 = vmatpush2.msra.mxu0 0.0
        %2280 = vmatprep.subr.mxu0 0.0
        %2281 = vmatpush2.msra.mxu0 0.0
        %2282 = vmatprep.subr.mxu0 0.0
        %2283 = vmatpush2.msra.mxu0 0.0
        %2284 = vmatprep.subr.mxu0 0.0
        %2285 = vmatpush2.msra.mxu0 0.0
        %2286 = vmatprep.subr.mxu0 0.0
        %2287 = vmatpush2.msra.mxu0 0.0
        %2288 = vmatprep.subr.mxu0 0.0
        %2289 = vmatpush2.msra.mxu0 0.0
        %2290 = vmatprep.mubr.f32.mxu0 0.0
        %2291 = vmatmul.mubr.f32.gmra.mxu0 %v2212
        %v2292 = vpop.f32.mrf.mxu0
        %v2293 = vadd.f32 0.0, %v2292
        %v2294 = vpop.f32.mrf.mxu0
        %v2295 = vadd.f32 0.0, %v2294
        %2296 = vmatprep.mubr.f32.mxu0 0.0
        %2297 = vmatmul.mubr.f32.gmra.mxu0 %v2214
        %v2298 = vpop.f32.mrf.mxu0
        %v2299 = vadd.f32 0.0, %v2298
        %v2300 = vpop.f32.mrf.mxu0
        %v2301 = vadd.f32 0.0, %v2300
        %2302 = vmatprep.mubr.f32.mxu0 0.0
        %2303 = vmatmul.mubr.f32.gmra.mxu0 %v2216
        %v2304 = vpop.f32.mrf.mxu0
        %v2305 = vadd.f32 0.0, %v2304
        %v2306 = vpop.f32.mrf.mxu0
        %v2307 = vadd.f32 0.0, %v2306
        %2308 = vmatprep.mubr.f32.mxu0 0.0
        %2309 = vmatmul.mubr.f32.gmra.mxu0 %v2218
        %v2310 = vpop.f32.mrf.mxu0
        %v2311 = vadd.f32 0.0, %v2310
        %v2312 = vpop.f32.mrf.mxu0
        %v2313 = vadd.f32 0.0, %v2312
        %2314 = vdwg.mxu0
        %v2315 = vadd.f32 %v2173, %v2293
        %v2316 = vadd.f32 %v2174, %v2295
        %v2317 = vadd.f32 %v2175, %v2299
        %v2318 = vadd.f32 %v2176, %v2301
        %v2319 = vadd.f32 %v2177, %v2305
        %v2320 = vadd.f32 %v2178, %v2307
        %v2321 = vadd.f32 %v2179, %v2311
        %v2322 = vadd.f32 %v2180, %v2313
        %s2323 = scalar_lea.vmem %s1, 2288
        %v2324 = vld [vmem:[%s2323] sm:$0xff]
        %v2325 = vld [vmem:[%s2323 + $0x8] sm:$0xff]
        %v2326 = vld [vmem:[%s2323 + $0x10] sm:$0xff]
        %v2327 = vld [vmem:[%s2323 + $0x18] sm:$0xff]
        %v2328 = vld [vmem:[%s2323 + $0x20] sm:$0xff]
        %v2329 = vld [vmem:[%s2323 + $0x28] sm:$0xff]
        %v2330 = vld [vmem:[%s2323 + $0x30] sm:$0xff]
        %v2331 = vld [vmem:[%s2323 + $0x38] sm:$0xff]
        %v2332 = vld [vmem:[%s2323 + $0x40] sm:$0xff]
        %v2333 = vld [vmem:[%s2323 + $0x48] sm:$0xff]
        %v2334 = vld [vmem:[%s2323 + $0x50] sm:$0xff]
        %v2335 = vld [vmem:[%s2323 + $0x58] sm:$0xff]
        %v2336 = vld [vmem:[%s2323 + $0x60] sm:$0xff]
        %v2337 = vld [vmem:[%s2323 + $0x68] sm:$0xff]
        %v2338 = vld [vmem:[%s2323 + $0x70] sm:$0xff]
        %v2339 = vld [vmem:[%s2323 + $0x78] sm:$0xff]
        %v2340 = vld [vmem:[%s2323 + $0x80] sm:$0xff]
        %v2341 = vld [vmem:[%s2323 + $0x88] sm:$0xff]
        %v2342 = vld [vmem:[%s2323 + $0x90] sm:$0xff]
        %v2343 = vld [vmem:[%s2323 + $0x98] sm:$0xff]
        %v2344 = vld [vmem:[%s2323 + $0xa0] sm:$0xf]
        %v2345 = vld [vmem:[%s2323 + $0xa8] sm:$0xf]
        %2346 = vrot.lane.b32.xlu0 %v1923, 119
        %v2347 = vpop.permute.xlu0 %2346
        %2348 = vrot.lane.b32.xlu0 %v1925, 119
        %v2349 = vpop.permute.xlu0 %2348
        %2350 = vrot.lane.b32.xlu0 %v1927, 119
        %v2351 = vpop.permute.xlu0 %2350
        %2352 = vrot.lane.b32.xlu0 %v1926, 119
        %v2353 = vpop.permute.xlu0 %2352
        %v2354 = vsel %vm553, %v2347, 0
        %v2356 = vsel %vm553, %v2349, 0
        %v2358 = vsel %vm553, %v2351, 0
        %v2360 = vsel %vm553, %v2353, 0
        %v2363 = vsel %vm562, %v2344, 0
        %v2366 = vsel %vm562, %v2345, 0
        %2368 = vmatprep.subr.mxu0 0.0
        %2369 = vmatpush1.msra.mxu0 0.0
        %2370 = vmatprep.subr.mxu0 0.0
        %2371 = vmatpush1.msra.mxu0 0.0
        %2372 = vmatprep.subr.mxu0 0.0
        %2373 = vmatpush1.msra.mxu0 0.0
        %2374 = vmatprep.subr.mxu0 0.0
        %2375 = vmatpush1.msra.mxu0 0.0
        %2376 = vmatprep.subr.mxu0 0.0
        %2377 = vmatpush1.msra.mxu0 0.0
        %2378 = vmatprep.subr.mxu0 %v2366
        %2379 = vmatpush1.msra.mxu0 %v2363
        %2380 = vmatprep.subr.mxu0 %v2343
        %2381 = vmatpush1.msra.mxu0 %v2342
        %2382 = vmatprep.subr.mxu0 %v2341
        %2383 = vmatpush1.msra.mxu0 %v2340
        %2384 = vmatprep.subr.mxu0 %v2339
        %2385 = vmatpush1.msra.mxu0 %v2338
        %2386 = vmatprep.subr.mxu0 %v2337
        %2387 = vmatpush1.msra.mxu0 %v2336
        %2388 = vmatprep.subr.mxu0 %v2335
        %2389 = vmatpush1.msra.mxu0 %v2334
        %2390 = vmatprep.subr.mxu0 %v2333
        %2391 = vmatpush1.msra.mxu0 %v2332
        %2392 = vmatprep.subr.mxu0 %v2331
        %2393 = vmatpush1.msra.mxu0 %v2330
        %2394 = vmatprep.subr.mxu0 %v2329
        %2395 = vmatpush1.msra.mxu0 %v2328
        %2396 = vmatprep.subr.mxu0 %v2327
        %2397 = vmatpush1.msra.mxu0 %v2326
        %2398 = vmatprep.subr.mxu0 %v2325
        %2399 = vmatpush1.msra.mxu0 %v2324
        %2400 = vmatprep.subr.mxu0 0.0
        %2401 = vmatpush2.msra.mxu0 0.0
        %2402 = vmatprep.subr.mxu0 0.0
        %2403 = vmatpush2.msra.mxu0 0.0
        %2404 = vmatprep.subr.mxu0 0.0
        %2405 = vmatpush2.msra.mxu0 0.0
        %2406 = vmatprep.subr.mxu0 0.0
        %2407 = vmatpush2.msra.mxu0 0.0
        %2408 = vmatprep.subr.mxu0 0.0
        %2409 = vmatpush2.msra.mxu0 0.0
        %2410 = vmatprep.subr.mxu0 0.0
        %2411 = vmatpush2.msra.mxu0 0.0
        %2412 = vmatprep.subr.mxu0 0.0
        %2413 = vmatpush2.msra.mxu0 0.0
        %2414 = vmatprep.subr.mxu0 0.0
        %2415 = vmatpush2.msra.mxu0 0.0
        %2416 = vmatprep.subr.mxu0 0.0
        %2417 = vmatpush2.msra.mxu0 0.0
        %2418 = vmatprep.subr.mxu0 0.0
        %2419 = vmatpush2.msra.mxu0 0.0
        %2420 = vmatprep.subr.mxu0 0.0
        %2421 = vmatpush2.msra.mxu0 0.0
        %2422 = vmatprep.subr.mxu0 0.0
        %2423 = vmatpush2.msra.mxu0 0.0
        %2424 = vmatprep.subr.mxu0 0.0
        %2425 = vmatpush2.msra.mxu0 0.0
        %2426 = vmatprep.subr.mxu0 0.0
        %2427 = vmatpush2.msra.mxu0 0.0
        %2428 = vmatprep.subr.mxu0 0.0
        %2429 = vmatpush2.msra.mxu0 0.0
        %2430 = vmatprep.subr.mxu0 0.0
        %2431 = vmatpush2.msra.mxu0 0.0
        %2432 = vmatprep.mubr.f32.mxu0 0.0
        %2433 = vmatmul.mubr.f32.gmra.mxu0 %v2354
        %v2434 = vpop.f32.mrf.mxu0
        %v2435 = vadd.f32 0.0, %v2434
        %v2436 = vpop.f32.mrf.mxu0
        %v2437 = vadd.f32 0.0, %v2436
        %2438 = vmatprep.mubr.f32.mxu0 0.0
        %2439 = vmatmul.mubr.f32.gmra.mxu0 %v2356
        %v2440 = vpop.f32.mrf.mxu0
        %v2441 = vadd.f32 0.0, %v2440
        %v2442 = vpop.f32.mrf.mxu0
        %v2443 = vadd.f32 0.0, %v2442
        %2444 = vmatprep.mubr.f32.mxu0 0.0
        %2445 = vmatmul.mubr.f32.gmra.mxu0 %v2358
        %v2446 = vpop.f32.mrf.mxu0
        %v2447 = vadd.f32 0.0, %v2446
        %v2448 = vpop.f32.mrf.mxu0
        %v2449 = vadd.f32 0.0, %v2448
        %2450 = vmatprep.mubr.f32.mxu0 0.0
        %2451 = vmatmul.mubr.f32.gmra.mxu0 %v2360
        %v2452 = vpop.f32.mrf.mxu0
        %v2453 = vadd.f32 0.0, %v2452
        %v2454 = vpop.f32.mrf.mxu0
        %v2455 = vadd.f32 0.0, %v2454
        %2456 = vdwg.mxu0
        %v2457 = vadd.f32 %v2315, %v2435
        %v2458 = vadd.f32 %v2316, %v2437
        %v2459 = vadd.f32 %v2317, %v2441
        %v2460 = vadd.f32 %v2318, %v2443
        %v2461 = vadd.f32 %v2319, %v2447
        %v2462 = vadd.f32 %v2320, %v2449
        %v2463 = vadd.f32 %v2321, %v2453
        %v2464 = vadd.f32 %v2322, %v2455
        %s2465 = scalar_lea.vmem %s1, 2464
        %v2466 = vld [vmem:[%s2465] sm:$0xff]
        %v2467 = vld [vmem:[%s2465 + $0x8] sm:$0xff]
        %v2468 = vld [vmem:[%s2465 + $0x10] sm:$0xff]
        %v2469 = vld [vmem:[%s2465 + $0x18] sm:$0xff]
        %v2470 = vld [vmem:[%s2465 + $0x20] sm:$0xff]
        %v2471 = vld [vmem:[%s2465 + $0x28] sm:$0xff]
        %v2472 = vld [vmem:[%s2465 + $0x30] sm:$0xff]
        %v2473 = vld [vmem:[%s2465 + $0x38] sm:$0xff]
        %v2474 = vld [vmem:[%s2465 + $0x40] sm:$0xff]
        %v2475 = vld [vmem:[%s2465 + $0x48] sm:$0xff]
        %v2476 = vld [vmem:[%s2465 + $0x50] sm:$0xff]
        %v2477 = vld [vmem:[%s2465 + $0x58] sm:$0xff]
        %v2478 = vld [vmem:[%s2465 + $0x60] sm:$0xff]
        %v2479 = vld [vmem:[%s2465 + $0x68] sm:$0xff]
        %v2480 = vld [vmem:[%s2465 + $0x70] sm:$0xff]
        %v2481 = vld [vmem:[%s2465 + $0x78] sm:$0xff]
        %v2482 = vld [vmem:[%s2465 + $0x80] sm:$0xff]
        %v2483 = vld [vmem:[%s2465 + $0x88] sm:$0xff]
        %v2484 = vld [vmem:[%s2465 + $0x90] sm:$0xff]
        %v2485 = vld [vmem:[%s2465 + $0x98] sm:$0xff]
        %v2486 = vld [vmem:[%s2465 + $0xa0] sm:$0xf]
        %v2487 = vld [vmem:[%s2465 + $0xa8] sm:$0xf]
        %2488 = vrot.lane.b32.xlu0 %v1923, 116
        %v2489 = vpop.permute.xlu0 %2488
        %2490 = vrot.lane.b32.xlu0 %v1925, 116
        %v2491 = vpop.permute.xlu0 %2490
        %2492 = vrot.lane.b32.xlu0 %v1927, 116
        %v2493 = vpop.permute.xlu0 %2492
        %2494 = vrot.lane.b32.xlu0 %v1926, 116
        %v2495 = vpop.permute.xlu0 %2494
        %v2496 = vsel %vm553, %v2489, 0
        %v2498 = vsel %vm553, %v2491, 0
        %v2500 = vsel %vm553, %v2493, 0
        %v2502 = vsel %vm553, %v2495, 0
        %v2505 = vsel %vm562, %v2486, 0
        %v2508 = vsel %vm562, %v2487, 0
        %2510 = vmatprep.subr.mxu0 0.0
        %2511 = vmatpush1.msra.mxu0 0.0
        %2512 = vmatprep.subr.mxu0 0.0
        %2513 = vmatpush1.msra.mxu0 0.0
        %2514 = vmatprep.subr.mxu0 0.0
        %2515 = vmatpush1.msra.mxu0 0.0
        %2516 = vmatprep.subr.mxu0 0.0
        %2517 = vmatpush1.msra.mxu0 0.0
        %2518 = vmatprep.subr.mxu0 0.0
        %2519 = vmatpush1.msra.mxu0 0.0
        %2520 = vmatprep.subr.mxu0 %v2508
        %2521 = vmatpush1.msra.mxu0 %v2505
        %2522 = vmatprep.subr.mxu0 %v2485
        %2523 = vmatpush1.msra.mxu0 %v2484
        %2524 = vmatprep.subr.mxu0 %v2483
        %2525 = vmatpush1.msra.mxu0 %v2482
        %2526 = vmatprep.subr.mxu0 %v2481
        %2527 = vmatpush1.msra.mxu0 %v2480
        %2528 = vmatprep.subr.mxu0 %v2479
        %2529 = vmatpush1.msra.mxu0 %v2478
        %2530 = vmatprep.subr.mxu0 %v2477
        %2531 = vmatpush1.msra.mxu0 %v2476
        %2532 = vmatprep.subr.mxu0 %v2475
        %2533 = vmatpush1.msra.mxu0 %v2474
        %2534 = vmatprep.subr.mxu0 %v2473
        %2535 = vmatpush1.msra.mxu0 %v2472
        %2536 = vmatprep.subr.mxu0 %v2471
        %2537 = vmatpush1.msra.mxu0 %v2470
        %2538 = vmatprep.subr.mxu0 %v2469
        %2539 = vmatpush1.msra.mxu0 %v2468
        %2540 = vmatprep.subr.mxu0 %v2467
        %2541 = vmatpush1.msra.mxu0 %v2466
        %2542 = vmatprep.subr.mxu0 0.0
        %2543 = vmatpush2.msra.mxu0 0.0
        %2544 = vmatprep.subr.mxu0 0.0
        %2545 = vmatpush2.msra.mxu0 0.0
        %2546 = vmatprep.subr.mxu0 0.0
        %2547 = vmatpush2.msra.mxu0 0.0
        %2548 = vmatprep.subr.mxu0 0.0
        %2549 = vmatpush2.msra.mxu0 0.0
        %2550 = vmatprep.subr.mxu0 0.0
        %2551 = vmatpush2.msra.mxu0 0.0
        %2552 = vmatprep.subr.mxu0 0.0
        %2553 = vmatpush2.msra.mxu0 0.0
        %2554 = vmatprep.subr.mxu0 0.0
        %2555 = vmatpush2.msra.mxu0 0.0
        %2556 = vmatprep.subr.mxu0 0.0
        %2557 = vmatpush2.msra.mxu0 0.0
        %2558 = vmatprep.subr.mxu0 0.0
        %2559 = vmatpush2.msra.mxu0 0.0
        %2560 = vmatprep.subr.mxu0 0.0
        %2561 = vmatpush2.msra.mxu0 0.0
        %2562 = vmatprep.subr.mxu0 0.0
        %2563 = vmatpush2.msra.mxu0 0.0
        %2564 = vmatprep.subr.mxu0 0.0
        %2565 = vmatpush2.msra.mxu0 0.0
        %2566 = vmatprep.subr.mxu0 0.0
        %2567 = vmatpush2.msra.mxu0 0.0
        %2568 = vmatprep.subr.mxu0 0.0
        %2569 = vmatpush2.msra.mxu0 0.0
        %2570 = vmatprep.subr.mxu0 0.0
        %2571 = vmatpush2.msra.mxu0 0.0
        %2572 = vmatprep.subr.mxu0 0.0
        %2573 = vmatpush2.msra.mxu0 0.0
        %2574 = vmatprep.mubr.f32.mxu0 0.0
        %2575 = vmatmul.mubr.f32.gmra.mxu0 %v2496
        %v2576 = vpop.f32.mrf.mxu0
        %v2577 = vadd.f32 0.0, %v2576
        %v2578 = vpop.f32.mrf.mxu0
        %v2579 = vadd.f32 0.0, %v2578
        %2580 = vmatprep.mubr.f32.mxu0 0.0
        %2581 = vmatmul.mubr.f32.gmra.mxu0 %v2498
        %v2582 = vpop.f32.mrf.mxu0
        %v2583 = vadd.f32 0.0, %v2582
        %v2584 = vpop.f32.mrf.mxu0
        %v2585 = vadd.f32 0.0, %v2584
        %2586 = vmatprep.mubr.f32.mxu0 0.0
        %2587 = vmatmul.mubr.f32.gmra.mxu0 %v2500
        %v2588 = vpop.f32.mrf.mxu0
        %v2589 = vadd.f32 0.0, %v2588
        %v2590 = vpop.f32.mrf.mxu0
        %v2591 = vadd.f32 0.0, %v2590
        %2592 = vmatprep.mubr.f32.mxu0 0.0
        %2593 = vmatmul.mubr.f32.gmra.mxu0 %v2502
        %v2594 = vpop.f32.mrf.mxu0
        %v2595 = vadd.f32 0.0, %v2594
        %v2596 = vpop.f32.mrf.mxu0
        %v2597 = vadd.f32 0.0, %v2596
        %2598 = vdwg.mxu0
        %v2599 = vadd.f32 %v2457, %v2577
        %v2600 = vadd.f32 %v2458, %v2579
        %v2601 = vadd.f32 %v2459, %v2583
        %v2602 = vadd.f32 %v2460, %v2585
        %v2603 = vadd.f32 %v2461, %v2589
        %v2604 = vadd.f32 %v2462, %v2591
        %v2605 = vadd.f32 %v2463, %v2595
        %v2606 = vadd.f32 %v2464, %v2597
        %s2607 = scalar_lea.vmem %s1, 2640
        %v2608 = vld [vmem:[%s2607] sm:$0xff]
        %v2609 = vld [vmem:[%s2607 + $0x8] sm:$0xff]
        %v2610 = vld [vmem:[%s2607 + $0x10] sm:$0xff]
        %v2611 = vld [vmem:[%s2607 + $0x18] sm:$0xff]
        %v2612 = vld [vmem:[%s2607 + $0x20] sm:$0xff]
        %v2613 = vld [vmem:[%s2607 + $0x28] sm:$0xff]
        %v2614 = vld [vmem:[%s2607 + $0x30] sm:$0xff]
        %v2615 = vld [vmem:[%s2607 + $0x38] sm:$0xff]
        %v2616 = vld [vmem:[%s2607 + $0x40] sm:$0xff]
        %v2617 = vld [vmem:[%s2607 + $0x48] sm:$0xff]
        %v2618 = vld [vmem:[%s2607 + $0x50] sm:$0xff]
        %v2619 = vld [vmem:[%s2607 + $0x58] sm:$0xff]
        %v2620 = vld [vmem:[%s2607 + $0x60] sm:$0xff]
        %v2621 = vld [vmem:[%s2607 + $0x68] sm:$0xff]
        %v2622 = vld [vmem:[%s2607 + $0x70] sm:$0xff]
        %v2623 = vld [vmem:[%s2607 + $0x78] sm:$0xff]
        %v2624 = vld [vmem:[%s2607 + $0x80] sm:$0xff]
        %v2625 = vld [vmem:[%s2607 + $0x88] sm:$0xff]
        %v2626 = vld [vmem:[%s2607 + $0x90] sm:$0xff]
        %v2627 = vld [vmem:[%s2607 + $0x98] sm:$0xff]
        %v2628 = vld [vmem:[%s2607 + $0xa0] sm:$0xf]
        %v2629 = vld [vmem:[%s2607 + $0xa8] sm:$0xf]
        %vm2630 = vcmask 1044480
        %v2631 = vrot.slane %v492, 3
        %v2632 = vrot.slane %v493, 3
        %v2633 = vsel %vm2630, %v2631, %v2632
        %v2634 = vrot.slane %v494, 3
        %v2635 = vsel %vm2630, %v2632, %v2634
        %v2636 = vrot.slane %v495, 3
        %v2637 = vsel %vm2630, %v2634, %v2636
        %v2638 = vsel %vm553, %v2633, 0
        %v2640 = vsel %vm553, %v2635, 0
        %v2642 = vsel %vm553, %v2637, 0
        %v2644 = vsel %vm553, %v2636, 0
        %v2647 = vsel %vm562, %v2628, 0
        %v2650 = vsel %vm562, %v2629, 0
        %2652 = vmatprep.subr.mxu0 0.0
        %2653 = vmatpush1.msra.mxu0 0.0
        %2654 = vmatprep.subr.mxu0 0.0
        %2655 = vmatpush1.msra.mxu0 0.0
        %2656 = vmatprep.subr.mxu0 0.0
        %2657 = vmatpush1.msra.mxu0 0.0
        %2658 = vmatprep.subr.mxu0 0.0
        %2659 = vmatpush1.msra.mxu0 0.0
        %2660 = vmatprep.subr.mxu0 0.0
        %2661 = vmatpush1.msra.mxu0 0.0
        %2662 = vmatprep.subr.mxu0 %v2650
        %2663 = vmatpush1.msra.mxu0 %v2647
        %2664 = vmatprep.subr.mxu0 %v2627
        %2665 = vmatpush1.msra.mxu0 %v2626
        %2666 = vmatprep.subr.mxu0 %v2625
        %2667 = vmatpush1.msra.mxu0 %v2624
        %2668 = vmatprep.subr.mxu0 %v2623
        %2669 = vmatpush1.msra.mxu0 %v2622
        %2670 = vmatprep.subr.mxu0 %v2621
        %2671 = vmatpush1.msra.mxu0 %v2620
        %2672 = vmatprep.subr.mxu0 %v2619
        %2673 = vmatpush1.msra.mxu0 %v2618
        %2674 = vmatprep.subr.mxu0 %v2617
        %2675 = vmatpush1.msra.mxu0 %v2616
        %2676 = vmatprep.subr.mxu0 %v2615
        %2677 = vmatpush1.msra.mxu0 %v2614
        %2678 = vmatprep.subr.mxu0 %v2613
        %2679 = vmatpush1.msra.mxu0 %v2612
        %2680 = vmatprep.subr.mxu0 %v2611
        %2681 = vmatpush1.msra.mxu0 %v2610
        %2682 = vmatprep.subr.mxu0 %v2609
        %2683 = vmatpush1.msra.mxu0 %v2608
        %2684 = vmatprep.subr.mxu0 0.0
        %2685 = vmatpush2.msra.mxu0 0.0
        %2686 = vmatprep.subr.mxu0 0.0
        %2687 = vmatpush2.msra.mxu0 0.0
        %2688 = vmatprep.subr.mxu0 0.0
        %2689 = vmatpush2.msra.mxu0 0.0
        %2690 = vmatprep.subr.mxu0 0.0
        %2691 = vmatpush2.msra.mxu0 0.0
        %2692 = vmatprep.subr.mxu0 0.0
        %2693 = vmatpush2.msra.mxu0 0.0
        %2694 = vmatprep.subr.mxu0 0.0
        %2695 = vmatpush2.msra.mxu0 0.0
        %2696 = vmatprep.subr.mxu0 0.0
        %2697 = vmatpush2.msra.mxu0 0.0
        %2698 = vmatprep.subr.mxu0 0.0
        %2699 = vmatpush2.msra.mxu0 0.0
        %2700 = vmatprep.subr.mxu0 0.0
        %2701 = vmatpush2.msra.mxu0 0.0
        %2702 = vmatprep.subr.mxu0 0.0
        %2703 = vmatpush2.msra.mxu0 0.0
        %2704 = vmatprep.subr.mxu0 0.0
        %2705 = vmatpush2.msra.mxu0 0.0
        %2706 = vmatprep.subr.mxu0 0.0
        %2707 = vmatpush2.msra.mxu0 0.0
        %2708 = vmatprep.subr.mxu0 0.0
        %2709 = vmatpush2.msra.mxu0 0.0
        %2710 = vmatprep.subr.mxu0 0.0
        %2711 = vmatpush2.msra.mxu0 0.0
        %2712 = vmatprep.subr.mxu0 0.0
        %2713 = vmatpush2.msra.mxu0 0.0
        %2714 = vmatprep.subr.mxu0 0.0
        %2715 = vmatpush2.msra.mxu0 0.0
        %2716 = vmatprep.mubr.f32.mxu0 0.0
        %2717 = vmatmul.mubr.f32.gmra.mxu0 %v2638
        %v2718 = vpop.f32.mrf.mxu0
        %v2719 = vadd.f32 0.0, %v2718
        %v2720 = vpop.f32.mrf.mxu0
        %v2721 = vadd.f32 0.0, %v2720
        %2722 = vmatprep.mubr.f32.mxu0 0.0
        %2723 = vmatmul.mubr.f32.gmra.mxu0 %v2640
        %v2724 = vpop.f32.mrf.mxu0
        %v2725 = vadd.f32 0.0, %v2724
        %v2726 = vpop.f32.mrf.mxu0
        %v2727 = vadd.f32 0.0, %v2726
        %2728 = vmatprep.mubr.f32.mxu0 0.0
        %2729 = vmatmul.mubr.f32.gmra.mxu0 %v2642
        %v2730 = vpop.f32.mrf.mxu0
        %v2731 = vadd.f32 0.0, %v2730
        %v2732 = vpop.f32.mrf.mxu0
        %v2733 = vadd.f32 0.0, %v2732
        %2734 = vmatprep.mubr.f32.mxu0 0.0
        %2735 = vmatmul.mubr.f32.gmra.mxu0 %v2644
        %v2736 = vpop.f32.mrf.mxu0
        %v2737 = vadd.f32 0.0, %v2736
        %v2738 = vpop.f32.mrf.mxu0
        %v2739 = vadd.f32 0.0, %v2738
        %2740 = vdwg.mxu0
        %v2741 = vadd.f32 %v2599, %v2719
        %v2742 = vadd.f32 %v2600, %v2721
        %v2743 = vadd.f32 %v2601, %v2725
        %v2744 = vadd.f32 %v2602, %v2727
        %v2745 = vadd.f32 %v2603, %v2731
        %v2746 = vadd.f32 %v2604, %v2733
        %v2747 = vadd.f32 %v2605, %v2737
        %v2748 = vadd.f32 %v2606, %v2739
        %s2749 = scalar_lea.vmem %s1, 2816
        %v2750 = vld [vmem:[%s2749] sm:$0xff]
        %v2751 = vld [vmem:[%s2749 + $0x8] sm:$0xff]
        %v2752 = vld [vmem:[%s2749 + $0x10] sm:$0xff]
        %v2753 = vld [vmem:[%s2749 + $0x18] sm:$0xff]
        %v2754 = vld [vmem:[%s2749 + $0x20] sm:$0xff]
        %v2755 = vld [vmem:[%s2749 + $0x28] sm:$0xff]
        %v2756 = vld [vmem:[%s2749 + $0x30] sm:$0xff]
        %v2757 = vld [vmem:[%s2749 + $0x38] sm:$0xff]
        %v2758 = vld [vmem:[%s2749 + $0x40] sm:$0xff]
        %v2759 = vld [vmem:[%s2749 + $0x48] sm:$0xff]
        %v2760 = vld [vmem:[%s2749 + $0x50] sm:$0xff]
        %v2761 = vld [vmem:[%s2749 + $0x58] sm:$0xff]
        %v2762 = vld [vmem:[%s2749 + $0x60] sm:$0xff]
        %v2763 = vld [vmem:[%s2749 + $0x68] sm:$0xff]
        %v2764 = vld [vmem:[%s2749 + $0x70] sm:$0xff]
        %v2765 = vld [vmem:[%s2749 + $0x78] sm:$0xff]
        %v2766 = vld [vmem:[%s2749 + $0x80] sm:$0xff]
        %v2767 = vld [vmem:[%s2749 + $0x88] sm:$0xff]
        %v2768 = vld [vmem:[%s2749 + $0x90] sm:$0xff]
        %v2769 = vld [vmem:[%s2749 + $0x98] sm:$0xff]
        %v2770 = vld [vmem:[%s2749 + $0xa0] sm:$0xf]
        %v2771 = vld [vmem:[%s2749 + $0xa8] sm:$0xf]
        %2772 = vrot.lane.b32.xlu0 %v2633, 125
        %v2773 = vpop.permute.xlu0 %2772
        %2774 = vrot.lane.b32.xlu0 %v2635, 125
        %v2775 = vpop.permute.xlu0 %2774
        %2776 = vrot.lane.b32.xlu0 %v2637, 125
        %v2777 = vpop.permute.xlu0 %2776
        %2778 = vrot.lane.b32.xlu0 %v2636, 125
        %v2779 = vpop.permute.xlu0 %2778
        %v2780 = vsel %vm553, %v2773, 0
        %v2782 = vsel %vm553, %v2775, 0
        %v2784 = vsel %vm553, %v2777, 0
        %v2786 = vsel %vm553, %v2779, 0
        %v2789 = vsel %vm562, %v2770, 0
        %v2792 = vsel %vm562, %v2771, 0
        %2794 = vmatprep.subr.mxu0 0.0
        %2795 = vmatpush1.msra.mxu0 0.0
        %2796 = vmatprep.subr.mxu0 0.0
        %2797 = vmatpush1.msra.mxu0 0.0
        %2798 = vmatprep.subr.mxu0 0.0
        %2799 = vmatpush1.msra.mxu0 0.0
        %2800 = vmatprep.subr.mxu0 0.0
        %2801 = vmatpush1.msra.mxu0 0.0
        %2802 = vmatprep.subr.mxu0 0.0
        %2803 = vmatpush1.msra.mxu0 0.0
        %2804 = vmatprep.subr.mxu0 %v2792
        %2805 = vmatpush1.msra.mxu0 %v2789
        %2806 = vmatprep.subr.mxu0 %v2769
        %2807 = vmatpush1.msra.mxu0 %v2768
        %2808 = vmatprep.subr.mxu0 %v2767
        %2809 = vmatpush1.msra.mxu0 %v2766
        %2810 = vmatprep.subr.mxu0 %v2765
        %2811 = vmatpush1.msra.mxu0 %v2764
        %2812 = vmatprep.subr.mxu0 %v2763
        %2813 = vmatpush1.msra.mxu0 %v2762
        %2814 = vmatprep.subr.mxu0 %v2761
        %2815 = vmatpush1.msra.mxu0 %v2760
        %2816 = vmatprep.subr.mxu0 %v2759
        %2817 = vmatpush1.msra.mxu0 %v2758
        %2818 = vmatprep.subr.mxu0 %v2757
        %2819 = vmatpush1.msra.mxu0 %v2756
        %2820 = vmatprep.subr.mxu0 %v2755
        %2821 = vmatpush1.msra.mxu0 %v2754
        %2822 = vmatprep.subr.mxu0 %v2753
        %2823 = vmatpush1.msra.mxu0 %v2752
        %2824 = vmatprep.subr.mxu0 %v2751
        %2825 = vmatpush1.msra.mxu0 %v2750
        %2826 = vmatprep.subr.mxu0 0.0
        %2827 = vmatpush2.msra.mxu0 0.0
        %2828 = vmatprep.subr.mxu0 0.0
        %2829 = vmatpush2.msra.mxu0 0.0
        %2830 = vmatprep.subr.mxu0 0.0
        %2831 = vmatpush2.msra.mxu0 0.0
        %2832 = vmatprep.subr.mxu0 0.0
        %2833 = vmatpush2.msra.mxu0 0.0
        %2834 = vmatprep.subr.mxu0 0.0
        %2835 = vmatpush2.msra.mxu0 0.0
        %2836 = vmatprep.subr.mxu0 0.0
        %2837 = vmatpush2.msra.mxu0 0.0
        %2838 = vmatprep.subr.mxu0 0.0
        %2839 = vmatpush2.msra.mxu0 0.0
        %2840 = vmatprep.subr.mxu0 0.0
        %2841 = vmatpush2.msra.mxu0 0.0
        %2842 = vmatprep.subr.mxu0 0.0
        %2843 = vmatpush2.msra.mxu0 0.0
        %2844 = vmatprep.subr.mxu0 0.0
        %2845 = vmatpush2.msra.mxu0 0.0
        %2846 = vmatprep.subr.mxu0 0.0
        %2847 = vmatpush2.msra.mxu0 0.0
        %2848 = vmatprep.subr.mxu0 0.0
        %2849 = vmatpush2.msra.mxu0 0.0
        %2850 = vmatprep.subr.mxu0 0.0
        %2851 = vmatpush2.msra.mxu0 0.0
        %2852 = vmatprep.subr.mxu0 0.0
        %2853 = vmatpush2.msra.mxu0 0.0
        %2854 = vmatprep.subr.mxu0 0.0
        %2855 = vmatpush2.msra.mxu0 0.0
        %2856 = vmatprep.subr.mxu0 0.0
        %2857 = vmatpush2.msra.mxu0 0.0
        %2858 = vmatprep.mubr.f32.mxu0 0.0
        %2859 = vmatmul.mubr.f32.gmra.mxu0 %v2780
        %v2860 = vpop.f32.mrf.mxu0
        %v2861 = vadd.f32 0.0, %v2860
        %v2862 = vpop.f32.mrf.mxu0
        %v2863 = vadd.f32 0.0, %v2862
        %2864 = vmatprep.mubr.f32.mxu0 0.0
        %2865 = vmatmul.mubr.f32.gmra.mxu0 %v2782
        %v2866 = vpop.f32.mrf.mxu0
        %v2867 = vadd.f32 0.0, %v2866
        %v2868 = vpop.f32.mrf.mxu0
        %v2869 = vadd.f32 0.0, %v2868
        %2870 = vmatprep.mubr.f32.mxu0 0.0
        %2871 = vmatmul.mubr.f32.gmra.mxu0 %v2784
        %v2872 = vpop.f32.mrf.mxu0
        %v2873 = vadd.f32 0.0, %v2872
        %v2874 = vpop.f32.mrf.mxu0
        %v2875 = vadd.f32 0.0, %v2874
        %2876 = vmatprep.mubr.f32.mxu0 0.0
        %2877 = vmatmul.mubr.f32.gmra.mxu0 %v2786
        %v2878 = vpop.f32.mrf.mxu0
        %v2879 = vadd.f32 0.0, %v2878
        %v2880 = vpop.f32.mrf.mxu0
        %v2881 = vadd.f32 0.0, %v2880
        %2882 = vdwg.mxu0
        %v2883 = vadd.f32 %v2741, %v2861
        %v2884 = vadd.f32 %v2742, %v2863
        %v2885 = vadd.f32 %v2743, %v2867
        %v2886 = vadd.f32 %v2744, %v2869
        %v2887 = vadd.f32 %v2745, %v2873
        %v2888 = vadd.f32 %v2746, %v2875
        %v2889 = vadd.f32 %v2747, %v2879
        %v2890 = vadd.f32 %v2748, %v2881
        %s2891 = scalar_lea.vmem %s1, 2992
        %v2892 = vld [vmem:[%s2891] sm:$0xff]
        %v2893 = vld [vmem:[%s2891 + $0x8] sm:$0xff]
        %v2894 = vld [vmem:[%s2891 + $0x10] sm:$0xff]
        %v2895 = vld [vmem:[%s2891 + $0x18] sm:$0xff]
        %v2896 = vld [vmem:[%s2891 + $0x20] sm:$0xff]
        %v2897 = vld [vmem:[%s2891 + $0x28] sm:$0xff]
        %v2898 = vld [vmem:[%s2891 + $0x30] sm:$0xff]
        %v2899 = vld [vmem:[%s2891 + $0x38] sm:$0xff]
        %v2900 = vld [vmem:[%s2891 + $0x40] sm:$0xff]
        %v2901 = vld [vmem:[%s2891 + $0x48] sm:$0xff]
        %v2902 = vld [vmem:[%s2891 + $0x50] sm:$0xff]
        %v2903 = vld [vmem:[%s2891 + $0x58] sm:$0xff]
        %v2904 = vld [vmem:[%s2891 + $0x60] sm:$0xff]
        %v2905 = vld [vmem:[%s2891 + $0x68] sm:$0xff]
        %v2906 = vld [vmem:[%s2891 + $0x70] sm:$0xff]
        %v2907 = vld [vmem:[%s2891 + $0x78] sm:$0xff]
        %v2908 = vld [vmem:[%s2891 + $0x80] sm:$0xff]
        %v2909 = vld [vmem:[%s2891 + $0x88] sm:$0xff]
        %v2910 = vld [vmem:[%s2891 + $0x90] sm:$0xff]
        %v2911 = vld [vmem:[%s2891 + $0x98] sm:$0xff]
        %v2912 = vld [vmem:[%s2891 + $0xa0] sm:$0xf]
        %v2913 = vld [vmem:[%s2891 + $0xa8] sm:$0xf]
        %2914 = vrot.lane.b32.xlu0 %v2633, 122
        %v2915 = vpop.permute.xlu0 %2914
        %2916 = vrot.lane.b32.xlu0 %v2635, 122
        %v2917 = vpop.permute.xlu0 %2916
        %2918 = vrot.lane.b32.xlu0 %v2637, 122
        %v2919 = vpop.permute.xlu0 %2918
        %2920 = vrot.lane.b32.xlu0 %v2636, 122
        %v2921 = vpop.permute.xlu0 %2920
        %v2922 = vsel %vm553, %v2915, 0
        %v2924 = vsel %vm553, %v2917, 0
        %v2926 = vsel %vm553, %v2919, 0
        %v2928 = vsel %vm553, %v2921, 0
        %v2931 = vsel %vm562, %v2912, 0
        %v2934 = vsel %vm562, %v2913, 0
        %2936 = vmatprep.subr.mxu0 0.0
        %2937 = vmatpush1.msra.mxu0 0.0
        %2938 = vmatprep.subr.mxu0 0.0
        %2939 = vmatpush1.msra.mxu0 0.0
        %2940 = vmatprep.subr.mxu0 0.0
        %2941 = vmatpush1.msra.mxu0 0.0
        %2942 = vmatprep.subr.mxu0 0.0
        %2943 = vmatpush1.msra.mxu0 0.0
        %2944 = vmatprep.subr.mxu0 0.0
        %2945 = vmatpush1.msra.mxu0 0.0
        %2946 = vmatprep.subr.mxu0 %v2934
        %2947 = vmatpush1.msra.mxu0 %v2931
        %2948 = vmatprep.subr.mxu0 %v2911
        %2949 = vmatpush1.msra.mxu0 %v2910
        %2950 = vmatprep.subr.mxu0 %v2909
        %2951 = vmatpush1.msra.mxu0 %v2908
        %2952 = vmatprep.subr.mxu0 %v2907
        %2953 = vmatpush1.msra.mxu0 %v2906
        %2954 = vmatprep.subr.mxu0 %v2905
        %2955 = vmatpush1.msra.mxu0 %v2904
        %2956 = vmatprep.subr.mxu0 %v2903
        %2957 = vmatpush1.msra.mxu0 %v2902
        %2958 = vmatprep.subr.mxu0 %v2901
        %2959 = vmatpush1.msra.mxu0 %v2900
        %2960 = vmatprep.subr.mxu0 %v2899
        %2961 = vmatpush1.msra.mxu0 %v2898
        %2962 = vmatprep.subr.mxu0 %v2897
        %2963 = vmatpush1.msra.mxu0 %v2896
        %2964 = vmatprep.subr.mxu0 %v2895
        %2965 = vmatpush1.msra.mxu0 %v2894
        %2966 = vmatprep.subr.mxu0 %v2893
        %2967 = vmatpush1.msra.mxu0 %v2892
        %2968 = vmatprep.subr.mxu0 0.0
        %2969 = vmatpush2.msra.mxu0 0.0
        %2970 = vmatprep.subr.mxu0 0.0
        %2971 = vmatpush2.msra.mxu0 0.0
        %2972 = vmatprep.subr.mxu0 0.0
        %2973 = vmatpush2.msra.mxu0 0.0
        %2974 = vmatprep.subr.mxu0 0.0
        %2975 = vmatpush2.msra.mxu0 0.0
        %2976 = vmatprep.subr.mxu0 0.0
        %2977 = vmatpush2.msra.mxu0 0.0
        %2978 = vmatprep.subr.mxu0 0.0
        %2979 = vmatpush2.msra.mxu0 0.0
        %2980 = vmatprep.subr.mxu0 0.0
        %2981 = vmatpush2.msra.mxu0 0.0
        %2982 = vmatprep.subr.mxu0 0.0
        %2983 = vmatpush2.msra.mxu0 0.0
        %2984 = vmatprep.subr.mxu0 0.0
        %2985 = vmatpush2.msra.mxu0 0.0
        %2986 = vmatprep.subr.mxu0 0.0
        %2987 = vmatpush2.msra.mxu0 0.0
        %2988 = vmatprep.subr.mxu0 0.0
        %2989 = vmatpush2.msra.mxu0 0.0
        %2990 = vmatprep.subr.mxu0 0.0
        %2991 = vmatpush2.msra.mxu0 0.0
        %2992 = vmatprep.subr.mxu0 0.0
        %2993 = vmatpush2.msra.mxu0 0.0
        %2994 = vmatprep.subr.mxu0 0.0
        %2995 = vmatpush2.msra.mxu0 0.0
        %2996 = vmatprep.subr.mxu0 0.0
        %2997 = vmatpush2.msra.mxu0 0.0
        %2998 = vmatprep.subr.mxu0 0.0
        %2999 = vmatpush2.msra.mxu0 0.0
        %3000 = vmatprep.mubr.f32.mxu0 0.0
        %3001 = vmatmul.mubr.f32.gmra.mxu0 %v2922
        %v3002 = vpop.f32.mrf.mxu0
        %v3003 = vadd.f32 0.0, %v3002
        %v3004 = vpop.f32.mrf.mxu0
        %v3005 = vadd.f32 0.0, %v3004
        %3006 = vmatprep.mubr.f32.mxu0 0.0
        %3007 = vmatmul.mubr.f32.gmra.mxu0 %v2924
        %v3008 = vpop.f32.mrf.mxu0
        %v3009 = vadd.f32 0.0, %v3008
        %v3010 = vpop.f32.mrf.mxu0
        %v3011 = vadd.f32 0.0, %v3010
        %3012 = vmatprep.mubr.f32.mxu0 0.0
        %3013 = vmatmul.mubr.f32.gmra.mxu0 %v2926
        %v3014 = vpop.f32.mrf.mxu0
        %v3015 = vadd.f32 0.0, %v3014
        %v3016 = vpop.f32.mrf.mxu0
        %v3017 = vadd.f32 0.0, %v3016
        %3018 = vmatprep.mubr.f32.mxu0 0.0
        %3019 = vmatmul.mubr.f32.gmra.mxu0 %v2928
        %v3020 = vpop.f32.mrf.mxu0
        %v3021 = vadd.f32 0.0, %v3020
        %v3022 = vpop.f32.mrf.mxu0
        %v3023 = vadd.f32 0.0, %v3022
        %3024 = vdwg.mxu0
        %v3025 = vadd.f32 %v2883, %v3003
        %v3026 = vadd.f32 %v2884, %v3005
        %v3027 = vadd.f32 %v2885, %v3009
        %v3028 = vadd.f32 %v2886, %v3011
        %v3029 = vadd.f32 %v2887, %v3015
        %v3030 = vadd.f32 %v2888, %v3017
        %v3031 = vadd.f32 %v2889, %v3021
        %v3032 = vadd.f32 %v2890, %v3023
        %s3033 = scalar_lea.vmem %s1, 3168
        %v3034 = vld [vmem:[%s3033] sm:$0xff]
        %v3035 = vld [vmem:[%s3033 + $0x8] sm:$0xff]
        %v3036 = vld [vmem:[%s3033 + $0x10] sm:$0xff]
        %v3037 = vld [vmem:[%s3033 + $0x18] sm:$0xff]
        %v3038 = vld [vmem:[%s3033 + $0x20] sm:$0xff]
        %v3039 = vld [vmem:[%s3033 + $0x28] sm:$0xff]
        %v3040 = vld [vmem:[%s3033 + $0x30] sm:$0xff]
        %v3041 = vld [vmem:[%s3033 + $0x38] sm:$0xff]
        %v3042 = vld [vmem:[%s3033 + $0x40] sm:$0xff]
        %v3043 = vld [vmem:[%s3033 + $0x48] sm:$0xff]
        %v3044 = vld [vmem:[%s3033 + $0x50] sm:$0xff]
        %v3045 = vld [vmem:[%s3033 + $0x58] sm:$0xff]
        %v3046 = vld [vmem:[%s3033 + $0x60] sm:$0xff]
        %v3047 = vld [vmem:[%s3033 + $0x68] sm:$0xff]
        %v3048 = vld [vmem:[%s3033 + $0x70] sm:$0xff]
        %v3049 = vld [vmem:[%s3033 + $0x78] sm:$0xff]
        %v3050 = vld [vmem:[%s3033 + $0x80] sm:$0xff]
        %v3051 = vld [vmem:[%s3033 + $0x88] sm:$0xff]
        %v3052 = vld [vmem:[%s3033 + $0x90] sm:$0xff]
        %v3053 = vld [vmem:[%s3033 + $0x98] sm:$0xff]
        %v3054 = vld [vmem:[%s3033 + $0xa0] sm:$0xf]
        %v3055 = vld [vmem:[%s3033 + $0xa8] sm:$0xf]
        %3056 = vrot.lane.b32.xlu0 %v2633, 119
        %v3057 = vpop.permute.xlu0 %3056
        %3058 = vrot.lane.b32.xlu0 %v2635, 119
        %v3059 = vpop.permute.xlu0 %3058
        %3060 = vrot.lane.b32.xlu0 %v2637, 119
        %v3061 = vpop.permute.xlu0 %3060
        %3062 = vrot.lane.b32.xlu0 %v2636, 119
        %v3063 = vpop.permute.xlu0 %3062
        %v3064 = vsel %vm553, %v3057, 0
        %v3066 = vsel %vm553, %v3059, 0
        %v3068 = vsel %vm553, %v3061, 0
        %v3070 = vsel %vm553, %v3063, 0
        %v3073 = vsel %vm562, %v3054, 0
        %v3076 = vsel %vm562, %v3055, 0
        %3078 = vmatprep.subr.mxu0 0.0
        %3079 = vmatpush1.msra.mxu0 0.0
        %3080 = vmatprep.subr.mxu0 0.0
        %3081 = vmatpush1.msra.mxu0 0.0
        %3082 = vmatprep.subr.mxu0 0.0
        %3083 = vmatpush1.msra.mxu0 0.0
        %3084 = vmatprep.subr.mxu0 0.0
        %3085 = vmatpush1.msra.mxu0 0.0
        %3086 = vmatprep.subr.mxu0 0.0
        %3087 = vmatpush1.msra.mxu0 0.0
        %3088 = vmatprep.subr.mxu0 %v3076
        %3089 = vmatpush1.msra.mxu0 %v3073
        %3090 = vmatprep.subr.mxu0 %v3053
        %3091 = vmatpush1.msra.mxu0 %v3052
        %3092 = vmatprep.subr.mxu0 %v3051
        %3093 = vmatpush1.msra.mxu0 %v3050
        %3094 = vmatprep.subr.mxu0 %v3049
        %3095 = vmatpush1.msra.mxu0 %v3048
        %3096 = vmatprep.subr.mxu0 %v3047
        %3097 = vmatpush1.msra.mxu0 %v3046
        %3098 = vmatprep.subr.mxu0 %v3045
        %3099 = vmatpush1.msra.mxu0 %v3044
        %3100 = vmatprep.subr.mxu0 %v3043
        %3101 = vmatpush1.msra.mxu0 %v3042
        %3102 = vmatprep.subr.mxu0 %v3041
        %3103 = vmatpush1.msra.mxu0 %v3040
        %3104 = vmatprep.subr.mxu0 %v3039
        %3105 = vmatpush1.msra.mxu0 %v3038
        %3106 = vmatprep.subr.mxu0 %v3037
        %3107 = vmatpush1.msra.mxu0 %v3036
        %3108 = vmatprep.subr.mxu0 %v3035
        %3109 = vmatpush1.msra.mxu0 %v3034
        %3110 = vmatprep.subr.mxu0 0.0
        %3111 = vmatpush2.msra.mxu0 0.0
        %3112 = vmatprep.subr.mxu0 0.0
        %3113 = vmatpush2.msra.mxu0 0.0
        %3114 = vmatprep.subr.mxu0 0.0
        %3115 = vmatpush2.msra.mxu0 0.0
        %3116 = vmatprep.subr.mxu0 0.0
        %3117 = vmatpush2.msra.mxu0 0.0
        %3118 = vmatprep.subr.mxu0 0.0
        %3119 = vmatpush2.msra.mxu0 0.0
        %3120 = vmatprep.subr.mxu0 0.0
        %3121 = vmatpush2.msra.mxu0 0.0
        %3122 = vmatprep.subr.mxu0 0.0
        %3123 = vmatpush2.msra.mxu0 0.0
        %3124 = vmatprep.subr.mxu0 0.0
        %3125 = vmatpush2.msra.mxu0 0.0
        %3126 = vmatprep.subr.mxu0 0.0
        %3127 = vmatpush2.msra.mxu0 0.0
        %3128 = vmatprep.subr.mxu0 0.0
        %3129 = vmatpush2.msra.mxu0 0.0
        %3130 = vmatprep.subr.mxu0 0.0
        %3131 = vmatpush2.msra.mxu0 0.0
        %3132 = vmatprep.subr.mxu0 0.0
        %3133 = vmatpush2.msra.mxu0 0.0
        %3134 = vmatprep.subr.mxu0 0.0
        %3135 = vmatpush2.msra.mxu0 0.0
        %3136 = vmatprep.subr.mxu0 0.0
        %3137 = vmatpush2.msra.mxu0 0.0
        %3138 = vmatprep.subr.mxu0 0.0
        %3139 = vmatpush2.msra.mxu0 0.0
        %3140 = vmatprep.subr.mxu0 0.0
        %3141 = vmatpush2.msra.mxu0 0.0
        %3142 = vmatprep.mubr.f32.mxu0 0.0
        %3143 = vmatmul.mubr.f32.gmra.mxu0 %v3064
        %v3144 = vpop.f32.mrf.mxu0
        %v3145 = vadd.f32 0.0, %v3144
        %v3146 = vpop.f32.mrf.mxu0
        %v3147 = vadd.f32 0.0, %v3146
        %3148 = vmatprep.mubr.f32.mxu0 0.0
        %3149 = vmatmul.mubr.f32.gmra.mxu0 %v3066
        %v3150 = vpop.f32.mrf.mxu0
        %v3151 = vadd.f32 0.0, %v3150
        %v3152 = vpop.f32.mrf.mxu0
        %v3153 = vadd.f32 0.0, %v3152
        %3154 = vmatprep.mubr.f32.mxu0 0.0
        %3155 = vmatmul.mubr.f32.gmra.mxu0 %v3068
        %v3156 = vpop.f32.mrf.mxu0
        %v3157 = vadd.f32 0.0, %v3156
        %v3158 = vpop.f32.mrf.mxu0
        %v3159 = vadd.f32 0.0, %v3158
        %3160 = vmatprep.mubr.f32.mxu0 0.0
        %3161 = vmatmul.mubr.f32.gmra.mxu0 %v3070
        %v3162 = vpop.f32.mrf.mxu0
        %v3163 = vadd.f32 0.0, %v3162
        %v3164 = vpop.f32.mrf.mxu0
        %v3165 = vadd.f32 0.0, %v3164
        %3166 = vdwg.mxu0
        %v3167 = vadd.f32 %v3025, %v3145
        %v3168 = vadd.f32 %v3026, %v3147
        %v3169 = vadd.f32 %v3027, %v3151
        %v3170 = vadd.f32 %v3028, %v3153
        %v3171 = vadd.f32 %v3029, %v3157
        %v3172 = vadd.f32 %v3030, %v3159
        %v3173 = vadd.f32 %v3031, %v3163
        %v3174 = vadd.f32 %v3032, %v3165
        %s3175 = scalar_lea.vmem %s1, 3344
        %v3176 = vld [vmem:[%s3175] sm:$0xff]
        %v3177 = vld [vmem:[%s3175 + $0x8] sm:$0xff]
        %v3178 = vld [vmem:[%s3175 + $0x10] sm:$0xff]
        %v3179 = vld [vmem:[%s3175 + $0x18] sm:$0xff]
        %v3180 = vld [vmem:[%s3175 + $0x20] sm:$0xff]
        %v3181 = vld [vmem:[%s3175 + $0x28] sm:$0xff]
        %v3182 = vld [vmem:[%s3175 + $0x30] sm:$0xff]
        %v3183 = vld [vmem:[%s3175 + $0x38] sm:$0xff]
        %v3184 = vld [vmem:[%s3175 + $0x40] sm:$0xff]
        %v3185 = vld [vmem:[%s3175 + $0x48] sm:$0xff]
        %v3186 = vld [vmem:[%s3175 + $0x50] sm:$0xff]
        %v3187 = vld [vmem:[%s3175 + $0x58] sm:$0xff]
        %v3188 = vld [vmem:[%s3175 + $0x60] sm:$0xff]
        %v3189 = vld [vmem:[%s3175 + $0x68] sm:$0xff]
        %v3190 = vld [vmem:[%s3175 + $0x70] sm:$0xff]
        %v3191 = vld [vmem:[%s3175 + $0x78] sm:$0xff]
        %v3192 = vld [vmem:[%s3175 + $0x80] sm:$0xff]
        %v3193 = vld [vmem:[%s3175 + $0x88] sm:$0xff]
        %v3194 = vld [vmem:[%s3175 + $0x90] sm:$0xff]
        %v3195 = vld [vmem:[%s3175 + $0x98] sm:$0xff]
        %v3196 = vld [vmem:[%s3175 + $0xa0] sm:$0xf]
        %v3197 = vld [vmem:[%s3175 + $0xa8] sm:$0xf]
        %3198 = vrot.lane.b32.xlu0 %v2633, 116
        %v3199 = vpop.permute.xlu0 %3198
        %3200 = vrot.lane.b32.xlu0 %v2635, 116
        %v3201 = vpop.permute.xlu0 %3200
        %3202 = vrot.lane.b32.xlu0 %v2637, 116
        %v3203 = vpop.permute.xlu0 %3202
        %3204 = vrot.lane.b32.xlu0 %v2636, 116
        %v3205 = vpop.permute.xlu0 %3204
        %v3206 = vsel %vm553, %v3199, 0
        %v3208 = vsel %vm553, %v3201, 0
        %v3210 = vsel %vm553, %v3203, 0
        %v3212 = vsel %vm553, %v3205, 0
        %v3215 = vsel %vm562, %v3196, 0
        %v3218 = vsel %vm562, %v3197, 0
        %3220 = vmatprep.subr.mxu0 0.0
        %3221 = vmatpush1.msra.mxu0 0.0
        %3222 = vmatprep.subr.mxu0 0.0
        %3223 = vmatpush1.msra.mxu0 0.0
        %3224 = vmatprep.subr.mxu0 0.0
        %3225 = vmatpush1.msra.mxu0 0.0
        %3226 = vmatprep.subr.mxu0 0.0
        %3227 = vmatpush1.msra.mxu0 0.0
        %3228 = vmatprep.subr.mxu0 0.0
        %3229 = vmatpush1.msra.mxu0 0.0
        %3230 = vmatprep.subr.mxu0 %v3218
        %3231 = vmatpush1.msra.mxu0 %v3215
        %3232 = vmatprep.subr.mxu0 %v3195
        %3233 = vmatpush1.msra.mxu0 %v3194
        %3234 = vmatprep.subr.mxu0 %v3193
        %3235 = vmatpush1.msra.mxu0 %v3192
        %3236 = vmatprep.subr.mxu0 %v3191
        %3237 = vmatpush1.msra.mxu0 %v3190
        %3238 = vmatprep.subr.mxu0 %v3189
        %3239 = vmatpush1.msra.mxu0 %v3188
        %3240 = vmatprep.subr.mxu0 %v3187
        %3241 = vmatpush1.msra.mxu0 %v3186
        %3242 = vmatprep.subr.mxu0 %v3185
        %3243 = vmatpush1.msra.mxu0 %v3184
        %3244 = vmatprep.subr.mxu0 %v3183
        %3245 = vmatpush1.msra.mxu0 %v3182
        %3246 = vmatprep.subr.mxu0 %v3181
        %3247 = vmatpush1.msra.mxu0 %v3180
        %3248 = vmatprep.subr.mxu0 %v3179
        %3249 = vmatpush1.msra.mxu0 %v3178
        %3250 = vmatprep.subr.mxu0 %v3177
        %3251 = vmatpush1.msra.mxu0 %v3176
        %3252 = vmatprep.subr.mxu0 0.0
        %3253 = vmatpush2.msra.mxu0 0.0
        %3254 = vmatprep.subr.mxu0 0.0
        %3255 = vmatpush2.msra.mxu0 0.0
        %3256 = vmatprep.subr.mxu0 0.0
        %3257 = vmatpush2.msra.mxu0 0.0
        %3258 = vmatprep.subr.mxu0 0.0
        %3259 = vmatpush2.msra.mxu0 0.0
        %3260 = vmatprep.subr.mxu0 0.0
        %3261 = vmatpush2.msra.mxu0 0.0
        %3262 = vmatprep.subr.mxu0 0.0
        %3263 = vmatpush2.msra.mxu0 0.0
        %3264 = vmatprep.subr.mxu0 0.0
        %3265 = vmatpush2.msra.mxu0 0.0
        %3266 = vmatprep.subr.mxu0 0.0
        %3267 = vmatpush2.msra.mxu0 0.0
        %3268 = vmatprep.subr.mxu0 0.0
        %3269 = vmatpush2.msra.mxu0 0.0
        %3270 = vmatprep.subr.mxu0 0.0
        %3271 = vmatpush2.msra.mxu0 0.0
        %3272 = vmatprep.subr.mxu0 0.0
        %3273 = vmatpush2.msra.mxu0 0.0
        %3274 = vmatprep.subr.mxu0 0.0
        %3275 = vmatpush2.msra.mxu0 0.0
        %3276 = vmatprep.subr.mxu0 0.0
        %3277 = vmatpush2.msra.mxu0 0.0
        %3278 = vmatprep.subr.mxu0 0.0
        %3279 = vmatpush2.msra.mxu0 0.0
        %3280 = vmatprep.subr.mxu0 0.0
        %3281 = vmatpush2.msra.mxu0 0.0
        %3282 = vmatprep.subr.mxu0 0.0
        %3283 = vmatpush2.msra.mxu0 0.0
        %3284 = vmatprep.mubr.f32.mxu0 0.0
        %3285 = vmatmul.mubr.f32.gmra.mxu0 %v3206
        %v3286 = vpop.f32.mrf.mxu0
        %v3287 = vadd.f32 0.0, %v3286
        %v3288 = vpop.f32.mrf.mxu0
        %v3289 = vadd.f32 0.0, %v3288
        %3290 = vmatprep.mubr.f32.mxu0 0.0
        %3291 = vmatmul.mubr.f32.gmra.mxu0 %v3208
        %v3292 = vpop.f32.mrf.mxu0
        %v3293 = vadd.f32 0.0, %v3292
        %v3294 = vpop.f32.mrf.mxu0
        %v3295 = vadd.f32 0.0, %v3294
        %3296 = vmatprep.mubr.f32.mxu0 0.0
        %3297 = vmatmul.mubr.f32.gmra.mxu0 %v3210
        %v3298 = vpop.f32.mrf.mxu0
        %v3299 = vadd.f32 0.0, %v3298
        %v3300 = vpop.f32.mrf.mxu0
        %v3301 = vadd.f32 0.0, %v3300
        %3302 = vmatprep.mubr.f32.mxu0 0.0
        %3303 = vmatmul.mubr.f32.gmra.mxu0 %v3212
        %v3304 = vpop.f32.mrf.mxu0
        %v3305 = vadd.f32 0.0, %v3304
        %v3306 = vpop.f32.mrf.mxu0
        %v3307 = vadd.f32 0.0, %v3306
        %3308 = vdwg.mxu0
        %v3309 = vadd.f32 %v3167, %v3287
        %v3310 = vadd.f32 %v3168, %v3289
        %v3311 = vadd.f32 %v3169, %v3293
        %v3312 = vadd.f32 %v3170, %v3295
        %v3313 = vadd.f32 %v3171, %v3299
        %v3314 = vadd.f32 %v3172, %v3301
        %v3315 = vadd.f32 %v3173, %v3305
        %v3316 = vadd.f32 %v3174, %v3307
        %s3317 = scalar_lea.vmem %s1, 3520
        %v3318 = vld [vmem:[%s3317] sm:$0xff]
        %v3319 = vld [vmem:[%s3317 + $0x8] sm:$0xff]
        %v3320 = vld [vmem:[%s3317 + $0x10] sm:$0xff]
        %v3321 = vld [vmem:[%s3317 + $0x18] sm:$0xff]
        %v3322 = vld [vmem:[%s3317 + $0x20] sm:$0xff]
        %v3323 = vld [vmem:[%s3317 + $0x28] sm:$0xff]
        %v3324 = vld [vmem:[%s3317 + $0x30] sm:$0xff]
        %v3325 = vld [vmem:[%s3317 + $0x38] sm:$0xff]
        %v3326 = vld [vmem:[%s3317 + $0x40] sm:$0xff]
        %v3327 = vld [vmem:[%s3317 + $0x48] sm:$0xff]
        %v3328 = vld [vmem:[%s3317 + $0x50] sm:$0xff]
        %v3329 = vld [vmem:[%s3317 + $0x58] sm:$0xff]
        %v3330 = vld [vmem:[%s3317 + $0x60] sm:$0xff]
        %v3331 = vld [vmem:[%s3317 + $0x68] sm:$0xff]
        %v3332 = vld [vmem:[%s3317 + $0x70] sm:$0xff]
        %v3333 = vld [vmem:[%s3317 + $0x78] sm:$0xff]
        %v3334 = vld [vmem:[%s3317 + $0x80] sm:$0xff]
        %v3335 = vld [vmem:[%s3317 + $0x88] sm:$0xff]
        %v3336 = vld [vmem:[%s3317 + $0x90] sm:$0xff]
        %v3337 = vld [vmem:[%s3317 + $0x98] sm:$0xff]
        %v3338 = vld [vmem:[%s3317 + $0xa0] sm:$0xf]
        %v3339 = vld [vmem:[%s3317 + $0xa8] sm:$0xf]
        %v3340 = vrot.slane %v492, 4
        %v3341 = vrot.slane %v493, 4
        %v3342 = vsel %vm562, %v3340, %v3341
        %v3343 = vrot.slane %v494, 4
        %v3344 = vsel %vm562, %v3341, %v3343
        %v3345 = vrot.slane %v495, 4
        %v3346 = vsel %vm562, %v3343, %v3345
        %v3347 = vsel %vm553, %v3342, 0
        %v3349 = vsel %vm553, %v3344, 0
        %v3351 = vsel %vm553, %v3346, 0
        %v3353 = vsel %vm553, %v3345, 0
        %v3356 = vsel %vm562, %v3338, 0
        %v3359 = vsel %vm562, %v3339, 0
        %3361 = vmatprep.subr.mxu0 0.0
        %3362 = vmatpush1.msra.mxu0 0.0
        %3363 = vmatprep.subr.mxu0 0.0
        %3364 = vmatpush1.msra.mxu0 0.0
        %3365 = vmatprep.subr.mxu0 0.0
        %3366 = vmatpush1.msra.mxu0 0.0
        %3367 = vmatprep.subr.mxu0 0.0
        %3368 = vmatpush1.msra.mxu0 0.0
        %3369 = vmatprep.subr.mxu0 0.0
        %3370 = vmatpush1.msra.mxu0 0.0
        %3371 = vmatprep.subr.mxu0 %v3359
        %3372 = vmatpush1.msra.mxu0 %v3356
        %3373 = vmatprep.subr.mxu0 %v3337
        %3374 = vmatpush1.msra.mxu0 %v3336
        %3375 = vmatprep.subr.mxu0 %v3335
        %3376 = vmatpush1.msra.mxu0 %v3334
        %3377 = vmatprep.subr.mxu0 %v3333
        %3378 = vmatpush1.msra.mxu0 %v3332
        %3379 = vmatprep.subr.mxu0 %v3331
        %3380 = vmatpush1.msra.mxu0 %v3330
        %3381 = vmatprep.subr.mxu0 %v3329
        %3382 = vmatpush1.msra.mxu0 %v3328
        %3383 = vmatprep.subr.mxu0 %v3327
        %3384 = vmatpush1.msra.mxu0 %v3326
        %3385 = vmatprep.subr.mxu0 %v3325
        %3386 = vmatpush1.msra.mxu0 %v3324
        %3387 = vmatprep.subr.mxu0 %v3323
        %3388 = vmatpush1.msra.mxu0 %v3322
        %3389 = vmatprep.subr.mxu0 %v3321
        %3390 = vmatpush1.msra.mxu0 %v3320
        %3391 = vmatprep.subr.mxu0 %v3319
        %3392 = vmatpush1.msra.mxu0 %v3318
        %3393 = vmatprep.subr.mxu0 0.0
        %3394 = vmatpush2.msra.mxu0 0.0
        %3395 = vmatprep.subr.mxu0 0.0
        %3396 = vmatpush2.msra.mxu0 0.0
        %3397 = vmatprep.subr.mxu0 0.0
        %3398 = vmatpush2.msra.mxu0 0.0
        %3399 = vmatprep.subr.mxu0 0.0
        %3400 = vmatpush2.msra.mxu0 0.0
        %3401 = vmatprep.subr.mxu0 0.0
        %3402 = vmatpush2.msra.mxu0 0.0
        %3403 = vmatprep.subr.mxu0 0.0
        %3404 = vmatpush2.msra.mxu0 0.0
        %3405 = vmatprep.subr.mxu0 0.0
        %3406 = vmatpush2.msra.mxu0 0.0
        %3407 = vmatprep.subr.mxu0 0.0
        %3408 = vmatpush2.msra.mxu0 0.0
        %3409 = vmatprep.subr.mxu0 0.0
        %3410 = vmatpush2.msra.mxu0 0.0
        %3411 = vmatprep.subr.mxu0 0.0
        %3412 = vmatpush2.msra.mxu0 0.0
        %3413 = vmatprep.subr.mxu0 0.0
        %3414 = vmatpush2.msra.mxu0 0.0
        %3415 = vmatprep.subr.mxu0 0.0
        %3416 = vmatpush2.msra.mxu0 0.0
        %3417 = vmatprep.subr.mxu0 0.0
        %3418 = vmatpush2.msra.mxu0 0.0
        %3419 = vmatprep.subr.mxu0 0.0
        %3420 = vmatpush2.msra.mxu0 0.0
        %3421 = vmatprep.subr.mxu0 0.0
        %3422 = vmatpush2.msra.mxu0 0.0
        %3423 = vmatprep.subr.mxu0 0.0
        %3424 = vmatpush2.msra.mxu0 0.0
        %3425 = vmatprep.mubr.f32.mxu0 0.0
        %3426 = vmatmul.mubr.f32.gmra.mxu0 %v3347
        %v3427 = vpop.f32.mrf.mxu0
        %v3428 = vadd.f32 0.0, %v3427
        %v3429 = vpop.f32.mrf.mxu0
        %v3430 = vadd.f32 0.0, %v3429
        %3431 = vmatprep.mubr.f32.mxu0 0.0
        %3432 = vmatmul.mubr.f32.gmra.mxu0 %v3349
        %v3433 = vpop.f32.mrf.mxu0
        %v3434 = vadd.f32 0.0, %v3433
        %v3435 = vpop.f32.mrf.mxu0
        %v3436 = vadd.f32 0.0, %v3435
        %3437 = vmatprep.mubr.f32.mxu0 0.0
        %3438 = vmatmul.mubr.f32.gmra.mxu0 %v3351
        %v3439 = vpop.f32.mrf.mxu0
        %v3440 = vadd.f32 0.0, %v3439
        %v3441 = vpop.f32.mrf.mxu0
        %v3442 = vadd.f32 0.0, %v3441
        %3443 = vmatprep.mubr.f32.mxu0 0.0
        %3444 = vmatmul.mubr.f32.gmra.mxu0 %v3353
        %v3445 = vpop.f32.mrf.mxu0
        %v3446 = vadd.f32 0.0, %v3445
        %v3447 = vpop.f32.mrf.mxu0
        %v3448 = vadd.f32 0.0, %v3447
        %3449 = vdwg.mxu0
        %v3450 = vadd.f32 %v3309, %v3428
        %v3451 = vadd.f32 %v3310, %v3430
        %v3452 = vadd.f32 %v3311, %v3434
        %v3453 = vadd.f32 %v3312, %v3436
        %v3454 = vadd.f32 %v3313, %v3440
        %v3455 = vadd.f32 %v3314, %v3442
        %v3456 = vadd.f32 %v3315, %v3446
        %v3457 = vadd.f32 %v3316, %v3448
        %s3458 = scalar_lea.vmem %s1, 3696
        %v3459 = vld [vmem:[%s3458] sm:$0xff]
        %v3460 = vld [vmem:[%s3458 + $0x8] sm:$0xff]
        %v3461 = vld [vmem:[%s3458 + $0x10] sm:$0xff]
        %v3462 = vld [vmem:[%s3458 + $0x18] sm:$0xff]
        %v3463 = vld [vmem:[%s3458 + $0x20] sm:$0xff]
        %v3464 = vld [vmem:[%s3458 + $0x28] sm:$0xff]
        %v3465 = vld [vmem:[%s3458 + $0x30] sm:$0xff]
        %v3466 = vld [vmem:[%s3458 + $0x38] sm:$0xff]
        %v3467 = vld [vmem:[%s3458 + $0x40] sm:$0xff]
        %v3468 = vld [vmem:[%s3458 + $0x48] sm:$0xff]
        %v3469 = vld [vmem:[%s3458 + $0x50] sm:$0xff]
        %v3470 = vld [vmem:[%s3458 + $0x58] sm:$0xff]
        %v3471 = vld [vmem:[%s3458 + $0x60] sm:$0xff]
        %v3472 = vld [vmem:[%s3458 + $0x68] sm:$0xff]
        %v3473 = vld [vmem:[%s3458 + $0x70] sm:$0xff]
        %v3474 = vld [vmem:[%s3458 + $0x78] sm:$0xff]
        %v3475 = vld [vmem:[%s3458 + $0x80] sm:$0xff]
        %v3476 = vld [vmem:[%s3458 + $0x88] sm:$0xff]
        %v3477 = vld [vmem:[%s3458 + $0x90] sm:$0xff]
        %v3478 = vld [vmem:[%s3458 + $0x98] sm:$0xff]
        %v3479 = vld [vmem:[%s3458 + $0xa0] sm:$0xf]
        %v3480 = vld [vmem:[%s3458 + $0xa8] sm:$0xf]
        %3481 = vrot.lane.b32.xlu0 %v3342, 125
        %v3482 = vpop.permute.xlu0 %3481
        %3483 = vrot.lane.b32.xlu0 %v3344, 125
        %v3484 = vpop.permute.xlu0 %3483
        %3485 = vrot.lane.b32.xlu0 %v3346, 125
        %v3486 = vpop.permute.xlu0 %3485
        %3487 = vrot.lane.b32.xlu0 %v3345, 125
        %v3488 = vpop.permute.xlu0 %3487
        %v3489 = vsel %vm553, %v3482, 0
        %v3491 = vsel %vm553, %v3484, 0
        %v3493 = vsel %vm553, %v3486, 0
        %v3495 = vsel %vm553, %v3488, 0
        %v3498 = vsel %vm562, %v3479, 0
        %v3501 = vsel %vm562, %v3480, 0
        %3503 = vmatprep.subr.mxu0 0.0
        %3504 = vmatpush1.msra.mxu0 0.0
        %3505 = vmatprep.subr.mxu0 0.0
        %3506 = vmatpush1.msra.mxu0 0.0
        %3507 = vmatprep.subr.mxu0 0.0
        %3508 = vmatpush1.msra.mxu0 0.0
        %3509 = vmatprep.subr.mxu0 0.0
        %3510 = vmatpush1.msra.mxu0 0.0
        %3511 = vmatprep.subr.mxu0 0.0
        %3512 = vmatpush1.msra.mxu0 0.0
        %3513 = vmatprep.subr.mxu0 %v3501
        %3514 = vmatpush1.msra.mxu0 %v3498
        %3515 = vmatprep.subr.mxu0 %v3478
        %3516 = vmatpush1.msra.mxu0 %v3477
        %3517 = vmatprep.subr.mxu0 %v3476
        %3518 = vmatpush1.msra.mxu0 %v3475
        %3519 = vmatprep.subr.mxu0 %v3474
        %3520 = vmatpush1.msra.mxu0 %v3473
        %3521 = vmatprep.subr.mxu0 %v3472
        %3522 = vmatpush1.msra.mxu0 %v3471
        %3523 = vmatprep.subr.mxu0 %v3470
        %3524 = vmatpush1.msra.mxu0 %v3469
        %3525 = vmatprep.subr.mxu0 %v3468
        %3526 = vmatpush1.msra.mxu0 %v3467
        %3527 = vmatprep.subr.mxu0 %v3466
        %3528 = vmatpush1.msra.mxu0 %v3465
        %3529 = vmatprep.subr.mxu0 %v3464
        %3530 = vmatpush1.msra.mxu0 %v3463
        %3531 = vmatprep.subr.mxu0 %v3462
        %3532 = vmatpush1.msra.mxu0 %v3461
        %3533 = vmatprep.subr.mxu0 %v3460
        %3534 = vmatpush1.msra.mxu0 %v3459
        %3535 = vmatprep.subr.mxu0 0.0
        %3536 = vmatpush2.msra.mxu0 0.0
        %3537 = vmatprep.subr.mxu0 0.0
        %3538 = vmatpush2.msra.mxu0 0.0
        %3539 = vmatprep.subr.mxu0 0.0
        %3540 = vmatpush2.msra.mxu0 0.0
        %3541 = vmatprep.subr.mxu0 0.0
        %3542 = vmatpush2.msra.mxu0 0.0
        %3543 = vmatprep.subr.mxu0 0.0
        %3544 = vmatpush2.msra.mxu0 0.0
        %3545 = vmatprep.subr.mxu0 0.0
        %3546 = vmatpush2.msra.mxu0 0.0
        %3547 = vmatprep.subr.mxu0 0.0
        %3548 = vmatpush2.msra.mxu0 0.0
        %3549 = vmatprep.subr.mxu0 0.0
        %3550 = vmatpush2.msra.mxu0 0.0
        %3551 = vmatprep.subr.mxu0 0.0
        %3552 = vmatpush2.msra.mxu0 0.0
        %3553 = vmatprep.subr.mxu0 0.0
        %3554 = vmatpush2.msra.mxu0 0.0
        %3555 = vmatprep.subr.mxu0 0.0
        %3556 = vmatpush2.msra.mxu0 0.0
        %3557 = vmatprep.subr.mxu0 0.0
        %3558 = vmatpush2.msra.mxu0 0.0
        %3559 = vmatprep.subr.mxu0 0.0
        %3560 = vmatpush2.msra.mxu0 0.0
        %3561 = vmatprep.subr.mxu0 0.0
        %3562 = vmatpush2.msra.mxu0 0.0
        %3563 = vmatprep.subr.mxu0 0.0
        %3564 = vmatpush2.msra.mxu0 0.0
        %3565 = vmatprep.subr.mxu0 0.0
        %3566 = vmatpush2.msra.mxu0 0.0
        %3567 = vmatprep.mubr.f32.mxu0 0.0
        %3568 = vmatmul.mubr.f32.gmra.mxu0 %v3489
        %v3569 = vpop.f32.mrf.mxu0
        %v3570 = vadd.f32 0.0, %v3569
        %v3571 = vpop.f32.mrf.mxu0
        %v3572 = vadd.f32 0.0, %v3571
        %3573 = vmatprep.mubr.f32.mxu0 0.0
        %3574 = vmatmul.mubr.f32.gmra.mxu0 %v3491
        %v3575 = vpop.f32.mrf.mxu0
        %v3576 = vadd.f32 0.0, %v3575
        %v3577 = vpop.f32.mrf.mxu0
        %v3578 = vadd.f32 0.0, %v3577
        %3579 = vmatprep.mubr.f32.mxu0 0.0
        %3580 = vmatmul.mubr.f32.gmra.mxu0 %v3493
        %v3581 = vpop.f32.mrf.mxu0
        %v3582 = vadd.f32 0.0, %v3581
        %v3583 = vpop.f32.mrf.mxu0
        %v3584 = vadd.f32 0.0, %v3583
        %3585 = vmatprep.mubr.f32.mxu0 0.0
        %3586 = vmatmul.mubr.f32.gmra.mxu0 %v3495
        %v3587 = vpop.f32.mrf.mxu0
        %v3588 = vadd.f32 0.0, %v3587
        %v3589 = vpop.f32.mrf.mxu0
        %v3590 = vadd.f32 0.0, %v3589
        %3591 = vdwg.mxu0
        %v3592 = vadd.f32 %v3450, %v3570
        %v3593 = vadd.f32 %v3451, %v3572
        %v3594 = vadd.f32 %v3452, %v3576
        %v3595 = vadd.f32 %v3453, %v3578
        %v3596 = vadd.f32 %v3454, %v3582
        %v3597 = vadd.f32 %v3455, %v3584
        %v3598 = vadd.f32 %v3456, %v3588
        %v3599 = vadd.f32 %v3457, %v3590
        %s3600 = scalar_lea.vmem %s1, 3872
        %v3601 = vld [vmem:[%s3600] sm:$0xff]
        %v3602 = vld [vmem:[%s3600 + $0x8] sm:$0xff]
        %v3603 = vld [vmem:[%s3600 + $0x10] sm:$0xff]
        %v3604 = vld [vmem:[%s3600 + $0x18] sm:$0xff]
        %v3605 = vld [vmem:[%s3600 + $0x20] sm:$0xff]
        %v3606 = vld [vmem:[%s3600 + $0x28] sm:$0xff]
        %v3607 = vld [vmem:[%s3600 + $0x30] sm:$0xff]
        %v3608 = vld [vmem:[%s3600 + $0x38] sm:$0xff]
        %v3609 = vld [vmem:[%s3600 + $0x40] sm:$0xff]
        %v3610 = vld [vmem:[%s3600 + $0x48] sm:$0xff]
        %v3611 = vld [vmem:[%s3600 + $0x50] sm:$0xff]
        %v3612 = vld [vmem:[%s3600 + $0x58] sm:$0xff]
        %v3613 = vld [vmem:[%s3600 + $0x60] sm:$0xff]
        %v3614 = vld [vmem:[%s3600 + $0x68] sm:$0xff]
        %v3615 = vld [vmem:[%s3600 + $0x70] sm:$0xff]
        %v3616 = vld [vmem:[%s3600 + $0x78] sm:$0xff]
        %v3617 = vld [vmem:[%s3600 + $0x80] sm:$0xff]
        %v3618 = vld [vmem:[%s3600 + $0x88] sm:$0xff]
        %v3619 = vld [vmem:[%s3600 + $0x90] sm:$0xff]
        %v3620 = vld [vmem:[%s3600 + $0x98] sm:$0xff]
        %v3621 = vld [vmem:[%s3600 + $0xa0] sm:$0xf]
        %v3622 = vld [vmem:[%s3600 + $0xa8] sm:$0xf]
        %3623 = vrot.lane.b32.xlu0 %v3342, 122
        %v3624 = vpop.permute.xlu0 %3623
        %3625 = vrot.lane.b32.xlu0 %v3344, 122
        %v3626 = vpop.permute.xlu0 %3625
        %3627 = vrot.lane.b32.xlu0 %v3346, 122
        %v3628 = vpop.permute.xlu0 %3627
        %3629 = vrot.lane.b32.xlu0 %v3345, 122
        %v3630 = vpop.permute.xlu0 %3629
        %v3631 = vsel %vm553, %v3624, 0
        %v3633 = vsel %vm553, %v3626, 0
        %v3635 = vsel %vm553, %v3628, 0
        %v3637 = vsel %vm553, %v3630, 0
        %v3640 = vsel %vm562, %v3621, 0
        %v3643 = vsel %vm562, %v3622, 0
        %3645 = vmatprep.subr.mxu0 0.0
        %3646 = vmatpush1.msra.mxu0 0.0
        %3647 = vmatprep.subr.mxu0 0.0
        %3648 = vmatpush1.msra.mxu0 0.0
        %3649 = vmatprep.subr.mxu0 0.0
        %3650 = vmatpush1.msra.mxu0 0.0
        %3651 = vmatprep.subr.mxu0 0.0
        %3652 = vmatpush1.msra.mxu0 0.0
        %3653 = vmatprep.subr.mxu0 0.0
        %3654 = vmatpush1.msra.mxu0 0.0
        %3655 = vmatprep.subr.mxu0 %v3643
        %3656 = vmatpush1.msra.mxu0 %v3640
        %3657 = vmatprep.subr.mxu0 %v3620
        %3658 = vmatpush1.msra.mxu0 %v3619
        %3659 = vmatprep.subr.mxu0 %v3618
        %3660 = vmatpush1.msra.mxu0 %v3617
        %3661 = vmatprep.subr.mxu0 %v3616
        %3662 = vmatpush1.msra.mxu0 %v3615
        %3663 = vmatprep.subr.mxu0 %v3614
        %3664 = vmatpush1.msra.mxu0 %v3613
        %3665 = vmatprep.subr.mxu0 %v3612
        %3666 = vmatpush1.msra.mxu0 %v3611
        %3667 = vmatprep.subr.mxu0 %v3610
        %3668 = vmatpush1.msra.mxu0 %v3609
        %3669 = vmatprep.subr.mxu0 %v3608
        %3670 = vmatpush1.msra.mxu0 %v3607
        %3671 = vmatprep.subr.mxu0 %v3606
        %3672 = vmatpush1.msra.mxu0 %v3605
        %3673 = vmatprep.subr.mxu0 %v3604
        %3674 = vmatpush1.msra.mxu0 %v3603
        %3675 = vmatprep.subr.mxu0 %v3602
        %3676 = vmatpush1.msra.mxu0 %v3601
        %3677 = vmatprep.subr.mxu0 0.0
        %3678 = vmatpush2.msra.mxu0 0.0
        %3679 = vmatprep.subr.mxu0 0.0
        %3680 = vmatpush2.msra.mxu0 0.0
        %3681 = vmatprep.subr.mxu0 0.0
        %3682 = vmatpush2.msra.mxu0 0.0
        %3683 = vmatprep.subr.mxu0 0.0
        %3684 = vmatpush2.msra.mxu0 0.0
        %3685 = vmatprep.subr.mxu0 0.0
        %3686 = vmatpush2.msra.mxu0 0.0
        %3687 = vmatprep.subr.mxu0 0.0
        %3688 = vmatpush2.msra.mxu0 0.0
        %3689 = vmatprep.subr.mxu0 0.0
        %3690 = vmatpush2.msra.mxu0 0.0
        %3691 = vmatprep.subr.mxu0 0.0
        %3692 = vmatpush2.msra.mxu0 0.0
        %3693 = vmatprep.subr.mxu0 0.0
        %3694 = vmatpush2.msra.mxu0 0.0
        %3695 = vmatprep.subr.mxu0 0.0
        %3696 = vmatpush2.msra.mxu0 0.0
        %3697 = vmatprep.subr.mxu0 0.0
        %3698 = vmatpush2.msra.mxu0 0.0
        %3699 = vmatprep.subr.mxu0 0.0
        %3700 = vmatpush2.msra.mxu0 0.0
        %3701 = vmatprep.subr.mxu0 0.0
        %3702 = vmatpush2.msra.mxu0 0.0
        %3703 = vmatprep.subr.mxu0 0.0
        %3704 = vmatpush2.msra.mxu0 0.0
        %3705 = vmatprep.subr.mxu0 0.0
        %3706 = vmatpush2.msra.mxu0 0.0
        %3707 = vmatprep.subr.mxu0 0.0
        %3708 = vmatpush2.msra.mxu0 0.0
        %3709 = vmatprep.mubr.f32.mxu0 0.0
        %3710 = vmatmul.mubr.f32.gmra.mxu0 %v3631
        %v3711 = vpop.f32.mrf.mxu0
        %v3712 = vadd.f32 0.0, %v3711
        %v3713 = vpop.f32.mrf.mxu0
        %v3714 = vadd.f32 0.0, %v3713
        %3715 = vmatprep.mubr.f32.mxu0 0.0
        %3716 = vmatmul.mubr.f32.gmra.mxu0 %v3633
        %v3717 = vpop.f32.mrf.mxu0
        %v3718 = vadd.f32 0.0, %v3717
        %v3719 = vpop.f32.mrf.mxu0
        %v3720 = vadd.f32 0.0, %v3719
        %3721 = vmatprep.mubr.f32.mxu0 0.0
        %3722 = vmatmul.mubr.f32.gmra.mxu0 %v3635
        %v3723 = vpop.f32.mrf.mxu0
        %v3724 = vadd.f32 0.0, %v3723
        %v3725 = vpop.f32.mrf.mxu0
        %v3726 = vadd.f32 0.0, %v3725
        %3727 = vmatprep.mubr.f32.mxu0 0.0
        %3728 = vmatmul.mubr.f32.gmra.mxu0 %v3637
        %v3729 = vpop.f32.mrf.mxu0
        %v3730 = vadd.f32 0.0, %v3729
        %v3731 = vpop.f32.mrf.mxu0
        %v3732 = vadd.f32 0.0, %v3731
        %3733 = vdwg.mxu0
        %v3734 = vadd.f32 %v3592, %v3712
        %v3735 = vadd.f32 %v3593, %v3714
        %v3736 = vadd.f32 %v3594, %v3718
        %v3737 = vadd.f32 %v3595, %v3720
        %v3738 = vadd.f32 %v3596, %v3724
        %v3739 = vadd.f32 %v3597, %v3726
        %v3740 = vadd.f32 %v3598, %v3730
        %v3741 = vadd.f32 %v3599, %v3732
        %s3742 = scalar_lea.vmem %s1, 4048
        %v3743 = vld [vmem:[%s3742] sm:$0xff]
        %v3744 = vld [vmem:[%s3742 + $0x8] sm:$0xff]
        %v3745 = vld [vmem:[%s3742 + $0x10] sm:$0xff]
        %v3746 = vld [vmem:[%s3742 + $0x18] sm:$0xff]
        %v3747 = vld [vmem:[%s3742 + $0x20] sm:$0xff]
        %v3748 = vld [vmem:[%s3742 + $0x28] sm:$0xff]
        %v3749 = vld [vmem:[%s3742 + $0x30] sm:$0xff]
        %v3750 = vld [vmem:[%s3742 + $0x38] sm:$0xff]
        %v3751 = vld [vmem:[%s3742 + $0x40] sm:$0xff]
        %v3752 = vld [vmem:[%s3742 + $0x48] sm:$0xff]
        %v3753 = vld [vmem:[%s3742 + $0x50] sm:$0xff]
        %v3754 = vld [vmem:[%s3742 + $0x58] sm:$0xff]
        %v3755 = vld [vmem:[%s3742 + $0x60] sm:$0xff]
        %v3756 = vld [vmem:[%s3742 + $0x68] sm:$0xff]
        %v3757 = vld [vmem:[%s3742 + $0x70] sm:$0xff]
        %v3758 = vld [vmem:[%s3742 + $0x78] sm:$0xff]
        %v3759 = vld [vmem:[%s3742 + $0x80] sm:$0xff]
        %v3760 = vld [vmem:[%s3742 + $0x88] sm:$0xff]
        %v3761 = vld [vmem:[%s3742 + $0x90] sm:$0xff]
        %v3762 = vld [vmem:[%s3742 + $0x98] sm:$0xff]
        %v3763 = vld [vmem:[%s3742 + $0xa0] sm:$0xf]
        %v3764 = vld [vmem:[%s3742 + $0xa8] sm:$0xf]
        %3765 = vrot.lane.b32.xlu0 %v3342, 119
        %v3766 = vpop.permute.xlu0 %3765
        %3767 = vrot.lane.b32.xlu0 %v3344, 119
        %v3768 = vpop.permute.xlu0 %3767
        %3769 = vrot.lane.b32.xlu0 %v3346, 119
        %v3770 = vpop.permute.xlu0 %3769
        %3771 = vrot.lane.b32.xlu0 %v3345, 119
        %v3772 = vpop.permute.xlu0 %3771
        %v3773 = vsel %vm553, %v3766, 0
        %v3775 = vsel %vm553, %v3768, 0
        %v3777 = vsel %vm553, %v3770, 0
        %v3779 = vsel %vm553, %v3772, 0
        %v3782 = vsel %vm562, %v3763, 0
        %v3785 = vsel %vm562, %v3764, 0
        %3787 = vmatprep.subr.mxu0 0.0
        %3788 = vmatpush1.msra.mxu0 0.0
        %3789 = vmatprep.subr.mxu0 0.0
        %3790 = vmatpush1.msra.mxu0 0.0
        %3791 = vmatprep.subr.mxu0 0.0
        %3792 = vmatpush1.msra.mxu0 0.0
        %3793 = vmatprep.subr.mxu0 0.0
        %3794 = vmatpush1.msra.mxu0 0.0
        %3795 = vmatprep.subr.mxu0 0.0
        %3796 = vmatpush1.msra.mxu0 0.0
        %3797 = vmatprep.subr.mxu0 %v3785
        %3798 = vmatpush1.msra.mxu0 %v3782
        %3799 = vmatprep.subr.mxu0 %v3762
        %3800 = vmatpush1.msra.mxu0 %v3761
        %3801 = vmatprep.subr.mxu0 %v3760
        %3802 = vmatpush1.msra.mxu0 %v3759
        %3803 = vmatprep.subr.mxu0 %v3758
        %3804 = vmatpush1.msra.mxu0 %v3757
        %3805 = vmatprep.subr.mxu0 %v3756
        %3806 = vmatpush1.msra.mxu0 %v3755
        %3807 = vmatprep.subr.mxu0 %v3754
        %3808 = vmatpush1.msra.mxu0 %v3753
        %3809 = vmatprep.subr.mxu0 %v3752
        %3810 = vmatpush1.msra.mxu0 %v3751
        %3811 = vmatprep.subr.mxu0 %v3750
        %3812 = vmatpush1.msra.mxu0 %v3749
        %3813 = vmatprep.subr.mxu0 %v3748
        %3814 = vmatpush1.msra.mxu0 %v3747
        %3815 = vmatprep.subr.mxu0 %v3746
        %3816 = vmatpush1.msra.mxu0 %v3745
        %3817 = vmatprep.subr.mxu0 %v3744
        %3818 = vmatpush1.msra.mxu0 %v3743
        %3819 = vmatprep.subr.mxu0 0.0
        %3820 = vmatpush2.msra.mxu0 0.0
        %3821 = vmatprep.subr.mxu0 0.0
        %3822 = vmatpush2.msra.mxu0 0.0
        %3823 = vmatprep.subr.mxu0 0.0
        %3824 = vmatpush2.msra.mxu0 0.0
        %3825 = vmatprep.subr.mxu0 0.0
        %3826 = vmatpush2.msra.mxu0 0.0
        %3827 = vmatprep.subr.mxu0 0.0
        %3828 = vmatpush2.msra.mxu0 0.0
        %3829 = vmatprep.subr.mxu0 0.0
        %3830 = vmatpush2.msra.mxu0 0.0
        %3831 = vmatprep.subr.mxu0 0.0
        %3832 = vmatpush2.msra.mxu0 0.0
        %3833 = vmatprep.subr.mxu0 0.0
        %3834 = vmatpush2.msra.mxu0 0.0
        %3835 = vmatprep.subr.mxu0 0.0
        %3836 = vmatpush2.msra.mxu0 0.0
        %3837 = vmatprep.subr.mxu0 0.0
        %3838 = vmatpush2.msra.mxu0 0.0
        %3839 = vmatprep.subr.mxu0 0.0
        %3840 = vmatpush2.msra.mxu0 0.0
        %3841 = vmatprep.subr.mxu0 0.0
        %3842 = vmatpush2.msra.mxu0 0.0
        %3843 = vmatprep.subr.mxu0 0.0
        %3844 = vmatpush2.msra.mxu0 0.0
        %3845 = vmatprep.subr.mxu0 0.0
        %3846 = vmatpush2.msra.mxu0 0.0
        %3847 = vmatprep.subr.mxu0 0.0
        %3848 = vmatpush2.msra.mxu0 0.0
        %3849 = vmatprep.subr.mxu0 0.0
        %3850 = vmatpush2.msra.mxu0 0.0
        %3851 = vmatprep.mubr.f32.mxu0 0.0
        %3852 = vmatmul.mubr.f32.gmra.mxu0 %v3773
        %v3853 = vpop.f32.mrf.mxu0
        %v3854 = vadd.f32 0.0, %v3853
        %v3855 = vpop.f32.mrf.mxu0
        %v3856 = vadd.f32 0.0, %v3855
        %3857 = vmatprep.mubr.f32.mxu0 0.0
        %3858 = vmatmul.mubr.f32.gmra.mxu0 %v3775
        %v3859 = vpop.f32.mrf.mxu0
        %v3860 = vadd.f32 0.0, %v3859
        %v3861 = vpop.f32.mrf.mxu0
        %v3862 = vadd.f32 0.0, %v3861
        %3863 = vmatprep.mubr.f32.mxu0 0.0
        %3864 = vmatmul.mubr.f32.gmra.mxu0 %v3777
        %v3865 = vpop.f32.mrf.mxu0
        %v3866 = vadd.f32 0.0, %v3865
        %v3867 = vpop.f32.mrf.mxu0
        %v3868 = vadd.f32 0.0, %v3867
        %3869 = vmatprep.mubr.f32.mxu0 0.0
        %3870 = vmatmul.mubr.f32.gmra.mxu0 %v3779
        %v3871 = vpop.f32.mrf.mxu0
        %v3872 = vadd.f32 0.0, %v3871
        %v3873 = vpop.f32.mrf.mxu0
        %v3874 = vadd.f32 0.0, %v3873
        %3875 = vdwg.mxu0
        %v3876 = vadd.f32 %v3734, %v3854
        %v3877 = vadd.f32 %v3735, %v3856
        %v3878 = vadd.f32 %v3736, %v3860
        %v3879 = vadd.f32 %v3737, %v3862
        %v3880 = vadd.f32 %v3738, %v3866
        %v3881 = vadd.f32 %v3739, %v3868
        %v3882 = vadd.f32 %v3740, %v3872
        %v3883 = vadd.f32 %v3741, %v3874
        %s3884 = scalar_lea.vmem %s1, 4224
        %v3885 = vld [vmem:[%s3884] sm:$0xff]
        %v3886 = vld [vmem:[%s3884 + $0x8] sm:$0xff]
        %v3887 = vld [vmem:[%s3884 + $0x10] sm:$0xff]
        %v3888 = vld [vmem:[%s3884 + $0x18] sm:$0xff]
        %v3889 = vld [vmem:[%s3884 + $0x20] sm:$0xff]
        %v3890 = vld [vmem:[%s3884 + $0x28] sm:$0xff]
        %v3891 = vld [vmem:[%s3884 + $0x30] sm:$0xff]
        %v3892 = vld [vmem:[%s3884 + $0x38] sm:$0xff]
        %v3893 = vld [vmem:[%s3884 + $0x40] sm:$0xff]
        %v3894 = vld [vmem:[%s3884 + $0x48] sm:$0xff]
        %v3895 = vld [vmem:[%s3884 + $0x50] sm:$0xff]
        %v3896 = vld [vmem:[%s3884 + $0x58] sm:$0xff]
        %v3897 = vld [vmem:[%s3884 + $0x60] sm:$0xff]
        %v3898 = vld [vmem:[%s3884 + $0x68] sm:$0xff]
        %v3899 = vld [vmem:[%s3884 + $0x70] sm:$0xff]
        %v3900 = vld [vmem:[%s3884 + $0x78] sm:$0xff]
        %v3901 = vld [vmem:[%s3884 + $0x80] sm:$0xff]
        %v3902 = vld [vmem:[%s3884 + $0x88] sm:$0xff]
        %v3903 = vld [vmem:[%s3884 + $0x90] sm:$0xff]
        %v3904 = vld [vmem:[%s3884 + $0x98] sm:$0xff]
        %v3905 = vld [vmem:[%s3884 + $0xa0] sm:$0xf]
        %v3906 = vld [vmem:[%s3884 + $0xa8] sm:$0xf]
        %3907 = vrot.lane.b32.xlu0 %v3342, 116
        %v3908 = vpop.permute.xlu0 %3907
        %3909 = vrot.lane.b32.xlu0 %v3344, 116
        %v3910 = vpop.permute.xlu0 %3909
        %3911 = vrot.lane.b32.xlu0 %v3346, 116
        %v3912 = vpop.permute.xlu0 %3911
        %3913 = vrot.lane.b32.xlu0 %v3345, 116
        %v3914 = vpop.permute.xlu0 %3913
        %v3915 = vsel %vm553, %v3908, 0
        %v3917 = vsel %vm553, %v3910, 0
        %v3919 = vsel %vm553, %v3912, 0
        %v3921 = vsel %vm553, %v3914, 0
        %v3924 = vsel %vm562, %v3905, 0
        %v3927 = vsel %vm562, %v3906, 0
        %3929 = vmatprep.subr.mxu0 0.0
        %3930 = vmatpush1.msra.mxu0 0.0
        %3931 = vmatprep.subr.mxu0 0.0
        %3932 = vmatpush1.msra.mxu0 0.0
        %3933 = vmatprep.subr.mxu0 0.0
        %3934 = vmatpush1.msra.mxu0 0.0
        %3935 = vmatprep.subr.mxu0 0.0
        %3936 = vmatpush1.msra.mxu0 0.0
        %3937 = vmatprep.subr.mxu0 0.0
        %3938 = vmatpush1.msra.mxu0 0.0
        %3939 = vmatprep.subr.mxu0 %v3927
        %3940 = vmatpush1.msra.mxu0 %v3924
        %3941 = vmatprep.subr.mxu0 %v3904
        %3942 = vmatpush1.msra.mxu0 %v3903
        %3943 = vmatprep.subr.mxu0 %v3902
        %3944 = vmatpush1.msra.mxu0 %v3901
        %3945 = vmatprep.subr.mxu0 %v3900
        %3946 = vmatpush1.msra.mxu0 %v3899
        %3947 = vmatprep.subr.mxu0 %v3898
        %3948 = vmatpush1.msra.mxu0 %v3897
        %3949 = vmatprep.subr.mxu0 %v3896
        %3950 = vmatpush1.msra.mxu0 %v3895
        %3951 = vmatprep.subr.mxu0 %v3894
        %3952 = vmatpush1.msra.mxu0 %v3893
        %3953 = vmatprep.subr.mxu0 %v3892
        %3954 = vmatpush1.msra.mxu0 %v3891
        %3955 = vmatprep.subr.mxu0 %v3890
        %3956 = vmatpush1.msra.mxu0 %v3889
        %3957 = vmatprep.subr.mxu0 %v3888
        %3958 = vmatpush1.msra.mxu0 %v3887
        %3959 = vmatprep.subr.mxu0 %v3886
        %3960 = vmatpush1.msra.mxu0 %v3885
        %3961 = vmatprep.subr.mxu0 0.0
        %3962 = vmatpush2.msra.mxu0 0.0
        %3963 = vmatprep.subr.mxu0 0.0
        %3964 = vmatpush2.msra.mxu0 0.0
        %3965 = vmatprep.subr.mxu0 0.0
        %3966 = vmatpush2.msra.mxu0 0.0
        %3967 = vmatprep.subr.mxu0 0.0
        %3968 = vmatpush2.msra.mxu0 0.0
        %3969 = vmatprep.subr.mxu0 0.0
        %3970 = vmatpush2.msra.mxu0 0.0
        %3971 = vmatprep.subr.mxu0 0.0
        %3972 = vmatpush2.msra.mxu0 0.0
        %3973 = vmatprep.subr.mxu0 0.0
        %3974 = vmatpush2.msra.mxu0 0.0
        %3975 = vmatprep.subr.mxu0 0.0
        %3976 = vmatpush2.msra.mxu0 0.0
        %3977 = vmatprep.subr.mxu0 0.0
        %3978 = vmatpush2.msra.mxu0 0.0
        %3979 = vmatprep.subr.mxu0 0.0
        %3980 = vmatpush2.msra.mxu0 0.0
        %3981 = vmatprep.subr.mxu0 0.0
        %3982 = vmatpush2.msra.mxu0 0.0
        %3983 = vmatprep.subr.mxu0 0.0
        %3984 = vmatpush2.msra.mxu0 0.0
        %3985 = vmatprep.subr.mxu0 0.0
        %3986 = vmatpush2.msra.mxu0 0.0
        %3987 = vmatprep.subr.mxu0 0.0
        %3988 = vmatpush2.msra.mxu0 0.0
        %3989 = vmatprep.subr.mxu0 0.0
        %3990 = vmatpush2.msra.mxu0 0.0
        %3991 = vmatprep.subr.mxu0 0.0
        %3992 = vmatpush2.msra.mxu0 0.0
        %3993 = vmatprep.mubr.f32.mxu0 0.0
        %3994 = vmatmul.mubr.f32.gmra.mxu0 %v3915
        %v3995 = vpop.f32.mrf.mxu0
        %v3996 = vadd.f32 0.0, %v3995
        %v3997 = vpop.f32.mrf.mxu0
        %v3998 = vadd.f32 0.0, %v3997
        %3999 = vmatprep.mubr.f32.mxu0 0.0
        %4000 = vmatmul.mubr.f32.gmra.mxu0 %v3917
        %v4001 = vpop.f32.mrf.mxu0
        %v4002 = vadd.f32 0.0, %v4001
        %v4003 = vpop.f32.mrf.mxu0
        %v4004 = vadd.f32 0.0, %v4003
        %4005 = vmatprep.mubr.f32.mxu0 0.0
        %4006 = vmatmul.mubr.f32.gmra.mxu0 %v3919
        %v4007 = vpop.f32.mrf.mxu0
        %v4008 = vadd.f32 0.0, %v4007
        %v4009 = vpop.f32.mrf.mxu0
        %v4010 = vadd.f32 0.0, %v4009
        %4011 = vmatprep.mubr.f32.mxu0 0.0
        %4012 = vmatmul.mubr.f32.gmra.mxu0 %v3921
        %v4013 = vpop.f32.mrf.mxu0
        %v4014 = vadd.f32 0.0, %v4013
        %v4015 = vpop.f32.mrf.mxu0
        %v4016 = vadd.f32 0.0, %v4015
        %4017 = vdwg.mxu0
        %v4018 = vadd.f32 %v3876, %v3996
        %v4019 = vadd.f32 %v3877, %v3998
        %v4020 = vadd.f32 %v3878, %v4002
        %v4021 = vadd.f32 %v3879, %v4004
        %v4022 = vadd.f32 %v3880, %v4008
        %v4023 = vadd.f32 %v3881, %v4010
        %v4024 = vadd.f32 %v3882, %v4014
        %v4025 = vadd.f32 %v3883, %v4016
        %v4026 = vld [vmem:[%s2] sm:$0x3]
        %v4028 = vlaneseq
        %v4029 = vshrl.u32 %v4028, 7
        %v4030 = vsub.s32 0, %v4029
        %v4031 = vrot.slane %v4026, %v4030
        %v4032 = vlaneseq
        %v4033 = vshrl.u32 %v4032, 7
        %v4034 = vsub.s32 1, %v4033
        %v4035 = vrot.slane %v4026, %v4034
        %v4038 = vadd.f32 %v4018, %v4031
        %v4039 = vadd.f32 %v4019, %v4035
        %v4040 = vadd.f32 %v4020, %v4031
        %v4041 = vadd.f32 %v4021, %v4035
        %v4042 = vadd.f32 %v4022, %v4031
        %v4043 = vadd.f32 %v4023, %v4035
        %v4044 = vadd.f32 %v4024, %v4031
        %v4045 = vadd.f32 %v4025, %v4035
        %v4046 = vmax.f32 %v4038, 0.0
        %v4047 = vmax.f32 %v4039, 0.0
        %v4048 = vmax.f32 %v4040, 0.0
        %v4049 = vmax.f32 %v4041, 0.0
        %v4050 = vmax.f32 %v4042, 0.0
        %v4051 = vmax.f32 %v4043, 0.0
        %v4052 = vmax.f32 %v4044, 0.0
        %v4053 = vmax.f32 %v4045, 0.0
        %v4054 = vld [vmem:[%s3] sm:$0xff]
        %v4055 = vld [vmem:[%s3 + $0x8] sm:$0x3f]
        %vm4056 = vcmask 228352
        %v4058 = vsel %vm4056, %v4054, 0
        %v4061 = vsel %vm4056, %v4055, 0
        %v4064 = vsel %vm562, %v4052, 0
        %v4067 = vsel %vm562, %v4053, 0
        %4069 = vmatprep.subr.mxu0 0.0
        %4070 = vmatpush1.msra.mxu0 0.0
        %4071 = vmatprep.subr.mxu0 0.0
        %4072 = vmatpush1.msra.mxu0 0.0
        %4073 = vmatprep.subr.mxu0 0.0
        %4074 = vmatpush1.msra.mxu0 0.0
        %4075 = vmatprep.subr.mxu0 0.0
        %4076 = vmatpush1.msra.mxu0 0.0
        %4077 = vmatprep.subr.mxu0 0.0
        %4078 = vmatpush1.msra.mxu0 0.0
        %4079 = vmatprep.subr.mxu0 0.0
        %4080 = vmatpush1.msra.mxu0 0.0
        %4081 = vmatprep.subr.mxu0 0.0
        %4082 = vmatpush1.msra.mxu0 0.0
        %4083 = vmatprep.subr.mxu0 0.0
        %4084 = vmatpush1.msra.mxu0 0.0
        %4085 = vmatprep.subr.mxu0 0.0
        %4086 = vmatpush1.msra.mxu0 0.0
        %4087 = vmatprep.subr.mxu0 0.0
        %4088 = vmatpush1.msra.mxu0 0.0
        %4089 = vmatprep.subr.mxu0 0.0
        %4090 = vmatpush1.msra.mxu0 0.0
        %4091 = vmatprep.subr.mxu0 0.0
        %4092 = vmatpush1.msra.mxu0 0.0
        %4093 = vmatprep.subr.mxu0 %v4067
        %4094 = vmatpush1.msra.mxu0 %v4064
        %4095 = vmatprep.subr.mxu0 %v4051
        %4096 = vmatpush1.msra.mxu0 %v4050
        %4097 = vmatprep.subr.mxu0 %v4049
        %4098 = vmatpush1.msra.mxu0 %v4048
        %4099 = vmatprep.subr.mxu0 %v4047
        %4100 = vmatpush1.msra.mxu0 %v4046
        %4101 = vmatprep.subr.mxu0 0.0
        %4102 = vmatpush2.msra.mxu0 0.0
        %4103 = vmatprep.subr.mxu0 0.0
        %4104 = vmatpush2.msra.mxu0 0.0
        %4105 = vmatprep.subr.mxu0 0.0
        %4106 = vmatpush2.msra.mxu0 0.0
        %4107 = vmatprep.subr.mxu0 0.0
        %4108 = vmatpush2.msra.mxu0 0.0
        %4109 = vmatprep.subr.mxu0 0.0
        %4110 = vmatpush2.msra.mxu0 0.0
        %4111 = vmatprep.subr.mxu0 0.0
        %4112 = vmatpush2.msra.mxu0 0.0
        %4113 = vmatprep.subr.mxu0 0.0
        %4114 = vmatpush2.msra.mxu0 0.0
        %4115 = vmatprep.subr.mxu0 0.0
        %4116 = vmatpush2.msra.mxu0 0.0
        %4117 = vmatprep.subr.mxu0 0.0
        %4118 = vmatpush2.msra.mxu0 0.0
        %4119 = vmatprep.subr.mxu0 0.0
        %4120 = vmatpush2.msra.mxu0 0.0
        %4121 = vmatprep.subr.mxu0 0.0
        %4122 = vmatpush2.msra.mxu0 0.0
        %4123 = vmatprep.subr.mxu0 0.0
        %4124 = vmatpush2.msra.mxu0 0.0
        %4125 = vmatprep.subr.mxu0 0.0
        %4126 = vmatpush2.msra.mxu0 0.0
        %4127 = vmatprep.subr.mxu0 0.0
        %4128 = vmatpush2.msra.mxu0 0.0
        %4129 = vmatprep.subr.mxu0 0.0
        %4130 = vmatpush2.msra.mxu0 0.0
        %4131 = vmatprep.subr.mxu0 0.0
        %4132 = vmatpush2.msra.mxu0 0.0
        %4133 = vmatprep.mubr.f32.mxu0 0.0
        %4134 = vmatmul.mubr.f32.gmra.mxu0 %v4058
        %v4135 = vpop.f32.mrf.mxu0
        %v4136 = vadd.f32 0.0, %v4135
        %v4137 = vpop.f32.mrf.mxu0
        %v4138 = vadd.f32 0.0, %v4137
        %4139 = vmatprep.mubr.f32.mxu0 0.0
        %4140 = vmatmul.mubr.f32.gmra.mxu0 %v4061
        %v4141 = vpop.f32.mrf.mxu0
        %v4142 = vadd.f32 0.0, %v4141
        %v4143 = vpop.f32.mrf.mxu0
        %v4144 = vadd.f32 0.0, %v4143
        %4145 = vdwg.mxu0
        %s4146 = scalar_lea.vmem %s3, 16
        %v4147 = vld [vmem:[%s4146] sm:$0xff]
        %v4148 = vld [vmem:[%s4146 + $0x8] sm:$0x3f]
        %v4150 = vsel %vm4056, %v4147, 0
        %v4153 = vsel %vm4056, %v4148, 0
        %4155 = vmatprep.subr.mxu0 0.0
        %4156 = vmatpush1.msra.mxu0 0.0
        %4157 = vmatprep.subr.mxu0 0.0
        %4158 = vmatpush1.msra.mxu0 0.0
        %4159 = vmatprep.subr.mxu0 0.0
        %4160 = vmatpush1.msra.mxu0 0.0
        %4161 = vmatprep.subr.mxu0 0.0
        %4162 = vmatpush1.msra.mxu0 0.0
        %4163 = vmatprep.subr.mxu0 0.0
        %4164 = vmatpush1.msra.mxu0 0.0
        %4165 = vmatprep.subr.mxu0 0.0
        %4166 = vmatpush1.msra.mxu0 0.0
        %4167 = vmatprep.subr.mxu0 0.0
        %4168 = vmatpush1.msra.mxu0 0.0
        %4169 = vmatprep.subr.mxu0 0.0
        %4170 = vmatpush1.msra.mxu0 0.0
        %4171 = vmatprep.subr.mxu0 0.0
        %4172 = vmatpush1.msra.mxu0 0.0
        %4173 = vmatprep.subr.mxu0 0.0
        %4174 = vmatpush1.msra.mxu0 0.0
        %4175 = vmatprep.subr.mxu0 0.0
        %4176 = vmatpush1.msra.mxu0 0.0
        %4177 = vmatprep.subr.mxu0 0.0
        %4178 = vmatpush1.msra.mxu0 0.0
        %4179 = vmatprep.subr.mxu0 %v4067
        %4180 = vmatpush1.msra.mxu0 %v4064
        %4181 = vmatprep.subr.mxu0 %v4051
        %4182 = vmatpush1.msra.mxu0 %v4050
        %4183 = vmatprep.subr.mxu0 %v4049
        %4184 = vmatpush1.msra.mxu0 %v4048
        %4185 = vmatprep.subr.mxu0 %v4047
        %4186 = vmatpush1.msra.mxu0 %v4046
        %4187 = vmatprep.subr.mxu0 0.0
        %4188 = vmatpush2.msra.mxu0 0.0
        %4189 = vmatprep.subr.mxu0 0.0
        %4190 = vmatpush2.msra.mxu0 0.0
        %4191 = vmatprep.subr.mxu0 0.0
        %4192 = vmatpush2.msra.mxu0 0.0
        %4193 = vmatprep.subr.mxu0 0.0
        %4194 = vmatpush2.msra.mxu0 0.0
        %4195 = vmatprep.subr.mxu0 0.0
        %4196 = vmatpush2.msra.mxu0 0.0
        %4197 = vmatprep.subr.mxu0 0.0
        %4198 = vmatpush2.msra.mxu0 0.0
        %4199 = vmatprep.subr.mxu0 0.0
        %4200 = vmatpush2.msra.mxu0 0.0
        %4201 = vmatprep.subr.mxu0 0.0
        %4202 = vmatpush2.msra.mxu0 0.0
        %4203 = vmatprep.subr.mxu0 0.0
        %4204 = vmatpush2.msra.mxu0 0.0
        %4205 = vmatprep.subr.mxu0 0.0
        %4206 = vmatpush2.msra.mxu0 0.0
        %4207 = vmatprep.subr.mxu0 0.0
        %4208 = vmatpush2.msra.mxu0 0.0
        %4209 = vmatprep.subr.mxu0 0.0
        %4210 = vmatpush2.msra.mxu0 0.0
        %4211 = vmatprep.subr.mxu0 0.0
        %4212 = vmatpush2.msra.mxu0 0.0
        %4213 = vmatprep.subr.mxu0 0.0
        %4214 = vmatpush2.msra.mxu0 0.0
        %4215 = vmatprep.subr.mxu0 0.0
        %4216 = vmatpush2.msra.mxu0 0.0
        %4217 = vmatprep.subr.mxu0 0.0
        %4218 = vmatpush2.msra.mxu0 0.0
        %4219 = vmatprep.mubr.f32.mxu0 0.0
        %4220 = vmatmul.mubr.f32.gmra.mxu0 %v4150
        %v4221 = vpop.f32.mrf.mxu0
        %v4222 = vadd.f32 0.0, %v4221
        %v4223 = vpop.f32.mrf.mxu0
        %v4224 = vadd.f32 0.0, %v4223
        %4225 = vmatprep.mubr.f32.mxu0 0.0
        %4226 = vmatmul.mubr.f32.gmra.mxu0 %v4153
        %v4227 = vpop.f32.mrf.mxu0
        %v4228 = vadd.f32 0.0, %v4227
        %v4229 = vpop.f32.mrf.mxu0
        %v4230 = vadd.f32 0.0, %v4229
        %4231 = vdwg.mxu0
        %v4232 = vmax.f32 %v4136, %v4222
        %v4233 = vmax.f32 %v4138, %v4224
        %v4234 = vmax.f32 %v4142, %v4228
        %v4235 = vmax.f32 %v4144, %v4230
        %v4236 = vld [vmem:[%s4] sm:$0xff]
        %v4237 = vld [vmem:[%s4 + $0x8] sm:$0xff]
        %v4238 = vld [vmem:[%s4 + $0x10] sm:$0xff]
        %v4239 = vld [vmem:[%s4 + $0x18] sm:$0xff]
        %v4240 = vld [vmem:[%s4 + $0x20] sm:$0xff]
        %v4241 = vld [vmem:[%s4 + $0x28] sm:$0xff]
        %v4242 = vld [vmem:[%s4 + $0x30] sm:$0xff]
        %v4243 = vld [vmem:[%s4 + $0x38] sm:$0xff]
        %v4244 = vld [vmem:[%s4 + $0x40] sm:$0xff]
        %v4245 = vld [vmem:[%s4 + $0x48] sm:$0xff]
        %v4246 = vld [vmem:[%s4 + $0x50] sm:$0xff]
        %v4247 = vld [vmem:[%s4 + $0x58] sm:$0xff]
        %v4248 = vld [vmem:[%s4 + $0x60] sm:$0xff]
        %v4249 = vld [vmem:[%s4 + $0x68] sm:$0xff]
        %v4250 = vld [vmem:[%s4 + $0x70] sm:$0xff]
        %v4251 = vld [vmem:[%s4 + $0x78] sm:$0xff]
        %v4252 = vld [vmem:[%s4 + $0x80] sm:$0xff]
        %v4253 = vld [vmem:[%s4 + $0x88] sm:$0xff]
        %v4254 = vld [vmem:[%s4 + $0x90] sm:$0xff]
        %v4255 = vld [vmem:[%s4 + $0x98] sm:$0xff]
        %v4256 = vld [vmem:[%s4 + $0xa0] sm:$0xff]
        %vm4257 = vcmask 326656
        %v4259 = vsel %vm4257, %v4233, 0
        %v4262 = vsel %vm4257, %v4235, 0
        %4264 = vmatprep.subr.mxu0 0.0
        %4265 = vmatpush1.msra.mxu0 %v4251
        %4266 = vmatprep.subr.mxu0 0.0
        %4267 = vmatpush1.msra.mxu0 %v4250
        %4268 = vmatprep.subr.mxu0 0.0
        %4269 = vmatpush1.msra.mxu0 %v4249
        %4270 = vmatprep.subr.mxu0 0.0
        %4271 = vmatpush1.msra.mxu0 %v4248
        %4272 = vmatprep.subr.mxu0 0.0
        %4273 = vmatpush1.msra.mxu0 %v4247
        %4274 = vmatprep.subr.mxu0 0.0
        %4275 = vmatpush1.msra.mxu0 %v4246
        %4276 = vmatprep.subr.mxu0 0.0
        %4277 = vmatpush1.msra.mxu0 %v4245
        %4278 = vmatprep.subr.mxu0 0.0
        %4279 = vmatpush1.msra.mxu0 %v4244
        %4280 = vmatprep.subr.mxu0 0.0
        %4281 = vmatpush1.msra.mxu0 %v4243
        %4282 = vmatprep.subr.mxu0 0.0
        %4283 = vmatpush1.msra.mxu0 %v4242
        %4284 = vmatprep.subr.mxu0 0.0
        %4285 = vmatpush1.msra.mxu0 %v4241
        %4286 = vmatprep.subr.mxu0 0.0
        %4287 = vmatpush1.msra.mxu0 %v4240
        %4288 = vmatprep.subr.mxu0 0.0
        %4289 = vmatpush1.msra.mxu0 %v4239
        %4290 = vmatprep.subr.mxu0 0.0
        %4291 = vmatpush1.msra.mxu0 %v4238
        %4292 = vmatprep.subr.mxu0 0.0
        %4293 = vmatpush1.msra.mxu0 %v4237
        %4294 = vmatprep.subr.mxu0 0.0
        %4295 = vmatpush1.msra.mxu0 %v4236
        %4296 = vmatprep.subr.mxu0 0.0
        %4297 = vmatpush2.msra.mxu0 0.0
        %4298 = vmatprep.subr.mxu0 0.0
        %4299 = vmatpush2.msra.mxu0 0.0
        %4300 = vmatprep.subr.mxu0 0.0
        %4301 = vmatpush2.msra.mxu0 0.0
        %4302 = vmatprep.subr.mxu0 0.0
        %4303 = vmatpush2.msra.mxu0 0.0
        %4304 = vmatprep.subr.mxu0 0.0
        %4305 = vmatpush2.msra.mxu0 0.0
        %4306 = vmatprep.subr.mxu0 0.0
        %4307 = vmatpush2.msra.mxu0 0.0
        %4308 = vmatprep.subr.mxu0 0.0
        %4309 = vmatpush2.msra.mxu0 0.0
        %4310 = vmatprep.subr.mxu0 0.0
        %4311 = vmatpush2.msra.mxu0 0.0
        %4312 = vmatprep.subr.mxu0 0.0
        %4313 = vmatpush2.msra.mxu0 0.0
        %4314 = vmatprep.subr.mxu0 0.0
        %4315 = vmatpush2.msra.mxu0 0.0
        %4316 = vmatprep.subr.mxu0 0.0
        %4317 = vmatpush2.msra.mxu0 0.0
        %4318 = vmatprep.subr.mxu0 0.0
        %4319 = vmatpush2.msra.mxu0 %v4256
        %4320 = vmatprep.subr.mxu0 0.0
        %4321 = vmatpush2.msra.mxu0 %v4255
        %4322 = vmatprep.subr.mxu0 0.0
        %4323 = vmatpush2.msra.mxu0 %v4254
        %4324 = vmatprep.subr.mxu0 0.0
        %4325 = vmatpush2.msra.mxu0 %v4253
        %4326 = vmatprep.subr.mxu0 0.0
        %4327 = vmatpush2.msra.mxu0 %v4252
        %4328 = vmatprep.mubr.f32.mxu0 %v4259
        %4329 = vmatmul.mubr.f32.gmra.mxu0 %v4232
        %v4330 = vpop.f32.mrf.mxu0
        %v4331 = vadd.f32 0.0, %v4330
        %v4332 = vpop.f32.mrf.mxu0
        %4333 = vmatprep.mubr.f32.mxu0 %v4262
        %4334 = vmatmul.mubr.f32.gmra.mxu0 %v4234
        %v4335 = vpop.f32.mrf.mxu0
        %v4336 = vadd.f32 0.0, %v4335
        %v4337 = vpop.f32.mrf.mxu0
        %4338 = vdwg.mxu0
        %s4339 = scalar_lea.vmem %s4, 168
        %v4340 = vld [vmem:[%s4339] sm:$0xff]
        %v4341 = vld [vmem:[%s4339 + $0x8] sm:$0xff]
        %v4342 = vld [vmem:[%s4339 + $0x10] sm:$0xff]
        %v4343 = vld [vmem:[%s4339 + $0x18] sm:$0xff]
        %v4344 = vld [vmem:[%s4339 + $0x20] sm:$0xff]
        %v4345 = vld [vmem:[%s4339 + $0x28] sm:$0xff]
        %v4346 = vld [vmem:[%s4339 + $0x30] sm:$0xff]
        %v4347 = vld [vmem:[%s4339 + $0x38] sm:$0xff]
        %v4348 = vld [vmem:[%s4339 + $0x40] sm:$0xff]
        %v4349 = vld [vmem:[%s4339 + $0x48] sm:$0xff]
        %v4350 = vld [vmem:[%s4339 + $0x50] sm:$0xff]
        %v4351 = vld [vmem:[%s4339 + $0x58] sm:$0xff]
        %v4352 = vld [vmem:[%s4339 + $0x60] sm:$0xff]
        %v4353 = vld [vmem:[%s4339 + $0x68] sm:$0xff]
        %v4354 = vld [vmem:[%s4339 + $0x70] sm:$0xff]
        %v4355 = vld [vmem:[%s4339 + $0x78] sm:$0xff]
        %v4356 = vld [vmem:[%s4339 + $0x80] sm:$0xff]
        %v4357 = vld [vmem:[%s4339 + $0x88] sm:$0xff]
        %v4358 = vld [vmem:[%s4339 + $0x90] sm:$0xff]
        %v4359 = vld [vmem:[%s4339 + $0x98] sm:$0xff]
        %v4360 = vld [vmem:[%s4339 + $0xa0] sm:$0xff]
        %4361 = vmatprep.subr.mxu0 0.0
        %4362 = vmatpush1.msra.mxu0 %v4355
        %4363 = vmatprep.subr.mxu0 0.0
        %4364 = vmatpush1.msra.mxu0 %v4354
        %4365 = vmatprep.subr.mxu0 0.0
        %4366 = vmatpush1.msra.mxu0 %v4353
        %4367 = vmatprep.subr.mxu0 0.0
        %4368 = vmatpush1.msra.mxu0 %v4352
        %4369 = vmatprep.subr.mxu0 0.0
        %4370 = vmatpush1.msra.mxu0 %v4351
        %4371 = vmatprep.subr.mxu0 0.0
        %4372 = vmatpush1.msra.mxu0 %v4350
        %4373 = vmatprep.subr.mxu0 0.0
        %4374 = vmatpush1.msra.mxu0 %v4349
        %4375 = vmatprep.subr.mxu0 0.0
        %4376 = vmatpush1.msra.mxu0 %v4348
        %4377 = vmatprep.subr.mxu0 0.0
        %4378 = vmatpush1.msra.mxu0 %v4347
        %4379 = vmatprep.subr.mxu0 0.0
        %4380 = vmatpush1.msra.mxu0 %v4346
        %4381 = vmatprep.subr.mxu0 0.0
        %4382 = vmatpush1.msra.mxu0 %v4345
        %4383 = vmatprep.subr.mxu0 0.0
        %4384 = vmatpush1.msra.mxu0 %v4344
        %4385 = vmatprep.subr.mxu0 0.0
        %4386 = vmatpush1.msra.mxu0 %v4343
        %4387 = vmatprep.subr.mxu0 0.0
        %4388 = vmatpush1.msra.mxu0 %v4342
        %4389 = vmatprep.subr.mxu0 0.0
        %4390 = vmatpush1.msra.mxu0 %v4341
        %4391 = vmatprep.subr.mxu0 0.0
        %4392 = vmatpush1.msra.mxu0 %v4340
        %4393 = vmatprep.subr.mxu0 0.0
        %4394 = vmatpush2.msra.mxu0 0.0
        %4395 = vmatprep.subr.mxu0 0.0
        %4396 = vmatpush2.msra.mxu0 0.0
        %4397 = vmatprep.subr.mxu0 0.0
        %4398 = vmatpush2.msra.mxu0 0.0
        %4399 = vmatprep.subr.mxu0 0.0
        %4400 = vmatpush2.msra.mxu0 0.0
        %4401 = vmatprep.subr.mxu0 0.0
        %4402 = vmatpush2.msra.mxu0 0.0
        %4403 = vmatprep.subr.mxu0 0.0
        %4404 = vmatpush2.msra.mxu0 0.0
        %4405 = vmatprep.subr.mxu0 0.0
        %4406 = vmatpush2.msra.mxu0 0.0
        %4407 = vmatprep.subr.mxu0 0.0
        %4408 = vmatpush2.msra.mxu0 0.0
        %4409 = vmatprep.subr.mxu0 0.0
        %4410 = vmatpush2.msra.mxu0 0.0
        %4411 = vmatprep.subr.mxu0 0.0
        %4412 = vmatpush2.msra.mxu0 0.0
        %4413 = vmatprep.subr.mxu0 0.0
        %4414 = vmatpush2.msra.mxu0 0.0
        %4415 = vmatprep.subr.mxu0 0.0
        %4416 = vmatpush2.msra.mxu0 %v4360
        %4417 = vmatprep.subr.mxu0 0.0
        %4418 = vmatpush2.msra.mxu0 %v4359
        %4419 = vmatprep.subr.mxu0 0.0
        %4420 = vmatpush2.msra.mxu0 %v4358
        %4421 = vmatprep.subr.mxu0 0.0
        %4422 = vmatpush2.msra.mxu0 %v4357
        %4423 = vmatprep.subr.mxu0 0.0
        %4424 = vmatpush2.msra.mxu0 %v4356
        %4425 = vmatprep.mubr.f32.mxu0 %v4259
        %4426 = vmatmul.mubr.f32.gmra.mxu0 %v4232
        %v4427 = vpop.f32.mrf.mxu0
        %v4428 = vadd.f32 0.0, %v4427
        %v4429 = vpop.f32.mrf.mxu0
        %4430 = vmatprep.mubr.f32.mxu0 %v4262
        %4431 = vmatmul.mubr.f32.gmra.mxu0 %v4234
        %v4432 = vpop.f32.mrf.mxu0
        %v4433 = vadd.f32 0.0, %v4432
        %v4434 = vpop.f32.mrf.mxu0
        %4435 = vdwg.mxu0
        %v4436 = vmax.f32 %v4331, %v4428
        %v4437 = vmax.f32 %v4336, %v4433
        %v4438 = vld [vmem:[%s5] sm:$0xff]
        %v4439 = vld [vmem:[%s5 + $0x8] sm:$0xff]
        %v4440 = vld [vmem:[%s5 + $0x10] sm:$0xff]
        %v4441 = vld [vmem:[%s5 + $0x18] sm:$0xff]
        %v4442 = vld [vmem:[%s5 + $0x20] sm:$0xff]
        %v4443 = vld [vmem:[%s5 + $0x28] sm:$0xff]
        %v4444 = vld [vmem:[%s5 + $0x30] sm:$0xff]
        %v4445 = vld [vmem:[%s5 + $0x38] sm:$0xff]
        %v4446 = vld [vmem:[%s5 + $0x40] sm:$0xff]
        %v4447 = vld [vmem:[%s5 + $0x48] sm:$0xff]
        %v4448 = vld [vmem:[%s5 + $0x50] sm:$0xff]
        %v4449 = vld [vmem:[%s5 + $0x58] sm:$0xff]
        %v4450 = vld [vmem:[%s5 + $0x60] sm:$0xff]
        %v4451 = vld [vmem:[%s5 + $0x68] sm:$0xff]
        %v4452 = vld [vmem:[%s5 + $0x70] sm:$0xf]
        %v4453 = vld [vmem:[%s5 + $0x78] sm:$0xf]
        %s4454 = scalar_lea.vmem %s5, 128
        %v4455 = vld [vmem:[%s4454] sm:$0xff]
        %v4456 = vld [vmem:[%s4454 + $0x8] sm:$0xff]
        %v4457 = vld [vmem:[%s4454 + $0x10] sm:$0xff]
        %v4458 = vld [vmem:[%s4454 + $0x18] sm:$0xff]
        %v4459 = vld [vmem:[%s4454 + $0x20] sm:$0xff]
        %v4460 = vld [vmem:[%s4454 + $0x28] sm:$0xff]
        %v4461 = vld [vmem:[%s4454 + $0x30] sm:$0xff]
        %v4462 = vld [vmem:[%s4454 + $0x38] sm:$0xff]
        %v4463 = vld [vmem:[%s4454 + $0x40] sm:$0xff]
        %v4464 = vld [vmem:[%s4454 + $0x48] sm:$0xff]
        %v4465 = vld [vmem:[%s4454 + $0x50] sm:$0xff]
        %v4466 = vld [vmem:[%s4454 + $0x58] sm:$0xff]
        %v4467 = vld [vmem:[%s4454 + $0x60] sm:$0xff]
        %v4468 = vld [vmem:[%s4454 + $0x68] sm:$0xff]
        %v4469 = vld [vmem:[%s4454 + $0x70] sm:$0xf]
        %v4470 = vld [vmem:[%s4454 + $0x78] sm:$0xf]
        %4473 = vrot.lane.b32.xlu0 %v4436, 122
        %v4474 = vpop.permute.xlu0 %4473
        %4475 = vrot.lane.b32.xlu0 %v4437, 122
        %v4476 = vpop.permute.xlu0 %4475
        %vm4477 = vcmask 490496
        %v4478 = vsel %vm4477, %v4474, 0
        %v4480 = vsel %vm4477, %v4476, 0
        %v4483 = vsel %vm562, %v4469, 0
        %v4486 = vsel %vm562, %v4470, 0
        %4488 = vmatprep.subr.mxu0 0.0
        %4489 = vmatpush1.msra.mxu0 0.0
        %4490 = vmatprep.subr.mxu0 0.0
        %4491 = vmatpush1.msra.mxu0 0.0
        %4492 = vmatprep.subr.mxu0 0.0
        %4493 = vmatpush1.msra.mxu0 0.0
        %4494 = vmatprep.subr.mxu0 0.0
        %4495 = vmatpush1.msra.mxu0 0.0
        %4496 = vmatprep.subr.mxu0 0.0
        %4497 = vmatpush1.msra.mxu0 0.0
        %4498 = vmatprep.subr.mxu0 0.0
        %4499 = vmatpush1.msra.mxu0 0.0
        %4500 = vmatprep.subr.mxu0 0.0
        %4501 = vmatpush1.msra.mxu0 0.0
        %4502 = vmatprep.subr.mxu0 0.0
        %4503 = vmatpush1.msra.mxu0 0.0
        %4504 = vmatprep.subr.mxu0 %v4486
        %4505 = vmatpush1.msra.mxu0 %v4483
        %4506 = vmatprep.subr.mxu0 %v4468
        %4507 = vmatpush1.msra.mxu0 %v4467
        %4508 = vmatprep.subr.mxu0 %v4466
        %4509 = vmatpush1.msra.mxu0 %v4465
        %4510 = vmatprep.subr.mxu0 %v4464
        %4511 = vmatpush1.msra.mxu0 %v4463
        %4512 = vmatprep.subr.mxu0 %v4462
        %4513 = vmatpush1.msra.mxu0 %v4461
        %4514 = vmatprep.subr.mxu0 %v4460
        %4515 = vmatpush1.msra.mxu0 %v4459
        %4516 = vmatprep.subr.mxu0 %v4458
        %4517 = vmatpush1.msra.mxu0 %v4457
        %4518 = vmatprep.subr.mxu0 %v4456
        %4519 = vmatpush1.msra.mxu0 %v4455
        %4520 = vmatprep.subr.mxu0 0.0
        %4521 = vmatpush2.msra.mxu0 0.0
        %4522 = vmatprep.subr.mxu0 0.0
        %4523 = vmatpush2.msra.mxu0 0.0
        %4524 = vmatprep.subr.mxu0 0.0
        %4525 = vmatpush2.msra.mxu0 0.0
        %4526 = vmatprep.subr.mxu0 0.0
        %4527 = vmatpush2.msra.mxu0 0.0
        %4528 = vmatprep.subr.mxu0 0.0
        %4529 = vmatpush2.msra.mxu0 0.0
        %4530 = vmatprep.subr.mxu0 0.0
        %4531 = vmatpush2.msra.mxu0 0.0
        %4532 = vmatprep.subr.mxu0 0.0
        %4533 = vmatpush2.msra.mxu0 0.0
        %4534 = vmatprep.subr.mxu0 0.0
        %4535 = vmatpush2.msra.mxu0 0.0
        %4536 = vmatprep.subr.mxu0 0.0
        %4537 = vmatpush2.msra.mxu0 0.0
        %4538 = vmatprep.subr.mxu0 0.0
        %4539 = vmatpush2.msra.mxu0 0.0
        %4540 = vmatprep.subr.mxu0 0.0
        %4541 = vmatpush2.msra.mxu0 0.0
        %4542 = vmatprep.subr.mxu0 0.0
        %4543 = vmatpush2.msra.mxu0 0.0
        %4544 = vmatprep.subr.mxu0 0.0
        %4545 = vmatpush2.msra.mxu0 0.0
        %4546 = vmatprep.subr.mxu0 0.0
        %4547 = vmatpush2.msra.mxu0 0.0
        %4548 = vmatprep.subr.mxu0 0.0
        %4549 = vmatpush2.msra.mxu0 0.0
        %4550 = vmatprep.subr.mxu0 0.0
        %4551 = vmatpush2.msra.mxu0 0.0
        %4552 = vmatprep.mubr.f32.mxu0 0.0
        %4553 = vmatmul.mubr.f32.gmra.mxu0 %v4478
        %v4554 = vpop.f32.mrf.mxu0
        %v4555 = vadd.f32 0.0, %v4554
        %v4556 = vpop.f32.mrf.mxu0
        %v4557 = vadd.f32 0.0, %v4556
        %4558 = vmatprep.mubr.f32.mxu0 0.0
        %4559 = vmatmul.mubr.f32.gmra.mxu0 %v4480
        %v4560 = vpop.f32.mrf.mxu0
        %v4561 = vadd.f32 0.0, %v4560
        %v4562 = vpop.f32.mrf.mxu0
        %v4563 = vadd.f32 0.0, %v4562
        %4564 = vdwg.mxu0
        %v4565 = vsel %vm4477, %v4436, 0
        %v4567 = vsel %vm4477, %v4437, 0
        %v4570 = vsel %vm562, %v4452, 0
        %v4573 = vsel %vm562, %v4453, 0
        %4575 = vmatprep.subr.mxu0 0.0
        %4576 = vmatpush1.msra.mxu0 0.0
        %4577 = vmatprep.subr.mxu0 0.0
        %4578 = vmatpush1.msra.mxu0 0.0
        %4579 = vmatprep.subr.mxu0 0.0
        %4580 = vmatpush1.msra.mxu0 0.0
        %4581 = vmatprep.subr.mxu0 0.0
        %4582 = vmatpush1.msra.mxu0 0.0
        %4583 = vmatprep.subr.mxu0 0.0
        %4584 = vmatpush1.msra.mxu0 0.0
        %4585 = vmatprep.subr.mxu0 0.0
        %4586 = vmatpush1.msra.mxu0 0.0
        %4587 = vmatprep.subr.mxu0 0.0
        %4588 = vmatpush1.msra.mxu0 0.0
        %4589 = vmatprep.subr.mxu0 0.0
        %4590 = vmatpush1.msra.mxu0 0.0
        %4591 = vmatprep.subr.mxu0 %v4573
        %4592 = vmatpush1.msra.mxu0 %v4570
        %4593 = vmatprep.subr.mxu0 %v4451
        %4594 = vmatpush1.msra.mxu0 %v4450
        %4595 = vmatprep.subr.mxu0 %v4449
        %4596 = vmatpush1.msra.mxu0 %v4448
        %4597 = vmatprep.subr.mxu0 %v4447
        %4598 = vmatpush1.msra.mxu0 %v4446
        %4599 = vmatprep.subr.mxu0 %v4445
        %4600 = vmatpush1.msra.mxu0 %v4444
        %4601 = vmatprep.subr.mxu0 %v4443
        %4602 = vmatpush1.msra.mxu0 %v4442
        %4603 = vmatprep.subr.mxu0 %v4441
        %4604 = vmatpush1.msra.mxu0 %v4440
        %4605 = vmatprep.subr.mxu0 %v4439
        %4606 = vmatpush1.msra.mxu0 %v4438
        %4607 = vmatprep.subr.mxu0 0.0
        %4608 = vmatpush2.msra.mxu0 0.0
        %4609 = vmatprep.subr.mxu0 0.0
        %4610 = vmatpush2.msra.mxu0 0.0
        %4611 = vmatprep.subr.mxu0 0.0
        %4612 = vmatpush2.msra.mxu0 0.0
        %4613 = vmatprep.subr.mxu0 0.0
        %4614 = vmatpush2.msra.mxu0 0.0
        %4615 = vmatprep.subr.mxu0 0.0
        %4616 = vmatpush2.msra.mxu0 0.0
        %4617 = vmatprep.subr.mxu0 0.0
        %4618 = vmatpush2.msra.mxu0 0.0
        %4619 = vmatprep.subr.mxu0 0.0
        %4620 = vmatpush2.msra.mxu0 0.0
        %4621 = vmatprep.subr.mxu0 0.0
        %4622 = vmatpush2.msra.mxu0 0.0
        %4623 = vmatprep.subr.mxu0 0.0
        %4624 = vmatpush2.msra.mxu0 0.0
        %4625 = vmatprep.subr.mxu0 0.0
        %4626 = vmatpush2.msra.mxu0 0.0
        %4627 = vmatprep.subr.mxu0 0.0
        %4628 = vmatpush2.msra.mxu0 0.0
        %4629 = vmatprep.subr.mxu0 0.0
        %4630 = vmatpush2.msra.mxu0 0.0
        %4631 = vmatprep.subr.mxu0 0.0
        %4632 = vmatpush2.msra.mxu0 0.0
        %4633 = vmatprep.subr.mxu0 0.0
        %4634 = vmatpush2.msra.mxu0 0.0
        %4635 = vmatprep.subr.mxu0 0.0
        %4636 = vmatpush2.msra.mxu0 0.0
        %4637 = vmatprep.subr.mxu0 0.0
        %4638 = vmatpush2.msra.mxu0 0.0
        %4639 = vmatprep.mubr.f32.mxu0 0.0
        %4640 = vmatmul.mubr.f32.gmra.mxu0 %v4565
        %v4641 = vpop.f32.mrf.mxu0
        %v4642 = vadd.f32 %v4555, %v4641
        %v4643 = vpop.f32.mrf.mxu0
        %v4644 = vadd.f32 %v4557, %v4643
        %4645 = vmatprep.mubr.f32.mxu0 0.0
        %4646 = vmatmul.mubr.f32.gmra.mxu0 %v4567
        %v4647 = vpop.f32.mrf.mxu0
        %v4648 = vadd.f32 %v4561, %v4647
        %v4649 = vpop.f32.mrf.mxu0
        %v4650 = vadd.f32 %v4563, %v4649
        %4651 = vdwg.mxu0
        %s4652 = scalar_lea.vmem %s5, 256
        %v4653 = vld [vmem:[%s4652] sm:$0xff]
        %v4654 = vld [vmem:[%s4652 + $0x8] sm:$0xff]
        %v4655 = vld [vmem:[%s4652 + $0x10] sm:$0xff]
        %v4656 = vld [vmem:[%s4652 + $0x18] sm:$0xff]
        %v4657 = vld [vmem:[%s4652 + $0x20] sm:$0xff]
        %v4658 = vld [vmem:[%s4652 + $0x28] sm:$0xff]
        %v4659 = vld [vmem:[%s4652 + $0x30] sm:$0xff]
        %v4660 = vld [vmem:[%s4652 + $0x38] sm:$0xff]
        %v4661 = vld [vmem:[%s4652 + $0x40] sm:$0xff]
        %v4662 = vld [vmem:[%s4652 + $0x48] sm:$0xff]
        %v4663 = vld [vmem:[%s4652 + $0x50] sm:$0xff]
        %v4664 = vld [vmem:[%s4652 + $0x58] sm:$0xff]
        %v4665 = vld [vmem:[%s4652 + $0x60] sm:$0xff]
        %v4666 = vld [vmem:[%s4652 + $0x68] sm:$0xff]
        %v4667 = vld [vmem:[%s4652 + $0x70] sm:$0xf]
        %v4668 = vld [vmem:[%s4652 + $0x78] sm:$0xf]
        %4669 = vrot.lane.b32.xlu0 %v4436, 116
        %v4670 = vpop.permute.xlu0 %4669
        %4671 = vrot.lane.b32.xlu0 %v4437, 116
        %v4672 = vpop.permute.xlu0 %4671
        %v4673 = vsel %vm4477, %v4670, 0
        %v4675 = vsel %vm4477, %v4672, 0
        %v4678 = vsel %vm562, %v4667, 0
        %v4681 = vsel %vm562, %v4668, 0
        %4683 = vmatprep.subr.mxu0 0.0
        %4684 = vmatpush1.msra.mxu0 0.0
        %4685 = vmatprep.subr.mxu0 0.0
        %4686 = vmatpush1.msra.mxu0 0.0
        %4687 = vmatprep.subr.mxu0 0.0
        %4688 = vmatpush1.msra.mxu0 0.0
        %4689 = vmatprep.subr.mxu0 0.0
        %4690 = vmatpush1.msra.mxu0 0.0
        %4691 = vmatprep.subr.mxu0 0.0
        %4692 = vmatpush1.msra.mxu0 0.0
        %4693 = vmatprep.subr.mxu0 0.0
        %4694 = vmatpush1.msra.mxu0 0.0
        %4695 = vmatprep.subr.mxu0 0.0
        %4696 = vmatpush1.msra.mxu0 0.0
        %4697 = vmatprep.subr.mxu0 0.0
        %4698 = vmatpush1.msra.mxu0 0.0
        %4699 = vmatprep.subr.mxu0 %v4681
        %4700 = vmatpush1.msra.mxu0 %v4678
        %4701 = vmatprep.subr.mxu0 %v4666
        %4702 = vmatpush1.msra.mxu0 %v4665
        %4703 = vmatprep.subr.mxu0 %v4664
        %4704 = vmatpush1.msra.mxu0 %v4663
        %4705 = vmatprep.subr.mxu0 %v4662
        %4706 = vmatpush1.msra.mxu0 %v4661
        %4707 = vmatprep.subr.mxu0 %v4660
        %4708 = vmatpush1.msra.mxu0 %v4659
        %4709 = vmatprep.subr.mxu0 %v4658
        %4710 = vmatpush1.msra.mxu0 %v4657
        %4711 = vmatprep.subr.mxu0 %v4656
        %4712 = vmatpush1.msra.mxu0 %v4655
        %4713 = vmatprep.subr.mxu0 %v4654
        %4714 = vmatpush1.msra.mxu0 %v4653
        %4715 = vmatprep.subr.mxu0 0.0
        %4716 = vmatpush2.msra.mxu0 0.0
        %4717 = vmatprep.subr.mxu0 0.0
        %4718 = vmatpush2.msra.mxu0 0.0
        %4719 = vmatprep.subr.mxu0 0.0
        %4720 = vmatpush2.msra.mxu0 0.0
        %4721 = vmatprep.subr.mxu0 0.0
        %4722 = vmatpush2.msra.mxu0 0.0
        %4723 = vmatprep.subr.mxu0 0.0
        %4724 = vmatpush2.msra.mxu0 0.0
        %4725 = vmatprep.subr.mxu0 0.0
        %4726 = vmatpush2.msra.mxu0 0.0
        %4727 = vmatprep.subr.mxu0 0.0
        %4728 = vmatpush2.msra.mxu0 0.0
        %4729 = vmatprep.subr.mxu0 0.0
        %4730 = vmatpush2.msra.mxu0 0.0
        %4731 = vmatprep.subr.mxu0 0.0
        %4732 = vmatpush2.msra.mxu0 0.0
        %4733 = vmatprep.subr.mxu0 0.0
        %4734 = vmatpush2.msra.mxu0 0.0
        %4735 = vmatprep.subr.mxu0 0.0
        %4736 = vmatpush2.msra.mxu0 0.0
        %4737 = vmatprep.subr.mxu0 0.0
        %4738 = vmatpush2.msra.mxu0 0.0
        %4739 = vmatprep.subr.mxu0 0.0
        %4740 = vmatpush2.msra.mxu0 0.0
        %4741 = vmatprep.subr.mxu0 0.0
        %4742 = vmatpush2.msra.mxu0 0.0
        %4743 = vmatprep.subr.mxu0 0.0
        %4744 = vmatpush2.msra.mxu0 0.0
        %4745 = vmatprep.subr.mxu0 0.0
        %4746 = vmatpush2.msra.mxu0 0.0
        %4747 = vmatprep.mubr.f32.mxu0 0.0
        %4748 = vmatmul.mubr.f32.gmra.mxu0 %v4673
        %v4749 = vpop.f32.mrf.mxu0
        %v4750 = vadd.f32 0.0, %v4749
        %v4751 = vpop.f32.mrf.mxu0
        %v4752 = vadd.f32 0.0, %v4751
        %4753 = vmatprep.mubr.f32.mxu0 0.0
        %4754 = vmatmul.mubr.f32.gmra.mxu0 %v4675
        %v4755 = vpop.f32.mrf.mxu0
        %v4756 = vadd.f32 0.0, %v4755
        %v4757 = vpop.f32.mrf.mxu0
        %v4758 = vadd.f32 0.0, %v4757
        %4759 = vdwg.mxu0
        %v4760 = vadd.f32 %v4642, %v4750
        %v4761 = vadd.f32 %v4644, %v4752
        %v4762 = vadd.f32 %v4648, %v4756
        %v4763 = vadd.f32 %v4650, %v4758
        %s4764 = scalar_lea.vmem %s5, 384
        %v4765 = vld [vmem:[%s4764] sm:$0xff]
        %v4766 = vld [vmem:[%s4764 + $0x8] sm:$0xff]
        %v4767 = vld [vmem:[%s4764 + $0x10] sm:$0xff]
        %v4768 = vld [vmem:[%s4764 + $0x18] sm:$0xff]
        %v4769 = vld [vmem:[%s4764 + $0x20] sm:$0xff]
        %v4770 = vld [vmem:[%s4764 + $0x28] sm:$0xff]
        %v4771 = vld [vmem:[%s4764 + $0x30] sm:$0xff]
        %v4772 = vld [vmem:[%s4764 + $0x38] sm:$0xff]
        %v4773 = vld [vmem:[%s4764 + $0x40] sm:$0xff]
        %v4774 = vld [vmem:[%s4764 + $0x48] sm:$0xff]
        %v4775 = vld [vmem:[%s4764 + $0x50] sm:$0xff]
        %v4776 = vld [vmem:[%s4764 + $0x58] sm:$0xff]
        %v4777 = vld [vmem:[%s4764 + $0x60] sm:$0xff]
        %v4778 = vld [vmem:[%s4764 + $0x68] sm:$0xff]
        %v4779 = vld [vmem:[%s4764 + $0x70] sm:$0xf]
        %v4780 = vld [vmem:[%s4764 + $0x78] sm:$0xf]
        %4781 = vrot.lane.b32.xlu0 %v4436, 110
        %v4782 = vpop.permute.xlu0 %4781
        %4783 = vrot.lane.b32.xlu0 %v4437, 110
        %v4784 = vpop.permute.xlu0 %4783
        %v4785 = vsel %vm4477, %v4782, 0
        %v4787 = vsel %vm4477, %v4784, 0
        %v4790 = vsel %vm562, %v4779, 0
        %v4793 = vsel %vm562, %v4780, 0
        %4795 = vmatprep.subr.mxu0 0.0
        %4796 = vmatpush1.msra.mxu0 0.0
        %4797 = vmatprep.subr.mxu0 0.0
        %4798 = vmatpush1.msra.mxu0 0.0
        %4799 = vmatprep.subr.mxu0 0.0
        %4800 = vmatpush1.msra.mxu0 0.0
        %4801 = vmatprep.subr.mxu0 0.0
        %4802 = vmatpush1.msra.mxu0 0.0
        %4803 = vmatprep.subr.mxu0 0.0
        %4804 = vmatpush1.msra.mxu0 0.0
        %4805 = vmatprep.subr.mxu0 0.0
        %4806 = vmatpush1.msra.mxu0 0.0
        %4807 = vmatprep.subr.mxu0 0.0
        %4808 = vmatpush1.msra.mxu0 0.0
        %4809 = vmatprep.subr.mxu0 0.0
        %4810 = vmatpush1.msra.mxu0 0.0
        %4811 = vmatprep.subr.mxu0 %v4793
        %4812 = vmatpush1.msra.mxu0 %v4790
        %4813 = vmatprep.subr.mxu0 %v4778
        %4814 = vmatpush1.msra.mxu0 %v4777
        %4815 = vmatprep.subr.mxu0 %v4776
        %4816 = vmatpush1.msra.mxu0 %v4775
        %4817 = vmatprep.subr.mxu0 %v4774
        %4818 = vmatpush1.msra.mxu0 %v4773
        %4819 = vmatprep.subr.mxu0 %v4772
        %4820 = vmatpush1.msra.mxu0 %v4771
        %4821 = vmatprep.subr.mxu0 %v4770
        %4822 = vmatpush1.msra.mxu0 %v4769
        %4823 = vmatprep.subr.mxu0 %v4768
        %4824 = vmatpush1.msra.mxu0 %v4767
        %4825 = vmatprep.subr.mxu0 %v4766
        %4826 = vmatpush1.msra.mxu0 %v4765
        %4827 = vmatprep.subr.mxu0 0.0
        %4828 = vmatpush2.msra.mxu0 0.0
        %4829 = vmatprep.subr.mxu0 0.0
        %4830 = vmatpush2.msra.mxu0 0.0
        %4831 = vmatprep.subr.mxu0 0.0
        %4832 = vmatpush2.msra.mxu0 0.0
        %4833 = vmatprep.subr.mxu0 0.0
        %4834 = vmatpush2.msra.mxu0 0.0
        %4835 = vmatprep.subr.mxu0 0.0
        %4836 = vmatpush2.msra.mxu0 0.0
        %4837 = vmatprep.subr.mxu0 0.0
        %4838 = vmatpush2.msra.mxu0 0.0
        %4839 = vmatprep.subr.mxu0 0.0
        %4840 = vmatpush2.msra.mxu0 0.0
        %4841 = vmatprep.subr.mxu0 0.0
        %4842 = vmatpush2.msra.mxu0 0.0
        %4843 = vmatprep.subr.mxu0 0.0
        %4844 = vmatpush2.msra.mxu0 0.0
        %4845 = vmatprep.subr.mxu0 0.0
        %4846 = vmatpush2.msra.mxu0 0.0
        %4847 = vmatprep.subr.mxu0 0.0
        %4848 = vmatpush2.msra.mxu0 0.0
        %4849 = vmatprep.subr.mxu0 0.0
        %4850 = vmatpush2.msra.mxu0 0.0
        %4851 = vmatprep.subr.mxu0 0.0
        %4852 = vmatpush2.msra.mxu0 0.0
        %4853 = vmatprep.subr.mxu0 0.0
        %4854 = vmatpush2.msra.mxu0 0.0
        %4855 = vmatprep.subr.mxu0 0.0
        %4856 = vmatpush2.msra.mxu0 0.0
        %4857 = vmatprep.subr.mxu0 0.0
        %4858 = vmatpush2.msra.mxu0 0.0
        %4859 = vmatprep.mubr.f32.mxu0 0.0
        %4860 = vmatmul.mubr.f32.gmra.mxu0 %v4785
        %v4861 = vpop.f32.mrf.mxu0
        %v4862 = vadd.f32 0.0, %v4861
        %v4863 = vpop.f32.mrf.mxu0
        %v4864 = vadd.f32 0.0, %v4863
        %4865 = vmatprep.mubr.f32.mxu0 0.0
        %4866 = vmatmul.mubr.f32.gmra.mxu0 %v4787
        %v4867 = vpop.f32.mrf.mxu0
        %v4868 = vadd.f32 0.0, %v4867
        %v4869 = vpop.f32.mrf.mxu0
        %v4870 = vadd.f32 0.0, %v4869
        %4871 = vdwg.mxu0
        %v4872 = vadd.f32 %v4760, %v4862
        %v4873 = vadd.f32 %v4761, %v4864
        %v4874 = vadd.f32 %v4762, %v4868
        %v4875 = vadd.f32 %v4763, %v4870
        %s4876 = scalar_lea.vmem %s5, 512
        %v4877 = vld [vmem:[%s4876] sm:$0xff]
        %v4878 = vld [vmem:[%s4876 + $0x8] sm:$0xff]
        %v4879 = vld [vmem:[%s4876 + $0x10] sm:$0xff]
        %v4880 = vld [vmem:[%s4876 + $0x18] sm:$0xff]
        %v4881 = vld [vmem:[%s4876 + $0x20] sm:$0xff]
        %v4882 = vld [vmem:[%s4876 + $0x28] sm:$0xff]
        %v4883 = vld [vmem:[%s4876 + $0x30] sm:$0xff]
        %v4884 = vld [vmem:[%s4876 + $0x38] sm:$0xff]
        %v4885 = vld [vmem:[%s4876 + $0x40] sm:$0xff]
        %v4886 = vld [vmem:[%s4876 + $0x48] sm:$0xff]
        %v4887 = vld [vmem:[%s4876 + $0x50] sm:$0xff]
        %v4888 = vld [vmem:[%s4876 + $0x58] sm:$0xff]
        %v4889 = vld [vmem:[%s4876 + $0x60] sm:$0xff]
        %v4890 = vld [vmem:[%s4876 + $0x68] sm:$0xff]
        %v4891 = vld [vmem:[%s4876 + $0x70] sm:$0xf]
        %v4892 = vld [vmem:[%s4876 + $0x78] sm:$0xf]
        %4893 = vrot.lane.b32.xlu0 %v4436, 104
        %v4894 = vpop.permute.xlu0 %4893
        %4895 = vrot.lane.b32.xlu0 %v4437, 104
        %v4896 = vpop.permute.xlu0 %4895
        %v4897 = vsel %vm4477, %v4894, 0
        %v4899 = vsel %vm4477, %v4896, 0
        %v4902 = vsel %vm562, %v4891, 0
        %v4905 = vsel %vm562, %v4892, 0
        %4907 = vmatprep.subr.mxu0 0.0
        %4908 = vmatpush1.msra.mxu0 0.0
        %4909 = vmatprep.subr.mxu0 0.0
        %4910 = vmatpush1.msra.mxu0 0.0
        %4911 = vmatprep.subr.mxu0 0.0
        %4912 = vmatpush1.msra.mxu0 0.0
        %4913 = vmatprep.subr.mxu0 0.0
        %4914 = vmatpush1.msra.mxu0 0.0
        %4915 = vmatprep.subr.mxu0 0.0
        %4916 = vmatpush1.msra.mxu0 0.0
        %4917 = vmatprep.subr.mxu0 0.0
        %4918 = vmatpush1.msra.mxu0 0.0
        %4919 = vmatprep.subr.mxu0 0.0
        %4920 = vmatpush1.msra.mxu0 0.0
        %4921 = vmatprep.subr.mxu0 0.0
        %4922 = vmatpush1.msra.mxu0 0.0
        %4923 = vmatprep.subr.mxu0 %v4905
        %4924 = vmatpush1.msra.mxu0 %v4902
        %4925 = vmatprep.subr.mxu0 %v4890
        %4926 = vmatpush1.msra.mxu0 %v4889
        %4927 = vmatprep.subr.mxu0 %v4888
        %4928 = vmatpush1.msra.mxu0 %v4887
        %4929 = vmatprep.subr.mxu0 %v4886
        %4930 = vmatpush1.msra.mxu0 %v4885
        %4931 = vmatprep.subr.mxu0 %v4884
        %4932 = vmatpush1.msra.mxu0 %v4883
        %4933 = vmatprep.subr.mxu0 %v4882
        %4934 = vmatpush1.msra.mxu0 %v4881
        %4935 = vmatprep.subr.mxu0 %v4880
        %4936 = vmatpush1.msra.mxu0 %v4879
        %4937 = vmatprep.subr.mxu0 %v4878
        %4938 = vmatpush1.msra.mxu0 %v4877
        %4939 = vmatprep.subr.mxu0 0.0
        %4940 = vmatpush2.msra.mxu0 0.0
        %4941 = vmatprep.subr.mxu0 0.0
        %4942 = vmatpush2.msra.mxu0 0.0
        %4943 = vmatprep.subr.mxu0 0.0
        %4944 = vmatpush2.msra.mxu0 0.0
        %4945 = vmatprep.subr.mxu0 0.0
        %4946 = vmatpush2.msra.mxu0 0.0
        %4947 = vmatprep.subr.mxu0 0.0
        %4948 = vmatpush2.msra.mxu0 0.0
        %4949 = vmatprep.subr.mxu0 0.0
        %4950 = vmatpush2.msra.mxu0 0.0
        %4951 = vmatprep.subr.mxu0 0.0
        %4952 = vmatpush2.msra.mxu0 0.0
        %4953 = vmatprep.subr.mxu0 0.0
        %4954 = vmatpush2.msra.mxu0 0.0
        %4955 = vmatprep.subr.mxu0 0.0
        %4956 = vmatpush2.msra.mxu0 0.0
        %4957 = vmatprep.subr.mxu0 0.0
        %4958 = vmatpush2.msra.mxu0 0.0
        %4959 = vmatprep.subr.mxu0 0.0
        %4960 = vmatpush2.msra.mxu0 0.0
        %4961 = vmatprep.subr.mxu0 0.0
        %4962 = vmatpush2.msra.mxu0 0.0
        %4963 = vmatprep.subr.mxu0 0.0
        %4964 = vmatpush2.msra.mxu0 0.0
        %4965 = vmatprep.subr.mxu0 0.0
        %4966 = vmatpush2.msra.mxu0 0.0
        %4967 = vmatprep.subr.mxu0 0.0
        %4968 = vmatpush2.msra.mxu0 0.0
        %4969 = vmatprep.subr.mxu0 0.0
        %4970 = vmatpush2.msra.mxu0 0.0
        %4971 = vmatprep.mubr.f32.mxu0 0.0
        %4972 = vmatmul.mubr.f32.gmra.mxu0 %v4897
        %v4973 = vpop.f32.mrf.mxu0
        %v4974 = vadd.f32 0.0, %v4973
        %v4975 = vpop.f32.mrf.mxu0
        %v4976 = vadd.f32 0.0, %v4975
        %4977 = vmatprep.mubr.f32.mxu0 0.0
        %4978 = vmatmul.mubr.f32.gmra.mxu0 %v4899
        %v4979 = vpop.f32.mrf.mxu0
        %v4980 = vadd.f32 0.0, %v4979
        %v4981 = vpop.f32.mrf.mxu0
        %v4982 = vadd.f32 0.0, %v4981
        %4983 = vdwg.mxu0
        %v4984 = vadd.f32 %v4872, %v4974
        %v4985 = vadd.f32 %v4873, %v4976
        %v4986 = vadd.f32 %v4874, %v4980
        %v4987 = vadd.f32 %v4875, %v4982
        %s4988 = scalar_lea.vmem %s5, 640
        %v4989 = vld [vmem:[%s4988] sm:$0xff]
        %v4990 = vld [vmem:[%s4988 + $0x8] sm:$0xff]
        %v4991 = vld [vmem:[%s4988 + $0x10] sm:$0xff]
        %v4992 = vld [vmem:[%s4988 + $0x18] sm:$0xff]
        %v4993 = vld [vmem:[%s4988 + $0x20] sm:$0xff]
        %v4994 = vld [vmem:[%s4988 + $0x28] sm:$0xff]
        %v4995 = vld [vmem:[%s4988 + $0x30] sm:$0xff]
        %v4996 = vld [vmem:[%s4988 + $0x38] sm:$0xff]
        %v4997 = vld [vmem:[%s4988 + $0x40] sm:$0xff]
        %v4998 = vld [vmem:[%s4988 + $0x48] sm:$0xff]
        %v4999 = vld [vmem:[%s4988 + $0x50] sm:$0xff]
        %v5000 = vld [vmem:[%s4988 + $0x58] sm:$0xff]
        %v5001 = vld [vmem:[%s4988 + $0x60] sm:$0xff]
        %v5002 = vld [vmem:[%s4988 + $0x68] sm:$0xff]
        %v5003 = vld [vmem:[%s4988 + $0x70] sm:$0xf]
        %v5004 = vld [vmem:[%s4988 + $0x78] sm:$0xf]
        %v5005 = vrot.slane %v4436, 1
        %v5006 = vrot.slane %v4437, 1
        %v5007 = vsel %vm1210, %v5005, %v5006
        %v5008 = vsel %vm4477, %v5007, 0
        %v5010 = vsel %vm4477, %v5006, 0
        %v5013 = vsel %vm562, %v5003, 0
        %v5016 = vsel %vm562, %v5004, 0
        %5018 = vmatprep.subr.mxu0 0.0
        %5019 = vmatpush1.msra.mxu0 0.0
        %5020 = vmatprep.subr.mxu0 0.0
        %5021 = vmatpush1.msra.mxu0 0.0
        %5022 = vmatprep.subr.mxu0 0.0
        %5023 = vmatpush1.msra.mxu0 0.0
        %5024 = vmatprep.subr.mxu0 0.0
        %5025 = vmatpush1.msra.mxu0 0.0
        %5026 = vmatprep.subr.mxu0 0.0
        %5027 = vmatpush1.msra.mxu0 0.0
        %5028 = vmatprep.subr.mxu0 0.0
        %5029 = vmatpush1.msra.mxu0 0.0
        %5030 = vmatprep.subr.mxu0 0.0
        %5031 = vmatpush1.msra.mxu0 0.0
        %5032 = vmatprep.subr.mxu0 0.0
        %5033 = vmatpush1.msra.mxu0 0.0
        %5034 = vmatprep.subr.mxu0 %v5016
        %5035 = vmatpush1.msra.mxu0 %v5013
        %5036 = vmatprep.subr.mxu0 %v5002
        %5037 = vmatpush1.msra.mxu0 %v5001
        %5038 = vmatprep.subr.mxu0 %v5000
        %5039 = vmatpush1.msra.mxu0 %v4999
        %5040 = vmatprep.subr.mxu0 %v4998
        %5041 = vmatpush1.msra.mxu0 %v4997
        %5042 = vmatprep.subr.mxu0 %v4996
        %5043 = vmatpush1.msra.mxu0 %v4995
        %5044 = vmatprep.subr.mxu0 %v4994
        %5045 = vmatpush1.msra.mxu0 %v4993
        %5046 = vmatprep.subr.mxu0 %v4992
        %5047 = vmatpush1.msra.mxu0 %v4991
        %5048 = vmatprep.subr.mxu0 %v4990
        %5049 = vmatpush1.msra.mxu0 %v4989
        %5050 = vmatprep.subr.mxu0 0.0
        %5051 = vmatpush2.msra.mxu0 0.0
        %5052 = vmatprep.subr.mxu0 0.0
        %5053 = vmatpush2.msra.mxu0 0.0
        %5054 = vmatprep.subr.mxu0 0.0
        %5055 = vmatpush2.msra.mxu0 0.0
        %5056 = vmatprep.subr.mxu0 0.0
        %5057 = vmatpush2.msra.mxu0 0.0
        %5058 = vmatprep.subr.mxu0 0.0
        %5059 = vmatpush2.msra.mxu0 0.0
        %5060 = vmatprep.subr.mxu0 0.0
        %5061 = vmatpush2.msra.mxu0 0.0
        %5062 = vmatprep.subr.mxu0 0.0
        %5063 = vmatpush2.msra.mxu0 0.0
        %5064 = vmatprep.subr.mxu0 0.0
        %5065 = vmatpush2.msra.mxu0 0.0
        %5066 = vmatprep.subr.mxu0 0.0
        %5067 = vmatpush2.msra.mxu0 0.0
        %5068 = vmatprep.subr.mxu0 0.0
        %5069 = vmatpush2.msra.mxu0 0.0
        %5070 = vmatprep.subr.mxu0 0.0
        %5071 = vmatpush2.msra.mxu0 0.0
        %5072 = vmatprep.subr.mxu0 0.0
        %5073 = vmatpush2.msra.mxu0 0.0
        %5074 = vmatprep.subr.mxu0 0.0
        %5075 = vmatpush2.msra.mxu0 0.0
        %5076 = vmatprep.subr.mxu0 0.0
        %5077 = vmatpush2.msra.mxu0 0.0
        %5078 = vmatprep.subr.mxu0 0.0
        %5079 = vmatpush2.msra.mxu0 0.0
        %5080 = vmatprep.subr.mxu0 0.0
        %5081 = vmatpush2.msra.mxu0 0.0
        %5082 = vmatprep.mubr.f32.mxu0 0.0
        %5083 = vmatmul.mubr.f32.gmra.mxu0 %v5008
        %v5084 = vpop.f32.mrf.mxu0
        %v5085 = vadd.f32 0.0, %v5084
        %v5086 = vpop.f32.mrf.mxu0
        %v5087 = vadd.f32 0.0, %v5086
        %5088 = vmatprep.mubr.f32.mxu0 0.0
        %5089 = vmatmul.mubr.f32.gmra.mxu0 %v5010
        %v5090 = vpop.f32.mrf.mxu0
        %v5091 = vadd.f32 0.0, %v5090
        %v5092 = vpop.f32.mrf.mxu0
        %v5093 = vadd.f32 0.0, %v5092
        %5094 = vdwg.mxu0
        %v5095 = vadd.f32 %v4984, %v5085
        %v5096 = vadd.f32 %v4985, %v5087
        %v5097 = vadd.f32 %v4986, %v5091
        %v5098 = vadd.f32 %v4987, %v5093
        %s5099 = scalar_lea.vmem %s5, 768
        %v5100 = vld [vmem:[%s5099] sm:$0xff]
        %v5101 = vld [vmem:[%s5099 + $0x8] sm:$0xff]
        %v5102 = vld [vmem:[%s5099 + $0x10] sm:$0xff]
        %v5103 = vld [vmem:[%s5099 + $0x18] sm:$0xff]
        %v5104 = vld [vmem:[%s5099 + $0x20] sm:$0xff]
        %v5105 = vld [vmem:[%s5099 + $0x28] sm:$0xff]
        %v5106 = vld [vmem:[%s5099 + $0x30] sm:$0xff]
        %v5107 = vld [vmem:[%s5099 + $0x38] sm:$0xff]
        %v5108 = vld [vmem:[%s5099 + $0x40] sm:$0xff]
        %v5109 = vld [vmem:[%s5099 + $0x48] sm:$0xff]
        %v5110 = vld [vmem:[%s5099 + $0x50] sm:$0xff]
        %v5111 = vld [vmem:[%s5099 + $0x58] sm:$0xff]
        %v5112 = vld [vmem:[%s5099 + $0x60] sm:$0xff]
        %v5113 = vld [vmem:[%s5099 + $0x68] sm:$0xff]
        %v5114 = vld [vmem:[%s5099 + $0x70] sm:$0xf]
        %v5115 = vld [vmem:[%s5099 + $0x78] sm:$0xf]
        %5116 = vrot.lane.b32.xlu0 %v5007, 122
        %v5117 = vpop.permute.xlu0 %5116
        %5118 = vrot.lane.b32.xlu0 %v5006, 122
        %v5119 = vpop.permute.xlu0 %5118
        %v5120 = vsel %vm4477, %v5117, 0
        %v5122 = vsel %vm4477, %v5119, 0
        %v5125 = vsel %vm562, %v5114, 0
        %v5128 = vsel %vm562, %v5115, 0
        %5130 = vmatprep.subr.mxu0 0.0
        %5131 = vmatpush1.msra.mxu0 0.0
        %5132 = vmatprep.subr.mxu0 0.0
        %5133 = vmatpush1.msra.mxu0 0.0
        %5134 = vmatprep.subr.mxu0 0.0
        %5135 = vmatpush1.msra.mxu0 0.0
        %5136 = vmatprep.subr.mxu0 0.0
        %5137 = vmatpush1.msra.mxu0 0.0
        %5138 = vmatprep.subr.mxu0 0.0
        %5139 = vmatpush1.msra.mxu0 0.0
        %5140 = vmatprep.subr.mxu0 0.0
        %5141 = vmatpush1.msra.mxu0 0.0
        %5142 = vmatprep.subr.mxu0 0.0
        %5143 = vmatpush1.msra.mxu0 0.0
        %5144 = vmatprep.subr.mxu0 0.0
        %5145 = vmatpush1.msra.mxu0 0.0
        %5146 = vmatprep.subr.mxu0 %v5128
        %5147 = vmatpush1.msra.mxu0 %v5125
        %5148 = vmatprep.subr.mxu0 %v5113
        %5149 = vmatpush1.msra.mxu0 %v5112
        %5150 = vmatprep.subr.mxu0 %v5111
        %5151 = vmatpush1.msra.mxu0 %v5110
        %5152 = vmatprep.subr.mxu0 %v5109
        %5153 = vmatpush1.msra.mxu0 %v5108
        %5154 = vmatprep.subr.mxu0 %v5107
        %5155 = vmatpush1.msra.mxu0 %v5106
        %5156 = vmatprep.subr.mxu0 %v5105
        %5157 = vmatpush1.msra.mxu0 %v5104
        %5158 = vmatprep.subr.mxu0 %v5103
        %5159 = vmatpush1.msra.mxu0 %v5102
        %5160 = vmatprep.subr.mxu0 %v5101
        %5161 = vmatpush1.msra.mxu0 %v5100
        %5162 = vmatprep.subr.mxu0 0.0
        %5163 = vmatpush2.msra.mxu0 0.0
        %5164 = vmatprep.subr.mxu0 0.0
        %5165 = vmatpush2.msra.mxu0 0.0
        %5166 = vmatprep.subr.mxu0 0.0
        %5167 = vmatpush2.msra.mxu0 0.0
        %5168 = vmatprep.subr.mxu0 0.0
        %5169 = vmatpush2.msra.mxu0 0.0
        %5170 = vmatprep.subr.mxu0 0.0
        %5171 = vmatpush2.msra.mxu0 0.0
        %5172 = vmatprep.subr.mxu0 0.0
        %5173 = vmatpush2.msra.mxu0 0.0
        %5174 = vmatprep.subr.mxu0 0.0
        %5175 = vmatpush2.msra.mxu0 0.0
        %5176 = vmatprep.subr.mxu0 0.0
        %5177 = vmatpush2.msra.mxu0 0.0
        %5178 = vmatprep.subr.mxu0 0.0
        %5179 = vmatpush2.msra.mxu0 0.0
        %5180 = vmatprep.subr.mxu0 0.0
        %5181 = vmatpush2.msra.mxu0 0.0
        %5182 = vmatprep.subr.mxu0 0.0
        %5183 = vmatpush2.msra.mxu0 0.0
        %5184 = vmatprep.subr.mxu0 0.0
        %5185 = vmatpush2.msra.mxu0 0.0
        %5186 = vmatprep.subr.mxu0 0.0
        %5187 = vmatpush2.msra.mxu0 0.0
        %5188 = vmatprep.subr.mxu0 0.0
        %5189 = vmatpush2.msra.mxu0 0.0
        %5190 = vmatprep.subr.mxu0 0.0
        %5191 = vmatpush2.msra.mxu0 0.0
        %5192 = vmatprep.subr.mxu0 0.0
        %5193 = vmatpush2.msra.mxu0 0.0
        %5194 = vmatprep.mubr.f32.mxu0 0.0
        %5195 = vmatmul.mubr.f32.gmra.mxu0 %v5120
        %v5196 = vpop.f32.mrf.mxu0
        %v5197 = vadd.f32 0.0, %v5196
        %v5198 = vpop.f32.mrf.mxu0
        %v5199 = vadd.f32 0.0, %v5198
        %5200 = vmatprep.mubr.f32.mxu0 0.0
        %5201 = vmatmul.mubr.f32.gmra.mxu0 %v5122
        %v5202 = vpop.f32.mrf.mxu0
        %v5203 = vadd.f32 0.0, %v5202
        %v5204 = vpop.f32.mrf.mxu0
        %v5205 = vadd.f32 0.0, %v5204
        %5206 = vdwg.mxu0
        %v5207 = vadd.f32 %v5095, %v5197
        %v5208 = vadd.f32 %v5096, %v5199
        %v5209 = vadd.f32 %v5097, %v5203
        %v5210 = vadd.f32 %v5098, %v5205
        %s5211 = scalar_lea.vmem %s5, 896
        %v5212 = vld [vmem:[%s5211] sm:$0xff]
        %v5213 = vld [vmem:[%s5211 + $0x8] sm:$0xff]
        %v5214 = vld [vmem:[%s5211 + $0x10] sm:$0xff]
        %v5215 = vld [vmem:[%s5211 + $0x18] sm:$0xff]
        %v5216 = vld [vmem:[%s5211 + $0x20] sm:$0xff]
        %v5217 = vld [vmem:[%s5211 + $0x28] sm:$0xff]
        %v5218 = vld [vmem:[%s5211 + $0x30] sm:$0xff]
        %v5219 = vld [vmem:[%s5211 + $0x38] sm:$0xff]
        %v5220 = vld [vmem:[%s5211 + $0x40] sm:$0xff]
        %v5221 = vld [vmem:[%s5211 + $0x48] sm:$0xff]
        %v5222 = vld [vmem:[%s5211 + $0x50] sm:$0xff]
        %v5223 = vld [vmem:[%s5211 + $0x58] sm:$0xff]
        %v5224 = vld [vmem:[%s5211 + $0x60] sm:$0xff]
        %v5225 = vld [vmem:[%s5211 + $0x68] sm:$0xff]
        %v5226 = vld [vmem:[%s5211 + $0x70] sm:$0xf]
        %v5227 = vld [vmem:[%s5211 + $0x78] sm:$0xf]
        %5228 = vrot.lane.b32.xlu0 %v5007, 116
        %v5229 = vpop.permute.xlu0 %5228
        %5230 = vrot.lane.b32.xlu0 %v5006, 116
        %v5231 = vpop.permute.xlu0 %5230
        %v5232 = vsel %vm4477, %v5229, 0
        %v5234 = vsel %vm4477, %v5231, 0
        %v5237 = vsel %vm562, %v5226, 0
        %v5240 = vsel %vm562, %v5227, 0
        %5242 = vmatprep.subr.mxu0 0.0
        %5243 = vmatpush1.msra.mxu0 0.0
        %5244 = vmatprep.subr.mxu0 0.0
        %5245 = vmatpush1.msra.mxu0 0.0
        %5246 = vmatprep.subr.mxu0 0.0
        %5247 = vmatpush1.msra.mxu0 0.0
        %5248 = vmatprep.subr.mxu0 0.0
        %5249 = vmatpush1.msra.mxu0 0.0
        %5250 = vmatprep.subr.mxu0 0.0
        %5251 = vmatpush1.msra.mxu0 0.0
        %5252 = vmatprep.subr.mxu0 0.0
        %5253 = vmatpush1.msra.mxu0 0.0
        %5254 = vmatprep.subr.mxu0 0.0
        %5255 = vmatpush1.msra.mxu0 0.0
        %5256 = vmatprep.subr.mxu0 0.0
        %5257 = vmatpush1.msra.mxu0 0.0
        %5258 = vmatprep.subr.mxu0 %v5240
        %5259 = vmatpush1.msra.mxu0 %v5237
        %5260 = vmatprep.subr.mxu0 %v5225
        %5261 = vmatpush1.msra.mxu0 %v5224
        %5262 = vmatprep.subr.mxu0 %v5223
        %5263 = vmatpush1.msra.mxu0 %v5222
        %5264 = vmatprep.subr.mxu0 %v5221
        %5265 = vmatpush1.msra.mxu0 %v5220
        %5266 = vmatprep.subr.mxu0 %v5219
        %5267 = vmatpush1.msra.mxu0 %v5218
        %5268 = vmatprep.subr.mxu0 %v5217
        %5269 = vmatpush1.msra.mxu0 %v5216
        %5270 = vmatprep.subr.mxu0 %v5215
        %5271 = vmatpush1.msra.mxu0 %v5214
        %5272 = vmatprep.subr.mxu0 %v5213
        %5273 = vmatpush1.msra.mxu0 %v5212
        %5274 = vmatprep.subr.mxu0 0.0
        %5275 = vmatpush2.msra.mxu0 0.0
        %5276 = vmatprep.subr.mxu0 0.0
        %5277 = vmatpush2.msra.mxu0 0.0
        %5278 = vmatprep.subr.mxu0 0.0
        %5279 = vmatpush2.msra.mxu0 0.0
        %5280 = vmatprep.subr.mxu0 0.0
        %5281 = vmatpush2.msra.mxu0 0.0
        %5282 = vmatprep.subr.mxu0 0.0
        %5283 = vmatpush2.msra.mxu0 0.0
        %5284 = vmatprep.subr.mxu0 0.0
        %5285 = vmatpush2.msra.mxu0 0.0
        %5286 = vmatprep.subr.mxu0 0.0
        %5287 = vmatpush2.msra.mxu0 0.0
        %5288 = vmatprep.subr.mxu0 0.0
        %5289 = vmatpush2.msra.mxu0 0.0
        %5290 = vmatprep.subr.mxu0 0.0
        %5291 = vmatpush2.msra.mxu0 0.0
        %5292 = vmatprep.subr.mxu0 0.0
        %5293 = vmatpush2.msra.mxu0 0.0
        %5294 = vmatprep.subr.mxu0 0.0
        %5295 = vmatpush2.msra.mxu0 0.0
        %5296 = vmatprep.subr.mxu0 0.0
        %5297 = vmatpush2.msra.mxu0 0.0
        %5298 = vmatprep.subr.mxu0 0.0
        %5299 = vmatpush2.msra.mxu0 0.0
        %5300 = vmatprep.subr.mxu0 0.0
        %5301 = vmatpush2.msra.mxu0 0.0
        %5302 = vmatprep.subr.mxu0 0.0
        %5303 = vmatpush2.msra.mxu0 0.0
        %5304 = vmatprep.subr.mxu0 0.0
        %5305 = vmatpush2.msra.mxu0 0.0
        %5306 = vmatprep.mubr.f32.mxu0 0.0
        %5307 = vmatmul.mubr.f32.gmra.mxu0 %v5232
        %v5308 = vpop.f32.mrf.mxu0
        %v5309 = vadd.f32 0.0, %v5308
        %v5310 = vpop.f32.mrf.mxu0
        %v5311 = vadd.f32 0.0, %v5310
        %5312 = vmatprep.mubr.f32.mxu0 0.0
        %5313 = vmatmul.mubr.f32.gmra.mxu0 %v5234
        %v5314 = vpop.f32.mrf.mxu0
        %v5315 = vadd.f32 0.0, %v5314
        %v5316 = vpop.f32.mrf.mxu0
        %v5317 = vadd.f32 0.0, %v5316
        %5318 = vdwg.mxu0
        %v5319 = vadd.f32 %v5207, %v5309
        %v5320 = vadd.f32 %v5208, %v5311
        %v5321 = vadd.f32 %v5209, %v5315
        %v5322 = vadd.f32 %v5210, %v5317
        %s5323 = scalar_lea.vmem %s5, 1024
        %v5324 = vld [vmem:[%s5323] sm:$0xff]
        %v5325 = vld [vmem:[%s5323 + $0x8] sm:$0xff]
        %v5326 = vld [vmem:[%s5323 + $0x10] sm:$0xff]
        %v5327 = vld [vmem:[%s5323 + $0x18] sm:$0xff]
        %v5328 = vld [vmem:[%s5323 + $0x20] sm:$0xff]
        %v5329 = vld [vmem:[%s5323 + $0x28] sm:$0xff]
        %v5330 = vld [vmem:[%s5323 + $0x30] sm:$0xff]
        %v5331 = vld [vmem:[%s5323 + $0x38] sm:$0xff]
        %v5332 = vld [vmem:[%s5323 + $0x40] sm:$0xff]
        %v5333 = vld [vmem:[%s5323 + $0x48] sm:$0xff]
        %v5334 = vld [vmem:[%s5323 + $0x50] sm:$0xff]
        %v5335 = vld [vmem:[%s5323 + $0x58] sm:$0xff]
        %v5336 = vld [vmem:[%s5323 + $0x60] sm:$0xff]
        %v5337 = vld [vmem:[%s5323 + $0x68] sm:$0xff]
        %v5338 = vld [vmem:[%s5323 + $0x70] sm:$0xf]
        %v5339 = vld [vmem:[%s5323 + $0x78] sm:$0xf]
        %5340 = vrot.lane.b32.xlu0 %v5007, 110
        %v5341 = vpop.permute.xlu0 %5340
        %5342 = vrot.lane.b32.xlu0 %v5006, 110
        %v5343 = vpop.permute.xlu0 %5342
        %v5344 = vsel %vm4477, %v5341, 0
        %v5346 = vsel %vm4477, %v5343, 0
        %v5349 = vsel %vm562, %v5338, 0
        %v5352 = vsel %vm562, %v5339, 0
        %5354 = vmatprep.subr.mxu0 0.0
        %5355 = vmatpush1.msra.mxu0 0.0
        %5356 = vmatprep.subr.mxu0 0.0
        %5357 = vmatpush1.msra.mxu0 0.0
        %5358 = vmatprep.subr.mxu0 0.0
        %5359 = vmatpush1.msra.mxu0 0.0
        %5360 = vmatprep.subr.mxu0 0.0
        %5361 = vmatpush1.msra.mxu0 0.0
        %5362 = vmatprep.subr.mxu0 0.0
        %5363 = vmatpush1.msra.mxu0 0.0
        %5364 = vmatprep.subr.mxu0 0.0
        %5365 = vmatpush1.msra.mxu0 0.0
        %5366 = vmatprep.subr.mxu0 0.0
        %5367 = vmatpush1.msra.mxu0 0.0
        %5368 = vmatprep.subr.mxu0 0.0
        %5369 = vmatpush1.msra.mxu0 0.0
        %5370 = vmatprep.subr.mxu0 %v5352
        %5371 = vmatpush1.msra.mxu0 %v5349
        %5372 = vmatprep.subr.mxu0 %v5337
        %5373 = vmatpush1.msra.mxu0 %v5336
        %5374 = vmatprep.subr.mxu0 %v5335
        %5375 = vmatpush1.msra.mxu0 %v5334
        %5376 = vmatprep.subr.mxu0 %v5333
        %5377 = vmatpush1.msra.mxu0 %v5332
        %5378 = vmatprep.subr.mxu0 %v5331
        %5379 = vmatpush1.msra.mxu0 %v5330
        %5380 = vmatprep.subr.mxu0 %v5329
        %5381 = vmatpush1.msra.mxu0 %v5328
        %5382 = vmatprep.subr.mxu0 %v5327
        %5383 = vmatpush1.msra.mxu0 %v5326
        %5384 = vmatprep.subr.mxu0 %v5325
        %5385 = vmatpush1.msra.mxu0 %v5324
        %5386 = vmatprep.subr.mxu0 0.0
        %5387 = vmatpush2.msra.mxu0 0.0
        %5388 = vmatprep.subr.mxu0 0.0
        %5389 = vmatpush2.msra.mxu0 0.0
        %5390 = vmatprep.subr.mxu0 0.0
        %5391 = vmatpush2.msra.mxu0 0.0
        %5392 = vmatprep.subr.mxu0 0.0
        %5393 = vmatpush2.msra.mxu0 0.0
        %5394 = vmatprep.subr.mxu0 0.0
        %5395 = vmatpush2.msra.mxu0 0.0
        %5396 = vmatprep.subr.mxu0 0.0
        %5397 = vmatpush2.msra.mxu0 0.0
        %5398 = vmatprep.subr.mxu0 0.0
        %5399 = vmatpush2.msra.mxu0 0.0
        %5400 = vmatprep.subr.mxu0 0.0
        %5401 = vmatpush2.msra.mxu0 0.0
        %5402 = vmatprep.subr.mxu0 0.0
        %5403 = vmatpush2.msra.mxu0 0.0
        %5404 = vmatprep.subr.mxu0 0.0
        %5405 = vmatpush2.msra.mxu0 0.0
        %5406 = vmatprep.subr.mxu0 0.0
        %5407 = vmatpush2.msra.mxu0 0.0
        %5408 = vmatprep.subr.mxu0 0.0
        %5409 = vmatpush2.msra.mxu0 0.0
        %5410 = vmatprep.subr.mxu0 0.0
        %5411 = vmatpush2.msra.mxu0 0.0
        %5412 = vmatprep.subr.mxu0 0.0
        %5413 = vmatpush2.msra.mxu0 0.0
        %5414 = vmatprep.subr.mxu0 0.0
        %5415 = vmatpush2.msra.mxu0 0.0
        %5416 = vmatprep.subr.mxu0 0.0
        %5417 = vmatpush2.msra.mxu0 0.0
        %5418 = vmatprep.mubr.f32.mxu0 0.0
        %5419 = vmatmul.mubr.f32.gmra.mxu0 %v5344
        %v5420 = vpop.f32.mrf.mxu0
        %v5421 = vadd.f32 0.0, %v5420
        %v5422 = vpop.f32.mrf.mxu0
        %v5423 = vadd.f32 0.0, %v5422
        %5424 = vmatprep.mubr.f32.mxu0 0.0
        %5425 = vmatmul.mubr.f32.gmra.mxu0 %v5346
        %v5426 = vpop.f32.mrf.mxu0
        %v5427 = vadd.f32 0.0, %v5426
        %v5428 = vpop.f32.mrf.mxu0
        %v5429 = vadd.f32 0.0, %v5428
        %5430 = vdwg.mxu0
        %v5431 = vadd.f32 %v5319, %v5421
        %v5432 = vadd.f32 %v5320, %v5423
        %v5433 = vadd.f32 %v5321, %v5427
        %v5434 = vadd.f32 %v5322, %v5429
        %s5435 = scalar_lea.vmem %s5, 1152
        %v5436 = vld [vmem:[%s5435] sm:$0xff]
        %v5437 = vld [vmem:[%s5435 + $0x8] sm:$0xff]
        %v5438 = vld [vmem:[%s5435 + $0x10] sm:$0xff]
        %v5439 = vld [vmem:[%s5435 + $0x18] sm:$0xff]
        %v5440 = vld [vmem:[%s5435 + $0x20] sm:$0xff]
        %v5441 = vld [vmem:[%s5435 + $0x28] sm:$0xff]
        %v5442 = vld [vmem:[%s5435 + $0x30] sm:$0xff]
        %v5443 = vld [vmem:[%s5435 + $0x38] sm:$0xff]
        %v5444 = vld [vmem:[%s5435 + $0x40] sm:$0xff]
        %v5445 = vld [vmem:[%s5435 + $0x48] sm:$0xff]
        %v5446 = vld [vmem:[%s5435 + $0x50] sm:$0xff]
        %v5447 = vld [vmem:[%s5435 + $0x58] sm:$0xff]
        %v5448 = vld [vmem:[%s5435 + $0x60] sm:$0xff]
        %v5449 = vld [vmem:[%s5435 + $0x68] sm:$0xff]
        %v5450 = vld [vmem:[%s5435 + $0x70] sm:$0xf]
        %v5451 = vld [vmem:[%s5435 + $0x78] sm:$0xf]
        %5452 = vrot.lane.b32.xlu0 %v5007, 104
        %v5453 = vpop.permute.xlu0 %5452
        %5454 = vrot.lane.b32.xlu0 %v5006, 104
        %v5455 = vpop.permute.xlu0 %5454
        %v5456 = vsel %vm4477, %v5453, 0
        %v5458 = vsel %vm4477, %v5455, 0
        %v5461 = vsel %vm562, %v5450, 0
        %v5464 = vsel %vm562, %v5451, 0
        %5466 = vmatprep.subr.mxu0 0.0
        %5467 = vmatpush1.msra.mxu0 0.0
        %5468 = vmatprep.subr.mxu0 0.0
        %5469 = vmatpush1.msra.mxu0 0.0
        %5470 = vmatprep.subr.mxu0 0.0
        %5471 = vmatpush1.msra.mxu0 0.0
        %5472 = vmatprep.subr.mxu0 0.0
        %5473 = vmatpush1.msra.mxu0 0.0
        %5474 = vmatprep.subr.mxu0 0.0
        %5475 = vmatpush1.msra.mxu0 0.0
        %5476 = vmatprep.subr.mxu0 0.0
        %5477 = vmatpush1.msra.mxu0 0.0
        %5478 = vmatprep.subr.mxu0 0.0
        %5479 = vmatpush1.msra.mxu0 0.0
        %5480 = vmatprep.subr.mxu0 0.0
        %5481 = vmatpush1.msra.mxu0 0.0
        %5482 = vmatprep.subr.mxu0 %v5464
        %5483 = vmatpush1.msra.mxu0 %v5461
        %5484 = vmatprep.subr.mxu0 %v5449
        %5485 = vmatpush1.msra.mxu0 %v5448
        %5486 = vmatprep.subr.mxu0 %v5447
        %5487 = vmatpush1.msra.mxu0 %v5446
        %5488 = vmatprep.subr.mxu0 %v5445
        %5489 = vmatpush1.msra.mxu0 %v5444
        %5490 = vmatprep.subr.mxu0 %v5443
        %5491 = vmatpush1.msra.mxu0 %v5442
        %5492 = vmatprep.subr.mxu0 %v5441
        %5493 = vmatpush1.msra.mxu0 %v5440
        %5494 = vmatprep.subr.mxu0 %v5439
        %5495 = vmatpush1.msra.mxu0 %v5438
        %5496 = vmatprep.subr.mxu0 %v5437
        %5497 = vmatpush1.msra.mxu0 %v5436
        %5498 = vmatprep.subr.mxu0 0.0
        %5499 = vmatpush2.msra.mxu0 0.0
        %5500 = vmatprep.subr.mxu0 0.0
        %5501 = vmatpush2.msra.mxu0 0.0
        %5502 = vmatprep.subr.mxu0 0.0
        %5503 = vmatpush2.msra.mxu0 0.0
        %5504 = vmatprep.subr.mxu0 0.0
        %5505 = vmatpush2.msra.mxu0 0.0
        %5506 = vmatprep.subr.mxu0 0.0
        %5507 = vmatpush2.msra.mxu0 0.0
        %5508 = vmatprep.subr.mxu0 0.0
        %5509 = vmatpush2.msra.mxu0 0.0
        %5510 = vmatprep.subr.mxu0 0.0
        %5511 = vmatpush2.msra.mxu0 0.0
        %5512 = vmatprep.subr.mxu0 0.0
        %5513 = vmatpush2.msra.mxu0 0.0
        %5514 = vmatprep.subr.mxu0 0.0
        %5515 = vmatpush2.msra.mxu0 0.0
        %5516 = vmatprep.subr.mxu0 0.0
        %5517 = vmatpush2.msra.mxu0 0.0
        %5518 = vmatprep.subr.mxu0 0.0
        %5519 = vmatpush2.msra.mxu0 0.0
        %5520 = vmatprep.subr.mxu0 0.0
        %5521 = vmatpush2.msra.mxu0 0.0
        %5522 = vmatprep.subr.mxu0 0.0
        %5523 = vmatpush2.msra.mxu0 0.0
        %5524 = vmatprep.subr.mxu0 0.0
        %5525 = vmatpush2.msra.mxu0 0.0
        %5526 = vmatprep.subr.mxu0 0.0
        %5527 = vmatpush2.msra.mxu0 0.0
        %5528 = vmatprep.subr.mxu0 0.0
        %5529 = vmatpush2.msra.mxu0 0.0
        %5530 = vmatprep.mubr.f32.mxu0 0.0
        %5531 = vmatmul.mubr.f32.gmra.mxu0 %v5456
        %v5532 = vpop.f32.mrf.mxu0
        %v5533 = vadd.f32 0.0, %v5532
        %v5534 = vpop.f32.mrf.mxu0
        %v5535 = vadd.f32 0.0, %v5534
        %5536 = vmatprep.mubr.f32.mxu0 0.0
        %5537 = vmatmul.mubr.f32.gmra.mxu0 %v5458
        %v5538 = vpop.f32.mrf.mxu0
        %v5539 = vadd.f32 0.0, %v5538
        %v5540 = vpop.f32.mrf.mxu0
        %v5541 = vadd.f32 0.0, %v5540
        %5542 = vdwg.mxu0
        %v5543 = vadd.f32 %v5431, %v5533
        %v5544 = vadd.f32 %v5432, %v5535
        %v5545 = vadd.f32 %v5433, %v5539
        %v5546 = vadd.f32 %v5434, %v5541
        %s5547 = scalar_lea.vmem %s5, 1280
        %v5548 = vld [vmem:[%s5547] sm:$0xff]
        %v5549 = vld [vmem:[%s5547 + $0x8] sm:$0xff]
        %v5550 = vld [vmem:[%s5547 + $0x10] sm:$0xff]
        %v5551 = vld [vmem:[%s5547 + $0x18] sm:$0xff]
        %v5552 = vld [vmem:[%s5547 + $0x20] sm:$0xff]
        %v5553 = vld [vmem:[%s5547 + $0x28] sm:$0xff]
        %v5554 = vld [vmem:[%s5547 + $0x30] sm:$0xff]
        %v5555 = vld [vmem:[%s5547 + $0x38] sm:$0xff]
        %v5556 = vld [vmem:[%s5547 + $0x40] sm:$0xff]
        %v5557 = vld [vmem:[%s5547 + $0x48] sm:$0xff]
        %v5558 = vld [vmem:[%s5547 + $0x50] sm:$0xff]
        %v5559 = vld [vmem:[%s5547 + $0x58] sm:$0xff]
        %v5560 = vld [vmem:[%s5547 + $0x60] sm:$0xff]
        %v5561 = vld [vmem:[%s5547 + $0x68] sm:$0xff]
        %v5562 = vld [vmem:[%s5547 + $0x70] sm:$0xf]
        %v5563 = vld [vmem:[%s5547 + $0x78] sm:$0xf]
        %v5564 = vrot.slane %v4436, 2
        %v5565 = vrot.slane %v4437, 2
        %v5566 = vsel %vm1920, %v5564, %v5565
        %v5567 = vsel %vm4477, %v5566, 0
        %v5569 = vsel %vm4477, %v5565, 0
        %v5572 = vsel %vm562, %v5562, 0
        %v5575 = vsel %vm562, %v5563, 0
        %5577 = vmatprep.subr.mxu0 0.0
        %5578 = vmatpush1.msra.mxu0 0.0
        %5579 = vmatprep.subr.mxu0 0.0
        %5580 = vmatpush1.msra.mxu0 0.0
        %5581 = vmatprep.subr.mxu0 0.0
        %5582 = vmatpush1.msra.mxu0 0.0
        %5583 = vmatprep.subr.mxu0 0.0
        %5584 = vmatpush1.msra.mxu0 0.0
        %5585 = vmatprep.subr.mxu0 0.0
        %5586 = vmatpush1.msra.mxu0 0.0
        %5587 = vmatprep.subr.mxu0 0.0
        %5588 = vmatpush1.msra.mxu0 0.0
        %5589 = vmatprep.subr.mxu0 0.0
        %5590 = vmatpush1.msra.mxu0 0.0
        %5591 = vmatprep.subr.mxu0 0.0
        %5592 = vmatpush1.msra.mxu0 0.0
        %5593 = vmatprep.subr.mxu0 %v5575
        %5594 = vmatpush1.msra.mxu0 %v5572
        %5595 = vmatprep.subr.mxu0 %v5561
        %5596 = vmatpush1.msra.mxu0 %v5560
        %5597 = vmatprep.subr.mxu0 %v5559
        %5598 = vmatpush1.msra.mxu0 %v5558
        %5599 = vmatprep.subr.mxu0 %v5557
        %5600 = vmatpush1.msra.mxu0 %v5556
        %5601 = vmatprep.subr.mxu0 %v5555
        %5602 = vmatpush1.msra.mxu0 %v5554
        %5603 = vmatprep.subr.mxu0 %v5553
        %5604 = vmatpush1.msra.mxu0 %v5552
        %5605 = vmatprep.subr.mxu0 %v5551
        %5606 = vmatpush1.msra.mxu0 %v5550
        %5607 = vmatprep.subr.mxu0 %v5549
        %5608 = vmatpush1.msra.mxu0 %v5548
        %5609 = vmatprep.subr.mxu0 0.0
        %5610 = vmatpush2.msra.mxu0 0.0
        %5611 = vmatprep.subr.mxu0 0.0
        %5612 = vmatpush2.msra.mxu0 0.0
        %5613 = vmatprep.subr.mxu0 0.0
        %5614 = vmatpush2.msra.mxu0 0.0
        %5615 = vmatprep.subr.mxu0 0.0
        %5616 = vmatpush2.msra.mxu0 0.0
        %5617 = vmatprep.subr.mxu0 0.0
        %5618 = vmatpush2.msra.mxu0 0.0
        %5619 = vmatprep.subr.mxu0 0.0
        %5620 = vmatpush2.msra.mxu0 0.0
        %5621 = vmatprep.subr.mxu0 0.0
        %5622 = vmatpush2.msra.mxu0 0.0
        %5623 = vmatprep.subr.mxu0 0.0
        %5624 = vmatpush2.msra.mxu0 0.0
        %5625 = vmatprep.subr.mxu0 0.0
        %5626 = vmatpush2.msra.mxu0 0.0
        %5627 = vmatprep.subr.mxu0 0.0
        %5628 = vmatpush2.msra.mxu0 0.0
        %5629 = vmatprep.subr.mxu0 0.0
        %5630 = vmatpush2.msra.mxu0 0.0
        %5631 = vmatprep.subr.mxu0 0.0
        %5632 = vmatpush2.msra.mxu0 0.0
        %5633 = vmatprep.subr.mxu0 0.0
        %5634 = vmatpush2.msra.mxu0 0.0
        %5635 = vmatprep.subr.mxu0 0.0
        %5636 = vmatpush2.msra.mxu0 0.0
        %5637 = vmatprep.subr.mxu0 0.0
        %5638 = vmatpush2.msra.mxu0 0.0
        %5639 = vmatprep.subr.mxu0 0.0
        %5640 = vmatpush2.msra.mxu0 0.0
        %5641 = vmatprep.mubr.f32.mxu0 0.0
        %5642 = vmatmul.mubr.f32.gmra.mxu0 %v5567
        %v5643 = vpop.f32.mrf.mxu0
        %v5644 = vadd.f32 0.0, %v5643
        %v5645 = vpop.f32.mrf.mxu0
        %v5646 = vadd.f32 0.0, %v5645
        %5647 = vmatprep.mubr.f32.mxu0 0.0
        %5648 = vmatmul.mubr.f32.gmra.mxu0 %v5569
        %v5649 = vpop.f32.mrf.mxu0
        %v5650 = vadd.f32 0.0, %v5649
        %v5651 = vpop.f32.mrf.mxu0
        %v5652 = vadd.f32 0.0, %v5651
        %5653 = vdwg.mxu0
        %v5654 = vadd.f32 %v5543, %v5644
        %v5655 = vadd.f32 %v5544, %v5646
        %v5656 = vadd.f32 %v5545, %v5650
        %v5657 = vadd.f32 %v5546, %v5652
        %s5658 = scalar_lea.vmem %s5, 1408
        %v5659 = vld [vmem:[%s5658] sm:$0xff]
        %v5660 = vld [vmem:[%s5658 + $0x8] sm:$0xff]
        %v5661 = vld [vmem:[%s5658 + $0x10] sm:$0xff]
        %v5662 = vld [vmem:[%s5658 + $0x18] sm:$0xff]
        %v5663 = vld [vmem:[%s5658 + $0x20] sm:$0xff]
        %v5664 = vld [vmem:[%s5658 + $0x28] sm:$0xff]
        %v5665 = vld [vmem:[%s5658 + $0x30] sm:$0xff]
        %v5666 = vld [vmem:[%s5658 + $0x38] sm:$0xff]
        %v5667 = vld [vmem:[%s5658 + $0x40] sm:$0xff]
        %v5668 = vld [vmem:[%s5658 + $0x48] sm:$0xff]
        %v5669 = vld [vmem:[%s5658 + $0x50] sm:$0xff]
        %v5670 = vld [vmem:[%s5658 + $0x58] sm:$0xff]
        %v5671 = vld [vmem:[%s5658 + $0x60] sm:$0xff]
        %v5672 = vld [vmem:[%s5658 + $0x68] sm:$0xff]
        %v5673 = vld [vmem:[%s5658 + $0x70] sm:$0xf]
        %v5674 = vld [vmem:[%s5658 + $0x78] sm:$0xf]
        %5675 = vrot.lane.b32.xlu0 %v5566, 122
        %v5676 = vpop.permute.xlu0 %5675
        %5677 = vrot.lane.b32.xlu0 %v5565, 122
        %v5678 = vpop.permute.xlu0 %5677
        %v5679 = vsel %vm4477, %v5676, 0
        %v5681 = vsel %vm4477, %v5678, 0
        %v5684 = vsel %vm562, %v5673, 0
        %v5687 = vsel %vm562, %v5674, 0
        %5689 = vmatprep.subr.mxu0 0.0
        %5690 = vmatpush1.msra.mxu0 0.0
        %5691 = vmatprep.subr.mxu0 0.0
        %5692 = vmatpush1.msra.mxu0 0.0
        %5693 = vmatprep.subr.mxu0 0.0
        %5694 = vmatpush1.msra.mxu0 0.0
        %5695 = vmatprep.subr.mxu0 0.0
        %5696 = vmatpush1.msra.mxu0 0.0
        %5697 = vmatprep.subr.mxu0 0.0
        %5698 = vmatpush1.msra.mxu0 0.0
        %5699 = vmatprep.subr.mxu0 0.0
        %5700 = vmatpush1.msra.mxu0 0.0
        %5701 = vmatprep.subr.mxu0 0.0
        %5702 = vmatpush1.msra.mxu0 0.0
        %5703 = vmatprep.subr.mxu0 0.0
        %5704 = vmatpush1.msra.mxu0 0.0
        %5705 = vmatprep.subr.mxu0 %v5687
        %5706 = vmatpush1.msra.mxu0 %v5684
        %5707 = vmatprep.subr.mxu0 %v5672
        %5708 = vmatpush1.msra.mxu0 %v5671
        %5709 = vmatprep.subr.mxu0 %v5670
        %5710 = vmatpush1.msra.mxu0 %v5669
        %5711 = vmatprep.subr.mxu0 %v5668
        %5712 = vmatpush1.msra.mxu0 %v5667
        %5713 = vmatprep.subr.mxu0 %v5666
        %5714 = vmatpush1.msra.mxu0 %v5665
        %5715 = vmatprep.subr.mxu0 %v5664
        %5716 = vmatpush1.msra.mxu0 %v5663
        %5717 = vmatprep.subr.mxu0 %v5662
        %5718 = vmatpush1.msra.mxu0 %v5661
        %5719 = vmatprep.subr.mxu0 %v5660
        %5720 = vmatpush1.msra.mxu0 %v5659
        %5721 = vmatprep.subr.mxu0 0.0
        %5722 = vmatpush2.msra.mxu0 0.0
        %5723 = vmatprep.subr.mxu0 0.0
        %5724 = vmatpush2.msra.mxu0 0.0
        %5725 = vmatprep.subr.mxu0 0.0
        %5726 = vmatpush2.msra.mxu0 0.0
        %5727 = vmatprep.subr.mxu0 0.0
        %5728 = vmatpush2.msra.mxu0 0.0
        %5729 = vmatprep.subr.mxu0 0.0
        %5730 = vmatpush2.msra.mxu0 0.0
        %5731 = vmatprep.subr.mxu0 0.0
        %5732 = vmatpush2.msra.mxu0 0.0
        %5733 = vmatprep.subr.mxu0 0.0
        %5734 = vmatpush2.msra.mxu0 0.0
        %5735 = vmatprep.subr.mxu0 0.0
        %5736 = vmatpush2.msra.mxu0 0.0
        %5737 = vmatprep.subr.mxu0 0.0
        %5738 = vmatpush2.msra.mxu0 0.0
        %5739 = vmatprep.subr.mxu0 0.0
        %5740 = vmatpush2.msra.mxu0 0.0
        %5741 = vmatprep.subr.mxu0 0.0
        %5742 = vmatpush2.msra.mxu0 0.0
        %5743 = vmatprep.subr.mxu0 0.0
        %5744 = vmatpush2.msra.mxu0 0.0
        %5745 = vmatprep.subr.mxu0 0.0
        %5746 = vmatpush2.msra.mxu0 0.0
        %5747 = vmatprep.subr.mxu0 0.0
        %5748 = vmatpush2.msra.mxu0 0.0
        %5749 = vmatprep.subr.mxu0 0.0
        %5750 = vmatpush2.msra.mxu0 0.0
        %5751 = vmatprep.subr.mxu0 0.0
        %5752 = vmatpush2.msra.mxu0 0.0
        %5753 = vmatprep.mubr.f32.mxu0 0.0
        %5754 = vmatmul.mubr.f32.gmra.mxu0 %v5679
        %v5755 = vpop.f32.mrf.mxu0
        %v5756 = vadd.f32 0.0, %v5755
        %v5757 = vpop.f32.mrf.mxu0
        %v5758 = vadd.f32 0.0, %v5757
        %5759 = vmatprep.mubr.f32.mxu0 0.0
        %5760 = vmatmul.mubr.f32.gmra.mxu0 %v5681
        %v5761 = vpop.f32.mrf.mxu0
        %v5762 = vadd.f32 0.0, %v5761
        %v5763 = vpop.f32.mrf.mxu0
        %v5764 = vadd.f32 0.0, %v5763
        %5765 = vdwg.mxu0
        %v5766 = vadd.f32 %v5654, %v5756
        %v5767 = vadd.f32 %v5655, %v5758
        %v5768 = vadd.f32 %v5656, %v5762
        %v5769 = vadd.f32 %v5657, %v5764
        %s5770 = scalar_lea.vmem %s5, 1536
        %v5771 = vld [vmem:[%s5770] sm:$0xff]
        %v5772 = vld [vmem:[%s5770 + $0x8] sm:$0xff]
        %v5773 = vld [vmem:[%s5770 + $0x10] sm:$0xff]
        %v5774 = vld [vmem:[%s5770 + $0x18] sm:$0xff]
        %v5775 = vld [vmem:[%s5770 + $0x20] sm:$0xff]
        %v5776 = vld [vmem:[%s5770 + $0x28] sm:$0xff]
        %v5777 = vld [vmem:[%s5770 + $0x30] sm:$0xff]
        %v5778 = vld [vmem:[%s5770 + $0x38] sm:$0xff]
        %v5779 = vld [vmem:[%s5770 + $0x40] sm:$0xff]
        %v5780 = vld [vmem:[%s5770 + $0x48] sm:$0xff]
        %v5781 = vld [vmem:[%s5770 + $0x50] sm:$0xff]
        %v5782 = vld [vmem:[%s5770 + $0x58] sm:$0xff]
        %v5783 = vld [vmem:[%s5770 + $0x60] sm:$0xff]
        %v5784 = vld [vmem:[%s5770 + $0x68] sm:$0xff]
        %v5785 = vld [vmem:[%s5770 + $0x70] sm:$0xf]
        %v5786 = vld [vmem:[%s5770 + $0x78] sm:$0xf]
        %5787 = vrot.lane.b32.xlu0 %v5566, 116
        %v5788 = vpop.permute.xlu0 %5787
        %5789 = vrot.lane.b32.xlu0 %v5565, 116
        %v5790 = vpop.permute.xlu0 %5789
        %v5791 = vsel %vm4477, %v5788, 0
        %v5793 = vsel %vm4477, %v5790, 0
        %v5796 = vsel %vm562, %v5785, 0
        %v5799 = vsel %vm562, %v5786, 0
        %5801 = vmatprep.subr.mxu0 0.0
        %5802 = vmatpush1.msra.mxu0 0.0
        %5803 = vmatprep.subr.mxu0 0.0
        %5804 = vmatpush1.msra.mxu0 0.0
        %5805 = vmatprep.subr.mxu0 0.0
        %5806 = vmatpush1.msra.mxu0 0.0
        %5807 = vmatprep.subr.mxu0 0.0
        %5808 = vmatpush1.msra.mxu0 0.0
        %5809 = vmatprep.subr.mxu0 0.0
        %5810 = vmatpush1.msra.mxu0 0.0
        %5811 = vmatprep.subr.mxu0 0.0
        %5812 = vmatpush1.msra.mxu0 0.0
        %5813 = vmatprep.subr.mxu0 0.0
        %5814 = vmatpush1.msra.mxu0 0.0
        %5815 = vmatprep.subr.mxu0 0.0
        %5816 = vmatpush1.msra.mxu0 0.0
        %5817 = vmatprep.subr.mxu0 %v5799
        %5818 = vmatpush1.msra.mxu0 %v5796
        %5819 = vmatprep.subr.mxu0 %v5784
        %5820 = vmatpush1.msra.mxu0 %v5783
        %5821 = vmatprep.subr.mxu0 %v5782
        %5822 = vmatpush1.msra.mxu0 %v5781
        %5823 = vmatprep.subr.mxu0 %v5780
        %5824 = vmatpush1.msra.mxu0 %v5779
        %5825 = vmatprep.subr.mxu0 %v5778
        %5826 = vmatpush1.msra.mxu0 %v5777
        %5827 = vmatprep.subr.mxu0 %v5776
        %5828 = vmatpush1.msra.mxu0 %v5775
        %5829 = vmatprep.subr.mxu0 %v5774
        %5830 = vmatpush1.msra.mxu0 %v5773
        %5831 = vmatprep.subr.mxu0 %v5772
        %5832 = vmatpush1.msra.mxu0 %v5771
        %5833 = vmatprep.subr.mxu0 0.0
        %5834 = vmatpush2.msra.mxu0 0.0
        %5835 = vmatprep.subr.mxu0 0.0
        %5836 = vmatpush2.msra.mxu0 0.0
        %5837 = vmatprep.subr.mxu0 0.0
        %5838 = vmatpush2.msra.mxu0 0.0
        %5839 = vmatprep.subr.mxu0 0.0
        %5840 = vmatpush2.msra.mxu0 0.0
        %5841 = vmatprep.subr.mxu0 0.0
        %5842 = vmatpush2.msra.mxu0 0.0
        %5843 = vmatprep.subr.mxu0 0.0
        %5844 = vmatpush2.msra.mxu0 0.0
        %5845 = vmatprep.subr.mxu0 0.0
        %5846 = vmatpush2.msra.mxu0 0.0
        %5847 = vmatprep.subr.mxu0 0.0
        %5848 = vmatpush2.msra.mxu0 0.0
        %5849 = vmatprep.subr.mxu0 0.0
        %5850 = vmatpush2.msra.mxu0 0.0
        %5851 = vmatprep.subr.mxu0 0.0
        %5852 = vmatpush2.msra.mxu0 0.0
        %5853 = vmatprep.subr.mxu0 0.0
        %5854 = vmatpush2.msra.mxu0 0.0
        %5855 = vmatprep.subr.mxu0 0.0
        %5856 = vmatpush2.msra.mxu0 0.0
        %5857 = vmatprep.subr.mxu0 0.0
        %5858 = vmatpush2.msra.mxu0 0.0
        %5859 = vmatprep.subr.mxu0 0.0
        %5860 = vmatpush2.msra.mxu0 0.0
        %5861 = vmatprep.subr.mxu0 0.0
        %5862 = vmatpush2.msra.mxu0 0.0
        %5863 = vmatprep.subr.mxu0 0.0
        %5864 = vmatpush2.msra.mxu0 0.0
        %5865 = vmatprep.mubr.f32.mxu0 0.0
        %5866 = vmatmul.mubr.f32.gmra.mxu0 %v5791
        %v5867 = vpop.f32.mrf.mxu0
        %v5868 = vadd.f32 0.0, %v5867
        %v5869 = vpop.f32.mrf.mxu0
        %v5870 = vadd.f32 0.0, %v5869
        %5871 = vmatprep.mubr.f32.mxu0 0.0
        %5872 = vmatmul.mubr.f32.gmra.mxu0 %v5793
        %v5873 = vpop.f32.mrf.mxu0
        %v5874 = vadd.f32 0.0, %v5873
        %v5875 = vpop.f32.mrf.mxu0
        %v5876 = vadd.f32 0.0, %v5875
        %5877 = vdwg.mxu0
        %v5878 = vadd.f32 %v5766, %v5868
        %v5879 = vadd.f32 %v5767, %v5870
        %v5880 = vadd.f32 %v5768, %v5874
        %v5881 = vadd.f32 %v5769, %v5876
        %s5882 = scalar_lea.vmem %s5, 1664
        %v5883 = vld [vmem:[%s5882] sm:$0xff]
        %v5884 = vld [vmem:[%s5882 + $0x8] sm:$0xff]
        %v5885 = vld [vmem:[%s5882 + $0x10] sm:$0xff]
        %v5886 = vld [vmem:[%s5882 + $0x18] sm:$0xff]
        %v5887 = vld [vmem:[%s5882 + $0x20] sm:$0xff]
        %v5888 = vld [vmem:[%s5882 + $0x28] sm:$0xff]
        %v5889 = vld [vmem:[%s5882 + $0x30] sm:$0xff]
        %v5890 = vld [vmem:[%s5882 + $0x38] sm:$0xff]
        %v5891 = vld [vmem:[%s5882 + $0x40] sm:$0xff]
        %v5892 = vld [vmem:[%s5882 + $0x48] sm:$0xff]
        %v5893 = vld [vmem:[%s5882 + $0x50] sm:$0xff]
        %v5894 = vld [vmem:[%s5882 + $0x58] sm:$0xff]
        %v5895 = vld [vmem:[%s5882 + $0x60] sm:$0xff]
        %v5896 = vld [vmem:[%s5882 + $0x68] sm:$0xff]
        %v5897 = vld [vmem:[%s5882 + $0x70] sm:$0xf]
        %v5898 = vld [vmem:[%s5882 + $0x78] sm:$0xf]
        %5899 = vrot.lane.b32.xlu0 %v5566, 110
        %v5900 = vpop.permute.xlu0 %5899
        %5901 = vrot.lane.b32.xlu0 %v5565, 110
        %v5902 = vpop.permute.xlu0 %5901
        %v5903 = vsel %vm4477, %v5900, 0
        %v5905 = vsel %vm4477, %v5902, 0
        %v5908 = vsel %vm562, %v5897, 0
        %v5911 = vsel %vm562, %v5898, 0
        %5913 = vmatprep.subr.mxu0 0.0
        %5914 = vmatpush1.msra.mxu0 0.0
        %5915 = vmatprep.subr.mxu0 0.0
        %5916 = vmatpush1.msra.mxu0 0.0
        %5917 = vmatprep.subr.mxu0 0.0
        %5918 = vmatpush1.msra.mxu0 0.0
        %5919 = vmatprep.subr.mxu0 0.0
        %5920 = vmatpush1.msra.mxu0 0.0
        %5921 = vmatprep.subr.mxu0 0.0
        %5922 = vmatpush1.msra.mxu0 0.0
        %5923 = vmatprep.subr.mxu0 0.0
        %5924 = vmatpush1.msra.mxu0 0.0
        %5925 = vmatprep.subr.mxu0 0.0
        %5926 = vmatpush1.msra.mxu0 0.0
        %5927 = vmatprep.subr.mxu0 0.0
        %5928 = vmatpush1.msra.mxu0 0.0
        %5929 = vmatprep.subr.mxu0 %v5911
        %5930 = vmatpush1.msra.mxu0 %v5908
        %5931 = vmatprep.subr.mxu0 %v5896
        %5932 = vmatpush1.msra.mxu0 %v5895
        %5933 = vmatprep.subr.mxu0 %v5894
        %5934 = vmatpush1.msra.mxu0 %v5893
        %5935 = vmatprep.subr.mxu0 %v5892
        %5936 = vmatpush1.msra.mxu0 %v5891
        %5937 = vmatprep.subr.mxu0 %v5890
        %5938 = vmatpush1.msra.mxu0 %v5889
        %5939 = vmatprep.subr.mxu0 %v5888
        %5940 = vmatpush1.msra.mxu0 %v5887
        %5941 = vmatprep.subr.mxu0 %v5886
        %5942 = vmatpush1.msra.mxu0 %v5885
        %5943 = vmatprep.subr.mxu0 %v5884
        %5944 = vmatpush1.msra.mxu0 %v5883
        %5945 = vmatprep.subr.mxu0 0.0
        %5946 = vmatpush2.msra.mxu0 0.0
        %5947 = vmatprep.subr.mxu0 0.0
        %5948 = vmatpush2.msra.mxu0 0.0
        %5949 = vmatprep.subr.mxu0 0.0
        %5950 = vmatpush2.msra.mxu0 0.0
        %5951 = vmatprep.subr.mxu0 0.0
        %5952 = vmatpush2.msra.mxu0 0.0
        %5953 = vmatprep.subr.mxu0 0.0
        %5954 = vmatpush2.msra.mxu0 0.0
        %5955 = vmatprep.subr.mxu0 0.0
        %5956 = vmatpush2.msra.mxu0 0.0
        %5957 = vmatprep.subr.mxu0 0.0
        %5958 = vmatpush2.msra.mxu0 0.0
        %5959 = vmatprep.subr.mxu0 0.0
        %5960 = vmatpush2.msra.mxu0 0.0
        %5961 = vmatprep.subr.mxu0 0.0
        %5962 = vmatpush2.msra.mxu0 0.0
        %5963 = vmatprep.subr.mxu0 0.0
        %5964 = vmatpush2.msra.mxu0 0.0
        %5965 = vmatprep.subr.mxu0 0.0
        %5966 = vmatpush2.msra.mxu0 0.0
        %5967 = vmatprep.subr.mxu0 0.0
        %5968 = vmatpush2.msra.mxu0 0.0
        %5969 = vmatprep.subr.mxu0 0.0
        %5970 = vmatpush2.msra.mxu0 0.0
        %5971 = vmatprep.subr.mxu0 0.0
        %5972 = vmatpush2.msra.mxu0 0.0
        %5973 = vmatprep.subr.mxu0 0.0
        %5974 = vmatpush2.msra.mxu0 0.0
        %5975 = vmatprep.subr.mxu0 0.0
        %5976 = vmatpush2.msra.mxu0 0.0
        %5977 = vmatprep.mubr.f32.mxu0 0.0
        %5978 = vmatmul.mubr.f32.gmra.mxu0 %v5903
        %v5979 = vpop.f32.mrf.mxu0
        %v5980 = vadd.f32 0.0, %v5979
        %v5981 = vpop.f32.mrf.mxu0
        %v5982 = vadd.f32 0.0, %v5981
        %5983 = vmatprep.mubr.f32.mxu0 0.0
        %5984 = vmatmul.mubr.f32.gmra.mxu0 %v5905
        %v5985 = vpop.f32.mrf.mxu0
        %v5986 = vadd.f32 0.0, %v5985
        %v5987 = vpop.f32.mrf.mxu0
        %v5988 = vadd.f32 0.0, %v5987
        %5989 = vdwg.mxu0
        %v5990 = vadd.f32 %v5878, %v5980
        %v5991 = vadd.f32 %v5879, %v5982
        %v5992 = vadd.f32 %v5880, %v5986
        %v5993 = vadd.f32 %v5881, %v5988
        %s5994 = scalar_lea.vmem %s5, 1792
        %v5995 = vld [vmem:[%s5994] sm:$0xff]
        %v5996 = vld [vmem:[%s5994 + $0x8] sm:$0xff]
        %v5997 = vld [vmem:[%s5994 + $0x10] sm:$0xff]
        %v5998 = vld [vmem:[%s5994 + $0x18] sm:$0xff]
        %v5999 = vld [vmem:[%s5994 + $0x20] sm:$0xff]
        %v6000 = vld [vmem:[%s5994 + $0x28] sm:$0xff]
        %v6001 = vld [vmem:[%s5994 + $0x30] sm:$0xff]
        %v6002 = vld [vmem:[%s5994 + $0x38] sm:$0xff]
        %v6003 = vld [vmem:[%s5994 + $0x40] sm:$0xff]
        %v6004 = vld [vmem:[%s5994 + $0x48] sm:$0xff]
        %v6005 = vld [vmem:[%s5994 + $0x50] sm:$0xff]
        %v6006 = vld [vmem:[%s5994 + $0x58] sm:$0xff]
        %v6007 = vld [vmem:[%s5994 + $0x60] sm:$0xff]
        %v6008 = vld [vmem:[%s5994 + $0x68] sm:$0xff]
        %v6009 = vld [vmem:[%s5994 + $0x70] sm:$0xf]
        %v6010 = vld [vmem:[%s5994 + $0x78] sm:$0xf]
        %6011 = vrot.lane.b32.xlu0 %v5566, 104
        %v6012 = vpop.permute.xlu0 %6011
        %6013 = vrot.lane.b32.xlu0 %v5565, 104
        %v6014 = vpop.permute.xlu0 %6013
        %v6015 = vsel %vm4477, %v6012, 0
        %v6017 = vsel %vm4477, %v6014, 0
        %v6020 = vsel %vm562, %v6009, 0
        %v6023 = vsel %vm562, %v6010, 0
        %6025 = vmatprep.subr.mxu0 0.0
        %6026 = vmatpush1.msra.mxu0 0.0
        %6027 = vmatprep.subr.mxu0 0.0
        %6028 = vmatpush1.msra.mxu0 0.0
        %6029 = vmatprep.subr.mxu0 0.0
        %6030 = vmatpush1.msra.mxu0 0.0
        %6031 = vmatprep.subr.mxu0 0.0
        %6032 = vmatpush1.msra.mxu0 0.0
        %6033 = vmatprep.subr.mxu0 0.0
        %6034 = vmatpush1.msra.mxu0 0.0
        %6035 = vmatprep.subr.mxu0 0.0
        %6036 = vmatpush1.msra.mxu0 0.0
        %6037 = vmatprep.subr.mxu0 0.0
        %6038 = vmatpush1.msra.mxu0 0.0
        %6039 = vmatprep.subr.mxu0 0.0
        %6040 = vmatpush1.msra.mxu0 0.0
        %6041 = vmatprep.subr.mxu0 %v6023
        %6042 = vmatpush1.msra.mxu0 %v6020
        %6043 = vmatprep.subr.mxu0 %v6008
        %6044 = vmatpush1.msra.mxu0 %v6007
        %6045 = vmatprep.subr.mxu0 %v6006
        %6046 = vmatpush1.msra.mxu0 %v6005
        %6047 = vmatprep.subr.mxu0 %v6004
        %6048 = vmatpush1.msra.mxu0 %v6003
        %6049 = vmatprep.subr.mxu0 %v6002
        %6050 = vmatpush1.msra.mxu0 %v6001
        %6051 = vmatprep.subr.mxu0 %v6000
        %6052 = vmatpush1.msra.mxu0 %v5999
        %6053 = vmatprep.subr.mxu0 %v5998
        %6054 = vmatpush1.msra.mxu0 %v5997
        %6055 = vmatprep.subr.mxu0 %v5996
        %6056 = vmatpush1.msra.mxu0 %v5995
        %6057 = vmatprep.subr.mxu0 0.0
        %6058 = vmatpush2.msra.mxu0 0.0
        %6059 = vmatprep.subr.mxu0 0.0
        %6060 = vmatpush2.msra.mxu0 0.0
        %6061 = vmatprep.subr.mxu0 0.0
        %6062 = vmatpush2.msra.mxu0 0.0
        %6063 = vmatprep.subr.mxu0 0.0
        %6064 = vmatpush2.msra.mxu0 0.0
        %6065 = vmatprep.subr.mxu0 0.0
        %6066 = vmatpush2.msra.mxu0 0.0
        %6067 = vmatprep.subr.mxu0 0.0
        %6068 = vmatpush2.msra.mxu0 0.0
        %6069 = vmatprep.subr.mxu0 0.0
        %6070 = vmatpush2.msra.mxu0 0.0
        %6071 = vmatprep.subr.mxu0 0.0
        %6072 = vmatpush2.msra.mxu0 0.0
        %6073 = vmatprep.subr.mxu0 0.0
        %6074 = vmatpush2.msra.mxu0 0.0
        %6075 = vmatprep.subr.mxu0 0.0
        %6076 = vmatpush2.msra.mxu0 0.0
        %6077 = vmatprep.subr.mxu0 0.0
        %6078 = vmatpush2.msra.mxu0 0.0
        %6079 = vmatprep.subr.mxu0 0.0
        %6080 = vmatpush2.msra.mxu0 0.0
        %6081 = vmatprep.subr.mxu0 0.0
        %6082 = vmatpush2.msra.mxu0 0.0
        %6083 = vmatprep.subr.mxu0 0.0
        %6084 = vmatpush2.msra.mxu0 0.0
        %6085 = vmatprep.subr.mxu0 0.0
        %6086 = vmatpush2.msra.mxu0 0.0
        %6087 = vmatprep.subr.mxu0 0.0
        %6088 = vmatpush2.msra.mxu0 0.0
        %6089 = vmatprep.mubr.f32.mxu0 0.0
        %6090 = vmatmul.mubr.f32.gmra.mxu0 %v6015
        %v6091 = vpop.f32.mrf.mxu0
        %v6092 = vadd.f32 0.0, %v6091
        %v6093 = vpop.f32.mrf.mxu0
        %v6094 = vadd.f32 0.0, %v6093
        %6095 = vmatprep.mubr.f32.mxu0 0.0
        %6096 = vmatmul.mubr.f32.gmra.mxu0 %v6017
        %v6097 = vpop.f32.mrf.mxu0
        %v6098 = vadd.f32 0.0, %v6097
        %v6099 = vpop.f32.mrf.mxu0
        %v6100 = vadd.f32 0.0, %v6099
        %6101 = vdwg.mxu0
        %v6102 = vadd.f32 %v5990, %v6092
        %v6103 = vadd.f32 %v5991, %v6094
        %v6104 = vadd.f32 %v5992, %v6098
        %v6105 = vadd.f32 %v5993, %v6100
        %s6106 = scalar_lea.vmem %s5, 1920
        %v6107 = vld [vmem:[%s6106] sm:$0xff]
        %v6108 = vld [vmem:[%s6106 + $0x8] sm:$0xff]
        %v6109 = vld [vmem:[%s6106 + $0x10] sm:$0xff]
        %v6110 = vld [vmem:[%s6106 + $0x18] sm:$0xff]
        %v6111 = vld [vmem:[%s6106 + $0x20] sm:$0xff]
        %v6112 = vld [vmem:[%s6106 + $0x28] sm:$0xff]
        %v6113 = vld [vmem:[%s6106 + $0x30] sm:$0xff]
        %v6114 = vld [vmem:[%s6106 + $0x38] sm:$0xff]
        %v6115 = vld [vmem:[%s6106 + $0x40] sm:$0xff]
        %v6116 = vld [vmem:[%s6106 + $0x48] sm:$0xff]
        %v6117 = vld [vmem:[%s6106 + $0x50] sm:$0xff]
        %v6118 = vld [vmem:[%s6106 + $0x58] sm:$0xff]
        %v6119 = vld [vmem:[%s6106 + $0x60] sm:$0xff]
        %v6120 = vld [vmem:[%s6106 + $0x68] sm:$0xff]
        %v6121 = vld [vmem:[%s6106 + $0x70] sm:$0xf]
        %v6122 = vld [vmem:[%s6106 + $0x78] sm:$0xf]
        %v6123 = vrot.slane %v4436, 3
        %v6124 = vrot.slane %v4437, 3
        %v6125 = vsel %vm2630, %v6123, %v6124
        %v6126 = vsel %vm4477, %v6125, 0
        %v6128 = vsel %vm4477, %v6124, 0
        %v6131 = vsel %vm562, %v6121, 0
        %v6134 = vsel %vm562, %v6122, 0
        %6136 = vmatprep.subr.mxu0 0.0
        %6137 = vmatpush1.msra.mxu0 0.0
        %6138 = vmatprep.subr.mxu0 0.0
        %6139 = vmatpush1.msra.mxu0 0.0
        %6140 = vmatprep.subr.mxu0 0.0
        %6141 = vmatpush1.msra.mxu0 0.0
        %6142 = vmatprep.subr.mxu0 0.0
        %6143 = vmatpush1.msra.mxu0 0.0
        %6144 = vmatprep.subr.mxu0 0.0
        %6145 = vmatpush1.msra.mxu0 0.0
        %6146 = vmatprep.subr.mxu0 0.0
        %6147 = vmatpush1.msra.mxu0 0.0
        %6148 = vmatprep.subr.mxu0 0.0
        %6149 = vmatpush1.msra.mxu0 0.0
        %6150 = vmatprep.subr.mxu0 0.0
        %6151 = vmatpush1.msra.mxu0 0.0
        %6152 = vmatprep.subr.mxu0 %v6134
        %6153 = vmatpush1.msra.mxu0 %v6131
        %6154 = vmatprep.subr.mxu0 %v6120
        %6155 = vmatpush1.msra.mxu0 %v6119
        %6156 = vmatprep.subr.mxu0 %v6118
        %6157 = vmatpush1.msra.mxu0 %v6117
        %6158 = vmatprep.subr.mxu0 %v6116
        %6159 = vmatpush1.msra.mxu0 %v6115
        %6160 = vmatprep.subr.mxu0 %v6114
        %6161 = vmatpush1.msra.mxu0 %v6113
        %6162 = vmatprep.subr.mxu0 %v6112
        %6163 = vmatpush1.msra.mxu0 %v6111
        %6164 = vmatprep.subr.mxu0 %v6110
        %6165 = vmatpush1.msra.mxu0 %v6109
        %6166 = vmatprep.subr.mxu0 %v6108
        %6167 = vmatpush1.msra.mxu0 %v6107
        %6168 = vmatprep.subr.mxu0 0.0
        %6169 = vmatpush2.msra.mxu0 0.0
        %6170 = vmatprep.subr.mxu0 0.0
        %6171 = vmatpush2.msra.mxu0 0.0
        %6172 = vmatprep.subr.mxu0 0.0
        %6173 = vmatpush2.msra.mxu0 0.0
        %6174 = vmatprep.subr.mxu0 0.0
        %6175 = vmatpush2.msra.mxu0 0.0
        %6176 = vmatprep.subr.mxu0 0.0
        %6177 = vmatpush2.msra.mxu0 0.0
        %6178 = vmatprep.subr.mxu0 0.0
        %6179 = vmatpush2.msra.mxu0 0.0
        %6180 = vmatprep.subr.mxu0 0.0
        %6181 = vmatpush2.msra.mxu0 0.0
        %6182 = vmatprep.subr.mxu0 0.0
        %6183 = vmatpush2.msra.mxu0 0.0
        %6184 = vmatprep.subr.mxu0 0.0
        %6185 = vmatpush2.msra.mxu0 0.0
        %6186 = vmatprep.subr.mxu0 0.0
        %6187 = vmatpush2.msra.mxu0 0.0
        %6188 = vmatprep.subr.mxu0 0.0
        %6189 = vmatpush2.msra.mxu0 0.0
        %6190 = vmatprep.subr.mxu0 0.0
        %6191 = vmatpush2.msra.mxu0 0.0
        %6192 = vmatprep.subr.mxu0 0.0
        %6193 = vmatpush2.msra.mxu0 0.0
        %6194 = vmatprep.subr.mxu0 0.0
        %6195 = vmatpush2.msra.mxu0 0.0
        %6196 = vmatprep.subr.mxu0 0.0
        %6197 = vmatpush2.msra.mxu0 0.0
        %6198 = vmatprep.subr.mxu0 0.0
        %6199 = vmatpush2.msra.mxu0 0.0
        %6200 = vmatprep.mubr.f32.mxu0 0.0
        %6201 = vmatmul.mubr.f32.gmra.mxu0 %v6126
        %v6202 = vpop.f32.mrf.mxu0
        %v6203 = vadd.f32 0.0, %v6202
        %v6204 = vpop.f32.mrf.mxu0
        %v6205 = vadd.f32 0.0, %v6204
        %6206 = vmatprep.mubr.f32.mxu0 0.0
        %6207 = vmatmul.mubr.f32.gmra.mxu0 %v6128
        %v6208 = vpop.f32.mrf.mxu0
        %v6209 = vadd.f32 0.0, %v6208
        %v6210 = vpop.f32.mrf.mxu0
        %v6211 = vadd.f32 0.0, %v6210
        %6212 = vdwg.mxu0
        %v6213 = vadd.f32 %v6102, %v6203
        %v6214 = vadd.f32 %v6103, %v6205
        %v6215 = vadd.f32 %v6104, %v6209
        %v6216 = vadd.f32 %v6105, %v6211
        %s6217 = scalar_lea.vmem %s5, 2048
        %v6218 = vld [vmem:[%s6217] sm:$0xff]
        %v6219 = vld [vmem:[%s6217 + $0x8] sm:$0xff]
        %v6220 = vld [vmem:[%s6217 + $0x10] sm:$0xff]
        %v6221 = vld [vmem:[%s6217 + $0x18] sm:$0xff]
        %v6222 = vld [vmem:[%s6217 + $0x20] sm:$0xff]
        %v6223 = vld [vmem:[%s6217 + $0x28] sm:$0xff]
        %v6224 = vld [vmem:[%s6217 + $0x30] sm:$0xff]
        %v6225 = vld [vmem:[%s6217 + $0x38] sm:$0xff]
        %v6226 = vld [vmem:[%s6217 + $0x40] sm:$0xff]
        %v6227 = vld [vmem:[%s6217 + $0x48] sm:$0xff]
        %v6228 = vld [vmem:[%s6217 + $0x50] sm:$0xff]
        %v6229 = vld [vmem:[%s6217 + $0x58] sm:$0xff]
        %v6230 = vld [vmem:[%s6217 + $0x60] sm:$0xff]
        %v6231 = vld [vmem:[%s6217 + $0x68] sm:$0xff]
        %v6232 = vld [vmem:[%s6217 + $0x70] sm:$0xf]
        %v6233 = vld [vmem:[%s6217 + $0x78] sm:$0xf]
        %6234 = vrot.lane.b32.xlu0 %v6125, 122
        %v6235 = vpop.permute.xlu0 %6234
        %6236 = vrot.lane.b32.xlu0 %v6124, 122
        %v6237 = vpop.permute.xlu0 %6236
        %v6238 = vsel %vm4477, %v6235, 0
        %v6240 = vsel %vm4477, %v6237, 0
        %v6243 = vsel %vm562, %v6232, 0
        %v6246 = vsel %vm562, %v6233, 0
        %6248 = vmatprep.subr.mxu0 0.0
        %6249 = vmatpush1.msra.mxu0 0.0
        %6250 = vmatprep.subr.mxu0 0.0
        %6251 = vmatpush1.msra.mxu0 0.0
        %6252 = vmatprep.subr.mxu0 0.0
        %6253 = vmatpush1.msra.mxu0 0.0
        %6254 = vmatprep.subr.mxu0 0.0
        %6255 = vmatpush1.msra.mxu0 0.0
        %6256 = vmatprep.subr.mxu0 0.0
        %6257 = vmatpush1.msra.mxu0 0.0
        %6258 = vmatprep.subr.mxu0 0.0
        %6259 = vmatpush1.msra.mxu0 0.0
        %6260 = vmatprep.subr.mxu0 0.0
        %6261 = vmatpush1.msra.mxu0 0.0
        %6262 = vmatprep.subr.mxu0 0.0
        %6263 = vmatpush1.msra.mxu0 0.0
        %6264 = vmatprep.subr.mxu0 %v6246
        %6265 = vmatpush1.msra.mxu0 %v6243
        %6266 = vmatprep.subr.mxu0 %v6231
        %6267 = vmatpush1.msra.mxu0 %v6230
        %6268 = vmatprep.subr.mxu0 %v6229
        %6269 = vmatpush1.msra.mxu0 %v6228
        %6270 = vmatprep.subr.mxu0 %v6227
        %6271 = vmatpush1.msra.mxu0 %v6226
        %6272 = vmatprep.subr.mxu0 %v6225
        %6273 = vmatpush1.msra.mxu0 %v6224
        %6274 = vmatprep.subr.mxu0 %v6223
        %6275 = vmatpush1.msra.mxu0 %v6222
        %6276 = vmatprep.subr.mxu0 %v6221
        %6277 = vmatpush1.msra.mxu0 %v6220
        %6278 = vmatprep.subr.mxu0 %v6219
        %6279 = vmatpush1.msra.mxu0 %v6218
        %6280 = vmatprep.subr.mxu0 0.0
        %6281 = vmatpush2.msra.mxu0 0.0
        %6282 = vmatprep.subr.mxu0 0.0
        %6283 = vmatpush2.msra.mxu0 0.0
        %6284 = vmatprep.subr.mxu0 0.0
        %6285 = vmatpush2.msra.mxu0 0.0
        %6286 = vmatprep.subr.mxu0 0.0
        %6287 = vmatpush2.msra.mxu0 0.0
        %6288 = vmatprep.subr.mxu0 0.0
        %6289 = vmatpush2.msra.mxu0 0.0
        %6290 = vmatprep.subr.mxu0 0.0
        %6291 = vmatpush2.msra.mxu0 0.0
        %6292 = vmatprep.subr.mxu0 0.0
        %6293 = vmatpush2.msra.mxu0 0.0
        %6294 = vmatprep.subr.mxu0 0.0
        %6295 = vmatpush2.msra.mxu0 0.0
        %6296 = vmatprep.subr.mxu0 0.0
        %6297 = vmatpush2.msra.mxu0 0.0
        %6298 = vmatprep.subr.mxu0 0.0
        %6299 = vmatpush2.msra.mxu0 0.0
        %6300 = vmatprep.subr.mxu0 0.0
        %6301 = vmatpush2.msra.mxu0 0.0
        %6302 = vmatprep.subr.mxu0 0.0
        %6303 = vmatpush2.msra.mxu0 0.0
        %6304 = vmatprep.subr.mxu0 0.0
        %6305 = vmatpush2.msra.mxu0 0.0
        %6306 = vmatprep.subr.mxu0 0.0
        %6307 = vmatpush2.msra.mxu0 0.0
        %6308 = vmatprep.subr.mxu0 0.0
        %6309 = vmatpush2.msra.mxu0 0.0
        %6310 = vmatprep.subr.mxu0 0.0
        %6311 = vmatpush2.msra.mxu0 0.0
        %6312 = vmatprep.mubr.f32.mxu0 0.0
        %6313 = vmatmul.mubr.f32.gmra.mxu0 %v6238
        %v6314 = vpop.f32.mrf.mxu0
        %v6315 = vadd.f32 0.0, %v6314
        %v6316 = vpop.f32.mrf.mxu0
        %v6317 = vadd.f32 0.0, %v6316
        %6318 = vmatprep.mubr.f32.mxu0 0.0
        %6319 = vmatmul.mubr.f32.gmra.mxu0 %v6240
        %v6320 = vpop.f32.mrf.mxu0
        %v6321 = vadd.f32 0.0, %v6320
        %v6322 = vpop.f32.mrf.mxu0
        %v6323 = vadd.f32 0.0, %v6322
        %6324 = vdwg.mxu0
        %v6325 = vadd.f32 %v6213, %v6315
        %v6326 = vadd.f32 %v6214, %v6317
        %v6327 = vadd.f32 %v6215, %v6321
        %v6328 = vadd.f32 %v6216, %v6323
        %s6329 = scalar_lea.vmem %s5, 2176
        %v6330 = vld [vmem:[%s6329] sm:$0xff]
        %v6331 = vld [vmem:[%s6329 + $0x8] sm:$0xff]
        %v6332 = vld [vmem:[%s6329 + $0x10] sm:$0xff]
        %v6333 = vld [vmem:[%s6329 + $0x18] sm:$0xff]
        %v6334 = vld [vmem:[%s6329 + $0x20] sm:$0xff]
        %v6335 = vld [vmem:[%s6329 + $0x28] sm:$0xff]
        %v6336 = vld [vmem:[%s6329 + $0x30] sm:$0xff]
        %v6337 = vld [vmem:[%s6329 + $0x38] sm:$0xff]
        %v6338 = vld [vmem:[%s6329 + $0x40] sm:$0xff]
        %v6339 = vld [vmem:[%s6329 + $0x48] sm:$0xff]
        %v6340 = vld [vmem:[%s6329 + $0x50] sm:$0xff]
        %v6341 = vld [vmem:[%s6329 + $0x58] sm:$0xff]
        %v6342 = vld [vmem:[%s6329 + $0x60] sm:$0xff]
        %v6343 = vld [vmem:[%s6329 + $0x68] sm:$0xff]
        %v6344 = vld [vmem:[%s6329 + $0x70] sm:$0xf]
        %v6345 = vld [vmem:[%s6329 + $0x78] sm:$0xf]
        %6346 = vrot.lane.b32.xlu0 %v6125, 116
        %v6347 = vpop.permute.xlu0 %6346
        %6348 = vrot.lane.b32.xlu0 %v6124, 116
        %v6349 = vpop.permute.xlu0 %6348
        %v6350 = vsel %vm4477, %v6347, 0
        %v6352 = vsel %vm4477, %v6349, 0
        %v6355 = vsel %vm562, %v6344, 0
        %v6358 = vsel %vm562, %v6345, 0
        %6360 = vmatprep.subr.mxu0 0.0
        %6361 = vmatpush1.msra.mxu0 0.0
        %6362 = vmatprep.subr.mxu0 0.0
        %6363 = vmatpush1.msra.mxu0 0.0
        %6364 = vmatprep.subr.mxu0 0.0
        %6365 = vmatpush1.msra.mxu0 0.0
        %6366 = vmatprep.subr.mxu0 0.0
        %6367 = vmatpush1.msra.mxu0 0.0
        %6368 = vmatprep.subr.mxu0 0.0
        %6369 = vmatpush1.msra.mxu0 0.0
        %6370 = vmatprep.subr.mxu0 0.0
        %6371 = vmatpush1.msra.mxu0 0.0
        %6372 = vmatprep.subr.mxu0 0.0
        %6373 = vmatpush1.msra.mxu0 0.0
        %6374 = vmatprep.subr.mxu0 0.0
        %6375 = vmatpush1.msra.mxu0 0.0
        %6376 = vmatprep.subr.mxu0 %v6358
        %6377 = vmatpush1.msra.mxu0 %v6355
        %6378 = vmatprep.subr.mxu0 %v6343
        %6379 = vmatpush1.msra.mxu0 %v6342
        %6380 = vmatprep.subr.mxu0 %v6341
        %6381 = vmatpush1.msra.mxu0 %v6340
        %6382 = vmatprep.subr.mxu0 %v6339
        %6383 = vmatpush1.msra.mxu0 %v6338
        %6384 = vmatprep.subr.mxu0 %v6337
        %6385 = vmatpush1.msra.mxu0 %v6336
        %6386 = vmatprep.subr.mxu0 %v6335
        %6387 = vmatpush1.msra.mxu0 %v6334
        %6388 = vmatprep.subr.mxu0 %v6333
        %6389 = vmatpush1.msra.mxu0 %v6332
        %6390 = vmatprep.subr.mxu0 %v6331
        %6391 = vmatpush1.msra.mxu0 %v6330
        %6392 = vmatprep.subr.mxu0 0.0
        %6393 = vmatpush2.msra.mxu0 0.0
        %6394 = vmatprep.subr.mxu0 0.0
        %6395 = vmatpush2.msra.mxu0 0.0
        %6396 = vmatprep.subr.mxu0 0.0
        %6397 = vmatpush2.msra.mxu0 0.0
        %6398 = vmatprep.subr.mxu0 0.0
        %6399 = vmatpush2.msra.mxu0 0.0
        %6400 = vmatprep.subr.mxu0 0.0
        %6401 = vmatpush2.msra.mxu0 0.0
        %6402 = vmatprep.subr.mxu0 0.0
        %6403 = vmatpush2.msra.mxu0 0.0
        %6404 = vmatprep.subr.mxu0 0.0
        %6405 = vmatpush2.msra.mxu0 0.0
        %6406 = vmatprep.subr.mxu0 0.0
        %6407 = vmatpush2.msra.mxu0 0.0
        %6408 = vmatprep.subr.mxu0 0.0
        %6409 = vmatpush2.msra.mxu0 0.0
        %6410 = vmatprep.subr.mxu0 0.0
        %6411 = vmatpush2.msra.mxu0 0.0
        %6412 = vmatprep.subr.mxu0 0.0
        %6413 = vmatpush2.msra.mxu0 0.0
        %6414 = vmatprep.subr.mxu0 0.0
        %6415 = vmatpush2.msra.mxu0 0.0
        %6416 = vmatprep.subr.mxu0 0.0
        %6417 = vmatpush2.msra.mxu0 0.0
        %6418 = vmatprep.subr.mxu0 0.0
        %6419 = vmatpush2.msra.mxu0 0.0
        %6420 = vmatprep.subr.mxu0 0.0
        %6421 = vmatpush2.msra.mxu0 0.0
        %6422 = vmatprep.subr.mxu0 0.0
        %6423 = vmatpush2.msra.mxu0 0.0
        %6424 = vmatprep.mubr.f32.mxu0 0.0
        %6425 = vmatmul.mubr.f32.gmra.mxu0 %v6350
        %v6426 = vpop.f32.mrf.mxu0
        %v6427 = vadd.f32 0.0, %v6426
        %v6428 = vpop.f32.mrf.mxu0
        %v6429 = vadd.f32 0.0, %v6428
        %6430 = vmatprep.mubr.f32.mxu0 0.0
        %6431 = vmatmul.mubr.f32.gmra.mxu0 %v6352
        %v6432 = vpop.f32.mrf.mxu0
        %v6433 = vadd.f32 0.0, %v6432
        %v6434 = vpop.f32.mrf.mxu0
        %v6435 = vadd.f32 0.0, %v6434
        %6436 = vdwg.mxu0
        %v6437 = vadd.f32 %v6325, %v6427
        %v6438 = vadd.f32 %v6326, %v6429
        %v6439 = vadd.f32 %v6327, %v6433
        %v6440 = vadd.f32 %v6328, %v6435
        %s6441 = scalar_lea.vmem %s5, 2304
        %v6442 = vld [vmem:[%s6441] sm:$0xff]
        %v6443 = vld [vmem:[%s6441 + $0x8] sm:$0xff]
        %v6444 = vld [vmem:[%s6441 + $0x10] sm:$0xff]
        %v6445 = vld [vmem:[%s6441 + $0x18] sm:$0xff]
        %v6446 = vld [vmem:[%s6441 + $0x20] sm:$0xff]
        %v6447 = vld [vmem:[%s6441 + $0x28] sm:$0xff]
        %v6448 = vld [vmem:[%s6441 + $0x30] sm:$0xff]
        %v6449 = vld [vmem:[%s6441 + $0x38] sm:$0xff]
        %v6450 = vld [vmem:[%s6441 + $0x40] sm:$0xff]
        %v6451 = vld [vmem:[%s6441 + $0x48] sm:$0xff]
        %v6452 = vld [vmem:[%s6441 + $0x50] sm:$0xff]
        %v6453 = vld [vmem:[%s6441 + $0x58] sm:$0xff]
        %v6454 = vld [vmem:[%s6441 + $0x60] sm:$0xff]
        %v6455 = vld [vmem:[%s6441 + $0x68] sm:$0xff]
        %v6456 = vld [vmem:[%s6441 + $0x70] sm:$0xf]
        %v6457 = vld [vmem:[%s6441 + $0x78] sm:$0xf]
        %6458 = vrot.lane.b32.xlu0 %v6125, 110
        %v6459 = vpop.permute.xlu0 %6458
        %6460 = vrot.lane.b32.xlu0 %v6124, 110
        %v6461 = vpop.permute.xlu0 %6460
        %v6462 = vsel %vm4477, %v6459, 0
        %v6464 = vsel %vm4477, %v6461, 0
        %v6467 = vsel %vm562, %v6456, 0
        %v6470 = vsel %vm562, %v6457, 0
        %6472 = vmatprep.subr.mxu0 0.0
        %6473 = vmatpush1.msra.mxu0 0.0
        %6474 = vmatprep.subr.mxu0 0.0
        %6475 = vmatpush1.msra.mxu0 0.0
        %6476 = vmatprep.subr.mxu0 0.0
        %6477 = vmatpush1.msra.mxu0 0.0
        %6478 = vmatprep.subr.mxu0 0.0
        %6479 = vmatpush1.msra.mxu0 0.0
        %6480 = vmatprep.subr.mxu0 0.0
        %6481 = vmatpush1.msra.mxu0 0.0
        %6482 = vmatprep.subr.mxu0 0.0
        %6483 = vmatpush1.msra.mxu0 0.0
        %6484 = vmatprep.subr.mxu0 0.0
        %6485 = vmatpush1.msra.mxu0 0.0
        %6486 = vmatprep.subr.mxu0 0.0
        %6487 = vmatpush1.msra.mxu0 0.0
        %6488 = vmatprep.subr.mxu0 %v6470
        %6489 = vmatpush1.msra.mxu0 %v6467
        %6490 = vmatprep.subr.mxu0 %v6455
        %6491 = vmatpush1.msra.mxu0 %v6454
        %6492 = vmatprep.subr.mxu0 %v6453
        %6493 = vmatpush1.msra.mxu0 %v6452
        %6494 = vmatprep.subr.mxu0 %v6451
        %6495 = vmatpush1.msra.mxu0 %v6450
        %6496 = vmatprep.subr.mxu0 %v6449
        %6497 = vmatpush1.msra.mxu0 %v6448
        %6498 = vmatprep.subr.mxu0 %v6447
        %6499 = vmatpush1.msra.mxu0 %v6446
        %6500 = vmatprep.subr.mxu0 %v6445
        %6501 = vmatpush1.msra.mxu0 %v6444
        %6502 = vmatprep.subr.mxu0 %v6443
        %6503 = vmatpush1.msra.mxu0 %v6442
        %6504 = vmatprep.subr.mxu0 0.0
        %6505 = vmatpush2.msra.mxu0 0.0
        %6506 = vmatprep.subr.mxu0 0.0
        %6507 = vmatpush2.msra.mxu0 0.0
        %6508 = vmatprep.subr.mxu0 0.0
        %6509 = vmatpush2.msra.mxu0 0.0
        %6510 = vmatprep.subr.mxu0 0.0
        %6511 = vmatpush2.msra.mxu0 0.0
        %6512 = vmatprep.subr.mxu0 0.0
        %6513 = vmatpush2.msra.mxu0 0.0
        %6514 = vmatprep.subr.mxu0 0.0
        %6515 = vmatpush2.msra.mxu0 0.0
        %6516 = vmatprep.subr.mxu0 0.0
        %6517 = vmatpush2.msra.mxu0 0.0
        %6518 = vmatprep.subr.mxu0 0.0
        %6519 = vmatpush2.msra.mxu0 0.0
        %6520 = vmatprep.subr.mxu0 0.0
        %6521 = vmatpush2.msra.mxu0 0.0
        %6522 = vmatprep.subr.mxu0 0.0
        %6523 = vmatpush2.msra.mxu0 0.0
        %6524 = vmatprep.subr.mxu0 0.0
        %6525 = vmatpush2.msra.mxu0 0.0
        %6526 = vmatprep.subr.mxu0 0.0
        %6527 = vmatpush2.msra.mxu0 0.0
        %6528 = vmatprep.subr.mxu0 0.0
        %6529 = vmatpush2.msra.mxu0 0.0
        %6530 = vmatprep.subr.mxu0 0.0
        %6531 = vmatpush2.msra.mxu0 0.0
        %6532 = vmatprep.subr.mxu0 0.0
        %6533 = vmatpush2.msra.mxu0 0.0
        %6534 = vmatprep.subr.mxu0 0.0
        %6535 = vmatpush2.msra.mxu0 0.0
        %6536 = vmatprep.mubr.f32.mxu0 0.0
        %6537 = vmatmul.mubr.f32.gmra.mxu0 %v6462
        %v6538 = vpop.f32.mrf.mxu0
        %v6539 = vadd.f32 0.0, %v6538
        %v6540 = vpop.f32.mrf.mxu0
        %v6541 = vadd.f32 0.0, %v6540
        %6542 = vmatprep.mubr.f32.mxu0 0.0
        %6543 = vmatmul.mubr.f32.gmra.mxu0 %v6464
        %v6544 = vpop.f32.mrf.mxu0
        %v6545 = vadd.f32 0.0, %v6544
        %v6546 = vpop.f32.mrf.mxu0
        %v6547 = vadd.f32 0.0, %v6546
        %6548 = vdwg.mxu0
        %v6549 = vadd.f32 %v6437, %v6539
        %v6550 = vadd.f32 %v6438, %v6541
        %v6551 = vadd.f32 %v6439, %v6545
        %v6552 = vadd.f32 %v6440, %v6547
        %s6553 = scalar_lea.vmem %s5, 2432
        %v6554 = vld [vmem:[%s6553] sm:$0xff]
        %v6555 = vld [vmem:[%s6553 + $0x8] sm:$0xff]
        %v6556 = vld [vmem:[%s6553 + $0x10] sm:$0xff]
        %v6557 = vld [vmem:[%s6553 + $0x18] sm:$0xff]
        %v6558 = vld [vmem:[%s6553 + $0x20] sm:$0xff]
        %v6559 = vld [vmem:[%s6553 + $0x28] sm:$0xff]
        %v6560 = vld [vmem:[%s6553 + $0x30] sm:$0xff]
        %v6561 = vld [vmem:[%s6553 + $0x38] sm:$0xff]
        %v6562 = vld [vmem:[%s6553 + $0x40] sm:$0xff]
        %v6563 = vld [vmem:[%s6553 + $0x48] sm:$0xff]
        %v6564 = vld [vmem:[%s6553 + $0x50] sm:$0xff]
        %v6565 = vld [vmem:[%s6553 + $0x58] sm:$0xff]
        %v6566 = vld [vmem:[%s6553 + $0x60] sm:$0xff]
        %v6567 = vld [vmem:[%s6553 + $0x68] sm:$0xff]
        %v6568 = vld [vmem:[%s6553 + $0x70] sm:$0xf]
        %v6569 = vld [vmem:[%s6553 + $0x78] sm:$0xf]
        %6570 = vrot.lane.b32.xlu0 %v6125, 104
        %v6571 = vpop.permute.xlu0 %6570
        %6572 = vrot.lane.b32.xlu0 %v6124, 104
        %v6573 = vpop.permute.xlu0 %6572
        %v6574 = vsel %vm4477, %v6571, 0
        %v6576 = vsel %vm4477, %v6573, 0
        %v6579 = vsel %vm562, %v6568, 0
        %v6582 = vsel %vm562, %v6569, 0
        %6584 = vmatprep.subr.mxu0 0.0
        %6585 = vmatpush1.msra.mxu0 0.0
        %6586 = vmatprep.subr.mxu0 0.0
        %6587 = vmatpush1.msra.mxu0 0.0
        %6588 = vmatprep.subr.mxu0 0.0
        %6589 = vmatpush1.msra.mxu0 0.0
        %6590 = vmatprep.subr.mxu0 0.0
        %6591 = vmatpush1.msra.mxu0 0.0
        %6592 = vmatprep.subr.mxu0 0.0
        %6593 = vmatpush1.msra.mxu0 0.0
        %6594 = vmatprep.subr.mxu0 0.0
        %6595 = vmatpush1.msra.mxu0 0.0
        %6596 = vmatprep.subr.mxu0 0.0
        %6597 = vmatpush1.msra.mxu0 0.0
        %6598 = vmatprep.subr.mxu0 0.0
        %6599 = vmatpush1.msra.mxu0 0.0
        %6600 = vmatprep.subr.mxu0 %v6582
        %6601 = vmatpush1.msra.mxu0 %v6579
        %6602 = vmatprep.subr.mxu0 %v6567
        %6603 = vmatpush1.msra.mxu0 %v6566
        %6604 = vmatprep.subr.mxu0 %v6565
        %6605 = vmatpush1.msra.mxu0 %v6564
        %6606 = vmatprep.subr.mxu0 %v6563
        %6607 = vmatpush1.msra.mxu0 %v6562
        %6608 = vmatprep.subr.mxu0 %v6561
        %6609 = vmatpush1.msra.mxu0 %v6560
        %6610 = vmatprep.subr.mxu0 %v6559
        %6611 = vmatpush1.msra.mxu0 %v6558
        %6612 = vmatprep.subr.mxu0 %v6557
        %6613 = vmatpush1.msra.mxu0 %v6556
        %6614 = vmatprep.subr.mxu0 %v6555
        %6615 = vmatpush1.msra.mxu0 %v6554
        %6616 = vmatprep.subr.mxu0 0.0
        %6617 = vmatpush2.msra.mxu0 0.0
        %6618 = vmatprep.subr.mxu0 0.0
        %6619 = vmatpush2.msra.mxu0 0.0
        %6620 = vmatprep.subr.mxu0 0.0
        %6621 = vmatpush2.msra.mxu0 0.0
        %6622 = vmatprep.subr.mxu0 0.0
        %6623 = vmatpush2.msra.mxu0 0.0
        %6624 = vmatprep.subr.mxu0 0.0
        %6625 = vmatpush2.msra.mxu0 0.0
        %6626 = vmatprep.subr.mxu0 0.0
        %6627 = vmatpush2.msra.mxu0 0.0
        %6628 = vmatprep.subr.mxu0 0.0
        %6629 = vmatpush2.msra.mxu0 0.0
        %6630 = vmatprep.subr.mxu0 0.0
        %6631 = vmatpush2.msra.mxu0 0.0
        %6632 = vmatprep.subr.mxu0 0.0
        %6633 = vmatpush2.msra.mxu0 0.0
        %6634 = vmatprep.subr.mxu0 0.0
        %6635 = vmatpush2.msra.mxu0 0.0
        %6636 = vmatprep.subr.mxu0 0.0
        %6637 = vmatpush2.msra.mxu0 0.0
        %6638 = vmatprep.subr.mxu0 0.0
        %6639 = vmatpush2.msra.mxu0 0.0
        %6640 = vmatprep.subr.mxu0 0.0
        %6641 = vmatpush2.msra.mxu0 0.0
        %6642 = vmatprep.subr.mxu0 0.0
        %6643 = vmatpush2.msra.mxu0 0.0
        %6644 = vmatprep.subr.mxu0 0.0
        %6645 = vmatpush2.msra.mxu0 0.0
        %6646 = vmatprep.subr.mxu0 0.0
        %6647 = vmatpush2.msra.mxu0 0.0
        %6648 = vmatprep.mubr.f32.mxu0 0.0
        %6649 = vmatmul.mubr.f32.gmra.mxu0 %v6574
        %v6650 = vpop.f32.mrf.mxu0
        %v6651 = vadd.f32 0.0, %v6650
        %v6652 = vpop.f32.mrf.mxu0
        %v6653 = vadd.f32 0.0, %v6652
        %6654 = vmatprep.mubr.f32.mxu0 0.0
        %6655 = vmatmul.mubr.f32.gmra.mxu0 %v6576
        %v6656 = vpop.f32.mrf.mxu0
        %v6657 = vadd.f32 0.0, %v6656
        %v6658 = vpop.f32.mrf.mxu0
        %v6659 = vadd.f32 0.0, %v6658
        %6660 = vdwg.mxu0
        %v6661 = vadd.f32 %v6549, %v6651
        %v6662 = vadd.f32 %v6550, %v6653
        %v6663 = vadd.f32 %v6551, %v6657
        %v6664 = vadd.f32 %v6552, %v6659
        %s6665 = scalar_lea.vmem %s5, 2560
        %v6666 = vld [vmem:[%s6665] sm:$0xff]
        %v6667 = vld [vmem:[%s6665 + $0x8] sm:$0xff]
        %v6668 = vld [vmem:[%s6665 + $0x10] sm:$0xff]
        %v6669 = vld [vmem:[%s6665 + $0x18] sm:$0xff]
        %v6670 = vld [vmem:[%s6665 + $0x20] sm:$0xff]
        %v6671 = vld [vmem:[%s6665 + $0x28] sm:$0xff]
        %v6672 = vld [vmem:[%s6665 + $0x30] sm:$0xff]
        %v6673 = vld [vmem:[%s6665 + $0x38] sm:$0xff]
        %v6674 = vld [vmem:[%s6665 + $0x40] sm:$0xff]
        %v6675 = vld [vmem:[%s6665 + $0x48] sm:$0xff]
        %v6676 = vld [vmem:[%s6665 + $0x50] sm:$0xff]
        %v6677 = vld [vmem:[%s6665 + $0x58] sm:$0xff]
        %v6678 = vld [vmem:[%s6665 + $0x60] sm:$0xff]
        %v6679 = vld [vmem:[%s6665 + $0x68] sm:$0xff]
        %v6680 = vld [vmem:[%s6665 + $0x70] sm:$0xf]
        %v6681 = vld [vmem:[%s6665 + $0x78] sm:$0xf]
        %v6682 = vrot.slane %v4436, 4
        %v6683 = vrot.slane %v4437, 4
        %v6684 = vsel %vm562, %v6682, %v6683
        %v6685 = vsel %vm4477, %v6684, 0
        %v6687 = vsel %vm4477, %v6683, 0
        %v6690 = vsel %vm562, %v6680, 0
        %v6693 = vsel %vm562, %v6681, 0
        %6695 = vmatprep.subr.mxu0 0.0
        %6696 = vmatpush1.msra.mxu0 0.0
        %6697 = vmatprep.subr.mxu0 0.0
        %6698 = vmatpush1.msra.mxu0 0.0
        %6699 = vmatprep.subr.mxu0 0.0
        %6700 = vmatpush1.msra.mxu0 0.0
        %6701 = vmatprep.subr.mxu0 0.0
        %6702 = vmatpush1.msra.mxu0 0.0
        %6703 = vmatprep.subr.mxu0 0.0
        %6704 = vmatpush1.msra.mxu0 0.0
        %6705 = vmatprep.subr.mxu0 0.0
        %6706 = vmatpush1.msra.mxu0 0.0
        %6707 = vmatprep.subr.mxu0 0.0
        %6708 = vmatpush1.msra.mxu0 0.0
        %6709 = vmatprep.subr.mxu0 0.0
        %6710 = vmatpush1.msra.mxu0 0.0
        %6711 = vmatprep.subr.mxu0 %v6693
        %6712 = vmatpush1.msra.mxu0 %v6690
        %6713 = vmatprep.subr.mxu0 %v6679
        %6714 = vmatpush1.msra.mxu0 %v6678
        %6715 = vmatprep.subr.mxu0 %v6677
        %6716 = vmatpush1.msra.mxu0 %v6676
        %6717 = vmatprep.subr.mxu0 %v6675
        %6718 = vmatpush1.msra.mxu0 %v6674
        %6719 = vmatprep.subr.mxu0 %v6673
        %6720 = vmatpush1.msra.mxu0 %v6672
        %6721 = vmatprep.subr.mxu0 %v6671
        %6722 = vmatpush1.msra.mxu0 %v6670
        %6723 = vmatprep.subr.mxu0 %v6669
        %6724 = vmatpush1.msra.mxu0 %v6668
        %6725 = vmatprep.subr.mxu0 %v6667
        %6726 = vmatpush1.msra.mxu0 %v6666
        %6727 = vmatprep.subr.mxu0 0.0
        %6728 = vmatpush2.msra.mxu0 0.0
        %6729 = vmatprep.subr.mxu0 0.0
        %6730 = vmatpush2.msra.mxu0 0.0
        %6731 = vmatprep.subr.mxu0 0.0
        %6732 = vmatpush2.msra.mxu0 0.0
        %6733 = vmatprep.subr.mxu0 0.0
        %6734 = vmatpush2.msra.mxu0 0.0
        %6735 = vmatprep.subr.mxu0 0.0
        %6736 = vmatpush2.msra.mxu0 0.0
        %6737 = vmatprep.subr.mxu0 0.0
        %6738 = vmatpush2.msra.mxu0 0.0
        %6739 = vmatprep.subr.mxu0 0.0
        %6740 = vmatpush2.msra.mxu0 0.0
        %6741 = vmatprep.subr.mxu0 0.0
        %6742 = vmatpush2.msra.mxu0 0.0
        %6743 = vmatprep.subr.mxu0 0.0
        %6744 = vmatpush2.msra.mxu0 0.0
        %6745 = vmatprep.subr.mxu0 0.0
        %6746 = vmatpush2.msra.mxu0 0.0
        %6747 = vmatprep.subr.mxu0 0.0
        %6748 = vmatpush2.msra.mxu0 0.0
        %6749 = vmatprep.subr.mxu0 0.0
        %6750 = vmatpush2.msra.mxu0 0.0
        %6751 = vmatprep.subr.mxu0 0.0
        %6752 = vmatpush2.msra.mxu0 0.0
        %6753 = vmatprep.subr.mxu0 0.0
        %6754 = vmatpush2.msra.mxu0 0.0
        %6755 = vmatprep.subr.mxu0 0.0
        %6756 = vmatpush2.msra.mxu0 0.0
        %6757 = vmatprep.subr.mxu0 0.0
        %6758 = vmatpush2.msra.mxu0 0.0
        %6759 = vmatprep.mubr.f32.mxu0 0.0
        %6760 = vmatmul.mubr.f32.gmra.mxu0 %v6685
        %v6761 = vpop.f32.mrf.mxu0
        %v6762 = vadd.f32 0.0, %v6761
        %v6763 = vpop.f32.mrf.mxu0
        %v6764 = vadd.f32 0.0, %v6763
        %6765 = vmatprep.mubr.f32.mxu0 0.0
        %6766 = vmatmul.mubr.f32.gmra.mxu0 %v6687
        %v6767 = vpop.f32.mrf.mxu0
        %v6768 = vadd.f32 0.0, %v6767
        %v6769 = vpop.f32.mrf.mxu0
        %v6770 = vadd.f32 0.0, %v6769
        %6771 = vdwg.mxu0
        %v6772 = vadd.f32 %v6661, %v6762
        %v6773 = vadd.f32 %v6662, %v6764
        %v6774 = vadd.f32 %v6663, %v6768
        %v6775 = vadd.f32 %v6664, %v6770
        %s6776 = scalar_lea.vmem %s5, 2688
        %v6777 = vld [vmem:[%s6776] sm:$0xff]
        %v6778 = vld [vmem:[%s6776 + $0x8] sm:$0xff]
        %v6779 = vld [vmem:[%s6776 + $0x10] sm:$0xff]
        %v6780 = vld [vmem:[%s6776 + $0x18] sm:$0xff]
        %v6781 = vld [vmem:[%s6776 + $0x20] sm:$0xff]
        %v6782 = vld [vmem:[%s6776 + $0x28] sm:$0xff]
        %v6783 = vld [vmem:[%s6776 + $0x30] sm:$0xff]
        %v6784 = vld [vmem:[%s6776 + $0x38] sm:$0xff]
        %v6785 = vld [vmem:[%s6776 + $0x40] sm:$0xff]
        %v6786 = vld [vmem:[%s6776 + $0x48] sm:$0xff]
        %v6787 = vld [vmem:[%s6776 + $0x50] sm:$0xff]
        %v6788 = vld [vmem:[%s6776 + $0x58] sm:$0xff]
        %v6789 = vld [vmem:[%s6776 + $0x60] sm:$0xff]
        %v6790 = vld [vmem:[%s6776 + $0x68] sm:$0xff]
        %v6791 = vld [vmem:[%s6776 + $0x70] sm:$0xf]
        %v6792 = vld [vmem:[%s6776 + $0x78] sm:$0xf]
        %6793 = vrot.lane.b32.xlu0 %v6684, 122
        %v6794 = vpop.permute.xlu0 %6793
        %6795 = vrot.lane.b32.xlu0 %v6683, 122
        %v6796 = vpop.permute.xlu0 %6795
        %v6797 = vsel %vm4477, %v6794, 0
        %v6799 = vsel %vm4477, %v6796, 0
        %v6802 = vsel %vm562, %v6791, 0
        %v6805 = vsel %vm562, %v6792, 0
        %6807 = vmatprep.subr.mxu0 0.0
        %6808 = vmatpush1.msra.mxu0 0.0
        %6809 = vmatprep.subr.mxu0 0.0
        %6810 = vmatpush1.msra.mxu0 0.0
        %6811 = vmatprep.subr.mxu0 0.0
        %6812 = vmatpush1.msra.mxu0 0.0
        %6813 = vmatprep.subr.mxu0 0.0
        %6814 = vmatpush1.msra.mxu0 0.0
        %6815 = vmatprep.subr.mxu0 0.0
        %6816 = vmatpush1.msra.mxu0 0.0
        %6817 = vmatprep.subr.mxu0 0.0
        %6818 = vmatpush1.msra.mxu0 0.0
        %6819 = vmatprep.subr.mxu0 0.0
        %6820 = vmatpush1.msra.mxu0 0.0
        %6821 = vmatprep.subr.mxu0 0.0
        %6822 = vmatpush1.msra.mxu0 0.0
        %6823 = vmatprep.subr.mxu0 %v6805
        %6824 = vmatpush1.msra.mxu0 %v6802
        %6825 = vmatprep.subr.mxu0 %v6790
        %6826 = vmatpush1.msra.mxu0 %v6789
        %6827 = vmatprep.subr.mxu0 %v6788
        %6828 = vmatpush1.msra.mxu0 %v6787
        %6829 = vmatprep.subr.mxu0 %v6786
        %6830 = vmatpush1.msra.mxu0 %v6785
        %6831 = vmatprep.subr.mxu0 %v6784
        %6832 = vmatpush1.msra.mxu0 %v6783
        %6833 = vmatprep.subr.mxu0 %v6782
        %6834 = vmatpush1.msra.mxu0 %v6781
        %6835 = vmatprep.subr.mxu0 %v6780
        %6836 = vmatpush1.msra.mxu0 %v6779
        %6837 = vmatprep.subr.mxu0 %v6778
        %6838 = vmatpush1.msra.mxu0 %v6777
        %6839 = vmatprep.subr.mxu0 0.0
        %6840 = vmatpush2.msra.mxu0 0.0
        %6841 = vmatprep.subr.mxu0 0.0
        %6842 = vmatpush2.msra.mxu0 0.0
        %6843 = vmatprep.subr.mxu0 0.0
        %6844 = vmatpush2.msra.mxu0 0.0
        %6845 = vmatprep.subr.mxu0 0.0
        %6846 = vmatpush2.msra.mxu0 0.0
        %6847 = vmatprep.subr.mxu0 0.0
        %6848 = vmatpush2.msra.mxu0 0.0
        %6849 = vmatprep.subr.mxu0 0.0
        %6850 = vmatpush2.msra.mxu0 0.0
        %6851 = vmatprep.subr.mxu0 0.0
        %6852 = vmatpush2.msra.mxu0 0.0
        %6853 = vmatprep.subr.mxu0 0.0
        %6854 = vmatpush2.msra.mxu0 0.0
        %6855 = vmatprep.subr.mxu0 0.0
        %6856 = vmatpush2.msra.mxu0 0.0
        %6857 = vmatprep.subr.mxu0 0.0
        %6858 = vmatpush2.msra.mxu0 0.0
        %6859 = vmatprep.subr.mxu0 0.0
        %6860 = vmatpush2.msra.mxu0 0.0
        %6861 = vmatprep.subr.mxu0 0.0
        %6862 = vmatpush2.msra.mxu0 0.0
        %6863 = vmatprep.subr.mxu0 0.0
        %6864 = vmatpush2.msra.mxu0 0.0
        %6865 = vmatprep.subr.mxu0 0.0
        %6866 = vmatpush2.msra.mxu0 0.0
        %6867 = vmatprep.subr.mxu0 0.0
        %6868 = vmatpush2.msra.mxu0 0.0
        %6869 = vmatprep.subr.mxu0 0.0
        %6870 = vmatpush2.msra.mxu0 0.0
        %6871 = vmatprep.mubr.f32.mxu0 0.0
        %6872 = vmatmul.mubr.f32.gmra.mxu0 %v6797
        %v6873 = vpop.f32.mrf.mxu0
        %v6874 = vadd.f32 0.0, %v6873
        %v6875 = vpop.f32.mrf.mxu0
        %v6876 = vadd.f32 0.0, %v6875
        %6877 = vmatprep.mubr.f32.mxu0 0.0
        %6878 = vmatmul.mubr.f32.gmra.mxu0 %v6799
        %v6879 = vpop.f32.mrf.mxu0
        %v6880 = vadd.f32 0.0, %v6879
        %v6881 = vpop.f32.mrf.mxu0
        %v6882 = vadd.f32 0.0, %v6881
        %6883 = vdwg.mxu0
        %v6884 = vadd.f32 %v6772, %v6874
        %v6885 = vadd.f32 %v6773, %v6876
        %v6886 = vadd.f32 %v6774, %v6880
        %v6887 = vadd.f32 %v6775, %v6882
        %s6888 = scalar_lea.vmem %s5, 2816
        %v6889 = vld [vmem:[%s6888] sm:$0xff]
        %v6890 = vld [vmem:[%s6888 + $0x8] sm:$0xff]
        %v6891 = vld [vmem:[%s6888 + $0x10] sm:$0xff]
        %v6892 = vld [vmem:[%s6888 + $0x18] sm:$0xff]
        %v6893 = vld [vmem:[%s6888 + $0x20] sm:$0xff]
        %v6894 = vld [vmem:[%s6888 + $0x28] sm:$0xff]
        %v6895 = vld [vmem:[%s6888 + $0x30] sm:$0xff]
        %v6896 = vld [vmem:[%s6888 + $0x38] sm:$0xff]
        %v6897 = vld [vmem:[%s6888 + $0x40] sm:$0xff]
        %v6898 = vld [vmem:[%s6888 + $0x48] sm:$0xff]
        %v6899 = vld [vmem:[%s6888 + $0x50] sm:$0xff]
        %v6900 = vld [vmem:[%s6888 + $0x58] sm:$0xff]
        %v6901 = vld [vmem:[%s6888 + $0x60] sm:$0xff]
        %v6902 = vld [vmem:[%s6888 + $0x68] sm:$0xff]
        %v6903 = vld [vmem:[%s6888 + $0x70] sm:$0xf]
        %v6904 = vld [vmem:[%s6888 + $0x78] sm:$0xf]
        %6905 = vrot.lane.b32.xlu0 %v6684, 116
        %v6906 = vpop.permute.xlu0 %6905
        %6907 = vrot.lane.b32.xlu0 %v6683, 116
        %v6908 = vpop.permute.xlu0 %6907
        %v6909 = vsel %vm4477, %v6906, 0
        %v6911 = vsel %vm4477, %v6908, 0
        %v6914 = vsel %vm562, %v6903, 0
        %v6917 = vsel %vm562, %v6904, 0
        %6919 = vmatprep.subr.mxu0 0.0
        %6920 = vmatpush1.msra.mxu0 0.0
        %6921 = vmatprep.subr.mxu0 0.0
        %6922 = vmatpush1.msra.mxu0 0.0
        %6923 = vmatprep.subr.mxu0 0.0
        %6924 = vmatpush1.msra.mxu0 0.0
        %6925 = vmatprep.subr.mxu0 0.0
        %6926 = vmatpush1.msra.mxu0 0.0
        %6927 = vmatprep.subr.mxu0 0.0
        %6928 = vmatpush1.msra.mxu0 0.0
        %6929 = vmatprep.subr.mxu0 0.0
        %6930 = vmatpush1.msra.mxu0 0.0
        %6931 = vmatprep.subr.mxu0 0.0
        %6932 = vmatpush1.msra.mxu0 0.0
        %6933 = vmatprep.subr.mxu0 0.0
        %6934 = vmatpush1.msra.mxu0 0.0
        %6935 = vmatprep.subr.mxu0 %v6917
        %6936 = vmatpush1.msra.mxu0 %v6914
        %6937 = vmatprep.subr.mxu0 %v6902
        %6938 = vmatpush1.msra.mxu0 %v6901
        %6939 = vmatprep.subr.mxu0 %v6900
        %6940 = vmatpush1.msra.mxu0 %v6899
        %6941 = vmatprep.subr.mxu0 %v6898
        %6942 = vmatpush1.msra.mxu0 %v6897
        %6943 = vmatprep.subr.mxu0 %v6896
        %6944 = vmatpush1.msra.mxu0 %v6895
        %6945 = vmatprep.subr.mxu0 %v6894
        %6946 = vmatpush1.msra.mxu0 %v6893
        %6947 = vmatprep.subr.mxu0 %v6892
        %6948 = vmatpush1.msra.mxu0 %v6891
        %6949 = vmatprep.subr.mxu0 %v6890
        %6950 = vmatpush1.msra.mxu0 %v6889
        %6951 = vmatprep.subr.mxu0 0.0
        %6952 = vmatpush2.msra.mxu0 0.0
        %6953 = vmatprep.subr.mxu0 0.0
        %6954 = vmatpush2.msra.mxu0 0.0
        %6955 = vmatprep.subr.mxu0 0.0
        %6956 = vmatpush2.msra.mxu0 0.0
        %6957 = vmatprep.subr.mxu0 0.0
        %6958 = vmatpush2.msra.mxu0 0.0
        %6959 = vmatprep.subr.mxu0 0.0
        %6960 = vmatpush2.msra.mxu0 0.0
        %6961 = vmatprep.subr.mxu0 0.0
        %6962 = vmatpush2.msra.mxu0 0.0
        %6963 = vmatprep.subr.mxu0 0.0
        %6964 = vmatpush2.msra.mxu0 0.0
        %6965 = vmatprep.subr.mxu0 0.0
        %6966 = vmatpush2.msra.mxu0 0.0
        %6967 = vmatprep.subr.mxu0 0.0
        %6968 = vmatpush2.msra.mxu0 0.0
        %6969 = vmatprep.subr.mxu0 0.0
        %6970 = vmatpush2.msra.mxu0 0.0
        %6971 = vmatprep.subr.mxu0 0.0
        %6972 = vmatpush2.msra.mxu0 0.0
        %6973 = vmatprep.subr.mxu0 0.0
        %6974 = vmatpush2.msra.mxu0 0.0
        %6975 = vmatprep.subr.mxu0 0.0
        %6976 = vmatpush2.msra.mxu0 0.0
        %6977 = vmatprep.subr.mxu0 0.0
        %6978 = vmatpush2.msra.mxu0 0.0
        %6979 = vmatprep.subr.mxu0 0.0
        %6980 = vmatpush2.msra.mxu0 0.0
        %6981 = vmatprep.subr.mxu0 0.0
        %6982 = vmatpush2.msra.mxu0 0.0
        %6983 = vmatprep.mubr.f32.mxu0 0.0
        %6984 = vmatmul.mubr.f32.gmra.mxu0 %v6909
        %v6985 = vpop.f32.mrf.mxu0
        %v6986 = vadd.f32 0.0, %v6985
        %v6987 = vpop.f32.mrf.mxu0
        %v6988 = vadd.f32 0.0, %v6987
        %6989 = vmatprep.mubr.f32.mxu0 0.0
        %6990 = vmatmul.mubr.f32.gmra.mxu0 %v6911
        %v6991 = vpop.f32.mrf.mxu0
        %v6992 = vadd.f32 0.0, %v6991
        %v6993 = vpop.f32.mrf.mxu0
        %v6994 = vadd.f32 0.0, %v6993
        %6995 = vdwg.mxu0
        %v6996 = vadd.f32 %v6884, %v6986
        %v6997 = vadd.f32 %v6885, %v6988
        %v6998 = vadd.f32 %v6886, %v6992
        %v6999 = vadd.f32 %v6887, %v6994
        %s7000 = scalar_lea.vmem %s5, 2944
        %v7001 = vld [vmem:[%s7000] sm:$0xff]
        %v7002 = vld [vmem:[%s7000 + $0x8] sm:$0xff]
        %v7003 = vld [vmem:[%s7000 + $0x10] sm:$0xff]
        %v7004 = vld [vmem:[%s7000 + $0x18] sm:$0xff]
        %v7005 = vld [vmem:[%s7000 + $0x20] sm:$0xff]
        %v7006 = vld [vmem:[%s7000 + $0x28] sm:$0xff]
        %v7007 = vld [vmem:[%s7000 + $0x30] sm:$0xff]
        %v7008 = vld [vmem:[%s7000 + $0x38] sm:$0xff]
        %v7009 = vld [vmem:[%s7000 + $0x40] sm:$0xff]
        %v7010 = vld [vmem:[%s7000 + $0x48] sm:$0xff]
        %v7011 = vld [vmem:[%s7000 + $0x50] sm:$0xff]
        %v7012 = vld [vmem:[%s7000 + $0x58] sm:$0xff]
        %v7013 = vld [vmem:[%s7000 + $0x60] sm:$0xff]
        %v7014 = vld [vmem:[%s7000 + $0x68] sm:$0xff]
        %v7015 = vld [vmem:[%s7000 + $0x70] sm:$0xf]
        %v7016 = vld [vmem:[%s7000 + $0x78] sm:$0xf]
        %7017 = vrot.lane.b32.xlu0 %v6684, 110
        %v7018 = vpop.permute.xlu0 %7017
        %7019 = vrot.lane.b32.xlu0 %v6683, 110
        %v7020 = vpop.permute.xlu0 %7019
        %v7021 = vsel %vm4477, %v7018, 0
        %v7023 = vsel %vm4477, %v7020, 0
        %v7026 = vsel %vm562, %v7015, 0
        %v7029 = vsel %vm562, %v7016, 0
        %7031 = vmatprep.subr.mxu0 0.0
        %7032 = vmatpush1.msra.mxu0 0.0
        %7033 = vmatprep.subr.mxu0 0.0
        %7034 = vmatpush1.msra.mxu0 0.0
        %7035 = vmatprep.subr.mxu0 0.0
        %7036 = vmatpush1.msra.mxu0 0.0
        %7037 = vmatprep.subr.mxu0 0.0
        %7038 = vmatpush1.msra.mxu0 0.0
        %7039 = vmatprep.subr.mxu0 0.0
        %7040 = vmatpush1.msra.mxu0 0.0
        %7041 = vmatprep.subr.mxu0 0.0
        %7042 = vmatpush1.msra.mxu0 0.0
        %7043 = vmatprep.subr.mxu0 0.0
        %7044 = vmatpush1.msra.mxu0 0.0
        %7045 = vmatprep.subr.mxu0 0.0
        %7046 = vmatpush1.msra.mxu0 0.0
        %7047 = vmatprep.subr.mxu0 %v7029
        %7048 = vmatpush1.msra.mxu0 %v7026
        %7049 = vmatprep.subr.mxu0 %v7014
        %7050 = vmatpush1.msra.mxu0 %v7013
        %7051 = vmatprep.subr.mxu0 %v7012
        %7052 = vmatpush1.msra.mxu0 %v7011
        %7053 = vmatprep.subr.mxu0 %v7010
        %7054 = vmatpush1.msra.mxu0 %v7009
        %7055 = vmatprep.subr.mxu0 %v7008
        %7056 = vmatpush1.msra.mxu0 %v7007
        %7057 = vmatprep.subr.mxu0 %v7006
        %7058 = vmatpush1.msra.mxu0 %v7005
        %7059 = vmatprep.subr.mxu0 %v7004
        %7060 = vmatpush1.msra.mxu0 %v7003
        %7061 = vmatprep.subr.mxu0 %v7002
        %7062 = vmatpush1.msra.mxu0 %v7001
        %7063 = vmatprep.subr.mxu0 0.0
        %7064 = vmatpush2.msra.mxu0 0.0
        %7065 = vmatprep.subr.mxu0 0.0
        %7066 = vmatpush2.msra.mxu0 0.0
        %7067 = vmatprep.subr.mxu0 0.0
        %7068 = vmatpush2.msra.mxu0 0.0
        %7069 = vmatprep.subr.mxu0 0.0
        %7070 = vmatpush2.msra.mxu0 0.0
        %7071 = vmatprep.subr.mxu0 0.0
        %7072 = vmatpush2.msra.mxu0 0.0
        %7073 = vmatprep.subr.mxu0 0.0
        %7074 = vmatpush2.msra.mxu0 0.0
        %7075 = vmatprep.subr.mxu0 0.0
        %7076 = vmatpush2.msra.mxu0 0.0
        %7077 = vmatprep.subr.mxu0 0.0
        %7078 = vmatpush2.msra.mxu0 0.0
        %7079 = vmatprep.subr.mxu0 0.0
        %7080 = vmatpush2.msra.mxu0 0.0
        %7081 = vmatprep.subr.mxu0 0.0
        %7082 = vmatpush2.msra.mxu0 0.0
        %7083 = vmatprep.subr.mxu0 0.0
        %7084 = vmatpush2.msra.mxu0 0.0
        %7085 = vmatprep.subr.mxu0 0.0
        %7086 = vmatpush2.msra.mxu0 0.0
        %7087 = vmatprep.subr.mxu0 0.0
        %7088 = vmatpush2.msra.mxu0 0.0
        %7089 = vmatprep.subr.mxu0 0.0
        %7090 = vmatpush2.msra.mxu0 0.0
        %7091 = vmatprep.subr.mxu0 0.0
        %7092 = vmatpush2.msra.mxu0 0.0
        %7093 = vmatprep.subr.mxu0 0.0
        %7094 = vmatpush2.msra.mxu0 0.0
        %7095 = vmatprep.mubr.f32.mxu0 0.0
        %7096 = vmatmul.mubr.f32.gmra.mxu0 %v7021
        %v7097 = vpop.f32.mrf.mxu0
        %v7098 = vadd.f32 0.0, %v7097
        %v7099 = vpop.f32.mrf.mxu0
        %v7100 = vadd.f32 0.0, %v7099
        %7101 = vmatprep.mubr.f32.mxu0 0.0
        %7102 = vmatmul.mubr.f32.gmra.mxu0 %v7023
        %v7103 = vpop.f32.mrf.mxu0
        %v7104 = vadd.f32 0.0, %v7103
        %v7105 = vpop.f32.mrf.mxu0
        %v7106 = vadd.f32 0.0, %v7105
        %7107 = vdwg.mxu0
        %v7108 = vadd.f32 %v6996, %v7098
        %v7109 = vadd.f32 %v6997, %v7100
        %v7110 = vadd.f32 %v6998, %v7104
        %v7111 = vadd.f32 %v6999, %v7106
        %s7112 = scalar_lea.vmem %s5, 3072
        %v7113 = vld [vmem:[%s7112] sm:$0xff]
        %v7114 = vld [vmem:[%s7112 + $0x8] sm:$0xff]
        %v7115 = vld [vmem:[%s7112 + $0x10] sm:$0xff]
        %v7116 = vld [vmem:[%s7112 + $0x18] sm:$0xff]
        %v7117 = vld [vmem:[%s7112 + $0x20] sm:$0xff]
        %v7118 = vld [vmem:[%s7112 + $0x28] sm:$0xff]
        %v7119 = vld [vmem:[%s7112 + $0x30] sm:$0xff]
        %v7120 = vld [vmem:[%s7112 + $0x38] sm:$0xff]
        %v7121 = vld [vmem:[%s7112 + $0x40] sm:$0xff]
        %v7122 = vld [vmem:[%s7112 + $0x48] sm:$0xff]
        %v7123 = vld [vmem:[%s7112 + $0x50] sm:$0xff]
        %v7124 = vld [vmem:[%s7112 + $0x58] sm:$0xff]
        %v7125 = vld [vmem:[%s7112 + $0x60] sm:$0xff]
        %v7126 = vld [vmem:[%s7112 + $0x68] sm:$0xff]
        %v7127 = vld [vmem:[%s7112 + $0x70] sm:$0xf]
        %v7128 = vld [vmem:[%s7112 + $0x78] sm:$0xf]
        %7129 = vrot.lane.b32.xlu0 %v6684, 104
        %v7130 = vpop.permute.xlu0 %7129
        %7131 = vrot.lane.b32.xlu0 %v6683, 104
        %v7132 = vpop.permute.xlu0 %7131
        %v7133 = vsel %vm4477, %v7130, 0
        %v7135 = vsel %vm4477, %v7132, 0
        %v7138 = vsel %vm562, %v7127, 0
        %v7141 = vsel %vm562, %v7128, 0
        %7143 = vmatprep.subr.mxu0 0.0
        %7144 = vmatpush1.msra.mxu0 0.0
        %7145 = vmatprep.subr.mxu0 0.0
        %7146 = vmatpush1.msra.mxu0 0.0
        %7147 = vmatprep.subr.mxu0 0.0
        %7148 = vmatpush1.msra.mxu0 0.0
        %7149 = vmatprep.subr.mxu0 0.0
        %7150 = vmatpush1.msra.mxu0 0.0
        %7151 = vmatprep.subr.mxu0 0.0
        %7152 = vmatpush1.msra.mxu0 0.0
        %7153 = vmatprep.subr.mxu0 0.0
        %7154 = vmatpush1.msra.mxu0 0.0
        %7155 = vmatprep.subr.mxu0 0.0
        %7156 = vmatpush1.msra.mxu0 0.0
        %7157 = vmatprep.subr.mxu0 0.0
        %7158 = vmatpush1.msra.mxu0 0.0
        %7159 = vmatprep.subr.mxu0 %v7141
        %7160 = vmatpush1.msra.mxu0 %v7138
        %7161 = vmatprep.subr.mxu0 %v7126
        %7162 = vmatpush1.msra.mxu0 %v7125
        %7163 = vmatprep.subr.mxu0 %v7124
        %7164 = vmatpush1.msra.mxu0 %v7123
        %7165 = vmatprep.subr.mxu0 %v7122
        %7166 = vmatpush1.msra.mxu0 %v7121
        %7167 = vmatprep.subr.mxu0 %v7120
        %7168 = vmatpush1.msra.mxu0 %v7119
        %7169 = vmatprep.subr.mxu0 %v7118
        %7170 = vmatpush1.msra.mxu0 %v7117
        %7171 = vmatprep.subr.mxu0 %v7116
        %7172 = vmatpush1.msra.mxu0 %v7115
        %7173 = vmatprep.subr.mxu0 %v7114
        %7174 = vmatpush1.msra.mxu0 %v7113
        %7175 = vmatprep.subr.mxu0 0.0
        %7176 = vmatpush2.msra.mxu0 0.0
        %7177 = vmatprep.subr.mxu0 0.0
        %7178 = vmatpush2.msra.mxu0 0.0
        %7179 = vmatprep.subr.mxu0 0.0
        %7180 = vmatpush2.msra.mxu0 0.0
        %7181 = vmatprep.subr.mxu0 0.0
        %7182 = vmatpush2.msra.mxu0 0.0
        %7183 = vmatprep.subr.mxu0 0.0
        %7184 = vmatpush2.msra.mxu0 0.0
        %7185 = vmatprep.subr.mxu0 0.0
        %7186 = vmatpush2.msra.mxu0 0.0
        %7187 = vmatprep.subr.mxu0 0.0
        %7188 = vmatpush2.msra.mxu0 0.0
        %7189 = vmatprep.subr.mxu0 0.0
        %7190 = vmatpush2.msra.mxu0 0.0
        %7191 = vmatprep.subr.mxu0 0.0
        %7192 = vmatpush2.msra.mxu0 0.0
        %7193 = vmatprep.subr.mxu0 0.0
        %7194 = vmatpush2.msra.mxu0 0.0
        %7195 = vmatprep.subr.mxu0 0.0
        %7196 = vmatpush2.msra.mxu0 0.0
        %7197 = vmatprep.subr.mxu0 0.0
        %7198 = vmatpush2.msra.mxu0 0.0
        %7199 = vmatprep.subr.mxu0 0.0
        %7200 = vmatpush2.msra.mxu0 0.0
        %7201 = vmatprep.subr.mxu0 0.0
        %7202 = vmatpush2.msra.mxu0 0.0
        %7203 = vmatprep.subr.mxu0 0.0
        %7204 = vmatpush2.msra.mxu0 0.0
        %7205 = vmatprep.subr.mxu0 0.0
        %7206 = vmatpush2.msra.mxu0 0.0
        %7207 = vmatprep.mubr.f32.mxu0 0.0
        %7208 = vmatmul.mubr.f32.gmra.mxu0 %v7133
        %v7209 = vpop.f32.mrf.mxu0
        %v7210 = vadd.f32 0.0, %v7209
        %v7211 = vpop.f32.mrf.mxu0
        %v7212 = vadd.f32 0.0, %v7211
        %7213 = vmatprep.mubr.f32.mxu0 0.0
        %7214 = vmatmul.mubr.f32.gmra.mxu0 %v7135
        %v7215 = vpop.f32.mrf.mxu0
        %v7216 = vadd.f32 0.0, %v7215
        %v7217 = vpop.f32.mrf.mxu0
        %v7218 = vadd.f32 0.0, %v7217
        %7219 = vdwg.mxu0
        %v7220 = vadd.f32 %v7108, %v7210
        %v7221 = vadd.f32 %v7109, %v7212
        %v7222 = vadd.f32 %v7110, %v7216
        %v7223 = vadd.f32 %v7111, %v7218
        %v7224 = vld [vmem:[%s6] sm:$0x3]
        %v7226 = vlaneseq
        %v7227 = vshrl.u32 %v7226, 7
        %v7228 = vsub.s32 0, %v7227
        %v7229 = vrot.slane %v7224, %v7228
        %v7230 = vlaneseq
        %v7231 = vshrl.u32 %v7230, 7
        %v7232 = vsub.s32 1, %v7231
        %v7233 = vrot.slane %v7224, %v7232
        %v7236 = vadd.f32 %v7220, %v7229
        %v7237 = vadd.f32 %v7221, %v7233
        %v7238 = vadd.f32 %v7222, %v7229
        %v7239 = vadd.f32 %v7223, %v7233
        %v7240 = vmax.f32 %v7236, 0.0
        %v7241 = vmax.f32 %v7237, 0.0
        %v7242 = vmax.f32 %v7238, 0.0
        %v7243 = vmax.f32 %v7239, 0.0
        %v7244 = vld [vmem:[%s7] sm:$0x1f]
        %vm7245 = vcmask 80896
        %v7247 = vsel %vm7245, %v7244, 0
        %vm7249 = vcmask 1041408
        %v7251 = vsel %vm7249, %v7242, 0
        %v7254 = vsel %vm7249, %v7243, 0
        %7256 = vmatprep.subr.mxu0 0.0
        %7257 = vmatpush1.msra.mxu0 0.0
        %7258 = vmatprep.subr.mxu0 0.0
        %7259 = vmatpush1.msra.mxu0 0.0
        %7260 = vmatprep.subr.mxu0 0.0
        %7261 = vmatpush1.msra.mxu0 0.0
        %7262 = vmatprep.subr.mxu0 0.0
        %7263 = vmatpush1.msra.mxu0 0.0
        %7264 = vmatprep.subr.mxu0 0.0
        %7265 = vmatpush1.msra.mxu0 0.0
        %7266 = vmatprep.subr.mxu0 0.0
        %7267 = vmatpush1.msra.mxu0 0.0
        %7268 = vmatprep.subr.mxu0 0.0
        %7269 = vmatpush1.msra.mxu0 0.0
        %7270 = vmatprep.subr.mxu0 0.0
        %7271 = vmatpush1.msra.mxu0 0.0
        %7272 = vmatprep.subr.mxu0 0.0
        %7273 = vmatpush1.msra.mxu0 0.0
        %7274 = vmatprep.subr.mxu0 0.0
        %7275 = vmatpush1.msra.mxu0 0.0
        %7276 = vmatprep.subr.mxu0 0.0
        %7277 = vmatpush1.msra.mxu0 0.0
        %7278 = vmatprep.subr.mxu0 0.0
        %7279 = vmatpush1.msra.mxu0 0.0
        %7280 = vmatprep.subr.mxu0 0.0
        %7281 = vmatpush1.msra.mxu0 0.0
        %7282 = vmatprep.subr.mxu0 0.0
        %7283 = vmatpush1.msra.mxu0 0.0
        %7284 = vmatprep.subr.mxu0 %v7254
        %7285 = vmatpush1.msra.mxu0 %v7251
        %7286 = vmatprep.subr.mxu0 %v7241
        %7287 = vmatpush1.msra.mxu0 %v7240
        %7288 = vmatprep.subr.mxu0 0.0
        %7289 = vmatpush2.msra.mxu0 0.0
        %7290 = vmatprep.subr.mxu0 0.0
        %7291 = vmatpush2.msra.mxu0 0.0
        %7292 = vmatprep.subr.mxu0 0.0
        %7293 = vmatpush2.msra.mxu0 0.0
        %7294 = vmatprep.subr.mxu0 0.0
        %7295 = vmatpush2.msra.mxu0 0.0
        %7296 = vmatprep.subr.mxu0 0.0
        %7297 = vmatpush2.msra.mxu0 0.0
        %7298 = vmatprep.subr.mxu0 0.0
        %7299 = vmatpush2.msra.mxu0 0.0
        %7300 = vmatprep.subr.mxu0 0.0
        %7301 = vmatpush2.msra.mxu0 0.0
        %7302 = vmatprep.subr.mxu0 0.0
        %7303 = vmatpush2.msra.mxu0 0.0
        %7304 = vmatprep.subr.mxu0 0.0
        %7305 = vmatpush2.msra.mxu0 0.0
        %7306 = vmatprep.subr.mxu0 0.0
        %7307 = vmatpush2.msra.mxu0 0.0
        %7308 = vmatprep.subr.mxu0 0.0
        %7309 = vmatpush2.msra.mxu0 0.0
        %7310 = vmatprep.subr.mxu0 0.0
        %7311 = vmatpush2.msra.mxu0 0.0
        %7312 = vmatprep.subr.mxu0 0.0
        %7313 = vmatpush2.msra.mxu0 0.0
        %7314 = vmatprep.subr.mxu0 0.0
        %7315 = vmatpush2.msra.mxu0 0.0
        %7316 = vmatprep.subr.mxu0 0.0
        %7317 = vmatpush2.msra.mxu0 0.0
        %7318 = vmatprep.subr.mxu0 0.0
        %7319 = vmatpush2.msra.mxu0 0.0
        %7320 = vmatprep.mubr.f32.mxu0 0.0
        %7321 = vmatmul.mubr.f32.gmra.mxu0 %v7247
        %v7322 = vpop.f32.mrf.mxu0
        %v7323 = vadd.f32 0.0, %v7322
        %v7324 = vpop.f32.mrf.mxu0
        %v7325 = vadd.f32 0.0, %v7324
        %7326 = vdwg.mxu0
        %s7327 = scalar_lea.vmem %s7, 8
        %v7328 = vld [vmem:[%s7327] sm:$0x1f]
        %v7330 = vsel %vm7245, %v7328, 0
        %7332 = vmatprep.subr.mxu0 0.0
        %7333 = vmatpush1.msra.mxu0 0.0
        %7334 = vmatprep.subr.mxu0 0.0
        %7335 = vmatpush1.msra.mxu0 0.0
        %7336 = vmatprep.subr.mxu0 0.0
        %7337 = vmatpush1.msra.mxu0 0.0
        %7338 = vmatprep.subr.mxu0 0.0
        %7339 = vmatpush1.msra.mxu0 0.0
        %7340 = vmatprep.subr.mxu0 0.0
        %7341 = vmatpush1.msra.mxu0 0.0
        %7342 = vmatprep.subr.mxu0 0.0
        %7343 = vmatpush1.msra.mxu0 0.0
        %7344 = vmatprep.subr.mxu0 0.0
        %7345 = vmatpush1.msra.mxu0 0.0
        %7346 = vmatprep.subr.mxu0 0.0
        %7347 = vmatpush1.msra.mxu0 0.0
        %7348 = vmatprep.subr.mxu0 0.0
        %7349 = vmatpush1.msra.mxu0 0.0
        %7350 = vmatprep.subr.mxu0 0.0
        %7351 = vmatpush1.msra.mxu0 0.0
        %7352 = vmatprep.subr.mxu0 0.0
        %7353 = vmatpush1.msra.mxu0 0.0
        %7354 = vmatprep.subr.mxu0 0.0
        %7355 = vmatpush1.msra.mxu0 0.0
        %7356 = vmatprep.subr.mxu0 0.0
        %7357 = vmatpush1.msra.mxu0 0.0
        %7358 = vmatprep.subr.mxu0 0.0
        %7359 = vmatpush1.msra.mxu0 0.0
        %7360 = vmatprep.subr.mxu0 %v7254
        %7361 = vmatpush1.msra.mxu0 %v7251
        %7362 = vmatprep.subr.mxu0 %v7241
        %7363 = vmatpush1.msra.mxu0 %v7240
        %7364 = vmatprep.subr.mxu0 0.0
        %7365 = vmatpush2.msra.mxu0 0.0
        %7366 = vmatprep.subr.mxu0 0.0
        %7367 = vmatpush2.msra.mxu0 0.0
        %7368 = vmatprep.subr.mxu0 0.0
        %7369 = vmatpush2.msra.mxu0 0.0
        %7370 = vmatprep.subr.mxu0 0.0
        %7371 = vmatpush2.msra.mxu0 0.0
        %7372 = vmatprep.subr.mxu0 0.0
        %7373 = vmatpush2.msra.mxu0 0.0
        %7374 = vmatprep.subr.mxu0 0.0
        %7375 = vmatpush2.msra.mxu0 0.0
        %7376 = vmatprep.subr.mxu0 0.0
        %7377 = vmatpush2.msra.mxu0 0.0
        %7378 = vmatprep.subr.mxu0 0.0
        %7379 = vmatpush2.msra.mxu0 0.0
        %7380 = vmatprep.subr.mxu0 0.0
        %7381 = vmatpush2.msra.mxu0 0.0
        %7382 = vmatprep.subr.mxu0 0.0
        %7383 = vmatpush2.msra.mxu0 0.0
        %7384 = vmatprep.subr.mxu0 0.0
        %7385 = vmatpush2.msra.mxu0 0.0
        %7386 = vmatprep.subr.mxu0 0.0
        %7387 = vmatpush2.msra.mxu0 0.0
        %7388 = vmatprep.subr.mxu0 0.0
        %7389 = vmatpush2.msra.mxu0 0.0
        %7390 = vmatprep.subr.mxu0 0.0
        %7391 = vmatpush2.msra.mxu0 0.0
        %7392 = vmatprep.subr.mxu0 0.0
        %7393 = vmatpush2.msra.mxu0 0.0
        %7394 = vmatprep.subr.mxu0 0.0
        %7395 = vmatpush2.msra.mxu0 0.0
        %7396 = vmatprep.mubr.f32.mxu0 0.0
        %7397 = vmatmul.mubr.f32.gmra.mxu0 %v7330
        %v7398 = vpop.f32.mrf.mxu0
        %v7399 = vadd.f32 0.0, %v7398
        %v7400 = vpop.f32.mrf.mxu0
        %v7401 = vadd.f32 0.0, %v7400
        %7402 = vdwg.mxu0
        %v7403 = vmax.f32 %v7323, %v7399
        %v7404 = vmax.f32 %v7325, %v7401
        %v7405 = vld [vmem:[%s8] sm:$0xff]
        %v7406 = vld [vmem:[%s8 + $0x8] sm:$0xff]
        %v7407 = vld [vmem:[%s8 + $0x10] sm:$0xff]
        %v7408 = vld [vmem:[%s8 + $0x18] sm:$0xff]
        %v7409 = vld [vmem:[%s8 + $0x20] sm:$0xff]
        %v7410 = vld [vmem:[%s8 + $0x28] sm:$0xff]
        %v7411 = vld [vmem:[%s8 + $0x30] sm:$0xff]
        %v7412 = vld [vmem:[%s8 + $0x38] sm:$0xff]
        %v7413 = vld [vmem:[%s8 + $0x40] sm:$0xff]
        %v7414 = vld [vmem:[%s8 + $0x48] sm:$0xff]
        %v7415 = vld [vmem:[%s8 + $0x50] sm:$0xff]
        %v7416 = vld [vmem:[%s8 + $0x58] sm:$0xff]
        %v7417 = vld [vmem:[%s8 + $0x60] sm:$0xff]
        %v7418 = vld [vmem:[%s8 + $0x68] sm:$0xff]
        %v7419 = vld [vmem:[%s8 + $0x70] sm:$0xff]
        %v7420 = vld [vmem:[%s8 + $0x78] sm:$0xff]
        %v7421 = vld [vmem:[%s8 + $0x80] sm:$0xff]
        %v7422 = vld [vmem:[%s8 + $0x88] sm:$0xff]
        %v7423 = vld [vmem:[%s8 + $0x90] sm:$0xff]
        %v7424 = vld [vmem:[%s8 + $0x98] sm:$0xff]
        %vm7425 = vcmask 261120
        %v7427 = vsel %vm7425, %v7404, 0
        %7429 = vmatprep.subr.mxu0 0.0
        %7430 = vmatpush1.msra.mxu0 %v7420
        %7431 = vmatprep.subr.mxu0 0.0
        %7432 = vmatpush1.msra.mxu0 %v7419
        %7433 = vmatprep.subr.mxu0 0.0
        %7434 = vmatpush1.msra.mxu0 %v7418
        %7435 = vmatprep.subr.mxu0 0.0
        %7436 = vmatpush1.msra.mxu0 %v7417
        %7437 = vmatprep.subr.mxu0 0.0
        %7438 = vmatpush1.msra.mxu0 %v7416
        %7439 = vmatprep.subr.mxu0 0.0
        %7440 = vmatpush1.msra.mxu0 %v7415
        %7441 = vmatprep.subr.mxu0 0.0
        %7442 = vmatpush1.msra.mxu0 %v7414
        %7443 = vmatprep.subr.mxu0 0.0
        %7444 = vmatpush1.msra.mxu0 %v7413
        %7445 = vmatprep.subr.mxu0 0.0
        %7446 = vmatpush1.msra.mxu0 %v7412
        %7447 = vmatprep.subr.mxu0 0.0
        %7448 = vmatpush1.msra.mxu0 %v7411
        %7449 = vmatprep.subr.mxu0 0.0
        %7450 = vmatpush1.msra.mxu0 %v7410
        %7451 = vmatprep.subr.mxu0 0.0
        %7452 = vmatpush1.msra.mxu0 %v7409
        %7453 = vmatprep.subr.mxu0 0.0
        %7454 = vmatpush1.msra.mxu0 %v7408
        %7455 = vmatprep.subr.mxu0 0.0
        %7456 = vmatpush1.msra.mxu0 %v7407
        %7457 = vmatprep.subr.mxu0 0.0
        %7458 = vmatpush1.msra.mxu0 %v7406
        %7459 = vmatprep.subr.mxu0 0.0
        %7460 = vmatpush1.msra.mxu0 %v7405
        %7461 = vmatprep.subr.mxu0 0.0
        %7462 = vmatpush2.msra.mxu0 0.0
        %7463 = vmatprep.subr.mxu0 0.0
        %7464 = vmatpush2.msra.mxu0 0.0
        %7465 = vmatprep.subr.mxu0 0.0
        %7466 = vmatpush2.msra.mxu0 0.0
        %7467 = vmatprep.subr.mxu0 0.0
        %7468 = vmatpush2.msra.mxu0 0.0
        %7469 = vmatprep.subr.mxu0 0.0
        %7470 = vmatpush2.msra.mxu0 0.0
        %7471 = vmatprep.subr.mxu0 0.0
        %7472 = vmatpush2.msra.mxu0 0.0
        %7473 = vmatprep.subr.mxu0 0.0
        %7474 = vmatpush2.msra.mxu0 0.0
        %7475 = vmatprep.subr.mxu0 0.0
        %7476 = vmatpush2.msra.mxu0 0.0
        %7477 = vmatprep.subr.mxu0 0.0
        %7478 = vmatpush2.msra.mxu0 0.0
        %7479 = vmatprep.subr.mxu0 0.0
        %7480 = vmatpush2.msra.mxu0 0.0
        %7481 = vmatprep.subr.mxu0 0.0
        %7482 = vmatpush2.msra.mxu0 0.0
        %7483 = vmatprep.subr.mxu0 0.0
        %7484 = vmatpush2.msra.mxu0 0.0
        %7485 = vmatprep.subr.mxu0 0.0
        %7486 = vmatpush2.msra.mxu0 %v7424
        %7487 = vmatprep.subr.mxu0 0.0
        %7488 = vmatpush2.msra.mxu0 %v7423
        %7489 = vmatprep.subr.mxu0 0.0
        %7490 = vmatpush2.msra.mxu0 %v7422
        %7491 = vmatprep.subr.mxu0 0.0
        %7492 = vmatpush2.msra.mxu0 %v7421
        %7493 = vmatprep.mubr.f32.mxu0 %v7427
        %7494 = vmatmul.mubr.f32.gmra.mxu0 %v7403
        %v7495 = vpop.f32.mrf.mxu0
        %v7496 = vadd.f32 0.0, %v7495
        %v7497 = vpop.f32.mrf.mxu0
        %7498 = vdwg.mxu0
        %s7499 = scalar_lea.vmem %s8, 160
        %v7500 = vld [vmem:[%s7499] sm:$0xff]
        %v7501 = vld [vmem:[%s7499 + $0x8] sm:$0xff]
        %v7502 = vld [vmem:[%s7499 + $0x10] sm:$0xff]
        %v7503 = vld [vmem:[%s7499 + $0x18] sm:$0xff]
        %v7504 = vld [vmem:[%s7499 + $0x20] sm:$0xff]
        %v7505 = vld [vmem:[%s7499 + $0x28] sm:$0xff]
        %v7506 = vld [vmem:[%s7499 + $0x30] sm:$0xff]
        %v7507 = vld [vmem:[%s7499 + $0x38] sm:$0xff]
        %v7508 = vld [vmem:[%s7499 + $0x40] sm:$0xff]
        %v7509 = vld [vmem:[%s7499 + $0x48] sm:$0xff]
        %v7510 = vld [vmem:[%s7499 + $0x50] sm:$0xff]
        %v7511 = vld [vmem:[%s7499 + $0x58] sm:$0xff]
        %v7512 = vld [vmem:[%s7499 + $0x60] sm:$0xff]
        %v7513 = vld [vmem:[%s7499 + $0x68] sm:$0xff]
        %v7514 = vld [vmem:[%s7499 + $0x70] sm:$0xff]
        %v7515 = vld [vmem:[%s7499 + $0x78] sm:$0xff]
        %v7516 = vld [vmem:[%s7499 + $0x80] sm:$0xff]
        %v7517 = vld [vmem:[%s7499 + $0x88] sm:$0xff]
        %v7518 = vld [vmem:[%s7499 + $0x90] sm:$0xff]
        %v7519 = vld [vmem:[%s7499 + $0x98] sm:$0xff]
        %7520 = vmatprep.subr.mxu0 0.0
        %7521 = vmatpush1.msra.mxu0 %v7515
        %7522 = vmatprep.subr.mxu0 0.0
        %7523 = vmatpush1.msra.mxu0 %v7514
        %7524 = vmatprep.subr.mxu0 0.0
        %7525 = vmatpush1.msra.mxu0 %v7513
        %7526 = vmatprep.subr.mxu0 0.0
        %7527 = vmatpush1.msra.mxu0 %v7512
        %7528 = vmatprep.subr.mxu0 0.0
        %7529 = vmatpush1.msra.mxu0 %v7511
        %7530 = vmatprep.subr.mxu0 0.0
        %7531 = vmatpush1.msra.mxu0 %v7510
        %7532 = vmatprep.subr.mxu0 0.0
        %7533 = vmatpush1.msra.mxu0 %v7509
        %7534 = vmatprep.subr.mxu0 0.0
        %7535 = vmatpush1.msra.mxu0 %v7508
        %7536 = vmatprep.subr.mxu0 0.0
        %7537 = vmatpush1.msra.mxu0 %v7507
        %7538 = vmatprep.subr.mxu0 0.0
        %7539 = vmatpush1.msra.mxu0 %v7506
        %7540 = vmatprep.subr.mxu0 0.0
        %7541 = vmatpush1.msra.mxu0 %v7505
        %7542 = vmatprep.subr.mxu0 0.0
        %7543 = vmatpush1.msra.mxu0 %v7504
        %7544 = vmatprep.subr.mxu0 0.0
        %7545 = vmatpush1.msra.mxu0 %v7503
        %7546 = vmatprep.subr.mxu0 0.0
        %7547 = vmatpush1.msra.mxu0 %v7502
        %7548 = vmatprep.subr.mxu0 0.0
        %7549 = vmatpush1.msra.mxu0 %v7501
        %7550 = vmatprep.subr.mxu0 0.0
        %7551 = vmatpush1.msra.mxu0 %v7500
        %7552 = vmatprep.subr.mxu0 0.0
        %7553 = vmatpush2.msra.mxu0 0.0
        %7554 = vmatprep.subr.mxu0 0.0
        %7555 = vmatpush2.msra.mxu0 0.0
        %7556 = vmatprep.subr.mxu0 0.0
        %7557 = vmatpush2.msra.mxu0 0.0
        %7558 = vmatprep.subr.mxu0 0.0
        %7559 = vmatpush2.msra.mxu0 0.0
        %7560 = vmatprep.subr.mxu0 0.0
        %7561 = vmatpush2.msra.mxu0 0.0
        %7562 = vmatprep.subr.mxu0 0.0
        %7563 = vmatpush2.msra.mxu0 0.0
        %7564 = vmatprep.subr.mxu0 0.0
        %7565 = vmatpush2.msra.mxu0 0.0
        %7566 = vmatprep.subr.mxu0 0.0
        %7567 = vmatpush2.msra.mxu0 0.0
        %7568 = vmatprep.subr.mxu0 0.0
        %7569 = vmatpush2.msra.mxu0 0.0
        %7570 = vmatprep.subr.mxu0 0.0
        %7571 = vmatpush2.msra.mxu0 0.0
        %7572 = vmatprep.subr.mxu0 0.0
        %7573 = vmatpush2.msra.mxu0 0.0
        %7574 = vmatprep.subr.mxu0 0.0
        %7575 = vmatpush2.msra.mxu0 0.0
        %7576 = vmatprep.subr.mxu0 0.0
        %7577 = vmatpush2.msra.mxu0 %v7519
        %7578 = vmatprep.subr.mxu0 0.0
        %7579 = vmatpush2.msra.mxu0 %v7518
        %7580 = vmatprep.subr.mxu0 0.0
        %7581 = vmatpush2.msra.mxu0 %v7517
        %7582 = vmatprep.subr.mxu0 0.0
        %7583 = vmatpush2.msra.mxu0 %v7516
        %7584 = vmatprep.mubr.f32.mxu0 %v7427
        %7585 = vmatmul.mubr.f32.gmra.mxu0 %v7403
        %v7586 = vpop.f32.mrf.mxu0
        %v7587 = vadd.f32 0.0, %v7586
        %v7588 = vpop.f32.mrf.mxu0
        %7589 = vdwg.mxu0
        %v7590 = vmax.f32 %v7496, %v7587
        %v7591 = vld [vmem:[%s9] sm:$0xff]
        %v7592 = vld [vmem:[%s9 + $0x8] sm:$0xff]
        %v7593 = vld [vmem:[%s9 + $0x10] sm:$0xff]
        %v7594 = vld [vmem:[%s9 + $0x18] sm:$0xff]
        %v7595 = vld [vmem:[%s9 + $0x20] sm:$0xff]
        %v7596 = vld [vmem:[%s9 + $0x28] sm:$0xff]
        %v7597 = vld [vmem:[%s9 + $0x30] sm:$0xff]
        %v7598 = vld [vmem:[%s9 + $0x38] sm:$0xff]
        %v7599 = vld [vmem:[%s9 + $0x40] sm:$0xff]
        %v7600 = vld [vmem:[%s9 + $0x48] sm:$0xff]
        %s7601 = scalar_lea.vmem %s9, 80
        %v7602 = vld [vmem:[%s7601] sm:$0xff]
        %v7603 = vld [vmem:[%s7601 + $0x8] sm:$0xff]
        %v7604 = vld [vmem:[%s7601 + $0x10] sm:$0xff]
        %v7605 = vld [vmem:[%s7601 + $0x18] sm:$0xff]
        %v7606 = vld [vmem:[%s7601 + $0x20] sm:$0xff]
        %v7607 = vld [vmem:[%s7601 + $0x28] sm:$0xff]
        %v7608 = vld [vmem:[%s7601 + $0x30] sm:$0xff]
        %v7609 = vld [vmem:[%s7601 + $0x38] sm:$0xff]
        %v7610 = vld [vmem:[%s7601 + $0x40] sm:$0xff]
        %v7611 = vld [vmem:[%s7601 + $0x48] sm:$0xff]
        %v7613 = vrot.slane %v7590, 1
        %vm7614 = vcmask 654336
        %v7615 = vsel %vm7614, %v7613, 0
        %7617 = vmatprep.subr.mxu0 0.0
        %7618 = vmatpush1.msra.mxu0 0.0
        %7619 = vmatprep.subr.mxu0 0.0
        %7620 = vmatpush1.msra.mxu0 0.0
        %7621 = vmatprep.subr.mxu0 0.0
        %7622 = vmatpush1.msra.mxu0 0.0
        %7623 = vmatprep.subr.mxu0 0.0
        %7624 = vmatpush1.msra.mxu0 0.0
        %7625 = vmatprep.subr.mxu0 0.0
        %7626 = vmatpush1.msra.mxu0 0.0
        %7627 = vmatprep.subr.mxu0 0.0
        %7628 = vmatpush1.msra.mxu0 0.0
        %7629 = vmatprep.subr.mxu0 0.0
        %7630 = vmatpush1.msra.mxu0 %v7611
        %7631 = vmatprep.subr.mxu0 0.0
        %7632 = vmatpush1.msra.mxu0 %v7610
        %7633 = vmatprep.subr.mxu0 0.0
        %7634 = vmatpush1.msra.mxu0 %v7609
        %7635 = vmatprep.subr.mxu0 0.0
        %7636 = vmatpush1.msra.mxu0 %v7608
        %7637 = vmatprep.subr.mxu0 0.0
        %7638 = vmatpush1.msra.mxu0 %v7607
        %7639 = vmatprep.subr.mxu0 0.0
        %7640 = vmatpush1.msra.mxu0 %v7606
        %7641 = vmatprep.subr.mxu0 0.0
        %7642 = vmatpush1.msra.mxu0 %v7605
        %7643 = vmatprep.subr.mxu0 0.0
        %7644 = vmatpush1.msra.mxu0 %v7604
        %7645 = vmatprep.subr.mxu0 0.0
        %7646 = vmatpush1.msra.mxu0 %v7603
        %7647 = vmatprep.subr.mxu0 0.0
        %7648 = vmatpush1.msra.mxu0 %v7602
        %7649 = vmatprep.subr.mxu0 0.0
        %7650 = vmatpush2.msra.mxu0 0.0
        %7651 = vmatprep.subr.mxu0 0.0
        %7652 = vmatpush2.msra.mxu0 0.0
        %7653 = vmatprep.subr.mxu0 0.0
        %7654 = vmatpush2.msra.mxu0 0.0
        %7655 = vmatprep.subr.mxu0 0.0
        %7656 = vmatpush2.msra.mxu0 0.0
        %7657 = vmatprep.subr.mxu0 0.0
        %7658 = vmatpush2.msra.mxu0 0.0
        %7659 = vmatprep.subr.mxu0 0.0
        %7660 = vmatpush2.msra.mxu0 0.0
        %7661 = vmatprep.subr.mxu0 0.0
        %7662 = vmatpush2.msra.mxu0 0.0
        %7663 = vmatprep.subr.mxu0 0.0
        %7664 = vmatpush2.msra.mxu0 0.0
        %7665 = vmatprep.subr.mxu0 0.0
        %7666 = vmatpush2.msra.mxu0 0.0
        %7667 = vmatprep.subr.mxu0 0.0
        %7668 = vmatpush2.msra.mxu0 0.0
        %7669 = vmatprep.subr.mxu0 0.0
        %7670 = vmatpush2.msra.mxu0 0.0
        %7671 = vmatprep.subr.mxu0 0.0
        %7672 = vmatpush2.msra.mxu0 0.0
        %7673 = vmatprep.subr.mxu0 0.0
        %7674 = vmatpush2.msra.mxu0 0.0
        %7675 = vmatprep.subr.mxu0 0.0
        %7676 = vmatpush2.msra.mxu0 0.0
        %7677 = vmatprep.subr.mxu0 0.0
        %7678 = vmatpush2.msra.mxu0 0.0
        %7679 = vmatprep.subr.mxu0 0.0
        %7680 = vmatpush2.msra.mxu0 0.0
        %7681 = vmatprep.mubr.f32.mxu0 0.0
        %7682 = vmatmul.mubr.f32.gmra.mxu0 %v7615
        %v7683 = vpop.f32.mrf.mxu0
        %v7684 = vadd.f32 0.0, %v7683
        %v7685 = vpop.f32.mrf.mxu0
        %7686 = vdwg.mxu0
        %v7687 = vsel %vm7614, %v7590, 0
        %7689 = vmatprep.subr.mxu0 0.0
        %7690 = vmatpush1.msra.mxu0 0.0
        %7691 = vmatprep.subr.mxu0 0.0
        %7692 = vmatpush1.msra.mxu0 0.0
        %7693 = vmatprep.subr.mxu0 0.0
        %7694 = vmatpush1.msra.mxu0 0.0
        %7695 = vmatprep.subr.mxu0 0.0
        %7696 = vmatpush1.msra.mxu0 0.0
        %7697 = vmatprep.subr.mxu0 0.0
        %7698 = vmatpush1.msra.mxu0 0.0
        %7699 = vmatprep.subr.mxu0 0.0
        %7700 = vmatpush1.msra.mxu0 0.0
        %7701 = vmatprep.subr.mxu0 0.0
        %7702 = vmatpush1.msra.mxu0 %v7600
        %7703 = vmatprep.subr.mxu0 0.0
        %7704 = vmatpush1.msra.mxu0 %v7599
        %7705 = vmatprep.subr.mxu0 0.0
        %7706 = vmatpush1.msra.mxu0 %v7598
        %7707 = vmatprep.subr.mxu0 0.0
        %7708 = vmatpush1.msra.mxu0 %v7597
        %7709 = vmatprep.subr.mxu0 0.0
        %7710 = vmatpush1.msra.mxu0 %v7596
        %7711 = vmatprep.subr.mxu0 0.0
        %7712 = vmatpush1.msra.mxu0 %v7595
        %7713 = vmatprep.subr.mxu0 0.0
        %7714 = vmatpush1.msra.mxu0 %v7594
        %7715 = vmatprep.subr.mxu0 0.0
        %7716 = vmatpush1.msra.mxu0 %v7593
        %7717 = vmatprep.subr.mxu0 0.0
        %7718 = vmatpush1.msra.mxu0 %v7592
        %7719 = vmatprep.subr.mxu0 0.0
        %7720 = vmatpush1.msra.mxu0 %v7591
        %7721 = vmatprep.subr.mxu0 0.0
        %7722 = vmatpush2.msra.mxu0 0.0
        %7723 = vmatprep.subr.mxu0 0.0
        %7724 = vmatpush2.msra.mxu0 0.0
        %7725 = vmatprep.subr.mxu0 0.0
        %7726 = vmatpush2.msra.mxu0 0.0
        %7727 = vmatprep.subr.mxu0 0.0
        %7728 = vmatpush2.msra.mxu0 0.0
        %7729 = vmatprep.subr.mxu0 0.0
        %7730 = vmatpush2.msra.mxu0 0.0
        %7731 = vmatprep.subr.mxu0 0.0
        %7732 = vmatpush2.msra.mxu0 0.0
        %7733 = vmatprep.subr.mxu0 0.0
        %7734 = vmatpush2.msra.mxu0 0.0
        %7735 = vmatprep.subr.mxu0 0.0
        %7736 = vmatpush2.msra.mxu0 0.0
        %7737 = vmatprep.subr.mxu0 0.0
        %7738 = vmatpush2.msra.mxu0 0.0
        %7739 = vmatprep.subr.mxu0 0.0
        %7740 = vmatpush2.msra.mxu0 0.0
        %7741 = vmatprep.subr.mxu0 0.0
        %7742 = vmatpush2.msra.mxu0 0.0
        %7743 = vmatprep.subr.mxu0 0.0
        %7744 = vmatpush2.msra.mxu0 0.0
        %7745 = vmatprep.subr.mxu0 0.0
        %7746 = vmatpush2.msra.mxu0 0.0
        %7747 = vmatprep.subr.mxu0 0.0
        %7748 = vmatpush2.msra.mxu0 0.0
        %7749 = vmatprep.subr.mxu0 0.0
        %7750 = vmatpush2.msra.mxu0 0.0
        %7751 = vmatprep.subr.mxu0 0.0
        %7752 = vmatpush2.msra.mxu0 0.0
        %7753 = vmatprep.mubr.f32.mxu0 0.0
        %7754 = vmatmul.mubr.f32.gmra.mxu0 %v7687
        %v7755 = vpop.f32.mrf.mxu0
        %v7756 = vadd.f32 %v7684, %v7755
        %v7757 = vpop.f32.mrf.mxu0
        %7758 = vdwg.mxu0
        %s7759 = scalar_lea.vmem %s9, 160
        %v7760 = vld [vmem:[%s7759] sm:$0xff]
        %v7761 = vld [vmem:[%s7759 + $0x8] sm:$0xff]
        %v7762 = vld [vmem:[%s7759 + $0x10] sm:$0xff]
        %v7763 = vld [vmem:[%s7759 + $0x18] sm:$0xff]
        %v7764 = vld [vmem:[%s7759 + $0x20] sm:$0xff]
        %v7765 = vld [vmem:[%s7759 + $0x28] sm:$0xff]
        %v7766 = vld [vmem:[%s7759 + $0x30] sm:$0xff]
        %v7767 = vld [vmem:[%s7759 + $0x38] sm:$0xff]
        %v7768 = vld [vmem:[%s7759 + $0x40] sm:$0xff]
        %v7769 = vld [vmem:[%s7759 + $0x48] sm:$0xff]
        %v7770 = vrot.slane %v7590, 2
        %v7771 = vsel %vm7614, %v7770, 0
        %7773 = vmatprep.subr.mxu0 0.0
        %7774 = vmatpush1.msra.mxu0 0.0
        %7775 = vmatprep.subr.mxu0 0.0
        %7776 = vmatpush1.msra.mxu0 0.0
        %7777 = vmatprep.subr.mxu0 0.0
        %7778 = vmatpush1.msra.mxu0 0.0
        %7779 = vmatprep.subr.mxu0 0.0
        %7780 = vmatpush1.msra.mxu0 0.0
        %7781 = vmatprep.subr.mxu0 0.0
        %7782 = vmatpush1.msra.mxu0 0.0
        %7783 = vmatprep.subr.mxu0 0.0
        %7784 = vmatpush1.msra.mxu0 0.0
        %7785 = vmatprep.subr.mxu0 0.0
        %7786 = vmatpush1.msra.mxu0 %v7769
        %7787 = vmatprep.subr.mxu0 0.0
        %7788 = vmatpush1.msra.mxu0 %v7768
        %7789 = vmatprep.subr.mxu0 0.0
        %7790 = vmatpush1.msra.mxu0 %v7767
        %7791 = vmatprep.subr.mxu0 0.0
        %7792 = vmatpush1.msra.mxu0 %v7766
        %7793 = vmatprep.subr.mxu0 0.0
        %7794 = vmatpush1.msra.mxu0 %v7765
        %7795 = vmatprep.subr.mxu0 0.0
        %7796 = vmatpush1.msra.mxu0 %v7764
        %7797 = vmatprep.subr.mxu0 0.0
        %7798 = vmatpush1.msra.mxu0 %v7763
        %7799 = vmatprep.subr.mxu0 0.0
        %7800 = vmatpush1.msra.mxu0 %v7762
        %7801 = vmatprep.subr.mxu0 0.0
        %7802 = vmatpush1.msra.mxu0 %v7761
        %7803 = vmatprep.subr.mxu0 0.0
        %7804 = vmatpush1.msra.mxu0 %v7760
        %7805 = vmatprep.subr.mxu0 0.0
        %7806 = vmatpush2.msra.mxu0 0.0
        %7807 = vmatprep.subr.mxu0 0.0
        %7808 = vmatpush2.msra.mxu0 0.0
        %7809 = vmatprep.subr.mxu0 0.0
        %7810 = vmatpush2.msra.mxu0 0.0
        %7811 = vmatprep.subr.mxu0 0.0
        %7812 = vmatpush2.msra.mxu0 0.0
        %7813 = vmatprep.subr.mxu0 0.0
        %7814 = vmatpush2.msra.mxu0 0.0
        %7815 = vmatprep.subr.mxu0 0.0
        %7816 = vmatpush2.msra.mxu0 0.0
        %7817 = vmatprep.subr.mxu0 0.0
        %7818 = vmatpush2.msra.mxu0 0.0
        %7819 = vmatprep.subr.mxu0 0.0
        %7820 = vmatpush2.msra.mxu0 0.0
        %7821 = vmatprep.subr.mxu0 0.0
        %7822 = vmatpush2.msra.mxu0 0.0
        %7823 = vmatprep.subr.mxu0 0.0
        %7824 = vmatpush2.msra.mxu0 0.0
        %7825 = vmatprep.subr.mxu0 0.0
        %7826 = vmatpush2.msra.mxu0 0.0
        %7827 = vmatprep.subr.mxu0 0.0
        %7828 = vmatpush2.msra.mxu0 0.0
        %7829 = vmatprep.subr.mxu0 0.0
        %7830 = vmatpush2.msra.mxu0 0.0
        %7831 = vmatprep.subr.mxu0 0.0
        %7832 = vmatpush2.msra.mxu0 0.0
        %7833 = vmatprep.subr.mxu0 0.0
        %7834 = vmatpush2.msra.mxu0 0.0
        %7835 = vmatprep.subr.mxu0 0.0
        %7836 = vmatpush2.msra.mxu0 0.0
        %7837 = vmatprep.mubr.f32.mxu0 0.0
        %7838 = vmatmul.mubr.f32.gmra.mxu0 %v7771
        %v7839 = vpop.f32.mrf.mxu0
        %v7840 = vadd.f32 0.0, %v7839
        %v7841 = vpop.f32.mrf.mxu0
        %7842 = vdwg.mxu0
        %v7843 = vadd.f32 %v7756, %v7840
        %s7844 = scalar_lea.vmem %s9, 240
        %v7845 = vld [vmem:[%s7844] sm:$0xff]
        %v7846 = vld [vmem:[%s7844 + $0x8] sm:$0xff]
        %v7847 = vld [vmem:[%s7844 + $0x10] sm:$0xff]
        %v7848 = vld [vmem:[%s7844 + $0x18] sm:$0xff]
        %v7849 = vld [vmem:[%s7844 + $0x20] sm:$0xff]
        %v7850 = vld [vmem:[%s7844 + $0x28] sm:$0xff]
        %v7851 = vld [vmem:[%s7844 + $0x30] sm:$0xff]
        %v7852 = vld [vmem:[%s7844 + $0x38] sm:$0xff]
        %v7853 = vld [vmem:[%s7844 + $0x40] sm:$0xff]
        %v7854 = vld [vmem:[%s7844 + $0x48] sm:$0xff]
        %v7855 = vrot.slane %v7590, 3
        %v7856 = vsel %vm7614, %v7855, 0
        %7858 = vmatprep.subr.mxu0 0.0
        %7859 = vmatpush1.msra.mxu0 0.0
        %7860 = vmatprep.subr.mxu0 0.0
        %7861 = vmatpush1.msra.mxu0 0.0
        %7862 = vmatprep.subr.mxu0 0.0
        %7863 = vmatpush1.msra.mxu0 0.0
        %7864 = vmatprep.subr.mxu0 0.0
        %7865 = vmatpush1.msra.mxu0 0.0
        %7866 = vmatprep.subr.mxu0 0.0
        %7867 = vmatpush1.msra.mxu0 0.0
        %7868 = vmatprep.subr.mxu0 0.0
        %7869 = vmatpush1.msra.mxu0 0.0
        %7870 = vmatprep.subr.mxu0 0.0
        %7871 = vmatpush1.msra.mxu0 %v7854
        %7872 = vmatprep.subr.mxu0 0.0
        %7873 = vmatpush1.msra.mxu0 %v7853
        %7874 = vmatprep.subr.mxu0 0.0
        %7875 = vmatpush1.msra.mxu0 %v7852
        %7876 = vmatprep.subr.mxu0 0.0
        %7877 = vmatpush1.msra.mxu0 %v7851
        %7878 = vmatprep.subr.mxu0 0.0
        %7879 = vmatpush1.msra.mxu0 %v7850
        %7880 = vmatprep.subr.mxu0 0.0
        %7881 = vmatpush1.msra.mxu0 %v7849
        %7882 = vmatprep.subr.mxu0 0.0
        %7883 = vmatpush1.msra.mxu0 %v7848
        %7884 = vmatprep.subr.mxu0 0.0
        %7885 = vmatpush1.msra.mxu0 %v7847
        %7886 = vmatprep.subr.mxu0 0.0
        %7887 = vmatpush1.msra.mxu0 %v7846
        %7888 = vmatprep.subr.mxu0 0.0
        %7889 = vmatpush1.msra.mxu0 %v7845
        %7890 = vmatprep.subr.mxu0 0.0
        %7891 = vmatpush2.msra.mxu0 0.0
        %7892 = vmatprep.subr.mxu0 0.0
        %7893 = vmatpush2.msra.mxu0 0.0
        %7894 = vmatprep.subr.mxu0 0.0
        %7895 = vmatpush2.msra.mxu0 0.0
        %7896 = vmatprep.subr.mxu0 0.0
        %7897 = vmatpush2.msra.mxu0 0.0
        %7898 = vmatprep.subr.mxu0 0.0
        %7899 = vmatpush2.msra.mxu0 0.0
        %7900 = vmatprep.subr.mxu0 0.0
        %7901 = vmatpush2.msra.mxu0 0.0
        %7902 = vmatprep.subr.mxu0 0.0
        %7903 = vmatpush2.msra.mxu0 0.0
        %7904 = vmatprep.subr.mxu0 0.0
        %7905 = vmatpush2.msra.mxu0 0.0
        %7906 = vmatprep.subr.mxu0 0.0
        %7907 = vmatpush2.msra.mxu0 0.0
        %7908 = vmatprep.subr.mxu0 0.0
        %7909 = vmatpush2.msra.mxu0 0.0
        %7910 = vmatprep.subr.mxu0 0.0
        %7911 = vmatpush2.msra.mxu0 0.0
        %7912 = vmatprep.subr.mxu0 0.0
        %7913 = vmatpush2.msra.mxu0 0.0
        %7914 = vmatprep.subr.mxu0 0.0
        %7915 = vmatpush2.msra.mxu0 0.0
        %7916 = vmatprep.subr.mxu0 0.0
        %7917 = vmatpush2.msra.mxu0 0.0
        %7918 = vmatprep.subr.mxu0 0.0
        %7919 = vmatpush2.msra.mxu0 0.0
        %7920 = vmatprep.subr.mxu0 0.0
        %7921 = vmatpush2.msra.mxu0 0.0
        %7922 = vmatprep.mubr.f32.mxu0 0.0
        %7923 = vmatmul.mubr.f32.gmra.mxu0 %v7856
        %v7924 = vpop.f32.mrf.mxu0
        %v7925 = vadd.f32 0.0, %v7924
        %v7926 = vpop.f32.mrf.mxu0
        %7927 = vdwg.mxu0
        %v7928 = vadd.f32 %v7843, %v7925
        %s7929 = scalar_lea.vmem %s9, 320
        %v7930 = vld [vmem:[%s7929] sm:$0xff]
        %v7931 = vld [vmem:[%s7929 + $0x8] sm:$0xff]
        %v7932 = vld [vmem:[%s7929 + $0x10] sm:$0xff]
        %v7933 = vld [vmem:[%s7929 + $0x18] sm:$0xff]
        %v7934 = vld [vmem:[%s7929 + $0x20] sm:$0xff]
        %v7935 = vld [vmem:[%s7929 + $0x28] sm:$0xff]
        %v7936 = vld [vmem:[%s7929 + $0x30] sm:$0xff]
        %v7937 = vld [vmem:[%s7929 + $0x38] sm:$0xff]
        %v7938 = vld [vmem:[%s7929 + $0x40] sm:$0xff]
        %v7939 = vld [vmem:[%s7929 + $0x48] sm:$0xff]
        %v7940 = vrot.slane %v7590, 4
        %v7941 = vsel %vm7614, %v7940, 0
        %7943 = vmatprep.subr.mxu0 0.0
        %7944 = vmatpush1.msra.mxu0 0.0
        %7945 = vmatprep.subr.mxu0 0.0
        %7946 = vmatpush1.msra.mxu0 0.0
        %7947 = vmatprep.subr.mxu0 0.0
        %7948 = vmatpush1.msra.mxu0 0.0
        %7949 = vmatprep.subr.mxu0 0.0
        %7950 = vmatpush1.msra.mxu0 0.0
        %7951 = vmatprep.subr.mxu0 0.0
        %7952 = vmatpush1.msra.mxu0 0.0
        %7953 = vmatprep.subr.mxu0 0.0
        %7954 = vmatpush1.msra.mxu0 0.0
        %7955 = vmatprep.subr.mxu0 0.0
        %7956 = vmatpush1.msra.mxu0 %v7939
        %7957 = vmatprep.subr.mxu0 0.0
        %7958 = vmatpush1.msra.mxu0 %v7938
        %7959 = vmatprep.subr.mxu0 0.0
        %7960 = vmatpush1.msra.mxu0 %v7937
        %7961 = vmatprep.subr.mxu0 0.0
        %7962 = vmatpush1.msra.mxu0 %v7936
        %7963 = vmatprep.subr.mxu0 0.0
        %7964 = vmatpush1.msra.mxu0 %v7935
        %7965 = vmatprep.subr.mxu0 0.0
        %7966 = vmatpush1.msra.mxu0 %v7934
        %7967 = vmatprep.subr.mxu0 0.0
        %7968 = vmatpush1.msra.mxu0 %v7933
        %7969 = vmatprep.subr.mxu0 0.0
        %7970 = vmatpush1.msra.mxu0 %v7932
        %7971 = vmatprep.subr.mxu0 0.0
        %7972 = vmatpush1.msra.mxu0 %v7931
        %7973 = vmatprep.subr.mxu0 0.0
        %7974 = vmatpush1.msra.mxu0 %v7930
        %7975 = vmatprep.subr.mxu0 0.0
        %7976 = vmatpush2.msra.mxu0 0.0
        %7977 = vmatprep.subr.mxu0 0.0
        %7978 = vmatpush2.msra.mxu0 0.0
        %7979 = vmatprep.subr.mxu0 0.0
        %7980 = vmatpush2.msra.mxu0 0.0
        %7981 = vmatprep.subr.mxu0 0.0
        %7982 = vmatpush2.msra.mxu0 0.0
        %7983 = vmatprep.subr.mxu0 0.0
        %7984 = vmatpush2.msra.mxu0 0.0
        %7985 = vmatprep.subr.mxu0 0.0
        %7986 = vmatpush2.msra.mxu0 0.0
        %7987 = vmatprep.subr.mxu0 0.0
        %7988 = vmatpush2.msra.mxu0 0.0
        %7989 = vmatprep.subr.mxu0 0.0
        %7990 = vmatpush2.msra.mxu0 0.0
        %7991 = vmatprep.subr.mxu0 0.0
        %7992 = vmatpush2.msra.mxu0 0.0
        %7993 = vmatprep.subr.mxu0 0.0
        %7994 = vmatpush2.msra.mxu0 0.0
        %7995 = vmatprep.subr.mxu0 0.0
        %7996 = vmatpush2.msra.mxu0 0.0
        %7997 = vmatprep.subr.mxu0 0.0
        %7998 = vmatpush2.msra.mxu0 0.0
        %7999 = vmatprep.subr.mxu0 0.0
        %8000 = vmatpush2.msra.mxu0 0.0
        %8001 = vmatprep.subr.mxu0 0.0
        %8002 = vmatpush2.msra.mxu0 0.0
        %8003 = vmatprep.subr.mxu0 0.0
        %8004 = vmatpush2.msra.mxu0 0.0
        %8005 = vmatprep.subr.mxu0 0.0
        %8006 = vmatpush2.msra.mxu0 0.0
        %8007 = vmatprep.mubr.f32.mxu0 0.0
        %8008 = vmatmul.mubr.f32.gmra.mxu0 %v7941
        %v8009 = vpop.f32.mrf.mxu0
        %v8010 = vadd.f32 0.0, %v8009
        %v8011 = vpop.f32.mrf.mxu0
        %8012 = vdwg.mxu0
        %v8013 = vadd.f32 %v7928, %v8010
        %v8014 = vld [vmem:[%s10] sm:$0x1]
        %v8015 = vadd.f32 %v8013, %v8014
        %v8016 = vmax.f32 %v8015, 0.0
        %v8017 = vld [vmem:[%s11] sm:$0xff]
        %v8018 = vld [vmem:[%s11 + $0x8] sm:$0xff]
        %v8019 = vld [vmem:[%s11 + $0x10] sm:$0xff]
        %v8020 = vld [vmem:[%s11 + $0x18] sm:$0xff]
        %v8021 = vld [vmem:[%s11 + $0x20] sm:$0xff]
        %v8022 = vld [vmem:[%s11 + $0x28] sm:$0xff]
        %v8023 = vld [vmem:[%s11 + $0x30] sm:$0xff]
        %v8024 = vld [vmem:[%s11 + $0x38] sm:$0xff]
        %v8025 = vld [vmem:[%s11 + $0x40] sm:$0xff]
        %v8026 = vld [vmem:[%s11 + $0x48] sm:$0xff]
        %v8027 = vld [vmem:[%s11 + $0x50] sm:$0xff]
        %v8028 = vld [vmem:[%s11 + $0x58] sm:$0xff]
        %v8029 = vld [vmem:[%s11 + $0x60] sm:$0xff]
        %v8030 = vld [vmem:[%s11 + $0x68] sm:$0xff]
        %v8031 = vld [vmem:[%s11 + $0x70] sm:$0xff]
        %v8032 = vld [vmem:[%s12] sm:$0x1]
        %vm8033 = vcmask 982016
        %v8035 = vsel %vm8033, %v8016, 0
        %8037 = vmatprep.subr.mxu0 0.0
        %8038 = vmatpush1.msra.mxu0 0.0
        %8039 = vmatprep.subr.mxu0 0.0
        %8040 = vmatpush1.msra.mxu0 %v8031
        %8041 = vmatprep.subr.mxu0 0.0
        %8042 = vmatpush1.msra.mxu0 %v8030
        %8043 = vmatprep.subr.mxu0 0.0
        %8044 = vmatpush1.msra.mxu0 %v8029
        %8045 = vmatprep.subr.mxu0 0.0
        %8046 = vmatpush1.msra.mxu0 %v8028
        %8047 = vmatprep.subr.mxu0 0.0
        %8048 = vmatpush1.msra.mxu0 %v8027
        %8049 = vmatprep.subr.mxu0 0.0
        %8050 = vmatpush1.msra.mxu0 %v8026
        %8051 = vmatprep.subr.mxu0 0.0
        %8052 = vmatpush1.msra.mxu0 %v8025
        %8053 = vmatprep.subr.mxu0 0.0
        %8054 = vmatpush1.msra.mxu0 %v8024
        %8055 = vmatprep.subr.mxu0 0.0
        %8056 = vmatpush1.msra.mxu0 %v8023
        %8057 = vmatprep.subr.mxu0 0.0
        %8058 = vmatpush1.msra.mxu0 %v8022
        %8059 = vmatprep.subr.mxu0 0.0
        %8060 = vmatpush1.msra.mxu0 %v8021
        %8061 = vmatprep.subr.mxu0 0.0
        %8062 = vmatpush1.msra.mxu0 %v8020
        %8063 = vmatprep.subr.mxu0 0.0
        %8064 = vmatpush1.msra.mxu0 %v8019
        %8065 = vmatprep.subr.mxu0 0.0
        %8066 = vmatpush1.msra.mxu0 %v8018
        %8067 = vmatprep.subr.mxu0 0.0
        %8068 = vmatpush1.msra.mxu0 %v8017
        %8069 = vmatprep.subr.mxu0 0.0
        %8070 = vmatpush2.msra.mxu0 0.0
        %8071 = vmatprep.subr.mxu0 0.0
        %8072 = vmatpush2.msra.mxu0 0.0
        %8073 = vmatprep.subr.mxu0 0.0
        %8074 = vmatpush2.msra.mxu0 0.0
        %8075 = vmatprep.subr.mxu0 0.0
        %8076 = vmatpush2.msra.mxu0 0.0
        %8077 = vmatprep.subr.mxu0 0.0
        %8078 = vmatpush2.msra.mxu0 0.0
        %8079 = vmatprep.subr.mxu0 0.0
        %8080 = vmatpush2.msra.mxu0 0.0
        %8081 = vmatprep.subr.mxu0 0.0
        %8082 = vmatpush2.msra.mxu0 0.0
        %8083 = vmatprep.subr.mxu0 0.0
        %8084 = vmatpush2.msra.mxu0 0.0
        %8085 = vmatprep.subr.mxu0 0.0
        %8086 = vmatpush2.msra.mxu0 0.0
        %8087 = vmatprep.subr.mxu0 0.0
        %8088 = vmatpush2.msra.mxu0 0.0
        %8089 = vmatprep.subr.mxu0 0.0
        %8090 = vmatpush2.msra.mxu0 0.0
        %8091 = vmatprep.subr.mxu0 0.0
        %8092 = vmatpush2.msra.mxu0 0.0
        %8093 = vmatprep.subr.mxu0 0.0
        %8094 = vmatpush2.msra.mxu0 0.0
        %8095 = vmatprep.subr.mxu0 0.0
        %8096 = vmatpush2.msra.mxu0 0.0
        %8097 = vmatprep.subr.mxu0 0.0
        %8098 = vmatpush2.msra.mxu0 0.0
        %8099 = vmatprep.subr.mxu0 0.0
        %8100 = vmatpush2.msra.mxu0 0.0
        %8101 = vmatprep.mubr.f32.mxu0 0.0
        %8102 = vmatmul.mubr.f32.gmra.mxu0 %v8035
        %v8103 = vpop.f32.mrf.mxu0
        %v8104 = vadd.f32 %v8032, %v8103
        %v8105 = vpop.f32.mrf.mxu0
        %8106 = vdwg.mxu0
        %v8107 = vmax.f32 %v8104, 0.0
        %v8108 = vld [vmem:[%s13] sm:$0xff]
        %v8109 = vld [vmem:[%s13 + $0x8] sm:$0xff]
        %v8110 = vld [vmem:[%s13 + $0x10] sm:$0xff]
        %v8111 = vld [vmem:[%s13 + $0x18] sm:$0xff]
        %v8112 = vld [vmem:[%s13 + $0x20] sm:$0xff]
        %v8113 = vld [vmem:[%s13 + $0x28] sm:$0xff]
        %v8114 = vld [vmem:[%s13 + $0x30] sm:$0xff]
        %v8115 = vld [vmem:[%s13 + $0x38] sm:$0xff]
        %v8116 = vld [vmem:[%s13 + $0x40] sm:$0xff]
        %v8117 = vld [vmem:[%s13 + $0x48] sm:$0xff]
        %v8118 = vld [vmem:[%s13 + $0x50] sm:$0xf]
        %v8119 = vld [vmem:[%s14] sm:$0x1]
        %v8121 = vsel %vm553, %v8107, 0
        %v8124 = vsel %vm562, %v8118, 0
        %8126 = vmatprep.subr.mxu0 0.0
        %8127 = vmatpush1.msra.mxu0 0.0
        %8128 = vmatprep.subr.mxu0 0.0
        %8129 = vmatpush1.msra.mxu0 0.0
        %8130 = vmatprep.subr.mxu0 0.0
        %8131 = vmatpush1.msra.mxu0 0.0
        %8132 = vmatprep.subr.mxu0 0.0
        %8133 = vmatpush1.msra.mxu0 0.0
        %8134 = vmatprep.subr.mxu0 0.0
        %8135 = vmatpush1.msra.mxu0 0.0
        %8136 = vmatprep.subr.mxu0 0.0
        %8137 = vmatpush1.msra.mxu0 %v8124
        %8138 = vmatprep.subr.mxu0 0.0
        %8139 = vmatpush1.msra.mxu0 %v8117
        %8140 = vmatprep.subr.mxu0 0.0
        %8141 = vmatpush1.msra.mxu0 %v8116
        %8142 = vmatprep.subr.mxu0 0.0
        %8143 = vmatpush1.msra.mxu0 %v8115
        %8144 = vmatprep.subr.mxu0 0.0
        %8145 = vmatpush1.msra.mxu0 %v8114
        %8146 = vmatprep.subr.mxu0 0.0
        %8147 = vmatpush1.msra.mxu0 %v8113
        %8148 = vmatprep.subr.mxu0 0.0
        %8149 = vmatpush1.msra.mxu0 %v8112
        %8150 = vmatprep.subr.mxu0 0.0
        %8151 = vmatpush1.msra.mxu0 %v8111
        %8152 = vmatprep.subr.mxu0 0.0
        %8153 = vmatpush1.msra.mxu0 %v8110
        %8154 = vmatprep.subr.mxu0 0.0
        %8155 = vmatpush1.msra.mxu0 %v8109
        %8156 = vmatprep.subr.mxu0 0.0
        %8157 = vmatpush1.msra.mxu0 %v8108
        %8158 = vmatprep.subr.mxu0 0.0
        %8159 = vmatpush2.msra.mxu0 0.0
        %8160 = vmatprep.subr.mxu0 0.0
        %8161 = vmatpush2.msra.mxu0 0.0
        %8162 = vmatprep.subr.mxu0 0.0
        %8163 = vmatpush2.msra.mxu0 0.0
        %8164 = vmatprep.subr.mxu0 0.0
        %8165 = vmatpush2.msra.mxu0 0.0
        %8166 = vmatprep.subr.mxu0 0.0
        %8167 = vmatpush2.msra.mxu0 0.0
        %8168 = vmatprep.subr.mxu0 0.0
        %8169 = vmatpush2.msra.mxu0 0.0
        %8170 = vmatprep.subr.mxu0 0.0
        %8171 = vmatpush2.msra.mxu0 0.0
        %8172 = vmatprep.subr.mxu0 0.0
        %8173 = vmatpush2.msra.mxu0 0.0
        %8174 = vmatprep.subr.mxu0 0.0
        %8175 = vmatpush2.msra.mxu0 0.0
        %8176 = vmatprep.subr.mxu0 0.0
        %8177 = vmatpush2.msra.mxu0 0.0
        %8178 = vmatprep.subr.mxu0 0.0
        %8179 = vmatpush2.msra.mxu0 0.0
        %8180 = vmatprep.subr.mxu0 0.0
        %8181 = vmatpush2.msra.mxu0 0.0
        %8182 = vmatprep.subr.mxu0 0.0
        %8183 = vmatpush2.msra.mxu0 0.0
        %8184 = vmatprep.subr.mxu0 0.0
        %8185 = vmatpush2.msra.mxu0 0.0
        %8186 = vmatprep.subr.mxu0 0.0
        %8187 = vmatpush2.msra.mxu0 0.0
        %8188 = vmatprep.subr.mxu0 0.0
        %8189 = vmatpush2.msra.mxu0 0.0
        %8190 = vmatprep.mubr.f32.mxu0 0.0
        %8191 = vmatmul.mubr.f32.gmra.mxu0 %v8121
        %v8192 = vpop.f32.mrf.mxu0
        %v8193 = vadd.f32 %v8119, %v8192
        %v8194 = vpop.f32.mrf.mxu0
        %8195 = vdwg.mxu0
        %vm8196 = vcmask 73728
        %8197 = vst.msk [vmem:[%s486] sm:$0x1] %vm8196, %v8193
        %s8198 = sand.u32 %s357, 1
        %s8199 = scalar_lea.sflag [#allocation3], %s8198
        %s8200 = sand.u32 %s357, 1
        %s8201 = scalar_lea.vmem [#allocation2], %s8200
        // Predicated region
        $region81: #{lenet_forward.1} parent=79 // pred_check
          %p8202 = pneg %p367
        $region82: #{lenet_forward.1} parent=79 // pred_check_branch
          %8204 = sbr.rel (%p8202) target = $region84
        $region83: #{lenet_forward.1} parent=79 // pred_region
          %s8206 = ssub.s32 16, 16
          %8207 = vsyncadd %s8199, %s8206
          %s8208 = smul.addr %s29, 16
          %s8209 = scalar_lea.hbm %s15, %s8208
          %s8211 = sshll.u32 %s8201, 4
          %s8212 = int_to_ptr.vmem [resolvable:$true] %s8211
          %8214 = dma.vmem_to_hbm [thread:$0]  %s8212, 16, %s8209, %s8199
        $region84: #{lenet_forward.1} parent=79 // pred_fallthru
          _
      $region80: #{lenet_forward.1} parent=5 // pred_fallthru
        _
      %p8215 = scmp.le.s32.totalorder 2, %s24
      // Predicated region
      $region85: #{lenet_forward.1} parent=5 // pred_check
        %p8216 = pneg %p8215
      $region86: #{lenet_forward.1} parent=5 // pred_check_branch
        %8218 = sbr.rel (%p8216) target = $region88
      $region87: #{lenet_forward.1} parent=5 // pred_region
        %s8219 = ssub.s32 %s24, 2
        // Predicated region
        $region89: #{lenet_forward.1} parent=87 // pred_check
          %p8220 = pneg %p373
        $region90: #{lenet_forward.1} parent=87 // pred_check_branch
          %8222 = sbr.rel (%p8220) target = $region92
        $region91: #{lenet_forward.1} parent=87 // pred_region
          %s8223 = sand.u32 %s358, 1
          %s8224 = scalar_lea.sflag [#allocation3], %s8223
          %s8225 = sand.u32 %s358, 1
          %s8226 = scalar_lea.vmem [#allocation2], %s8225
          %8227 = dma.done %s8224, 16
        $region92: #{lenet_forward.1} parent=87 // pred_fallthru
          _
      $region88: #{lenet_forward.1} parent=5 // pred_fallthru
        _
    $region6: #{lenet_forward.1} parent=1 // loop_footer
      %s28 = sadd.s32 1, %s24
    $region7: #{lenet_forward.1} parent=1 // loop_footer_branch
      %23 = sbr.rel target = $region3
    $region8: #{lenet_forward.1} parent=1 // loop_exit
      _
    %8228 = vsyncpa [#allocation3], 1
    %s8229 = scalar_lea.sflag [#allocation3], 1
    %8230 = vsyncpa %s8229, 1

</llo_original>
